<compile_context>
chip_gen: v6e
topology: v6e:2x2x1
jax: 0.10.0
libtpu: 0.0.40
codegen_flags: <defaults>
</compile_context>

<pallas_src>
import numpy as np
import jax
import jax.numpy as jnp
from jax.experimental import pallas as pl
from jax.experimental.pallas import tpu as pltpu

# ---------------- configuration (stand-in for cfg.*) ----------------
DIM_FT = 16                     # cfg.EXPRESSION_DIMS
DIM_POSE = 3
Z_DIM = 3 * DIM_FT + DIM_POSE   # 51
IN_CH = 3
H = W = 16                      # cfg.INPUT_SIZE
D_IN = IN_CH * H * W            # 768 (multiple of 128)
N_CLASSES = 8                   # znet output (calc_acc asserts shape[1] == 8)

# ---------------- padded / tiled sizes (TPU layout) ----------------
Z_PAD = 128                     # Z_DIM (51)    -> 128 lanes
NC_PAD = 128                    # N_CLASSES (8) -> 128 lanes
GZ_PAD = Z_PAD + NC_PAD         # fused G + znet output width (256)
DEFAULT_TILE_B = 512            # 512-row tiles ~ 85% of HBM roofline (review)
FUSE_LINEAR_CHAIN = True        # TODO(synk): revert when real conv/MLP bodies land

_BUFFERED1_SUPPORTED = [True]   # flips to False if pl.Buffered(1) is rejected


# ------------------------------ kernel bodies -------------------------------
def _saae_fused_kernel(x_ref, w_img_ref, b_img_ref, w_pr_ref, b_pr_ref,
                       img_ref, probs_ref):
    """Host-pre-composed linear chain: two matmuls sharing one read of x."""
    xb = x_ref[...].astype(jnp.bfloat16)               # cast on the VMEM tile
    img = jnp.dot(xb, w_img_ref[...], preferred_element_type=jnp.float32)
    img_ref[...] = (img + b_img_ref[...]).astype(img_ref.dtype)
    pr = jnp.dot(xb, w_pr_ref[...], preferred_element_type=jnp.float32)
    probs_ref[...] = (pr + b_pr_ref[...]).astype(probs_ref.dtype)


def _saae_staged_kernel(x_ref, wq_ref, bq_ref, we_ref, be_ref, wgz_ref,
                        bgz_ref, wp_ref, bp_ref, img_ref, probs_ref):
    """Mirrors the module structure: Q -> E -> [G | znet] -> P."""
    xb = x_ref[...].astype(jnp.bfloat16)
    # z_pre = Q(X)
    z_pre = jnp.dot(xb, wq_ref[...],
                    preferred_element_type=jnp.float32) + bq_ref[...]
    # f = E(z_pre), concat [fp | fi | fs | fe] (+ zero lane padding)
    f = jnp.dot(z_pre.astype(jnp.bfloat16), we_ref[...],
                preferred_element_type=jnp.float32) + be_ref[...]
    # Fused G + znet: cols [0:Z_PAD) = z_recon = G(fp,fi,fs,fe),
    # cols [Z_PAD:) = emotion logits znet(fe) (wz embedded at the fe rows).
    gz = jnp.dot(f.astype(jnp.bfloat16), wgz_ref[...],
                 preferred_element_type=jnp.float32) + bgz_ref[...]
    z_recon = gz[:, :Z_PAD]                       # lane-tile-aligned slice
    probs_ref[...] = gz[:, Z_PAD:].astype(probs_ref.dtype)
    # output = P(z)
    img = jnp.dot(z_recon.astype(jnp.bfloat16), wp_ref[...],
                  preferred_element_type=jnp.float32) + bp_ref[...]
    img_ref[...] = img.astype(img_ref.dtype)


# --------------------------------- wrapper ----------------------------------
def _choose_tile_b(batch, requested=None):
    if requested is not None:
        return requested
    pad128 = pl.cdiv(batch, 128) * 128
    tile = min(DEFAULT_TILE_B, pad128)        # never over-pad a tiny batch
    # v7x has 2 TensorCores sharing the "parallel" grid axis: prefer an even
    # number of tiles when the batch is large enough to split.
    if pad128 // tile == 1 and tile >= 256:
        tile //= 2
    return tile


def _weight_spec(shape, single_buffer):
    index_map = lambda i: (0,) * len(shape)   # resident: same block every step
    if single_buffer:
        # Block index never changes -> the second pipeline buffer is dead
        # weight; single-buffer it to save VMEM and DMA bookkeeping.
        return pl.BlockSpec(shape, index_map, pipeline_mode=pl.Buffered(1))
    return pl.BlockSpec(shape, index_map)


def saae_forward(x_nchw, prepared_params, *, fused=FUSE_LINEAR_CHAIN,
                 tile_b=None):
    """SAAE forward (inference, skip_disentanglement=False).

    Returns (decoded image NCHW, emotion logits (B, 8))."""
    B = x_nchw.shape[0]
    tile_b = _choose_tile_b(B, tile_b)

    x_flat = x_nchw.reshape(B, D_IN)                   # stays f32 (review #3)
    padded_b = pl.cdiv(B, tile_b) * tile_b
    if padded_b != B:
        x_flat = jnp.pad(x_flat, ((0, padded_b - B), (0, 0)))
    num_tiles = padded_b // tile_b

    weights = prepared_params['fused' if fused else 'staged']
    kernel = _saae_fused_kernel if fused else _saae_staged_kernel

    # Advisory cost estimate so XLA can schedule around the custom call.
    if fused:
        flops = 2 * padded_b * D_IN * (D_IN + NC_PAD)
    else:
        flops = 2 * padded_b * (D_IN * Z_PAD + Z_PAD * Z_PAD
                                + Z_PAD * GZ_PAD + Z_PAD * D_IN)
    bytes_accessed = (int(x_flat.size) * x_flat.dtype.itemsize
                      + sum(int(w.size) * w.dtype.itemsize for w in weights)
                      + padded_b * (D_IN + NC_PAD) * 2)   # bf16 outputs
    cost = pl.CostEstimate(flops=flops, transcendentals=0,
                           bytes_accessed=bytes_accessed)

    out_shape = (jax.ShapeDtypeStruct((padded_b, D_IN), jnp.bfloat16),
                 jax.ShapeDtypeStruct((padded_b, NC_PAD), jnp.bfloat16))
    out_specs = (pl.BlockSpec((tile_b, D_IN), lambda i: (i, 0)),
                 pl.BlockSpec((tile_b, NC_PAD), lambda i: (i, 0)))

    def run(single_buffer_weights):
        in_specs = [pl.BlockSpec((tile_b, D_IN), lambda i: (i, 0))]
        in_specs += [_weight_spec(w.shape, single_buffer_weights)
                     for w in weights]
        return pl.pallas_call(
            kernel,
            out_shape=out_shape,
            grid=(num_tiles,),
            in_specs=in_specs,
            out_specs=out_specs,
            compiler_params=pltpu.CompilerParams(
                dimension_semantics=("parallel",)),
            cost_estimate=cost,
        )(x_flat, *weights)

    img_flat = probs = None
    if _BUFFERED1_SUPPORTED[0]:
        try:
            img_flat, probs = run(single_buffer_weights=True)
            jax.block_until_ready((img_flat, probs))
        except Exception:
            # pl.Buffered(1) (single-buffered resident weights) not supported
            # by this jax version; fall back to default double buffering.
            _BUFFERED1_SUPPORTED[0] = False
            img_flat = probs = None
    if img_flat is None:
        img_flat, probs = run(single_buffer_weights=False)

    # Padded batch rows carry bias-valued junk; slice them away before use.
    img = img_flat[:B].reshape(B, IN_CH, H, W)
    return img, probs[:B, :N_CLASSES]


# ---------------- parameter construction (host side, one time) --------------
def make_params(key):
    """Logical (unpadded, f32) parameters with the submodules' I/O shapes.

    TODO(synk): Q (resnet18 / DCGAN encoder), P (InvResNet decoder) and the
    E/G/znet MLP bodies live in external files not given with the module;
    they are modelled as single linear layers with identical I/O shapes.
    """
    ks = jax.random.split(key, 10)

    def lin(kw, kb, fan_in, fan_out):
        w = jax.random.normal(kw, (fan_in, fan_out), jnp.float32) / np.sqrt(fan_in)
        b = 0.1 * jax.random.normal(kb, (fan_out,), jnp.float32)
        return w, b

    wq, bq = lin(ks[0], ks[1], D_IN, Z_DIM)        # Q
    we, be = lin(ks[2], ks[3], Z_DIM, Z_DIM)       # E
    wg, bg = lin(ks[4], ks[5], Z_DIM, Z_DIM)       # G
    wz, bz = lin(ks[6], ks[7], DIM_FT, N_CLASSES)  # znet
    wp, bp = lin(ks[8], ks[9], Z_DIM, D_IN)        # P
    return dict(wq=wq, bq=bq, we=we, be=be, wg=wg, bg=bg,
                wz=wz, bz=bz, wp=wp, bp=bp)


def prepare_params(p):
    """Pad ragged dims to 128 lanes, embed znet at the fe rows, fuse G + znet,
    pre-compose the linear chain for the fused kernel, cast weights to bf16
    (biases stay f32)."""
    def pad2(a, shape):
        out = np.zeros(shape, np.float32)
        a = np.asarray(a, np.float32)
        out[:a.shape[0], :a.shape[1]] = a
        return out

    def pad_row(b, n):
        out = np.zeros((1, n), np.float32)
        b = np.asarray(b, np.float32)
        out[0, :b.shape[0]] = b
        return out

    wq = pad2(p['wq'], (D_IN, Z_PAD))
    we = pad2(p['we'], (Z_PAD, Z_PAD))
    wg = pad2(p['wg'], (Z_PAD, Z_PAD))
    wp = pad2(p['wp'], (Z_PAD, D_IN))

    # znet acts on the fe slice f[:, 3+2*DIM_FT : 3+3*DIM_FT]; embed its weight
    # at exactly those rows so the zero-padded full-width contraction is exact.
    wz_full = np.zeros((Z_PAD, NC_PAD), np.float32)
    fe0 = DIM_POSE + 2 * DIM_FT
    wz_full[fe0:fe0 + DIM_FT, :N_CLASSES] = np.asarray(p['wz'], np.float32)

    wgz = np.concatenate([wg, wz_full], axis=1)              # (Z_PAD, GZ_PAD)

    bq = pad_row(p['bq'], Z_PAD)
    be = pad_row(p['be'], Z_PAD)
    bg = pad_row(p['bg'], Z_PAD)
    bz = pad_row(p['bz'], NC_PAD)
    bgz = np.concatenate([bg, bz], axis=1)                    # (1, GZ_PAD)
    bp = pad_row(p['bp'], D_IN)

    bf = jnp.bfloat16
    staged = (jnp.asarray(wq, bf), jnp.asarray(bq, jnp.float32),
              jnp.asarray(we, bf), jnp.asarray(be, jnp.float32),
              jnp.asarray(wgz, bf), jnp.asarray(bgz, jnp.float32),
              jnp.asarray(wp, bf), jnp.asarray(bp, jnp.float32))

    # Host-side pre-composition of the (currently all-linear) chain:
    #   img   = x @ (Wq We Wg Wp) + (((bq We + be) Wg + bg) Wp + bp)
    #   probs = x @ (Wq We Wz)    + ((bq We + be) Wz + bz)
    qe = wq @ we                                  # (D_IN, Z_PAD)
    h = bq @ we + be                              # (1, Z_PAD)
    w_img = qe @ wg @ wp                          # (D_IN, D_IN)
    b_img = (h @ wg + bg) @ wp + bp               # (1, D_IN)
    w_pr = qe @ wz_full                           # (D_IN, NC_PAD)
    b_pr = h @ wz_full + bz                       # (1, NC_PAD)

    fused = (jnp.asarray(w_img, bf), jnp.asarray(b_img, jnp.float32),
             jnp.asarray(w_pr, bf), jnp.asarray(b_pr, jnp.float32))

    return {'staged': staged, 'fused': fused}


# ---------------- pure-JAX reference (mirrors the kernel math) --------------
def saae_forward_ref(x_nchw, prepared_params, *, fused=FUSE_LINEAR_CHAIN):
    B = x_nchw.shape[0]
    x = x_nchw.reshape(B, D_IN).astype(jnp.float32)
    bfr = lambda a: a.astype(jnp.bfloat16).astype(jnp.float32)  # bf16 round
    to_bf = lambda a: a.astype(jnp.bfloat16)

    if fused:
        w_img, b_img, w_pr, b_pr = prepared_params['fused']
        xb = bfr(x)
        img = to_bf(xb @ bfr(w_img) + b_img)
        probs = to_bf(xb @ bfr(w_pr) + b_pr)
    else:
        wq, bq, we, be, wgz, bgz, wp, bp = prepared_params['staged']
        z_pre = bfr(x) @ bfr(wq) + bq
        f = bfr(z_pre) @ bfr(we) + be
        gz = bfr(f) @ bfr(wgz) + bgz
        probs = to_bf(gz[:, Z_PAD:])
        img = to_bf(bfr(gz[:, :Z_PAD]) @ bfr(wp) + bp)
    return img.reshape(B, IN_CH, H, W), probs[:, :N_CLASSES]


if __name__ == "__main__":
    key = jax.random.PRNGKey(0)
    k_x, k_p = jax.random.split(key)

    x = jax.random.normal(k_x, (2, IN_CH, H, W), jnp.float32)  # NCHW like PyTorch
    params = prepare_params(make_params(k_p))

    def check(got, want, **tol):
        np.testing.assert_allclose(np.asarray(got.astype(jnp.float32)),
                                   np.asarray(want.astype(jnp.float32)), **tol)

    # Optimized path: host-composed linear chain, two matmuls in-kernel.
    img, probs = saae_forward(x, params, fused=True)
    jax.block_until_ready((img, probs))
    img_ref, probs_ref = saae_forward_ref(x, params, fused=True)
    check(img, img_ref, rtol=2e-2, atol=2e-2)
    check(probs, probs_ref, rtol=2e-2, atol=2e-2)

    # Staged path (Q -> E -> [G|znet] -> P), kept for when real bodies land.
    img_s, probs_s = saae_forward(x, params, fused=False)
    jax.block_until_ready((img_s, probs_s))
    img_ref_s, probs_ref_s = saae_forward_ref(x, params, fused=False)
    check(img_s, img_ref_s, rtol=2e-2, atol=2e-2)
    check(probs_s, probs_ref_s, rtol=2e-2, atol=2e-2)

    # Both kernels implement the same linear map (up to bf16 rounding of the
    # staged intermediates).
    check(img, img_s, rtol=0, atol=1e-1)
    check(probs, probs_s, rtol=0, atol=1e-1)

    assert img.shape == (2, IN_CH, H, W)
    assert probs.shape == (2, N_CLASSES)

    print("KERNEL_OK")
</pallas_src>

<mosaic_0001>
module attributes {stable_mosaic.version = 11 : i64} {
  func.func @_saae_fused_kernel(%arg0: i32, %arg1: memref<128x768xf32, #tpu.memory_space<vmem>>, %arg2: memref<768x768xbf16, #tpu.memory_space<vmem>>, %arg3: memref<1x768xf32, #tpu.memory_space<vmem>>, %arg4: memref<768x128xbf16, #tpu.memory_space<vmem>>, %arg5: memref<1x128xf32, #tpu.memory_space<vmem>>, %arg6: memref<128x768xbf16, #tpu.memory_space<vmem>>, %arg7: memref<128x128xbf16, #tpu.memory_space<vmem>>) attributes {dimension_semantics = [#tpu.dimension_semantics<parallel>], iteration_bounds = array<i64: 1>, scalar_prefetch = 0 : i64, scratch_operands = 0 : i64, tpu.core_type = #tpu.core_type<tc>, window_params = [{transform_indices = @transform_0, window_bounds = array<i64: 128, 768>}, {pipeline_mode = #tpu.pipeline_mode<synchronous>, transform_indices = @transform_1, window_bounds = array<i64: 768, 768>}, {pipeline_mode = #tpu.pipeline_mode<synchronous>, transform_indices = @transform_2, window_bounds = array<i64: 1, 768>}, {pipeline_mode = #tpu.pipeline_mode<synchronous>, transform_indices = @transform_3, window_bounds = array<i64: 768, 128>}, {pipeline_mode = #tpu.pipeline_mode<synchronous>, transform_indices = @transform_4, window_bounds = array<i64: 1, 128>}, {transform_indices = @transform_5, window_bounds = array<i64: 128, 768>}, {transform_indices = @transform_6, window_bounds = array<i64: 128, 128>}]} {
    %c0 = arith.constant 0 : index
    %c0_0 = arith.constant 0 : index
    %0 = vector.load %arg1[%c0, %c0_0] : memref<128x768xf32, #tpu.memory_space<vmem>>, vector<128x768xf32>
    %1 = arith.truncf %0 : vector<128x768xf32> to vector<128x768xbf16>
    %c0_1 = arith.constant 0 : index
    %c0_2 = arith.constant 0 : index
    %2 = vector.load %arg2[%c0_1, %c0_2] : memref<768x768xbf16, #tpu.memory_space<vmem>>, vector<768x768xbf16>
    %cst = arith.constant dense<0.000000e+00> : vector<128x768xf32>
    %3 = tpu.matmul %1, %2, %cst {dimension_numbers = #tpu.dot_dimension_numbers<[1], [0], [0], [1], [0, 0, 1, 1], [], []>} : vector<128x768xbf16>, vector<768x768xbf16>, vector<128x768xf32> -> vector<128x768xf32>
    %c0_3 = arith.constant 0 : index
    %c0_4 = arith.constant 0 : index
    %4 = vector.load %arg3[%c0_3, %c0_4] : memref<1x768xf32, #tpu.memory_space<vmem>>, vector<1x768xf32>
    %5 = vector.broadcast %4 : vector<1x768xf32> to vector<128x768xf32>
    %6 = arith.addf %3, %5 : vector<128x768xf32>
    %7 = arith.truncf %6 : vector<128x768xf32> to vector<128x768xbf16>
    %c0_5 = arith.constant 0 : index
    %c0_6 = arith.constant 0 : index
    %8 = vector.load %arg6[%c0_5, %c0_6] : memref<128x768xbf16, #tpu.memory_space<vmem>>, vector<128x768xbf16>
    tpu.vector_store %arg6[%c0_5, %c0_6], %7 {strides = array<i32>} : memref<128x768xbf16, #tpu.memory_space<vmem>>, vector<128x768xbf16>,
    %c0_7 = arith.constant 0 : index
    %c0_8 = arith.constant 0 : index
    %9 = vector.load %arg4[%c0_7, %c0_8] : memref<768x128xbf16, #tpu.memory_space<vmem>>, vector<768x128xbf16>
    %cst_9 = arith.constant dense<0.000000e+00> : vector<128x128xf32>
    %10 = tpu.matmul %1, %9, %cst_9 {dimension_numbers = #tpu.dot_dimension_numbers<[1], [0], [0], [1], [0, 0, 1, 1], [], []>} : vector<128x768xbf16>, vector<768x128xbf16>, vector<128x128xf32> -> vector<128x128xf32>
    %c0_10 = arith.constant 0 : index
    %c0_11 = arith.constant 0 : index
    %11 = vector.load %arg5[%c0_10, %c0_11] : memref<1x128xf32, #tpu.memory_space<vmem>>, vector<1x128xf32>
    %12 = vector.broadcast %11 : vector<1x128xf32> to vector<128x128xf32>
    %13 = arith.addf %10, %12 : vector<128x128xf32>
    %14 = arith.truncf %13 : vector<128x128xf32> to vector<128x128xbf16>
    %c0_12 = arith.constant 0 : index
    %c0_13 = arith.constant 0 : index
    %15 = vector.load %arg7[%c0_12, %c0_13] : memref<128x128xbf16, #tpu.memory_space<vmem>>, vector<128x128xbf16>
    tpu.vector_store %arg7[%c0_12, %c0_13], %14 {strides = array<i32>} : memref<128x128xbf16, #tpu.memory_space<vmem>>, vector<128x128xbf16>,
    return
  }
  func.func @transform_0(%arg0: i32) -> (i32, i32) {
    %c0_i32 = arith.constant 0 : i32
    %c0_i32_0 = arith.constant 0 : i32
    return %arg0, %c0_i32 : i32, i32
  }
  func.func @transform_1(%arg0: i32) -> (i32, i32) {
    %c0_i32 = arith.constant 0 : i32
    %c0_i32_0 = arith.constant 0 : i32
    %c0_i32_1 = arith.constant 0 : i32
    return %c0_i32, %c0_i32_0 : i32, i32
  }
  func.func @transform_2(%arg0: i32) -> (i32, i32) {
    %c0_i32 = arith.constant 0 : i32
    %c0_i32_0 = arith.constant 0 : i32
    %c0_i32_1 = arith.constant 0 : i32
    return %c0_i32, %c0_i32_0 : i32, i32
  }
  func.func @transform_3(%arg0: i32) -> (i32, i32) {
    %c0_i32 = arith.constant 0 : i32
    %c0_i32_0 = arith.constant 0 : i32
    %c0_i32_1 = arith.constant 0 : i32
    return %c0_i32, %c0_i32_0 : i32, i32
  }
  func.func @transform_4(%arg0: i32) -> (i32, i32) {
    %c0_i32 = arith.constant 0 : i32
    %c0_i32_0 = arith.constant 0 : i32
    %c0_i32_1 = arith.constant 0 : i32
    return %c0_i32, %c0_i32_0 : i32, i32
  }
  func.func @transform_5(%arg0: i32) -> (i32, i32) {
    %c0_i32 = arith.constant 0 : i32
    %c0_i32_0 = arith.constant 0 : i32
    return %arg0, %c0_i32 : i32, i32
  }
  func.func @transform_6(%arg0: i32) -> (i32, i32) {
    %c0_i32 = arith.constant 0 : i32
    %c0_i32_0 = arith.constant 0 : i32
    return %arg0, %c0_i32 : i32, i32
  }
}

module attributes {stable_mosaic.version = 11 : i64} {
  func.func @_saae_fused_kernel(%arg0: i32, %arg1: memref<128x768xf32, #tpu.memory_space<vmem>>, %arg2: memref<768x768xbf16, #tpu.memory_space<vmem>>, %arg3: memref<1x768xf32, #tpu.memory_space<vmem>>, %arg4: memref<768x128xbf16, #tpu.memory_space<vmem>>, %arg5: memref<1x128xf32, #tpu.memory_space<vmem>>, %arg6: memref<128x768xbf16, #tpu.memory_space<vmem>>, %arg7: memref<128x128xbf16, #tpu.memory_space<vmem>>) attributes {dimension_semantics = [#tpu.dimension_semantics<parallel>], iteration_bounds = array<i64: 1>, scalar_prefetch = 0 : i64, scratch_operands = 0 : i64, tpu.core_type = #tpu.core_type<tc>, window_params = [{transform_indices = @transform_0, window_bounds = array<i64: 128, 768>}, {pipeline_mode = #tpu.pipeline_mode<synchronous>, transform_indices = @transform_1, window_bounds = array<i64: 768, 768>}, {pipeline_mode = #tpu.pipeline_mode<synchronous>, transform_indices = @transform_2, window_bounds = array<i64: 1, 768>}, {pipeline_mode = #tpu.pipeline_mode<synchronous>, transform_indices = @transform_3, window_bounds = array<i64: 768, 128>}, {pipeline_mode = #tpu.pipeline_mode<synchronous>, transform_indices = @transform_4, window_bounds = array<i64: 1, 128>}, {transform_indices = @transform_5, window_bounds = array<i64: 128, 768>}, {transform_indices = @transform_6, window_bounds = array<i64: 128, 128>}]} {
    %c0 = arith.constant 0 : index
    %c0_0 = arith.constant 0 : index
    %0 = vector.load %arg1[%c0, %c0_0] : memref<128x768xf32, #tpu.memory_space<vmem>>, vector<128x768xf32>
    %1 = arith.truncf %0 : vector<128x768xf32> to vector<128x768xbf16>
    %c0_1 = arith.constant 0 : index
    %c0_2 = arith.constant 0 : index
    %2 = vector.load %arg2[%c0_1, %c0_2] : memref<768x768xbf16, #tpu.memory_space<vmem>>, vector<768x768xbf16>
    %cst = arith.constant dense<0.000000e+00> : vector<128x768xf32>
    %3 = tpu.matmul %1, %2, %cst {dimension_numbers = #tpu.dot_dimension_numbers<[1], [0], [0], [1], [0, 0, 1, 1], [], []>} : vector<128x768xbf16>, vector<768x768xbf16>, vector<128x768xf32> -> vector<128x768xf32>
    %c0_3 = arith.constant 0 : index
    %c0_4 = arith.constant 0 : index
    %4 = vector.load %arg3[%c0_3, %c0_4] : memref<1x768xf32, #tpu.memory_space<vmem>>, vector<1x768xf32>
    %5 = vector.broadcast %4 : vector<1x768xf32> to vector<128x768xf32>
    %6 = arith.addf %3, %5 : vector<128x768xf32>
    %7 = arith.truncf %6 : vector<128x768xf32> to vector<128x768xbf16>
    %c0_5 = arith.constant 0 : index
    %c0_6 = arith.constant 0 : index
    %8 = vector.load %arg6[%c0_5, %c0_6] : memref<128x768xbf16, #tpu.memory_space<vmem>>, vector<128x768xbf16>
    tpu.vector_store %arg6[%c0_5, %c0_6], %7 {strides = array<i32>} : memref<128x768xbf16, #tpu.memory_space<vmem>>, vector<128x768xbf16>,
    %c0_7 = arith.constant 0 : index
    %c0_8 = arith.constant 0 : index
    %9 = vector.load %arg4[%c0_7, %c0_8] : memref<768x128xbf16, #tpu.memory_space<vmem>>, vector<768x128xbf16>
    %cst_9 = arith.constant dense<0.000000e+00> : vector<128x128xf32>
    %10 = tpu.matmul %1, %9, %cst_9 {dimension_numbers = #tpu.dot_dimension_numbers<[1], [0], [0], [1], [0, 0, 1, 1], [], []>} : vector<128x768xbf16>, vector<768x128xbf16>, vector<128x128xf32> -> vector<128x128xf32>
    %c0_10 = arith.constant 0 : index
    %c0_11 = arith.constant 0 : index
    %11 = vector.load %arg5[%c0_10, %c0_11] : memref<1x128xf32, #tpu.memory_space<vmem>>, vector<1x128xf32>
    %12 = vector.broadcast %11 : vector<1x128xf32> to vector<128x128xf32>
    %13 = arith.addf %10, %12 : vector<128x128xf32>
    %14 = arith.truncf %13 : vector<128x128xf32> to vector<128x128xbf16>
    %c0_12 = arith.constant 0 : index
    %c0_13 = arith.constant 0 : index
    %15 = vector.load %arg7[%c0_12, %c0_13] : memref<128x128xbf16, #tpu.memory_space<vmem>>, vector<128x128xbf16>
    tpu.vector_store %arg7[%c0_12, %c0_13], %14 {strides = array<i32>} : memref<128x128xbf16, #tpu.memory_space<vmem>>, vector<128x128xbf16>,
    return
  }
  func.func @transform_0(%arg0: i32) -> (i32, i32) {
    %c0_i32 = arith.constant 0 : i32
    %c0_i32_0 = arith.constant 0 : i32
    return %arg0, %c0_i32 : i32, i32
  }
  func.func @transform_1(%arg0: i32) -> (i32, i32) {
    %c0_i32 = arith.constant 0 : i32
    %c0_i32_0 = arith.constant 0 : i32
    %c0_i32_1 = arith.constant 0 : i32
    return %c0_i32, %c0_i32_0 : i32, i32
  }
  func.func @transform_2(%arg0: i32) -> (i32, i32) {
    %c0_i32 = arith.constant 0 : i32
    %c0_i32_0 = arith.constant 0 : i32
    %c0_i32_1 = arith.constant 0 : i32
    return %c0_i32, %c0_i32_0 : i32, i32
  }
  func.func @transform_3(%arg0: i32) -> (i32, i32) {
    %c0_i32 = arith.constant 0 : i32
    %c0_i32_0 = arith.constant 0 : i32
    %c0_i32_1 = arith.constant 0 : i32
    return %c0_i32, %c0_i32_0 : i32, i32
  }
  func.func @transform_4(%arg0: i32) -> (i32, i32) {
    %c0_i32 = arith.constant 0 : i32
    %c0_i32_0 = arith.constant 0 : i32
    %c0_i32_1 = arith.constant 0 : i32
    return %c0_i32, %c0_i32_0 : i32, i32
  }
  func.func @transform_5(%arg0: i32) -> (i32, i32) {
    %c0_i32 = arith.constant 0 : i32
    %c0_i32_0 = arith.constant 0 : i32
    return %arg0, %c0_i32 : i32, i32
  }
  func.func @transform_6(%arg0: i32) -> (i32, i32) {
    %c0_i32 = arith.constant 0 : i32
    %c0_i32_0 = arith.constant 0 : i32
    return %arg0, %c0_i32 : i32, i32
  }
}

</mosaic_0001>

<llo_original>
// kernel: tpu_custom_call.1
$region0: #{tpu_custom_call.1}
  #allocation0 [shape = 'u32[]', space=smem, size = 0x4, offset = 0x4, fixed_abs, tag = 'smem constant byte address 0x4 - core index']
  #allocation1 [shape = 'u32[144,128]{1,0:T(1,128)}', space=vmem, size = 0x12000, scoped, tag = 'internal scratch']
  %s0 = inlined_call_operand.hbm [shape: f32[128,768], index: 0, kind: input, shape index: {}]
  %s1 = inlined_call_operand.hbm [shape: bf16[768,768], index: 1, kind: input, shape index: {}]
  %s2 = inlined_call_operand.hbm [shape: f32[1,768], index: 2, kind: input, shape index: {}]
  %s3 = inlined_call_operand.hbm [shape: bf16[768,128], index: 3, kind: input, shape index: {}]
  %s4 = inlined_call_operand.hbm [shape: f32[1,128], index: 4, kind: input, shape index: {}]
  %s5 = inlined_call_operand.hbm [shape: bf16[128,768], index: 5, kind: output, shape index: {0}]
  %s6 = inlined_call_operand.hbm [shape: bf16[128,128], index: 6, kind: output, shape index: {1}]
  %7 = xla_tuple %s5, %s6
  %s8 = sld [smem:[#allocation0]]
  $region58: #{tpu_custom_call.1} parent=0
    _
  %s10 = ssub.s32 1, %s8
  %s11 = scalar_select 0, %s10, %s8
  $region1: #{tpu_custom_call.1} parent=0
    #allocation2 [shape = 'u8[393216]{0}', space=vmem, size = 0x60000, scoped, tag = 'input window, operand 0, single buffered']
    #allocation3 [shape = 's32[1]{0}', space=sflag, size = 0x4, scoped, tag = 'scoped memory for tpu_custom_call.1']
    #allocation4 [shape = 's32[1]{0}', space=sflag, size = 0x4, scoped, tag = 'scoped memory for tpu_custom_call.1']
    #allocation5 [shape = 'u8[1179648]{0}', space=vmem, size = 0x120000, scoped, tag = 'input window, operand 1, single buffered']
    #allocation6 [shape = 's32[1]{0}', space=sflag, size = 0x4, scoped, tag = 'scoped memory for tpu_custom_call.1']
    #allocation7 [shape = 'u8[3072]{0}', space=vmem, size = 0xc00, scoped, tag = 'input window, operand 2, single buffered']
    #allocation8 [shape = 'u8[196608]{0}', space=vmem, size = 0x30000, scoped, tag = 'input window, operand 3, single buffered']
    #allocation9 [shape = 's32[1]{0}', space=sflag, size = 0x4, scoped, tag = 'scoped memory for tpu_custom_call.1']
    #allocation10 [shape = 'u8[512]{0}', space=vmem, size = 0x400, scoped, tag = 'input window, operand 4, single buffered']
    #allocation11 [shape = 'u8[196608]{0}', space=vmem, size = 0x30000, scoped, tag = 'output window, operand 0, single buffered']
    #allocation12 [shape = 'u8[32768]{0}', space=vmem, size = 0x8000, scoped, tag = 'output window, operand 1, single buffered']
    #allocation13 [shape = 's32[1]{0}', space=sflag, size = 0x4, scoped, tag = 'scoped memory for tpu_custom_call.1']
    %12 = vsyncpa [#allocation3], 0
    %13 = vsyncpa [#allocation6], 0
    %14 = vsyncpa [#allocation9], 0
    %15 = vsyncpa [#allocation4], 0
    %16 = vsyncpa [#allocation13], 0
    // Predicated region
    $region2: #{tpu_custom_call.1} parent=1 // pred_check
      _
    $region3: #{tpu_custom_call.1} parent=1 // pred_check_branch
      %18 = sbr.rel (0) target = $region5
    $region4: #{tpu_custom_call.1} parent=1 // pred_region
      %s20 = ssub.s32 12288, 12288
      %21 = vsyncadd [#allocation3], %s20
      %s22 = sshll.u32 [#allocation2], 4
      %s23 = int_to_ptr.vmem [resolvable:$true] %s22
      %28 = dma.hbm_to_vmem [thread:$0]  %s0, 12288, %s23, [#allocation3], 768, 768, 48
    $region5: #{tpu_custom_call.1} parent=1 // pred_fallthru
      _
    // Predicated region
    $region6: #{tpu_custom_call.1} parent=1 // pred_check
      _
    $region7: #{tpu_custom_call.1} parent=1 // pred_check_branch
      %30 = sbr.rel (0) target = $region9
    $region8: #{tpu_custom_call.1} parent=1 // pred_region
      %s32 = ssub.s32 36864, 36864
      %33 = vsyncadd [#allocation6], %s32
      %s34 = sshll.u32 [#allocation5], 4
      %s35 = int_to_ptr.vmem [resolvable:$true] %s34
      %40 = dma.hbm_to_vmem [thread:$0]  %s1, 36864, %s35, [#allocation6], 384, 384, 24
    $region9: #{tpu_custom_call.1} parent=1 // pred_fallthru
      _
    // Predicated region
    $region10: #{tpu_custom_call.1} parent=1 // pred_check
      _
    $region11: #{tpu_custom_call.1} parent=1 // pred_check_branch
      %42 = sbr.rel (0) target = $region13
    $region12: #{tpu_custom_call.1} parent=1 // pred_region
      %s44 = ssub.s32 96, 96
      %45 = vsyncadd [#allocation6], %s44
      %s47 = sshll.u32 [#allocation7], 4
      %s48 = int_to_ptr.vmem [resolvable:$true] %s47
      %50 = dma.hbm_to_vmem [thread:$0]  %s2, 96, %s48, [#allocation6]
    $region13: #{tpu_custom_call.1} parent=1 // pred_fallthru
      _
    // Predicated region
    $region14: #{tpu_custom_call.1} parent=1 // pred_check
      _
    $region15: #{tpu_custom_call.1} parent=1 // pred_check_branch
      %52 = sbr.rel (0) target = $region17
    $region16: #{tpu_custom_call.1} parent=1 // pred_region
      %s54 = ssub.s32 6144, 6144
      %55 = vsyncadd [#allocation9], %s54
      %s56 = sshll.u32 [#allocation8], 4
      %s57 = int_to_ptr.vmem [resolvable:$true] %s56
      %62 = dma.hbm_to_vmem [thread:$0]  %s3, 6144, %s57, [#allocation9], 64, 64, 4
    $region17: #{tpu_custom_call.1} parent=1 // pred_fallthru
      _
    // Predicated region
    $region18: #{tpu_custom_call.1} parent=1 // pred_check
      _
    $region19: #{tpu_custom_call.1} parent=1 // pred_check_branch
      %64 = sbr.rel (0) target = $region21
    $region20: #{tpu_custom_call.1} parent=1 // pred_region
      %s66 = ssub.s32 16, 16
      %67 = vsyncadd [#allocation9], %s66
      %s69 = sshll.u32 [#allocation10], 4
      %s70 = int_to_ptr.vmem [resolvable:$true] %s69
      %72 = dma.hbm_to_vmem [thread:$0]  %s4, 16, %s70, [#allocation9]
    $region21: #{tpu_custom_call.1} parent=1 // pred_fallthru
      _
    // Predicated region
    $region22: #{tpu_custom_call.1} parent=1 // pred_check
      _
    $region23: #{tpu_custom_call.1} parent=1 // pred_check_branch
      %74 = sbr.rel (0) target = $region25
    $region24: #{tpu_custom_call.1} parent=1 // pred_region
      %75 = dma.done [#allocation3], 12288
    $region25: #{tpu_custom_call.1} parent=1 // pred_fallthru
      _
    // Predicated region
    $region26: #{tpu_custom_call.1} parent=1 // pred_check
      _
    $region27: #{tpu_custom_call.1} parent=1 // pred_check_branch
      %77 = sbr.rel (0) target = $region29
    $region28: #{tpu_custom_call.1} parent=1 // pred_region
      %78 = dma.done [#allocation6], 36864
    $region29: #{tpu_custom_call.1} parent=1 // pred_fallthru
      _
    // Predicated region
    $region30: #{tpu_custom_call.1} parent=1 // pred_check
      _
    $region31: #{tpu_custom_call.1} parent=1 // pred_check_branch
      %80 = sbr.rel (0) target = $region33
    $region32: #{tpu_custom_call.1} parent=1 // pred_region
      %81 = dma.done [#allocation6], 96
    $region33: #{tpu_custom_call.1} parent=1 // pred_fallthru
      _
    // Predicated region
    $region34: #{tpu_custom_call.1} parent=1 // pred_check
      _
    $region35: #{tpu_custom_call.1} parent=1 // pred_check_branch
      %83 = sbr.rel (0) target = $region37
    $region36: #{tpu_custom_call.1} parent=1 // pred_region
      %84 = dma.done [#allocation9], 6144
    $region37: #{tpu_custom_call.1} parent=1 // pred_fallthru
      _
    // Predicated region
    $region38: #{tpu_custom_call.1} parent=1 // pred_check
      _
    $region39: #{tpu_custom_call.1} parent=1 // pred_check_branch
      %86 = sbr.rel (0) target = $region41
    $region40: #{tpu_custom_call.1} parent=1 // pred_region
      %87 = dma.done [#allocation9], 16
    $region41: #{tpu_custom_call.1} parent=1 // pred_fallthru
      _
    %v89 = vld [vmem:[#allocation2] sm:$0xff]
    %v90 = vld [vmem:[#allocation2 + $0x8] sm:$0xff]
    %v91 = vld [vmem:[#allocation2 + $0x10] sm:$0xff]
    %v92 = vld [vmem:[#allocation2 + $0x18] sm:$0xff]
    %v93 = vld [vmem:[#allocation2 + $0x20] sm:$0xff]
    %v94 = vld [vmem:[#allocation2 + $0x28] sm:$0xff]
    %v95 = vld [vmem:[#allocation2 + $0x30] sm:$0xff]
    %v96 = vld [vmem:[#allocation2 + $0x38] sm:$0xff]
    %v97 = vld [vmem:[#allocation2 + $0x40] sm:$0xff]
    %v98 = vld [vmem:[#allocation2 + $0x48] sm:$0xff]
    %v99 = vld [vmem:[#allocation2 + $0x50] sm:$0xff]
    %v100 = vld [vmem:[#allocation2 + $0x58] sm:$0xff]
    %v101 = vld [vmem:[#allocation2 + $0x60] sm:$0xff]
    %v102 = vld [vmem:[#allocation2 + $0x68] sm:$0xff]
    %v103 = vld [vmem:[#allocation2 + $0x70] sm:$0xff]
    %v104 = vld [vmem:[#allocation2 + $0x78] sm:$0xff]
    %v105 = vld [vmem:[#allocation2 + $0x80] sm:$0xff]
    %v106 = vld [vmem:[#allocation2 + $0x88] sm:$0xff]
    %v107 = vld [vmem:[#allocation2 + $0x90] sm:$0xff]
    %v108 = vld [vmem:[#allocation2 + $0x98] sm:$0xff]
    %v109 = vld [vmem:[#allocation2 + $0xa0] sm:$0xff]
    %v110 = vld [vmem:[#allocation2 + $0xa8] sm:$0xff]
    %v111 = vld [vmem:[#allocation2 + $0xb0] sm:$0xff]
    %v112 = vld [vmem:[#allocation2 + $0xb8] sm:$0xff]
    %v113 = vld [vmem:[#allocation2 + $0xc0] sm:$0xff]
    %v114 = vld [vmem:[#allocation2 + $0xc8] sm:$0xff]
    %v115 = vld [vmem:[#allocation2 + $0xd0] sm:$0xff]
    %v116 = vld [vmem:[#allocation2 + $0xd8] sm:$0xff]
    %v117 = vld [vmem:[#allocation2 + $0xe0] sm:$0xff]
    %v118 = vld [vmem:[#allocation2 + $0xe8] sm:$0xff]
    %v119 = vld [vmem:[#allocation2 + $0xf0] sm:$0xff]
    %v120 = vld [vmem:[#allocation2 + $0xf8] sm:$0xff]
    %v121 = vld [vmem:[#allocation2 + $0x100] sm:$0xff]
    %v122 = vld [vmem:[#allocation2 + $0x108] sm:$0xff]
    %v123 = vld [vmem:[#allocation2 + $0x110] sm:$0xff]
    %v124 = vld [vmem:[#allocation2 + $0x118] sm:$0xff]
    %v125 = vld [vmem:[#allocation2 + $0x120] sm:$0xff]
    %v126 = vld [vmem:[#allocation2 + $0x128] sm:$0xff]
    %v127 = vld [vmem:[#allocation2 + $0x130] sm:$0xff]
    %v128 = vld [vmem:[#allocation2 + $0x138] sm:$0xff]
    %v129 = vld [vmem:[#allocation2 + $0x140] sm:$0xff]
    %v130 = vld [vmem:[#allocation2 + $0x148] sm:$0xff]
    %v131 = vld [vmem:[#allocation2 + $0x150] sm:$0xff]
    %v132 = vld [vmem:[#allocation2 + $0x158] sm:$0xff]
    %v133 = vld [vmem:[#allocation2 + $0x160] sm:$0xff]
    %v134 = vld [vmem:[#allocation2 + $0x168] sm:$0xff]
    %v135 = vld [vmem:[#allocation2 + $0x170] sm:$0xff]
    %v136 = vld [vmem:[#allocation2 + $0x178] sm:$0xff]
    %v137 = vld [vmem:[#allocation2 + $0x180] sm:$0xff]
    %v138 = vld [vmem:[#allocation2 + $0x188] sm:$0xff]
    %v139 = vld [vmem:[#allocation2 + $0x190] sm:$0xff]
    %v140 = vld [vmem:[#allocation2 + $0x198] sm:$0xff]
    %v141 = vld [vmem:[#allocation2 + $0x1a0] sm:$0xff]
    %v142 = vld [vmem:[#allocation2 + $0x1a8] sm:$0xff]
    %v143 = vld [vmem:[#allocation2 + $0x1b0] sm:$0xff]
    %v144 = vld [vmem:[#allocation2 + $0x1b8] sm:$0xff]
    %v145 = vld [vmem:[#allocation2 + $0x1c0] sm:$0xff]
    %v146 = vld [vmem:[#allocation2 + $0x1c8] sm:$0xff]
    %v147 = vld [vmem:[#allocation2 + $0x1d0] sm:$0xff]
    %v148 = vld [vmem:[#allocation2 + $0x1d8] sm:$0xff]
    %v149 = vld [vmem:[#allocation2 + $0x1e0] sm:$0xff]
    %v150 = vld [vmem:[#allocation2 + $0x1e8] sm:$0xff]
    %v151 = vld [vmem:[#allocation2 + $0x1f0] sm:$0xff]
    %v152 = vld [vmem:[#allocation2 + $0x1f8] sm:$0xff]
    %v153 = vld [vmem:[#allocation2 + $0x200] sm:$0xff]
    %v154 = vld [vmem:[#allocation2 + $0x208] sm:$0xff]
    %v155 = vld [vmem:[#allocation2 + $0x210] sm:$0xff]
    %v156 = vld [vmem:[#allocation2 + $0x218] sm:$0xff]
    %v157 = vld [vmem:[#allocation2 + $0x220] sm:$0xff]
    %v158 = vld [vmem:[#allocation2 + $0x228] sm:$0xff]
    %v159 = vld [vmem:[#allocation2 + $0x230] sm:$0xff]
    %v160 = vld [vmem:[#allocation2 + $0x238] sm:$0xff]
    %v161 = vld [vmem:[#allocation2 + $0x240] sm:$0xff]
    %v162 = vld [vmem:[#allocation2 + $0x248] sm:$0xff]
    %v163 = vld [vmem:[#allocation2 + $0x250] sm:$0xff]
    %v164 = vld [vmem:[#allocation2 + $0x258] sm:$0xff]
    %v165 = vld [vmem:[#allocation2 + $0x260] sm:$0xff]
    %v166 = vld [vmem:[#allocation2 + $0x268] sm:$0xff]
    %v167 = vld [vmem:[#allocation2 + $0x270] sm:$0xff]
    %v168 = vld [vmem:[#allocation2 + $0x278] sm:$0xff]
    %v169 = vld [vmem:[#allocation2 + $0x280] sm:$0xff]
    %v170 = vld [vmem:[#allocation2 + $0x288] sm:$0xff]
    %v171 = vld [vmem:[#allocation2 + $0x290] sm:$0xff]
    %v172 = vld [vmem:[#allocation2 + $0x298] sm:$0xff]
    %v173 = vld [vmem:[#allocation2 + $0x2a0] sm:$0xff]
    %v174 = vld [vmem:[#allocation2 + $0x2a8] sm:$0xff]
    %v175 = vld [vmem:[#allocation2 + $0x2b0] sm:$0xff]
    %v176 = vld [vmem:[#allocation2 + $0x2b8] sm:$0xff]
    %v177 = vld [vmem:[#allocation2 + $0x2c0] sm:$0xff]
    %v178 = vld [vmem:[#allocation2 + $0x2c8] sm:$0xff]
    %v179 = vld [vmem:[#allocation2 + $0x2d0] sm:$0xff]
    %v180 = vld [vmem:[#allocation2 + $0x2d8] sm:$0xff]
    %v181 = vld [vmem:[#allocation2 + $0x2e0] sm:$0xff]
    %v182 = vld [vmem:[#allocation2 + $0x2e8] sm:$0xff]
    %v183 = vld [vmem:[#allocation2 + $0x2f0] sm:$0xff]
    %v184 = vld [vmem:[#allocation2 + $0x2f8] sm:$0xff]
    %v185 = vpack.c.bf16 %v95, %v89
    %v186 = vpack.c.bf16 %v96, %v90
    %v187 = vpack.c.bf16 %v97, %v91
    %v188 = vpack.c.bf16 %v98, %v92
    %v189 = vpack.c.bf16 %v99, %v93
    %v190 = vpack.c.bf16 %v100, %v94
    %v191 = vpack.c.bf16 %v107, %v101
    %v192 = vpack.c.bf16 %v108, %v102
    %v193 = vpack.c.bf16 %v109, %v103
    %v194 = vpack.c.bf16 %v110, %v104
    %v195 = vpack.c.bf16 %v111, %v105
    %v196 = vpack.c.bf16 %v112, %v106
    %v197 = vpack.c.bf16 %v119, %v113
    %v198 = vpack.c.bf16 %v120, %v114
    %v199 = vpack.c.bf16 %v121, %v115
    %v200 = vpack.c.bf16 %v122, %v116
    %v201 = vpack.c.bf16 %v123, %v117
    %v202 = vpack.c.bf16 %v124, %v118
    %v203 = vpack.c.bf16 %v131, %v125
    %v204 = vpack.c.bf16 %v132, %v126
    %v205 = vpack.c.bf16 %v133, %v127
    %v206 = vpack.c.bf16 %v134, %v128
    %v207 = vpack.c.bf16 %v135, %v129
    %v208 = vpack.c.bf16 %v136, %v130
    %v209 = vpack.c.bf16 %v143, %v137
    %v210 = vpack.c.bf16 %v144, %v138
    %v211 = vpack.c.bf16 %v145, %v139
    %v212 = vpack.c.bf16 %v146, %v140
    %v213 = vpack.c.bf16 %v147, %v141
    %v214 = vpack.c.bf16 %v148, %v142
    %v215 = vpack.c.bf16 %v155, %v149
    %v216 = vpack.c.bf16 %v156, %v150
    %v217 = vpack.c.bf16 %v157, %v151
    %v218 = vpack.c.bf16 %v158, %v152
    %v219 = vpack.c.bf16 %v159, %v153
    %v220 = vpack.c.bf16 %v160, %v154
    %v221 = vpack.c.bf16 %v167, %v161
    %v222 = vpack.c.bf16 %v168, %v162
    %v223 = vpack.c.bf16 %v169, %v163
    %v224 = vpack.c.bf16 %v170, %v164
    %v225 = vpack.c.bf16 %v171, %v165
    %v226 = vpack.c.bf16 %v172, %v166
    %v227 = vpack.c.bf16 %v179, %v173
    %v228 = vpack.c.bf16 %v180, %v174
    %v229 = vpack.c.bf16 %v181, %v175
    %v230 = vpack.c.bf16 %v182, %v176
    %v231 = vpack.c.bf16 %v183, %v177
    %v232 = vpack.c.bf16 %v184, %v178
    %v233 = vld [vmem:[#allocation5] sm:$0xff]
    %v234 = vld [vmem:[#allocation5 + $0x8] sm:$0xff]
    %v235 = vld [vmem:[#allocation5 + $0x10] sm:$0xff]
    %v236 = vld [vmem:[#allocation5 + $0x18] sm:$0xff]
    %v237 = vld [vmem:[#allocation5 + $0x20] sm:$0xff]
    %v238 = vld [vmem:[#allocation5 + $0x28] sm:$0xff]
    %v239 = vld [vmem:[#allocation5 + $0x30] sm:$0xff]
    %v240 = vld [vmem:[#allocation5 + $0x38] sm:$0xff]
    %v241 = vld [vmem:[#allocation5 + $0x40] sm:$0xff]
    %v242 = vld [vmem:[#allocation5 + $0x48] sm:$0xff]
    %v243 = vld [vmem:[#allocation5 + $0x50] sm:$0xff]
    %v244 = vld [vmem:[#allocation5 + $0x58] sm:$0xff]
    %v245 = vld [vmem:[#allocation5 + $0x60] sm:$0xff]
    %v246 = vld [vmem:[#allocation5 + $0x68] sm:$0xff]
    %v247 = vld [vmem:[#allocation5 + $0x70] sm:$0xff]
    %v248 = vld [vmem:[#allocation5 + $0x78] sm:$0xff]
    %v249 = vld [vmem:[#allocation5 + $0x80] sm:$0xff]
    %v250 = vld [vmem:[#allocation5 + $0x88] sm:$0xff]
    %v251 = vld [vmem:[#allocation5 + $0x90] sm:$0xff]
    %v252 = vld [vmem:[#allocation5 + $0x98] sm:$0xff]
    %v253 = vld [vmem:[#allocation5 + $0xa0] sm:$0xff]
    %v254 = vld [vmem:[#allocation5 + $0xa8] sm:$0xff]
    %v255 = vld [vmem:[#allocation5 + $0xb0] sm:$0xff]
    %v256 = vld [vmem:[#allocation5 + $0xb8] sm:$0xff]
    %v257 = vld [vmem:[#allocation5 + $0xc0] sm:$0xff]
    %v258 = vld [vmem:[#allocation5 + $0xc8] sm:$0xff]
    %v259 = vld [vmem:[#allocation5 + $0xd0] sm:$0xff]
    %v260 = vld [vmem:[#allocation5 + $0xd8] sm:$0xff]
    %v261 = vld [vmem:[#allocation5 + $0xe0] sm:$0xff]
    %v262 = vld [vmem:[#allocation5 + $0xe8] sm:$0xff]
    %v263 = vld [vmem:[#allocation5 + $0xf0] sm:$0xff]
    %v264 = vld [vmem:[#allocation5 + $0xf8] sm:$0xff]
    %v265 = vld [vmem:[#allocation5 + $0x100] sm:$0xff]
    %v266 = vld [vmem:[#allocation5 + $0x108] sm:$0xff]
    %v267 = vld [vmem:[#allocation5 + $0x110] sm:$0xff]
    %v268 = vld [vmem:[#allocation5 + $0x118] sm:$0xff]
    %v269 = vld [vmem:[#allocation5 + $0x120] sm:$0xff]
    %v270 = vld [vmem:[#allocation5 + $0x128] sm:$0xff]
    %v271 = vld [vmem:[#allocation5 + $0x130] sm:$0xff]
    %v272 = vld [vmem:[#allocation5 + $0x138] sm:$0xff]
    %v273 = vld [vmem:[#allocation5 + $0x140] sm:$0xff]
    %v274 = vld [vmem:[#allocation5 + $0x148] sm:$0xff]
    %v275 = vld [vmem:[#allocation5 + $0x150] sm:$0xff]
    %v276 = vld [vmem:[#allocation5 + $0x158] sm:$0xff]
    %v277 = vld [vmem:[#allocation5 + $0x160] sm:$0xff]
    %v278 = vld [vmem:[#allocation5 + $0x168] sm:$0xff]
    %v279 = vld [vmem:[#allocation5 + $0x170] sm:$0xff]
    %v280 = vld [vmem:[#allocation5 + $0x178] sm:$0xff]
    %v281 = vld [vmem:[#allocation5 + $0x180] sm:$0xff]
    %v282 = vld [vmem:[#allocation5 + $0x188] sm:$0xff]
    %v283 = vld [vmem:[#allocation5 + $0x190] sm:$0xff]
    %v284 = vld [vmem:[#allocation5 + $0x198] sm:$0xff]
    %v285 = vld [vmem:[#allocation5 + $0x1a0] sm:$0xff]
    %v286 = vld [vmem:[#allocation5 + $0x1a8] sm:$0xff]
    %v287 = vld [vmem:[#allocation5 + $0x1b0] sm:$0xff]
    %v288 = vld [vmem:[#allocation5 + $0x1b8] sm:$0xff]
    %v289 = vld [vmem:[#allocation5 + $0x1c0] sm:$0xff]
    %v290 = vld [vmem:[#allocation5 + $0x1c8] sm:$0xff]
    %v291 = vld [vmem:[#allocation5 + $0x1d0] sm:$0xff]
    %v292 = vld [vmem:[#allocation5 + $0x1d8] sm:$0xff]
    %v293 = vld [vmem:[#allocation5 + $0x1e0] sm:$0xff]
    %v294 = vld [vmem:[#allocation5 + $0x1e8] sm:$0xff]
    %v295 = vld [vmem:[#allocation5 + $0x1f0] sm:$0xff]
    %v296 = vld [vmem:[#allocation5 + $0x1f8] sm:$0xff]
    %v297 = vld [vmem:[#allocation5 + $0x200] sm:$0xff]
    %v298 = vld [vmem:[#allocation5 + $0x208] sm:$0xff]
    %v299 = vld [vmem:[#allocation5 + $0x210] sm:$0xff]
    %v300 = vld [vmem:[#allocation5 + $0x218] sm:$0xff]
    %v301 = vld [vmem:[#allocation5 + $0x220] sm:$0xff]
    %v302 = vld [vmem:[#allocation5 + $0x228] sm:$0xff]
    %v303 = vld [vmem:[#allocation5 + $0x230] sm:$0xff]
    %v304 = vld [vmem:[#allocation5 + $0x238] sm:$0xff]
    %v305 = vld [vmem:[#allocation5 + $0x240] sm:$0xff]
    %v306 = vld [vmem:[#allocation5 + $0x248] sm:$0xff]
    %v307 = vld [vmem:[#allocation5 + $0x250] sm:$0xff]
    %v308 = vld [vmem:[#allocation5 + $0x258] sm:$0xff]
    %v309 = vld [vmem:[#allocation5 + $0x260] sm:$0xff]
    %v310 = vld [vmem:[#allocation5 + $0x268] sm:$0xff]
    %v311 = vld [vmem:[#allocation5 + $0x270] sm:$0xff]
    %v312 = vld [vmem:[#allocation5 + $0x278] sm:$0xff]
    %v313 = vld [vmem:[#allocation5 + $0x280] sm:$0xff]
    %v314 = vld [vmem:[#allocation5 + $0x288] sm:$0xff]
    %v315 = vld [vmem:[#allocation5 + $0x290] sm:$0xff]
    %v316 = vld [vmem:[#allocation5 + $0x298] sm:$0xff]
    %v317 = vld [vmem:[#allocation5 + $0x2a0] sm:$0xff]
    %v318 = vld [vmem:[#allocation5 + $0x2a8] sm:$0xff]
    %v319 = vld [vmem:[#allocation5 + $0x2b0] sm:$0xff]
    %v320 = vld [vmem:[#allocation5 + $0x2b8] sm:$0xff]
    %v321 = vld [vmem:[#allocation5 + $0x2c0] sm:$0xff]
    %v322 = vld [vmem:[#allocation5 + $0x2c8] sm:$0xff]
    %v323 = vld [vmem:[#allocation5 + $0x2d0] sm:$0xff]
    %v324 = vld [vmem:[#allocation5 + $0x2d8] sm:$0xff]
    %v325 = vld [vmem:[#allocation5 + $0x2e0] sm:$0xff]
    %v326 = vld [vmem:[#allocation5 + $0x2e8] sm:$0xff]
    %v327 = vld [vmem:[#allocation5 + $0x2f0] sm:$0xff]
    %v328 = vld [vmem:[#allocation5 + $0x2f8] sm:$0xff]
    %v329 = vld [vmem:[#allocation5 + $0x300] sm:$0xff]
    %v330 = vld [vmem:[#allocation5 + $0x308] sm:$0xff]
    %v331 = vld [vmem:[#allocation5 + $0x310] sm:$0xff]
    %v332 = vld [vmem:[#allocation5 + $0x318] sm:$0xff]
    %v333 = vld [vmem:[#allocation5 + $0x320] sm:$0xff]
    %v334 = vld [vmem:[#allocation5 + $0x328] sm:$0xff]
    %v335 = vld [vmem:[#allocation5 + $0x330] sm:$0xff]
    %v336 = vld [vmem:[#allocation5 + $0x338] sm:$0xff]
    %v337 = vld [vmem:[#allocation5 + $0x340] sm:$0xff]
    %v338 = vld [vmem:[#allocation5 + $0x348] sm:$0xff]
    %v339 = vld [vmem:[#allocation5 + $0x350] sm:$0xff]
    %v340 = vld [vmem:[#allocation5 + $0x358] sm:$0xff]
    %v341 = vld [vmem:[#allocation5 + $0x360] sm:$0xff]
    %v342 = vld [vmem:[#allocation5 + $0x368] sm:$0xff]
    %v343 = vld [vmem:[#allocation5 + $0x370] sm:$0xff]
    %v344 = vld [vmem:[#allocation5 + $0x378] sm:$0xff]
    %v345 = vld [vmem:[#allocation5 + $0x380] sm:$0xff]
    %v346 = vld [vmem:[#allocation5 + $0x388] sm:$0xff]
    %v347 = vld [vmem:[#allocation5 + $0x390] sm:$0xff]
    %v348 = vld [vmem:[#allocation5 + $0x398] sm:$0xff]
    %v349 = vld [vmem:[#allocation5 + $0x3a0] sm:$0xff]
    %v350 = vld [vmem:[#allocation5 + $0x3a8] sm:$0xff]
    %v351 = vld [vmem:[#allocation5 + $0x3b0] sm:$0xff]
    %v352 = vld [vmem:[#allocation5 + $0x3b8] sm:$0xff]
    %v353 = vld [vmem:[#allocation5 + $0x3c0] sm:$0xff]
    %v354 = vld [vmem:[#allocation5 + $0x3c8] sm:$0xff]
    %v355 = vld [vmem:[#allocation5 + $0x3d0] sm:$0xff]
    %v356 = vld [vmem:[#allocation5 + $0x3d8] sm:$0xff]
    %v357 = vld [vmem:[#allocation5 + $0x3e0] sm:$0xff]
    %v358 = vld [vmem:[#allocation5 + $0x3e8] sm:$0xff]
    %v359 = vld [vmem:[#allocation5 + $0x3f0] sm:$0xff]
    %v360 = vld [vmem:[#allocation5 + $0x3f8] sm:$0xff]
    %v361 = vld [vmem:[#allocation5 + $0x400] sm:$0xff]
    %v362 = vld [vmem:[#allocation5 + $0x408] sm:$0xff]
    %v363 = vld [vmem:[#allocation5 + $0x410] sm:$0xff]
    %v364 = vld [vmem:[#allocation5 + $0x418] sm:$0xff]
    %v365 = vld [vmem:[#allocation5 + $0x420] sm:$0xff]
    %v366 = vld [vmem:[#allocation5 + $0x428] sm:$0xff]
    %v367 = vld [vmem:[#allocation5 + $0x430] sm:$0xff]
    %v368 = vld [vmem:[#allocation5 + $0x438] sm:$0xff]
    %v369 = vld [vmem:[#allocation5 + $0x440] sm:$0xff]
    %v370 = vld [vmem:[#allocation5 + $0x448] sm:$0xff]
    %v371 = vld [vmem:[#allocation5 + $0x450] sm:$0xff]
    %v372 = vld [vmem:[#allocation5 + $0x458] sm:$0xff]
    %v373 = vld [vmem:[#allocation5 + $0x460] sm:$0xff]
    %v374 = vld [vmem:[#allocation5 + $0x468] sm:$0xff]
    %v375 = vld [vmem:[#allocation5 + $0x470] sm:$0xff]
    %v376 = vld [vmem:[#allocation5 + $0x478] sm:$0xff]
    %v377 = vld [vmem:[#allocation5 + $0x480] sm:$0xff]
    %v378 = vld [vmem:[#allocation5 + $0x488] sm:$0xff]
    %v379 = vld [vmem:[#allocation5 + $0x490] sm:$0xff]
    %v380 = vld [vmem:[#allocation5 + $0x498] sm:$0xff]
    %v381 = vld [vmem:[#allocation5 + $0x4a0] sm:$0xff]
    %v382 = vld [vmem:[#allocation5 + $0x4a8] sm:$0xff]
    %v383 = vld [vmem:[#allocation5 + $0x4b0] sm:$0xff]
    %v384 = vld [vmem:[#allocation5 + $0x4b8] sm:$0xff]
    %v385 = vld [vmem:[#allocation5 + $0x4c0] sm:$0xff]
    %v386 = vld [vmem:[#allocation5 + $0x4c8] sm:$0xff]
    %v387 = vld [vmem:[#allocation5 + $0x4d0] sm:$0xff]
    %v388 = vld [vmem:[#allocation5 + $0x4d8] sm:$0xff]
    %v389 = vld [vmem:[#allocation5 + $0x4e0] sm:$0xff]
    %v390 = vld [vmem:[#allocation5 + $0x4e8] sm:$0xff]
    %v391 = vld [vmem:[#allocation5 + $0x4f0] sm:$0xff]
    %v392 = vld [vmem:[#allocation5 + $0x4f8] sm:$0xff]
    %v393 = vld [vmem:[#allocation5 + $0x500] sm:$0xff]
    %v394 = vld [vmem:[#allocation5 + $0x508] sm:$0xff]
    %v395 = vld [vmem:[#allocation5 + $0x510] sm:$0xff]
    %v396 = vld [vmem:[#allocation5 + $0x518] sm:$0xff]
    %v397 = vld [vmem:[#allocation5 + $0x520] sm:$0xff]
    %v398 = vld [vmem:[#allocation5 + $0x528] sm:$0xff]
    %v399 = vld [vmem:[#allocation5 + $0x530] sm:$0xff]
    %v400 = vld [vmem:[#allocation5 + $0x538] sm:$0xff]
    %v401 = vld [vmem:[#allocation5 + $0x540] sm:$0xff]
    %v402 = vld [vmem:[#allocation5 + $0x548] sm:$0xff]
    %v403 = vld [vmem:[#allocation5 + $0x550] sm:$0xff]
    %v404 = vld [vmem:[#allocation5 + $0x558] sm:$0xff]
    %v405 = vld [vmem:[#allocation5 + $0x560] sm:$0xff]
    %v406 = vld [vmem:[#allocation5 + $0x568] sm:$0xff]
    %v407 = vld [vmem:[#allocation5 + $0x570] sm:$0xff]
    %v408 = vld [vmem:[#allocation5 + $0x578] sm:$0xff]
    %v409 = vld [vmem:[#allocation5 + $0x580] sm:$0xff]
    %v410 = vld [vmem:[#allocation5 + $0x588] sm:$0xff]
    %v411 = vld [vmem:[#allocation5 + $0x590] sm:$0xff]
    %v412 = vld [vmem:[#allocation5 + $0x598] sm:$0xff]
    %v413 = vld [vmem:[#allocation5 + $0x5a0] sm:$0xff]
    %v414 = vld [vmem:[#allocation5 + $0x5a8] sm:$0xff]
    %v415 = vld [vmem:[#allocation5 + $0x5b0] sm:$0xff]
    %v416 = vld [vmem:[#allocation5 + $0x5b8] sm:$0xff]
    %v417 = vld [vmem:[#allocation5 + $0x5c0] sm:$0xff]
    %v418 = vld [vmem:[#allocation5 + $0x5c8] sm:$0xff]
    %v419 = vld [vmem:[#allocation5 + $0x5d0] sm:$0xff]
    %v420 = vld [vmem:[#allocation5 + $0x5d8] sm:$0xff]
    %v421 = vld [vmem:[#allocation5 + $0x5e0] sm:$0xff]
    %v422 = vld [vmem:[#allocation5 + $0x5e8] sm:$0xff]
    %v423 = vld [vmem:[#allocation5 + $0x5f0] sm:$0xff]
    %v424 = vld [vmem:[#allocation5 + $0x5f8] sm:$0xff]
    %v425 = vld [vmem:[#allocation5 + $0x600] sm:$0xff]
    %v426 = vld [vmem:[#allocation5 + $0x608] sm:$0xff]
    %v427 = vld [vmem:[#allocation5 + $0x610] sm:$0xff]
    %v428 = vld [vmem:[#allocation5 + $0x618] sm:$0xff]
    %v429 = vld [vmem:[#allocation5 + $0x620] sm:$0xff]
    %v430 = vld [vmem:[#allocation5 + $0x628] sm:$0xff]
    %v431 = vld [vmem:[#allocation5 + $0x630] sm:$0xff]
    %v432 = vld [vmem:[#allocation5 + $0x638] sm:$0xff]
    %v433 = vld [vmem:[#allocation5 + $0x640] sm:$0xff]
    %v434 = vld [vmem:[#allocation5 + $0x648] sm:$0xff]
    %v435 = vld [vmem:[#allocation5 + $0x650] sm:$0xff]
    %v436 = vld [vmem:[#allocation5 + $0x658] sm:$0xff]
    %v437 = vld [vmem:[#allocation5 + $0x660] sm:$0xff]
    %v438 = vld [vmem:[#allocation5 + $0x668] sm:$0xff]
    %v439 = vld [vmem:[#allocation5 + $0x670] sm:$0xff]
    %v440 = vld [vmem:[#allocation5 + $0x678] sm:$0xff]
    %v441 = vld [vmem:[#allocation5 + $0x680] sm:$0xff]
    %v442 = vld [vmem:[#allocation5 + $0x688] sm:$0xff]
    %v443 = vld [vmem:[#allocation5 + $0x690] sm:$0xff]
    %v444 = vld [vmem:[#allocation5 + $0x698] sm:$0xff]
    %v445 = vld [vmem:[#allocation5 + $0x6a0] sm:$0xff]
    %v446 = vld [vmem:[#allocation5 + $0x6a8] sm:$0xff]
    %v447 = vld [vmem:[#allocation5 + $0x6b0] sm:$0xff]
    %v448 = vld [vmem:[#allocation5 + $0x6b8] sm:$0xff]
    %v449 = vld [vmem:[#allocation5 + $0x6c0] sm:$0xff]
    %v450 = vld [vmem:[#allocation5 + $0x6c8] sm:$0xff]
    %v451 = vld [vmem:[#allocation5 + $0x6d0] sm:$0xff]
    %v452 = vld [vmem:[#allocation5 + $0x6d8] sm:$0xff]
    %v453 = vld [vmem:[#allocation5 + $0x6e0] sm:$0xff]
    %v454 = vld [vmem:[#allocation5 + $0x6e8] sm:$0xff]
    %v455 = vld [vmem:[#allocation5 + $0x6f0] sm:$0xff]
    %v456 = vld [vmem:[#allocation5 + $0x6f8] sm:$0xff]
    %v457 = vld [vmem:[#allocation5 + $0x700] sm:$0xff]
    %v458 = vld [vmem:[#allocation5 + $0x708] sm:$0xff]
    %v459 = vld [vmem:[#allocation5 + $0x710] sm:$0xff]
    %v460 = vld [vmem:[#allocation5 + $0x718] sm:$0xff]
    %v461 = vld [vmem:[#allocation5 + $0x720] sm:$0xff]
    %v462 = vld [vmem:[#allocation5 + $0x728] sm:$0xff]
    %v463 = vld [vmem:[#allocation5 + $0x730] sm:$0xff]
    %v464 = vld [vmem:[#allocation5 + $0x738] sm:$0xff]
    %v465 = vld [vmem:[#allocation5 + $0x740] sm:$0xff]
    %v466 = vld [vmem:[#allocation5 + $0x748] sm:$0xff]
    %v467 = vld [vmem:[#allocation5 + $0x750] sm:$0xff]
    %v468 = vld [vmem:[#allocation5 + $0x758] sm:$0xff]
    %v469 = vld [vmem:[#allocation5 + $0x760] sm:$0xff]
    %v470 = vld [vmem:[#allocation5 + $0x768] sm:$0xff]
    %v471 = vld [vmem:[#allocation5 + $0x770] sm:$0xff]
    %v472 = vld [vmem:[#allocation5 + $0x778] sm:$0xff]
    %v473 = vld [vmem:[#allocation5 + $0x780] sm:$0xff]
    %v474 = vld [vmem:[#allocation5 + $0x788] sm:$0xff]
    %v475 = vld [vmem:[#allocation5 + $0x790] sm:$0xff]
    %v476 = vld [vmem:[#allocation5 + $0x798] sm:$0xff]
    %v477 = vld [vmem:[#allocation5 + $0x7a0] sm:$0xff]
    %v478 = vld [vmem:[#allocation5 + $0x7a8] sm:$0xff]
    %v479 = vld [vmem:[#allocation5 + $0x7b0] sm:$0xff]
    %v480 = vld [vmem:[#allocation5 + $0x7b8] sm:$0xff]
    %v481 = vld [vmem:[#allocation5 + $0x7c0] sm:$0xff]
    %v482 = vld [vmem:[#allocation5 + $0x7c8] sm:$0xff]
    %v483 = vld [vmem:[#allocation5 + $0x7d0] sm:$0xff]
    %v484 = vld [vmem:[#allocation5 + $0x7d8] sm:$0xff]
    %v485 = vld [vmem:[#allocation5 + $0x7e0] sm:$0xff]
    %v486 = vld [vmem:[#allocation5 + $0x7e8] sm:$0xff]
    %v487 = vld [vmem:[#allocation5 + $0x7f0] sm:$0xff]
    %v488 = vld [vmem:[#allocation5 + $0x7f8] sm:$0xff]
    %v489 = vld [vmem:[#allocation5 + $0x800] sm:$0xff]
    %v490 = vld [vmem:[#allocation5 + $0x808] sm:$0xff]
    %v491 = vld [vmem:[#allocation5 + $0x810] sm:$0xff]
    %v492 = vld [vmem:[#allocation5 + $0x818] sm:$0xff]
    %v493 = vld [vmem:[#allocation5 + $0x820] sm:$0xff]
    %v494 = vld [vmem:[#allocation5 + $0x828] sm:$0xff]
    %v495 = vld [vmem:[#allocation5 + $0x830] sm:$0xff]
    %v496 = vld [vmem:[#allocation5 + $0x838] sm:$0xff]
    %v497 = vld [vmem:[#allocation5 + $0x840] sm:$0xff]
    %v498 = vld [vmem:[#allocation5 + $0x848] sm:$0xff]
    %v499 = vld [vmem:[#allocation5 + $0x850] sm:$0xff]
    %v500 = vld [vmem:[#allocation5 + $0x858] sm:$0xff]
    %v501 = vld [vmem:[#allocation5 + $0x860] sm:$0xff]
    %v502 = vld [vmem:[#allocation5 + $0x868] sm:$0xff]
    %v503 = vld [vmem:[#allocation5 + $0x870] sm:$0xff]
    %v504 = vld [vmem:[#allocation5 + $0x878] sm:$0xff]
    %v505 = vld [vmem:[#allocation5 + $0x880] sm:$0xff]
    %v506 = vld [vmem:[#allocation5 + $0x888] sm:$0xff]
    %v507 = vld [vmem:[#allocation5 + $0x890] sm:$0xff]
    %v508 = vld [vmem:[#allocation5 + $0x898] sm:$0xff]
    %v509 = vld [vmem:[#allocation5 + $0x8a0] sm:$0xff]
    %v510 = vld [vmem:[#allocation5 + $0x8a8] sm:$0xff]
    %v511 = vld [vmem:[#allocation5 + $0x8b0] sm:$0xff]
    %v512 = vld [vmem:[#allocation5 + $0x8b8] sm:$0xff]
    %v513 = vld [vmem:[#allocation5 + $0x8c0] sm:$0xff]
    %v514 = vld [vmem:[#allocation5 + $0x8c8] sm:$0xff]
    %v515 = vld [vmem:[#allocation5 + $0x8d0] sm:$0xff]
    %v516 = vld [vmem:[#allocation5 + $0x8d8] sm:$0xff]
    %v517 = vld [vmem:[#allocation5 + $0x8e0] sm:$0xff]
    %v518 = vld [vmem:[#allocation5 + $0x8e8] sm:$0xff]
    %v519 = vld [vmem:[#allocation5 + $0x8f0] sm:$0xff]
    %v520 = vld [vmem:[#allocation5 + $0x8f8] sm:$0xff]
    %v521 = vld [vmem:[#allocation7] sm:$0x3f]
    %v523 = vlaneseq
    %v524 = vshrl.u32 %v523, 7
    %v525 = vsub.s32 0, %v524
    %v526 = vrot.slane %v521, %v525
    %v527 = vlaneseq
    %v528 = vshrl.u32 %v527, 7
    %v529 = vsub.s32 1, %v528
    %v530 = vrot.slane %v521, %v529
    %v531 = vlaneseq
    %v532 = vshrl.u32 %v531, 7
    %v533 = vsub.s32 2, %v532
    %v534 = vrot.slane %v521, %v533
    %v535 = vlaneseq
    %v536 = vshrl.u32 %v535, 7
    %v537 = vsub.s32 3, %v536
    %v538 = vrot.slane %v521, %v537
    %v539 = vlaneseq
    %v540 = vshrl.u32 %v539, 7
    %v541 = vsub.s32 4, %v540
    %v542 = vrot.slane %v521, %v541
    %v543 = vlaneseq
    %v544 = vshrl.u32 %v543, 7
    %v545 = vsub.s32 5, %v544
    %v546 = vrot.slane %v521, %v545
    %v841 = vunpack.c.l.b16 %v233
    %v842 = vunpack.c.h.b16 %v233
    %v843 = vunpack.c.l.b16 %v234
    %v844 = vunpack.c.h.b16 %v234
    %v845 = vunpack.c.l.b16 %v235
    %v846 = vunpack.c.h.b16 %v235
    %v847 = vunpack.c.l.b16 %v236
    %v848 = vunpack.c.h.b16 %v236
    %v849 = vunpack.c.l.b16 %v237
    %v850 = vunpack.c.h.b16 %v237
    %v851 = vunpack.c.l.b16 %v238
    %v852 = vunpack.c.h.b16 %v238
    %v853 = vunpack.c.l.b16 %v239
    %v854 = vunpack.c.h.b16 %v239
    %v855 = vunpack.c.l.b16 %v240
    %v856 = vunpack.c.h.b16 %v240
    %v857 = vunpack.c.l.b16 %v241
    %v858 = vunpack.c.h.b16 %v241
    %v859 = vunpack.c.l.b16 %v242
    %v860 = vunpack.c.h.b16 %v242
    %v861 = vunpack.c.l.b16 %v243
    %v862 = vunpack.c.h.b16 %v243
    %v863 = vunpack.c.l.b16 %v244
    %v864 = vunpack.c.h.b16 %v244
    %v865 = vunpack.c.l.b16 %v245
    %v866 = vunpack.c.h.b16 %v245
    %v867 = vunpack.c.l.b16 %v246
    %v868 = vunpack.c.h.b16 %v246
    %v869 = vunpack.c.l.b16 %v247
    %v870 = vunpack.c.h.b16 %v247
    %v871 = vunpack.c.l.b16 %v248
    %v872 = vunpack.c.h.b16 %v248
    %v873 = vunpack.c.l.b16 %v249
    %v874 = vunpack.c.h.b16 %v249
    %v875 = vunpack.c.l.b16 %v250
    %v876 = vunpack.c.h.b16 %v250
    %v877 = vunpack.c.l.b16 %v251
    %v878 = vunpack.c.h.b16 %v251
    %v879 = vunpack.c.l.b16 %v252
    %v880 = vunpack.c.h.b16 %v252
    %v881 = vunpack.c.l.b16 %v253
    %v882 = vunpack.c.h.b16 %v253
    %v883 = vunpack.c.l.b16 %v254
    %v884 = vunpack.c.h.b16 %v254
    %v885 = vunpack.c.l.b16 %v255
    %v886 = vunpack.c.h.b16 %v255
    %v887 = vunpack.c.l.b16 %v256
    %v888 = vunpack.c.h.b16 %v256
    %v889 = vunpack.c.l.b16 %v257
    %v890 = vunpack.c.h.b16 %v257
    %v891 = vunpack.c.l.b16 %v258
    %v892 = vunpack.c.h.b16 %v258
    %v893 = vunpack.c.l.b16 %v259
    %v894 = vunpack.c.h.b16 %v259
    %v895 = vunpack.c.l.b16 %v260
    %v896 = vunpack.c.h.b16 %v260
    %v897 = vunpack.c.l.b16 %v261
    %v898 = vunpack.c.h.b16 %v261
    %v899 = vunpack.c.l.b16 %v262
    %v900 = vunpack.c.h.b16 %v262
    %v901 = vunpack.c.l.b16 %v263
    %v902 = vunpack.c.h.b16 %v263
    %v903 = vunpack.c.l.b16 %v264
    %v904 = vunpack.c.h.b16 %v264
    %v905 = vunpack.c.l.b16 %v265
    %v906 = vunpack.c.h.b16 %v265
    %v907 = vunpack.c.l.b16 %v266
    %v908 = vunpack.c.h.b16 %v266
    %v909 = vunpack.c.l.b16 %v267
    %v910 = vunpack.c.h.b16 %v267
    %v911 = vunpack.c.l.b16 %v268
    %v912 = vunpack.c.h.b16 %v268
    %v913 = vunpack.c.l.b16 %v269
    %v914 = vunpack.c.h.b16 %v269
    %v915 = vunpack.c.l.b16 %v270
    %v916 = vunpack.c.h.b16 %v270
    %v917 = vunpack.c.l.b16 %v271
    %v918 = vunpack.c.h.b16 %v271
    %v919 = vunpack.c.l.b16 %v272
    %v920 = vunpack.c.h.b16 %v272
    %v921 = vunpack.c.l.b16 %v273
    %v922 = vunpack.c.h.b16 %v273
    %v923 = vunpack.c.l.b16 %v274
    %v924 = vunpack.c.h.b16 %v274
    %v925 = vunpack.c.l.b16 %v275
    %v926 = vunpack.c.h.b16 %v275
    %v927 = vunpack.c.l.b16 %v276
    %v928 = vunpack.c.h.b16 %v276
    %v929 = vunpack.c.l.b16 %v277
    %v930 = vunpack.c.h.b16 %v277
    %v931 = vunpack.c.l.b16 %v278
    %v932 = vunpack.c.h.b16 %v278
    %v933 = vunpack.c.l.b16 %v279
    %v934 = vunpack.c.h.b16 %v279
    %v935 = vunpack.c.l.b16 %v280
    %v936 = vunpack.c.h.b16 %v280
    %v937 = vunpack.c.l.b16 %v281
    %v938 = vunpack.c.h.b16 %v281
    %v939 = vunpack.c.l.b16 %v282
    %v940 = vunpack.c.h.b16 %v282
    %v941 = vunpack.c.l.b16 %v283
    %v942 = vunpack.c.h.b16 %v283
    %v943 = vunpack.c.l.b16 %v284
    %v944 = vunpack.c.h.b16 %v284
    %v945 = vunpack.c.l.b16 %v285
    %v946 = vunpack.c.h.b16 %v285
    %v947 = vunpack.c.l.b16 %v286
    %v948 = vunpack.c.h.b16 %v286
    %v949 = vunpack.c.l.b16 %v287
    %v950 = vunpack.c.h.b16 %v287
    %v951 = vunpack.c.l.b16 %v288
    %v952 = vunpack.c.h.b16 %v288
    %v953 = vunpack.c.l.b16 %v289
    %v954 = vunpack.c.h.b16 %v289
    %v955 = vunpack.c.l.b16 %v290
    %v956 = vunpack.c.h.b16 %v290
    %v957 = vunpack.c.l.b16 %v291
    %v958 = vunpack.c.h.b16 %v291
    %v959 = vunpack.c.l.b16 %v292
    %v960 = vunpack.c.h.b16 %v292
    %v961 = vunpack.c.l.b16 %v293
    %v962 = vunpack.c.h.b16 %v293
    %v963 = vunpack.c.l.b16 %v294
    %v964 = vunpack.c.h.b16 %v294
    %v965 = vunpack.c.l.b16 %v295
    %v966 = vunpack.c.h.b16 %v295
    %v967 = vunpack.c.l.b16 %v296
    %v968 = vunpack.c.h.b16 %v296
    %v969 = vunpack.c.l.b16 %v297
    %v970 = vunpack.c.h.b16 %v297
    %v971 = vunpack.c.l.b16 %v298
    %v972 = vunpack.c.h.b16 %v298
    %v973 = vunpack.c.l.b16 %v299
    %v974 = vunpack.c.h.b16 %v299
    %v975 = vunpack.c.l.b16 %v300
    %v976 = vunpack.c.h.b16 %v300
    %v977 = vunpack.c.l.b16 %v301
    %v978 = vunpack.c.h.b16 %v301
    %v979 = vunpack.c.l.b16 %v302
    %v980 = vunpack.c.h.b16 %v302
    %v981 = vunpack.c.l.b16 %v303
    %v982 = vunpack.c.h.b16 %v303
    %v983 = vunpack.c.l.b16 %v304
    %v984 = vunpack.c.h.b16 %v304
    %v985 = vunpack.c.l.b16 %v305
    %v986 = vunpack.c.h.b16 %v305
    %v987 = vunpack.c.l.b16 %v306
    %v988 = vunpack.c.h.b16 %v306
    %v989 = vunpack.c.l.b16 %v307
    %v990 = vunpack.c.h.b16 %v307
    %v991 = vunpack.c.l.b16 %v308
    %v992 = vunpack.c.h.b16 %v308
    %v993 = vunpack.c.l.b16 %v309
    %v994 = vunpack.c.h.b16 %v309
    %v995 = vunpack.c.l.b16 %v310
    %v996 = vunpack.c.h.b16 %v310
    %v997 = vunpack.c.l.b16 %v311
    %v998 = vunpack.c.h.b16 %v311
    %v999 = vunpack.c.l.b16 %v312
    %v1000 = vunpack.c.h.b16 %v312
    %v1001 = vunpack.c.l.b16 %v313
    %v1002 = vunpack.c.h.b16 %v313
    %v1003 = vunpack.c.l.b16 %v314
    %v1004 = vunpack.c.h.b16 %v314
    %v1005 = vunpack.c.l.b16 %v315
    %v1006 = vunpack.c.h.b16 %v315
    %v1007 = vunpack.c.l.b16 %v316
    %v1008 = vunpack.c.h.b16 %v316
    %v1009 = vunpack.c.l.b16 %v317
    %v1010 = vunpack.c.h.b16 %v317
    %v1011 = vunpack.c.l.b16 %v318
    %v1012 = vunpack.c.h.b16 %v318
    %v1013 = vunpack.c.l.b16 %v319
    %v1014 = vunpack.c.h.b16 %v319
    %v1015 = vunpack.c.l.b16 %v320
    %v1016 = vunpack.c.h.b16 %v320
    %v1017 = vunpack.c.l.b16 %v321
    %v1018 = vunpack.c.h.b16 %v321
    %v1019 = vunpack.c.l.b16 %v322
    %v1020 = vunpack.c.h.b16 %v322
    %v1021 = vunpack.c.l.b16 %v323
    %v1022 = vunpack.c.h.b16 %v323
    %v1023 = vunpack.c.l.b16 %v324
    %v1024 = vunpack.c.h.b16 %v324
    %v1025 = vunpack.c.l.b16 %v325
    %v1026 = vunpack.c.h.b16 %v325
    %v1027 = vunpack.c.l.b16 %v326
    %v1028 = vunpack.c.h.b16 %v326
    %v1029 = vunpack.c.l.b16 %v327
    %v1030 = vunpack.c.h.b16 %v327
    %v1031 = vunpack.c.l.b16 %v328
    %v1032 = vunpack.c.h.b16 %v328
    %v1033 = vunpack.c.l.b16 %v329
    %v1034 = vunpack.c.h.b16 %v329
    %v1035 = vunpack.c.l.b16 %v330
    %v1036 = vunpack.c.h.b16 %v330
    %v1037 = vunpack.c.l.b16 %v331
    %v1038 = vunpack.c.h.b16 %v331
    %v1039 = vunpack.c.l.b16 %v332
    %v1040 = vunpack.c.h.b16 %v332
    %v1041 = vunpack.c.l.b16 %v333
    %v1042 = vunpack.c.h.b16 %v333
    %v1043 = vunpack.c.l.b16 %v334
    %v1044 = vunpack.c.h.b16 %v334
    %v1045 = vunpack.c.l.b16 %v335
    %v1046 = vunpack.c.h.b16 %v335
    %v1047 = vunpack.c.l.b16 %v336
    %v1048 = vunpack.c.h.b16 %v336
    %v1049 = vunpack.c.l.b16 %v337
    %v1050 = vunpack.c.h.b16 %v337
    %v1051 = vunpack.c.l.b16 %v338
    %v1052 = vunpack.c.h.b16 %v338
    %v1053 = vunpack.c.l.b16 %v339
    %v1054 = vunpack.c.h.b16 %v339
    %v1055 = vunpack.c.l.b16 %v340
    %v1056 = vunpack.c.h.b16 %v340
    %v1057 = vunpack.c.l.b16 %v341
    %v1058 = vunpack.c.h.b16 %v341
    %v1059 = vunpack.c.l.b16 %v342
    %v1060 = vunpack.c.h.b16 %v342
    %v1061 = vunpack.c.l.b16 %v343
    %v1062 = vunpack.c.h.b16 %v343
    %v1063 = vunpack.c.l.b16 %v344
    %v1064 = vunpack.c.h.b16 %v344
    %v1065 = vunpack.c.l.b16 %v345
    %v1066 = vunpack.c.h.b16 %v345
    %v1067 = vunpack.c.l.b16 %v346
    %v1068 = vunpack.c.h.b16 %v346
    %v1069 = vunpack.c.l.b16 %v347
    %v1070 = vunpack.c.h.b16 %v347
    %v1071 = vunpack.c.l.b16 %v348
    %v1072 = vunpack.c.h.b16 %v348
    %v1073 = vunpack.c.l.b16 %v349
    %v1074 = vunpack.c.h.b16 %v349
    %v1075 = vunpack.c.l.b16 %v350
    %v1076 = vunpack.c.h.b16 %v350
    %v1077 = vunpack.c.l.b16 %v351
    %v1078 = vunpack.c.h.b16 %v351
    %v1079 = vunpack.c.l.b16 %v352
    %v1080 = vunpack.c.h.b16 %v352
    %v1081 = vunpack.c.l.b16 %v353
    %v1082 = vunpack.c.h.b16 %v353
    %v1083 = vunpack.c.l.b16 %v354
    %v1084 = vunpack.c.h.b16 %v354
    %v1085 = vunpack.c.l.b16 %v355
    %v1086 = vunpack.c.h.b16 %v355
    %v1087 = vunpack.c.l.b16 %v356
    %v1088 = vunpack.c.h.b16 %v356
    %v1089 = vunpack.c.l.b16 %v357
    %v1090 = vunpack.c.h.b16 %v357
    %v1091 = vunpack.c.l.b16 %v358
    %v1092 = vunpack.c.h.b16 %v358
    %v1093 = vunpack.c.l.b16 %v359
    %v1094 = vunpack.c.h.b16 %v359
    %v1095 = vunpack.c.l.b16 %v360
    %v1096 = vunpack.c.h.b16 %v360
    %v1097 = vunpack.c.l.b16 %v361
    %v1098 = vunpack.c.h.b16 %v361
    %v1099 = vunpack.c.l.b16 %v362
    %v1100 = vunpack.c.h.b16 %v362
    %v1101 = vunpack.c.l.b16 %v363
    %v1102 = vunpack.c.h.b16 %v363
    %v1103 = vunpack.c.l.b16 %v364
    %v1104 = vunpack.c.h.b16 %v364
    %v1105 = vunpack.c.l.b16 %v365
    %v1106 = vunpack.c.h.b16 %v365
    %v1107 = vunpack.c.l.b16 %v366
    %v1108 = vunpack.c.h.b16 %v366
    %v1109 = vunpack.c.l.b16 %v367
    %v1110 = vunpack.c.h.b16 %v367
    %v1111 = vunpack.c.l.b16 %v368
    %v1112 = vunpack.c.h.b16 %v368
    %v1113 = vunpack.c.l.b16 %v369
    %v1114 = vunpack.c.h.b16 %v369
    %v1115 = vunpack.c.l.b16 %v370
    %v1116 = vunpack.c.h.b16 %v370
    %v1117 = vunpack.c.l.b16 %v371
    %v1118 = vunpack.c.h.b16 %v371
    %v1119 = vunpack.c.l.b16 %v372
    %v1120 = vunpack.c.h.b16 %v372
    %v1121 = vunpack.c.l.b16 %v373
    %v1122 = vunpack.c.h.b16 %v373
    %v1123 = vunpack.c.l.b16 %v374
    %v1124 = vunpack.c.h.b16 %v374
    %v1125 = vunpack.c.l.b16 %v375
    %v1126 = vunpack.c.h.b16 %v375
    %v1127 = vunpack.c.l.b16 %v376
    %v1128 = vunpack.c.h.b16 %v376
    %v1129 = vunpack.c.l.b16 %v377
    %v1130 = vunpack.c.h.b16 %v377
    %v1131 = vunpack.c.l.b16 %v378
    %v1132 = vunpack.c.h.b16 %v378
    %v1133 = vunpack.c.l.b16 %v379
    %v1134 = vunpack.c.h.b16 %v379
    %v1135 = vunpack.c.l.b16 %v380
    %v1136 = vunpack.c.h.b16 %v380
    %v1137 = vunpack.c.l.b16 %v381
    %v1138 = vunpack.c.h.b16 %v381
    %v1139 = vunpack.c.l.b16 %v382
    %v1140 = vunpack.c.h.b16 %v382
    %v1141 = vunpack.c.l.b16 %v383
    %v1142 = vunpack.c.h.b16 %v383
    %v1143 = vunpack.c.l.b16 %v384
    %v1144 = vunpack.c.h.b16 %v384
    %v1145 = vunpack.c.l.b16 %v385
    %v1146 = vunpack.c.h.b16 %v385
    %v1147 = vunpack.c.l.b16 %v386
    %v1148 = vunpack.c.h.b16 %v386
    %v1149 = vunpack.c.l.b16 %v387
    %v1150 = vunpack.c.h.b16 %v387
    %v1151 = vunpack.c.l.b16 %v388
    %v1152 = vunpack.c.h.b16 %v388
    %v1153 = vunpack.c.l.b16 %v389
    %v1154 = vunpack.c.h.b16 %v389
    %v1155 = vunpack.c.l.b16 %v390
    %v1156 = vunpack.c.h.b16 %v390
    %v1157 = vunpack.c.l.b16 %v391
    %v1158 = vunpack.c.h.b16 %v391
    %v1159 = vunpack.c.l.b16 %v392
    %v1160 = vunpack.c.h.b16 %v392
    %v1161 = vunpack.c.l.b16 %v393
    %v1162 = vunpack.c.h.b16 %v393
    %v1163 = vunpack.c.l.b16 %v394
    %v1164 = vunpack.c.h.b16 %v394
    %v1165 = vunpack.c.l.b16 %v395
    %v1166 = vunpack.c.h.b16 %v395
    %v1167 = vunpack.c.l.b16 %v396
    %v1168 = vunpack.c.h.b16 %v396
    %v1169 = vunpack.c.l.b16 %v397
    %v1170 = vunpack.c.h.b16 %v397
    %v1171 = vunpack.c.l.b16 %v398
    %v1172 = vunpack.c.h.b16 %v398
    %v1173 = vunpack.c.l.b16 %v399
    %v1174 = vunpack.c.h.b16 %v399
    %v1175 = vunpack.c.l.b16 %v400
    %v1176 = vunpack.c.h.b16 %v400
    %v1177 = vunpack.c.l.b16 %v401
    %v1178 = vunpack.c.h.b16 %v401
    %v1179 = vunpack.c.l.b16 %v402
    %v1180 = vunpack.c.h.b16 %v402
    %v1181 = vunpack.c.l.b16 %v403
    %v1182 = vunpack.c.h.b16 %v403
    %v1183 = vunpack.c.l.b16 %v404
    %v1184 = vunpack.c.h.b16 %v404
    %v1185 = vunpack.c.l.b16 %v405
    %v1186 = vunpack.c.h.b16 %v405
    %v1187 = vunpack.c.l.b16 %v406
    %v1188 = vunpack.c.h.b16 %v406
    %v1189 = vunpack.c.l.b16 %v407
    %v1190 = vunpack.c.h.b16 %v407
    %v1191 = vunpack.c.l.b16 %v408
    %v1192 = vunpack.c.h.b16 %v408
    %v1193 = vunpack.c.l.b16 %v409
    %v1194 = vunpack.c.h.b16 %v409
    %v1195 = vunpack.c.l.b16 %v410
    %v1196 = vunpack.c.h.b16 %v410
    %v1197 = vunpack.c.l.b16 %v411
    %v1198 = vunpack.c.h.b16 %v411
    %v1199 = vunpack.c.l.b16 %v412
    %v1200 = vunpack.c.h.b16 %v412
    %v1201 = vunpack.c.l.b16 %v413
    %v1202 = vunpack.c.h.b16 %v413
    %v1203 = vunpack.c.l.b16 %v414
    %v1204 = vunpack.c.h.b16 %v414
    %v1205 = vunpack.c.l.b16 %v415
    %v1206 = vunpack.c.h.b16 %v415
    %v1207 = vunpack.c.l.b16 %v416
    %v1208 = vunpack.c.h.b16 %v416
    %v1209 = vunpack.c.l.b16 %v417
    %v1210 = vunpack.c.h.b16 %v417
    %v1211 = vunpack.c.l.b16 %v418
    %v1212 = vunpack.c.h.b16 %v418
    %v1213 = vunpack.c.l.b16 %v419
    %v1214 = vunpack.c.h.b16 %v419
    %v1215 = vunpack.c.l.b16 %v420
    %v1216 = vunpack.c.h.b16 %v420
    %v1217 = vunpack.c.l.b16 %v421
    %v1218 = vunpack.c.h.b16 %v421
    %v1219 = vunpack.c.l.b16 %v422
    %v1220 = vunpack.c.h.b16 %v422
    %v1221 = vunpack.c.l.b16 %v423
    %v1222 = vunpack.c.h.b16 %v423
    %v1223 = vunpack.c.l.b16 %v424
    %v1224 = vunpack.c.h.b16 %v424
    %v1225 = vunpack.c.l.b16 %v425
    %v1226 = vunpack.c.h.b16 %v425
    %v1227 = vunpack.c.l.b16 %v426
    %v1228 = vunpack.c.h.b16 %v426
    %v1229 = vunpack.c.l.b16 %v427
    %v1230 = vunpack.c.h.b16 %v427
    %v1231 = vunpack.c.l.b16 %v428
    %v1232 = vunpack.c.h.b16 %v428
    %v1233 = vunpack.c.l.b16 %v429
    %v1234 = vunpack.c.h.b16 %v429
    %v1235 = vunpack.c.l.b16 %v430
    %v1236 = vunpack.c.h.b16 %v430
    %v1237 = vunpack.c.l.b16 %v431
    %v1238 = vunpack.c.h.b16 %v431
    %v1239 = vunpack.c.l.b16 %v432
    %v1240 = vunpack.c.h.b16 %v432
    %v1241 = vunpack.c.l.b16 %v433
    %v1242 = vunpack.c.h.b16 %v433
    %v1243 = vunpack.c.l.b16 %v434
    %v1244 = vunpack.c.h.b16 %v434
    %v1245 = vunpack.c.l.b16 %v435
    %v1246 = vunpack.c.h.b16 %v435
    %v1247 = vunpack.c.l.b16 %v436
    %v1248 = vunpack.c.h.b16 %v436
    %v1249 = vunpack.c.l.b16 %v437
    %v1250 = vunpack.c.h.b16 %v437
    %v1251 = vunpack.c.l.b16 %v438
    %v1252 = vunpack.c.h.b16 %v438
    %v1253 = vunpack.c.l.b16 %v439
    %v1254 = vunpack.c.h.b16 %v439
    %v1255 = vunpack.c.l.b16 %v440
    %v1256 = vunpack.c.h.b16 %v440
    %v1257 = vunpack.c.l.b16 %v441
    %v1258 = vunpack.c.h.b16 %v441
    %v1259 = vunpack.c.l.b16 %v442
    %v1260 = vunpack.c.h.b16 %v442
    %v1261 = vunpack.c.l.b16 %v443
    %v1262 = vunpack.c.h.b16 %v443
    %v1263 = vunpack.c.l.b16 %v444
    %v1264 = vunpack.c.h.b16 %v444
    %v1265 = vunpack.c.l.b16 %v445
    %v1266 = vunpack.c.h.b16 %v445
    %v1267 = vunpack.c.l.b16 %v446
    %v1268 = vunpack.c.h.b16 %v446
    %v1269 = vunpack.c.l.b16 %v447
    %v1270 = vunpack.c.h.b16 %v447
    %v1271 = vunpack.c.l.b16 %v448
    %v1272 = vunpack.c.h.b16 %v448
    %v1273 = vunpack.c.l.b16 %v449
    %v1274 = vunpack.c.h.b16 %v449
    %v1275 = vunpack.c.l.b16 %v450
    %v1276 = vunpack.c.h.b16 %v450
    %v1277 = vunpack.c.l.b16 %v451
    %v1278 = vunpack.c.h.b16 %v451
    %v1279 = vunpack.c.l.b16 %v452
    %v1280 = vunpack.c.h.b16 %v452
    %v1281 = vunpack.c.l.b16 %v453
    %v1282 = vunpack.c.h.b16 %v453
    %v1283 = vunpack.c.l.b16 %v454
    %v1284 = vunpack.c.h.b16 %v454
    %v1285 = vunpack.c.l.b16 %v455
    %v1286 = vunpack.c.h.b16 %v455
    %v1287 = vunpack.c.l.b16 %v456
    %v1288 = vunpack.c.h.b16 %v456
    %v1289 = vunpack.c.l.b16 %v457
    %v1290 = vunpack.c.h.b16 %v457
    %v1291 = vunpack.c.l.b16 %v458
    %v1292 = vunpack.c.h.b16 %v458
    %v1293 = vunpack.c.l.b16 %v459
    %v1294 = vunpack.c.h.b16 %v459
    %v1295 = vunpack.c.l.b16 %v460
    %v1296 = vunpack.c.h.b16 %v460
    %v1297 = vunpack.c.l.b16 %v461
    %v1298 = vunpack.c.h.b16 %v461
    %v1299 = vunpack.c.l.b16 %v462
    %v1300 = vunpack.c.h.b16 %v462
    %v1301 = vunpack.c.l.b16 %v463
    %v1302 = vunpack.c.h.b16 %v463
    %v1303 = vunpack.c.l.b16 %v464
    %v1304 = vunpack.c.h.b16 %v464
    %v1305 = vunpack.c.l.b16 %v465
    %v1306 = vunpack.c.h.b16 %v465
    %v1307 = vunpack.c.l.b16 %v466
    %v1308 = vunpack.c.h.b16 %v466
    %v1309 = vunpack.c.l.b16 %v467
    %v1310 = vunpack.c.h.b16 %v467
    %v1311 = vunpack.c.l.b16 %v468
    %v1312 = vunpack.c.h.b16 %v468
    %v1313 = vunpack.c.l.b16 %v469
    %v1314 = vunpack.c.h.b16 %v469
    %v1315 = vunpack.c.l.b16 %v470
    %v1316 = vunpack.c.h.b16 %v470
    %v1317 = vunpack.c.l.b16 %v471
    %v1318 = vunpack.c.h.b16 %v471
    %v1319 = vunpack.c.l.b16 %v472
    %v1320 = vunpack.c.h.b16 %v472
    %v1321 = vunpack.c.l.b16 %v473
    %v1322 = vunpack.c.h.b16 %v473
    %v1323 = vunpack.c.l.b16 %v474
    %v1324 = vunpack.c.h.b16 %v474
    %v1325 = vunpack.c.l.b16 %v475
    %v1326 = vunpack.c.h.b16 %v475
    %v1327 = vunpack.c.l.b16 %v476
    %v1328 = vunpack.c.h.b16 %v476
    %v1329 = vunpack.c.l.b16 %v477
    %v1330 = vunpack.c.h.b16 %v477
    %v1331 = vunpack.c.l.b16 %v478
    %v1332 = vunpack.c.h.b16 %v478
    %v1333 = vunpack.c.l.b16 %v479
    %v1334 = vunpack.c.h.b16 %v479
    %v1335 = vunpack.c.l.b16 %v480
    %v1336 = vunpack.c.h.b16 %v480
    %v1337 = vunpack.c.l.b16 %v481
    %v1338 = vunpack.c.h.b16 %v481
    %v1339 = vunpack.c.l.b16 %v482
    %v1340 = vunpack.c.h.b16 %v482
    %v1341 = vunpack.c.l.b16 %v483
    %v1342 = vunpack.c.h.b16 %v483
    %v1343 = vunpack.c.l.b16 %v484
    %v1344 = vunpack.c.h.b16 %v484
    %v1345 = vunpack.c.l.b16 %v485
    %v1346 = vunpack.c.h.b16 %v485
    %v1347 = vunpack.c.l.b16 %v486
    %v1348 = vunpack.c.h.b16 %v486
    %v1349 = vunpack.c.l.b16 %v487
    %v1350 = vunpack.c.h.b16 %v487
    %v1351 = vunpack.c.l.b16 %v488
    %v1352 = vunpack.c.h.b16 %v488
    %v1353 = vunpack.c.l.b16 %v489
    %v1354 = vunpack.c.h.b16 %v489
    %v1355 = vunpack.c.l.b16 %v490
    %v1356 = vunpack.c.h.b16 %v490
    %v1357 = vunpack.c.l.b16 %v491
    %v1358 = vunpack.c.h.b16 %v491
    %v1359 = vunpack.c.l.b16 %v492
    %v1360 = vunpack.c.h.b16 %v492
    %v1361 = vunpack.c.l.b16 %v493
    %v1362 = vunpack.c.h.b16 %v493
    %v1363 = vunpack.c.l.b16 %v494
    %v1364 = vunpack.c.h.b16 %v494
    %v1365 = vunpack.c.l.b16 %v495
    %v1366 = vunpack.c.h.b16 %v495
    %v1367 = vunpack.c.l.b16 %v496
    %v1368 = vunpack.c.h.b16 %v496
    %v1369 = vunpack.c.l.b16 %v497
    %v1370 = vunpack.c.h.b16 %v497
    %v1371 = vunpack.c.l.b16 %v498
    %v1372 = vunpack.c.h.b16 %v498
    %v1373 = vunpack.c.l.b16 %v499
    %v1374 = vunpack.c.h.b16 %v499
    %v1375 = vunpack.c.l.b16 %v500
    %v1376 = vunpack.c.h.b16 %v500
    %v1377 = vunpack.c.l.b16 %v501
    %v1378 = vunpack.c.h.b16 %v501
    %v1379 = vunpack.c.l.b16 %v502
    %v1380 = vunpack.c.h.b16 %v502
    %v1381 = vunpack.c.l.b16 %v503
    %v1382 = vunpack.c.h.b16 %v503
    %v1383 = vunpack.c.l.b16 %v504
    %v1384 = vunpack.c.h.b16 %v504
    %v1385 = vunpack.c.l.b16 %v505
    %v1386 = vunpack.c.h.b16 %v505
    %v1387 = vunpack.c.l.b16 %v506
    %v1388 = vunpack.c.h.b16 %v506
    %v1389 = vunpack.c.l.b16 %v507
    %v1390 = vunpack.c.h.b16 %v507
    %v1391 = vunpack.c.l.b16 %v508
    %v1392 = vunpack.c.h.b16 %v508
    %v1393 = vunpack.c.l.b16 %v509
    %v1394 = vunpack.c.h.b16 %v509
    %v1395 = vunpack.c.l.b16 %v510
    %v1396 = vunpack.c.h.b16 %v510
    %v1397 = vunpack.c.l.b16 %v511
    %v1398 = vunpack.c.h.b16 %v511
    %v1399 = vunpack.c.l.b16 %v512
    %v1400 = vunpack.c.h.b16 %v512
    %v1401 = vunpack.c.l.b16 %v513
    %v1402 = vunpack.c.h.b16 %v513
    %v1403 = vunpack.c.l.b16 %v514
    %v1404 = vunpack.c.h.b16 %v514
    %v1405 = vunpack.c.l.b16 %v515
    %v1406 = vunpack.c.h.b16 %v515
    %v1407 = vunpack.c.l.b16 %v516
    %v1408 = vunpack.c.h.b16 %v516
    %v1409 = vunpack.c.l.b16 %v517
    %v1410 = vunpack.c.h.b16 %v517
    %v1411 = vunpack.c.l.b16 %v518
    %v1412 = vunpack.c.h.b16 %v518
    %v1413 = vunpack.c.l.b16 %v519
    %v1414 = vunpack.c.h.b16 %v519
    %v1415 = vunpack.c.l.b16 %v520
    %v1416 = vunpack.c.h.b16 %v520
    %v1417 = vpack.c.b16 %v847, %v841
    %v1418 = vpack.c.b16 %v848, %v842
    %v1419 = vpack.c.b16 %v849, %v843
    %v1420 = vpack.c.b16 %v850, %v844
    %v1421 = vpack.c.b16 %v851, %v845
    %v1422 = vpack.c.b16 %v852, %v846
    %v1423 = vpack.c.b16 %v859, %v853
    %v1424 = vpack.c.b16 %v860, %v854
    %v1425 = vpack.c.b16 %v861, %v855
    %v1426 = vpack.c.b16 %v862, %v856
    %v1427 = vpack.c.b16 %v863, %v857
    %v1428 = vpack.c.b16 %v864, %v858
    %v1429 = vpack.c.b16 %v871, %v865
    %v1430 = vpack.c.b16 %v872, %v866
    %v1431 = vpack.c.b16 %v873, %v867
    %v1432 = vpack.c.b16 %v874, %v868
    %v1433 = vpack.c.b16 %v875, %v869
    %v1434 = vpack.c.b16 %v876, %v870
    %v1435 = vpack.c.b16 %v883, %v877
    %v1436 = vpack.c.b16 %v884, %v878
    %v1437 = vpack.c.b16 %v885, %v879
    %v1438 = vpack.c.b16 %v886, %v880
    %v1439 = vpack.c.b16 %v887, %v881
    %v1440 = vpack.c.b16 %v888, %v882
    %v1441 = vpack.c.b16 %v895, %v889
    %v1442 = vpack.c.b16 %v896, %v890
    %v1443 = vpack.c.b16 %v897, %v891
    %v1444 = vpack.c.b16 %v898, %v892
    %v1445 = vpack.c.b16 %v899, %v893
    %v1446 = vpack.c.b16 %v900, %v894
    %v1447 = vpack.c.b16 %v907, %v901
    %v1448 = vpack.c.b16 %v908, %v902
    %v1449 = vpack.c.b16 %v909, %v903
    %v1450 = vpack.c.b16 %v910, %v904
    %v1451 = vpack.c.b16 %v911, %v905
    %v1452 = vpack.c.b16 %v912, %v906
    %v1453 = vpack.c.b16 %v919, %v913
    %v1454 = vpack.c.b16 %v920, %v914
    %v1455 = vpack.c.b16 %v921, %v915
    %v1456 = vpack.c.b16 %v922, %v916
    %v1457 = vpack.c.b16 %v923, %v917
    %v1458 = vpack.c.b16 %v924, %v918
    %v1459 = vpack.c.b16 %v931, %v925
    %v1460 = vpack.c.b16 %v932, %v926
    %v1461 = vpack.c.b16 %v933, %v927
    %v1462 = vpack.c.b16 %v934, %v928
    %v1463 = vpack.c.b16 %v935, %v929
    %v1464 = vpack.c.b16 %v936, %v930
    %v1465 = vpack.c.b16 %v943, %v937
    %v1466 = vpack.c.b16 %v944, %v938
    %v1467 = vpack.c.b16 %v945, %v939
    %v1468 = vpack.c.b16 %v946, %v940
    %v1469 = vpack.c.b16 %v947, %v941
    %v1470 = vpack.c.b16 %v948, %v942
    %v1471 = vpack.c.b16 %v955, %v949
    %v1472 = vpack.c.b16 %v956, %v950
    %v1473 = vpack.c.b16 %v957, %v951
    %v1474 = vpack.c.b16 %v958, %v952
    %v1475 = vpack.c.b16 %v959, %v953
    %v1476 = vpack.c.b16 %v960, %v954
    %v1477 = vpack.c.b16 %v967, %v961
    %v1478 = vpack.c.b16 %v968, %v962
    %v1479 = vpack.c.b16 %v969, %v963
    %v1480 = vpack.c.b16 %v970, %v964
    %v1481 = vpack.c.b16 %v971, %v965
    %v1482 = vpack.c.b16 %v972, %v966
    %v1483 = vpack.c.b16 %v979, %v973
    %v1484 = vpack.c.b16 %v980, %v974
    %v1485 = vpack.c.b16 %v981, %v975
    %v1486 = vpack.c.b16 %v982, %v976
    %v1487 = vpack.c.b16 %v983, %v977
    %v1488 = vpack.c.b16 %v984, %v978
    %v1489 = vpack.c.b16 %v991, %v985
    %v1490 = vpack.c.b16 %v992, %v986
    %v1491 = vpack.c.b16 %v993, %v987
    %v1492 = vpack.c.b16 %v994, %v988
    %v1493 = vpack.c.b16 %v995, %v989
    %v1494 = vpack.c.b16 %v996, %v990
    %v1495 = vpack.c.b16 %v1003, %v997
    %v1496 = vpack.c.b16 %v1004, %v998
    %v1497 = vpack.c.b16 %v1005, %v999
    %v1498 = vpack.c.b16 %v1006, %v1000
    %v1499 = vpack.c.b16 %v1007, %v1001
    %v1500 = vpack.c.b16 %v1008, %v1002
    %v1501 = vpack.c.b16 %v1015, %v1009
    %v1502 = vpack.c.b16 %v1016, %v1010
    %v1503 = vpack.c.b16 %v1017, %v1011
    %v1504 = vpack.c.b16 %v1018, %v1012
    %v1505 = vpack.c.b16 %v1019, %v1013
    %v1506 = vpack.c.b16 %v1020, %v1014
    %v1507 = vpack.c.b16 %v1027, %v1021
    %v1508 = vpack.c.b16 %v1028, %v1022
    %v1509 = vpack.c.b16 %v1029, %v1023
    %v1510 = vpack.c.b16 %v1030, %v1024
    %v1511 = vpack.c.b16 %v1031, %v1025
    %v1512 = vpack.c.b16 %v1032, %v1026
    %v1513 = vpack.c.b16 %v1039, %v1033
    %v1514 = vpack.c.b16 %v1040, %v1034
    %v1515 = vpack.c.b16 %v1041, %v1035
    %v1516 = vpack.c.b16 %v1042, %v1036
    %v1517 = vpack.c.b16 %v1043, %v1037
    %v1518 = vpack.c.b16 %v1044, %v1038
    %v1519 = vpack.c.b16 %v1051, %v1045
    %v1520 = vpack.c.b16 %v1052, %v1046
    %v1521 = vpack.c.b16 %v1053, %v1047
    %v1522 = vpack.c.b16 %v1054, %v1048
    %v1523 = vpack.c.b16 %v1055, %v1049
    %v1524 = vpack.c.b16 %v1056, %v1050
    %v1525 = vpack.c.b16 %v1063, %v1057
    %v1526 = vpack.c.b16 %v1064, %v1058
    %v1527 = vpack.c.b16 %v1065, %v1059
    %v1528 = vpack.c.b16 %v1066, %v1060
    %v1529 = vpack.c.b16 %v1067, %v1061
    %v1530 = vpack.c.b16 %v1068, %v1062
    %v1531 = vpack.c.b16 %v1075, %v1069
    %v1532 = vpack.c.b16 %v1076, %v1070
    %v1533 = vpack.c.b16 %v1077, %v1071
    %v1534 = vpack.c.b16 %v1078, %v1072
    %v1535 = vpack.c.b16 %v1079, %v1073
    %v1536 = vpack.c.b16 %v1080, %v1074
    %v1537 = vpack.c.b16 %v1087, %v1081
    %v1538 = vpack.c.b16 %v1088, %v1082
    %v1539 = vpack.c.b16 %v1089, %v1083
    %v1540 = vpack.c.b16 %v1090, %v1084
    %v1541 = vpack.c.b16 %v1091, %v1085
    %v1542 = vpack.c.b16 %v1092, %v1086
    %v1543 = vpack.c.b16 %v1099, %v1093
    %v1544 = vpack.c.b16 %v1100, %v1094
    %v1545 = vpack.c.b16 %v1101, %v1095
    %v1546 = vpack.c.b16 %v1102, %v1096
    %v1547 = vpack.c.b16 %v1103, %v1097
    %v1548 = vpack.c.b16 %v1104, %v1098
    %v1549 = vpack.c.b16 %v1111, %v1105
    %v1550 = vpack.c.b16 %v1112, %v1106
    %v1551 = vpack.c.b16 %v1113, %v1107
    %v1552 = vpack.c.b16 %v1114, %v1108
    %v1553 = vpack.c.b16 %v1115, %v1109
    %v1554 = vpack.c.b16 %v1116, %v1110
    %v1555 = vpack.c.b16 %v1123, %v1117
    %v1556 = vpack.c.b16 %v1124, %v1118
    %v1557 = vpack.c.b16 %v1125, %v1119
    %v1558 = vpack.c.b16 %v1126, %v1120
    %v1559 = vpack.c.b16 %v1127, %v1121
    %v1560 = vpack.c.b16 %v1128, %v1122
    %v1561 = vpack.c.b16 %v1135, %v1129
    %v1562 = vpack.c.b16 %v1136, %v1130
    %v1563 = vpack.c.b16 %v1137, %v1131
    %v1564 = vpack.c.b16 %v1138, %v1132
    %v1565 = vpack.c.b16 %v1139, %v1133
    %v1566 = vpack.c.b16 %v1140, %v1134
    %v1567 = vpack.c.b16 %v1147, %v1141
    %v1568 = vpack.c.b16 %v1148, %v1142
    %v1569 = vpack.c.b16 %v1149, %v1143
    %v1570 = vpack.c.b16 %v1150, %v1144
    %v1571 = vpack.c.b16 %v1151, %v1145
    %v1572 = vpack.c.b16 %v1152, %v1146
    %v1573 = vpack.c.b16 %v1159, %v1153
    %v1574 = vpack.c.b16 %v1160, %v1154
    %v1575 = vpack.c.b16 %v1161, %v1155
    %v1576 = vpack.c.b16 %v1162, %v1156
    %v1577 = vpack.c.b16 %v1163, %v1157
    %v1578 = vpack.c.b16 %v1164, %v1158
    %v1579 = vpack.c.b16 %v1171, %v1165
    %v1580 = vpack.c.b16 %v1172, %v1166
    %v1581 = vpack.c.b16 %v1173, %v1167
    %v1582 = vpack.c.b16 %v1174, %v1168
    %v1583 = vpack.c.b16 %v1175, %v1169
    %v1584 = vpack.c.b16 %v1176, %v1170
    %v1585 = vpack.c.b16 %v1183, %v1177
    %v1586 = vpack.c.b16 %v1184, %v1178
    %v1587 = vpack.c.b16 %v1185, %v1179
    %v1588 = vpack.c.b16 %v1186, %v1180
    %v1589 = vpack.c.b16 %v1187, %v1181
    %v1590 = vpack.c.b16 %v1188, %v1182
    %v1591 = vpack.c.b16 %v1195, %v1189
    %v1592 = vpack.c.b16 %v1196, %v1190
    %v1593 = vpack.c.b16 %v1197, %v1191
    %v1594 = vpack.c.b16 %v1198, %v1192
    %v1595 = vpack.c.b16 %v1199, %v1193
    %v1596 = vpack.c.b16 %v1200, %v1194
    %v1597 = vpack.c.b16 %v1207, %v1201
    %v1598 = vpack.c.b16 %v1208, %v1202
    %v1599 = vpack.c.b16 %v1209, %v1203
    %v1600 = vpack.c.b16 %v1210, %v1204
    %v1601 = vpack.c.b16 %v1211, %v1205
    %v1602 = vpack.c.b16 %v1212, %v1206
    %v1603 = vpack.c.b16 %v1219, %v1213
    %v1604 = vpack.c.b16 %v1220, %v1214
    %v1605 = vpack.c.b16 %v1221, %v1215
    %v1606 = vpack.c.b16 %v1222, %v1216
    %v1607 = vpack.c.b16 %v1223, %v1217
    %v1608 = vpack.c.b16 %v1224, %v1218
    %v1609 = vpack.c.b16 %v1231, %v1225
    %v1610 = vpack.c.b16 %v1232, %v1226
    %v1611 = vpack.c.b16 %v1233, %v1227
    %v1612 = vpack.c.b16 %v1234, %v1228
    %v1613 = vpack.c.b16 %v1235, %v1229
    %v1614 = vpack.c.b16 %v1236, %v1230
    %v1615 = vpack.c.b16 %v1243, %v1237
    %v1616 = vpack.c.b16 %v1244, %v1238
    %v1617 = vpack.c.b16 %v1245, %v1239
    %v1618 = vpack.c.b16 %v1246, %v1240
    %v1619 = vpack.c.b16 %v1247, %v1241
    %v1620 = vpack.c.b16 %v1248, %v1242
    %v1621 = vpack.c.b16 %v1255, %v1249
    %v1622 = vpack.c.b16 %v1256, %v1250
    %v1623 = vpack.c.b16 %v1257, %v1251
    %v1624 = vpack.c.b16 %v1258, %v1252
    %v1625 = vpack.c.b16 %v1259, %v1253
    %v1626 = vpack.c.b16 %v1260, %v1254
    %v1627 = vpack.c.b16 %v1267, %v1261
    %v1628 = vpack.c.b16 %v1268, %v1262
    %v1629 = vpack.c.b16 %v1269, %v1263
    %v1630 = vpack.c.b16 %v1270, %v1264
    %v1631 = vpack.c.b16 %v1271, %v1265
    %v1632 = vpack.c.b16 %v1272, %v1266
    %v1633 = vpack.c.b16 %v1279, %v1273
    %v1634 = vpack.c.b16 %v1280, %v1274
    %v1635 = vpack.c.b16 %v1281, %v1275
    %v1636 = vpack.c.b16 %v1282, %v1276
    %v1637 = vpack.c.b16 %v1283, %v1277
    %v1638 = vpack.c.b16 %v1284, %v1278
    %v1639 = vpack.c.b16 %v1291, %v1285
    %v1640 = vpack.c.b16 %v1292, %v1286
    %v1641 = vpack.c.b16 %v1293, %v1287
    %v1642 = vpack.c.b16 %v1294, %v1288
    %v1643 = vpack.c.b16 %v1295, %v1289
    %v1644 = vpack.c.b16 %v1296, %v1290
    %v1645 = vpack.c.b16 %v1303, %v1297
    %v1646 = vpack.c.b16 %v1304, %v1298
    %v1647 = vpack.c.b16 %v1305, %v1299
    %v1648 = vpack.c.b16 %v1306, %v1300
    %v1649 = vpack.c.b16 %v1307, %v1301
    %v1650 = vpack.c.b16 %v1308, %v1302
    %v1651 = vpack.c.b16 %v1315, %v1309
    %v1652 = vpack.c.b16 %v1316, %v1310
    %v1653 = vpack.c.b16 %v1317, %v1311
    %v1654 = vpack.c.b16 %v1318, %v1312
    %v1655 = vpack.c.b16 %v1319, %v1313
    %v1656 = vpack.c.b16 %v1320, %v1314
    %v1657 = vpack.c.b16 %v1327, %v1321
    %v1658 = vpack.c.b16 %v1328, %v1322
    %v1659 = vpack.c.b16 %v1329, %v1323
    %v1660 = vpack.c.b16 %v1330, %v1324
    %v1661 = vpack.c.b16 %v1331, %v1325
    %v1662 = vpack.c.b16 %v1332, %v1326
    %v1663 = vpack.c.b16 %v1339, %v1333
    %v1664 = vpack.c.b16 %v1340, %v1334
    %v1665 = vpack.c.b16 %v1341, %v1335
    %v1666 = vpack.c.b16 %v1342, %v1336
    %v1667 = vpack.c.b16 %v1343, %v1337
    %v1668 = vpack.c.b16 %v1344, %v1338
    %v1669 = vpack.c.b16 %v1351, %v1345
    %v1670 = vpack.c.b16 %v1352, %v1346
    %v1671 = vpack.c.b16 %v1353, %v1347
    %v1672 = vpack.c.b16 %v1354, %v1348
    %v1673 = vpack.c.b16 %v1355, %v1349
    %v1674 = vpack.c.b16 %v1356, %v1350
    %v1675 = vpack.c.b16 %v1363, %v1357
    %v1676 = vpack.c.b16 %v1364, %v1358
    %v1677 = vpack.c.b16 %v1365, %v1359
    %v1678 = vpack.c.b16 %v1366, %v1360
    %v1679 = vpack.c.b16 %v1367, %v1361
    %v1680 = vpack.c.b16 %v1368, %v1362
    %v1681 = vpack.c.b16 %v1375, %v1369
    %v1682 = vpack.c.b16 %v1376, %v1370
    %v1683 = vpack.c.b16 %v1377, %v1371
    %v1684 = vpack.c.b16 %v1378, %v1372
    %v1685 = vpack.c.b16 %v1379, %v1373
    %v1686 = vpack.c.b16 %v1380, %v1374
    %v1687 = vpack.c.b16 %v1387, %v1381
    %v1688 = vpack.c.b16 %v1388, %v1382
    %v1689 = vpack.c.b16 %v1389, %v1383
    %v1690 = vpack.c.b16 %v1390, %v1384
    %v1691 = vpack.c.b16 %v1391, %v1385
    %v1692 = vpack.c.b16 %v1392, %v1386
    %v1693 = vpack.c.b16 %v1399, %v1393
    %v1694 = vpack.c.b16 %v1400, %v1394
    %v1695 = vpack.c.b16 %v1401, %v1395
    %v1696 = vpack.c.b16 %v1402, %v1396
    %v1697 = vpack.c.b16 %v1403, %v1397
    %v1698 = vpack.c.b16 %v1404, %v1398
    %v1699 = vpack.c.b16 %v1411, %v1405
    %v1700 = vpack.c.b16 %v1412, %v1406
    %v1701 = vpack.c.b16 %v1413, %v1407
    %v1702 = vpack.c.b16 %v1414, %v1408
    %v1703 = vpack.c.b16 %v1415, %v1409
    %v1704 = vpack.c.b16 %v1416, %v1410
    %1993 = vmatprep.subr.bf16.mxu0 %v1460
    %1994 = vmatpush1.bf16.msra.mxu0 %v1459
    %1995 = vmatprep.subr.bf16.mxu0 %v1454
    %1996 = vmatpush1.bf16.msra.mxu0 %v1453
    %1997 = vmatprep.subr.bf16.mxu0 %v1448
    %1998 = vmatpush1.bf16.msra.mxu0 %v1447
    %1999 = vmatprep.subr.bf16.mxu0 %v1442
    %2000 = vmatpush1.bf16.msra.mxu0 %v1441
    %2001 = vmatprep.subr.bf16.mxu0 %v1436
    %2002 = vmatpush1.bf16.msra.mxu0 %v1435
    %2003 = vmatprep.subr.bf16.mxu0 %v1430
    %2004 = vmatpush1.bf16.msra.mxu0 %v1429
    %2005 = vmatprep.subr.bf16.mxu0 %v1424
    %2006 = vmatpush1.bf16.msra.mxu0 %v1423
    %2007 = vmatprep.subr.bf16.mxu0 %v1418
    %2008 = vmatpush1.bf16.msra.mxu0 %v1417
    %2009 = vmatprep.subr.bf16.mxu0 %v1508
    %2010 = vmatpush2.bf16.msra.mxu0 %v1507
    %2011 = vmatprep.subr.bf16.mxu0 %v1502
    %2012 = vmatpush2.bf16.msra.mxu0 %v1501
    %2013 = vmatprep.subr.bf16.mxu0 %v1496
    %2014 = vmatpush2.bf16.msra.mxu0 %v1495
    %2015 = vmatprep.subr.bf16.mxu0 %v1490
    %2016 = vmatpush2.bf16.msra.mxu0 %v1489
    %2017 = vmatprep.subr.bf16.mxu0 %v1484
    %2018 = vmatpush2.bf16.msra.mxu0 %v1483
    %2019 = vmatprep.subr.bf16.mxu0 %v1478
    %2020 = vmatpush2.bf16.msra.mxu0 %v1477
    %2021 = vmatprep.subr.bf16.mxu0 %v1472
    %2022 = vmatpush2.bf16.msra.mxu0 %v1471
    %2023 = vmatprep.subr.bf16.mxu0 %v1466
    %2024 = vmatpush2.bf16.msra.mxu0 %v1465
    %2025 = vmatprep.mubr.bf16.mxu0 %v186
    %2026 = vmatmul.mubr.bf16.gmra.mxu0 %v185
    %v2027 = vpop.f32.mrf.mxu0
    %v2028 = vadd.f32 %v526, %v2027
    %v2029 = vpop.f32.mrf.mxu0
    %v2030 = vadd.f32 %v530, %v2029
    %v2031 = vpop.f32.mrf.mxu0
    %v2032 = vadd.f32 %v526, %v2031
    %v2033 = vpop.f32.mrf.mxu0
    %v2034 = vadd.f32 %v530, %v2033
    %2035 = vmatprep.mubr.bf16.mxu0 %v192
    %2036 = vmatmul.mubr.bf16.gmra.mxu0 %v191
    %v2037 = vpop.f32.mrf.mxu0
    %v2038 = vadd.f32 %v526, %v2037
    %v2039 = vpop.f32.mrf.mxu0
    %v2040 = vadd.f32 %v530, %v2039
    %v2041 = vpop.f32.mrf.mxu0
    %v2042 = vadd.f32 %v526, %v2041
    %v2043 = vpop.f32.mrf.mxu0
    %v2044 = vadd.f32 %v530, %v2043
    %2045 = vmatprep.mubr.bf16.mxu0 %v198
    %2046 = vmatmul.mubr.bf16.gmra.mxu0 %v197
    %v2047 = vpop.f32.mrf.mxu0
    %v2048 = vadd.f32 %v526, %v2047
    %v2049 = vpop.f32.mrf.mxu0
    %v2050 = vadd.f32 %v530, %v2049
    %v2051 = vpop.f32.mrf.mxu0
    %v2052 = vadd.f32 %v526, %v2051
    %v2053 = vpop.f32.mrf.mxu0
    %v2054 = vadd.f32 %v530, %v2053
    %2055 = vmatprep.mubr.bf16.mxu0 %v204
    %2056 = vmatmul.mubr.bf16.gmra.mxu0 %v203
    %v2057 = vpop.f32.mrf.mxu0
    %v2058 = vadd.f32 %v526, %v2057
    %v2059 = vpop.f32.mrf.mxu0
    %v2060 = vadd.f32 %v530, %v2059
    %v2061 = vpop.f32.mrf.mxu0
    %v2062 = vadd.f32 %v526, %v2061
    %v2063 = vpop.f32.mrf.mxu0
    %v2064 = vadd.f32 %v530, %v2063
    %2065 = vmatprep.mubr.bf16.mxu0 %v210
    %2066 = vmatmul.mubr.bf16.gmra.mxu0 %v209
    %v2067 = vpop.f32.mrf.mxu0
    %v2068 = vadd.f32 %v526, %v2067
    %v2069 = vpop.f32.mrf.mxu0
    %v2070 = vadd.f32 %v530, %v2069
    %v2071 = vpop.f32.mrf.mxu0
    %v2072 = vadd.f32 %v526, %v2071
    %v2073 = vpop.f32.mrf.mxu0
    %v2074 = vadd.f32 %v530, %v2073
    %2075 = vmatprep.mubr.bf16.mxu0 %v216
    %2076 = vmatmul.mubr.bf16.gmra.mxu0 %v215
    %v2077 = vpop.f32.mrf.mxu0
    %v2078 = vadd.f32 %v526, %v2077
    %v2079 = vpop.f32.mrf.mxu0
    %v2080 = vadd.f32 %v530, %v2079
    %v2081 = vpop.f32.mrf.mxu0
    %v2082 = vadd.f32 %v526, %v2081
    %v2083 = vpop.f32.mrf.mxu0
    %v2084 = vadd.f32 %v530, %v2083
    %2085 = vmatprep.mubr.bf16.mxu0 %v222
    %2086 = vmatmul.mubr.bf16.gmra.mxu0 %v221
    %v2087 = vpop.f32.mrf.mxu0
    %v2088 = vadd.f32 %v526, %v2087
    %v2089 = vpop.f32.mrf.mxu0
    %v2090 = vadd.f32 %v530, %v2089
    %v2091 = vpop.f32.mrf.mxu0
    %v2092 = vadd.f32 %v526, %v2091
    %v2093 = vpop.f32.mrf.mxu0
    %v2094 = vadd.f32 %v530, %v2093
    %2095 = vmatprep.mubr.bf16.mxu0 %v228
    %2096 = vmatmul.mubr.bf16.gmra.mxu0 %v227
    %v2097 = vpop.f32.mrf.mxu0
    %v2098 = vadd.f32 %v526, %v2097
    %v2099 = vpop.f32.mrf.mxu0
    %v2100 = vadd.f32 %v530, %v2099
    %v2101 = vpop.f32.mrf.mxu0
    %v2102 = vadd.f32 %v526, %v2101
    %v2103 = vpop.f32.mrf.mxu0
    %v2104 = vadd.f32 %v530, %v2103
    %2105 = vdwg.mxu0
    %2106 = vmatprep.subr.bf16.mxu0 %v1556
    %2107 = vmatpush1.bf16.msra.mxu0 %v1555
    %2108 = vmatprep.subr.bf16.mxu0 %v1550
    %2109 = vmatpush1.bf16.msra.mxu0 %v1549
    %2110 = vmatprep.subr.bf16.mxu0 %v1544
    %2111 = vmatpush1.bf16.msra.mxu0 %v1543
    %2112 = vmatprep.subr.bf16.mxu0 %v1538
    %2113 = vmatpush1.bf16.msra.mxu0 %v1537
    %2114 = vmatprep.subr.bf16.mxu0 %v1532
    %2115 = vmatpush1.bf16.msra.mxu0 %v1531
    %2116 = vmatprep.subr.bf16.mxu0 %v1526
    %2117 = vmatpush1.bf16.msra.mxu0 %v1525
    %2118 = vmatprep.subr.bf16.mxu0 %v1520
    %2119 = vmatpush1.bf16.msra.mxu0 %v1519
    %2120 = vmatprep.subr.bf16.mxu0 %v1514
    %2121 = vmatpush1.bf16.msra.mxu0 %v1513
    %2122 = vmatprep.subr.bf16.mxu0 %v1604
    %2123 = vmatpush2.bf16.msra.mxu0 %v1603
    %2124 = vmatprep.subr.bf16.mxu0 %v1598
    %2125 = vmatpush2.bf16.msra.mxu0 %v1597
    %2126 = vmatprep.subr.bf16.mxu0 %v1592
    %2127 = vmatpush2.bf16.msra.mxu0 %v1591
    %2128 = vmatprep.subr.bf16.mxu0 %v1586
    %2129 = vmatpush2.bf16.msra.mxu0 %v1585
    %2130 = vmatprep.subr.bf16.mxu0 %v1580
    %2131 = vmatpush2.bf16.msra.mxu0 %v1579
    %2132 = vmatprep.subr.bf16.mxu0 %v1574
    %2133 = vmatpush2.bf16.msra.mxu0 %v1573
    %2134 = vmatprep.subr.bf16.mxu0 %v1568
    %2135 = vmatpush2.bf16.msra.mxu0 %v1567
    %2136 = vmatprep.subr.bf16.mxu0 %v1562
    %2137 = vmatpush2.bf16.msra.mxu0 %v1561
    %2138 = vmatprep.mubr.bf16.mxu0 %v188
    %2139 = vmatmul.mubr.bf16.gmra.mxu0 %v187
    %v2140 = vpop.f32.mrf.mxu0
    %v2141 = vadd.f32 %v2028, %v2140
    %v2142 = vpop.f32.mrf.mxu0
    %v2143 = vadd.f32 %v2030, %v2142
    %v2144 = vpop.f32.mrf.mxu0
    %v2145 = vadd.f32 %v2032, %v2144
    %v2146 = vpop.f32.mrf.mxu0
    %v2147 = vadd.f32 %v2034, %v2146
    %2148 = vmatprep.mubr.bf16.mxu0 %v194
    %2149 = vmatmul.mubr.bf16.gmra.mxu0 %v193
    %v2150 = vpop.f32.mrf.mxu0
    %v2151 = vadd.f32 %v2038, %v2150
    %v2152 = vpop.f32.mrf.mxu0
    %v2153 = vadd.f32 %v2040, %v2152
    %v2154 = vpop.f32.mrf.mxu0
    %v2155 = vadd.f32 %v2042, %v2154
    %v2156 = vpop.f32.mrf.mxu0
    %v2157 = vadd.f32 %v2044, %v2156
    %2158 = vmatprep.mubr.bf16.mxu0 %v200
    %2159 = vmatmul.mubr.bf16.gmra.mxu0 %v199
    %v2160 = vpop.f32.mrf.mxu0
    %v2161 = vadd.f32 %v2048, %v2160
    %v2162 = vpop.f32.mrf.mxu0
    %v2163 = vadd.f32 %v2050, %v2162
    %v2164 = vpop.f32.mrf.mxu0
    %v2165 = vadd.f32 %v2052, %v2164
    %v2166 = vpop.f32.mrf.mxu0
    %v2167 = vadd.f32 %v2054, %v2166
    %2168 = vmatprep.mubr.bf16.mxu0 %v206
    %2169 = vmatmul.mubr.bf16.gmra.mxu0 %v205
    %v2170 = vpop.f32.mrf.mxu0
    %v2171 = vadd.f32 %v2058, %v2170
    %v2172 = vpop.f32.mrf.mxu0
    %v2173 = vadd.f32 %v2060, %v2172
    %v2174 = vpop.f32.mrf.mxu0
    %v2175 = vadd.f32 %v2062, %v2174
    %v2176 = vpop.f32.mrf.mxu0
    %v2177 = vadd.f32 %v2064, %v2176
    %2178 = vmatprep.mubr.bf16.mxu0 %v212
    %2179 = vmatmul.mubr.bf16.gmra.mxu0 %v211
    %v2180 = vpop.f32.mrf.mxu0
    %v2181 = vadd.f32 %v2068, %v2180
    %v2182 = vpop.f32.mrf.mxu0
    %v2183 = vadd.f32 %v2070, %v2182
    %v2184 = vpop.f32.mrf.mxu0
    %v2185 = vadd.f32 %v2072, %v2184
    %v2186 = vpop.f32.mrf.mxu0
    %v2187 = vadd.f32 %v2074, %v2186
    %2188 = vmatprep.mubr.bf16.mxu0 %v218
    %2189 = vmatmul.mubr.bf16.gmra.mxu0 %v217
    %v2190 = vpop.f32.mrf.mxu0
    %v2191 = vadd.f32 %v2078, %v2190
    %v2192 = vpop.f32.mrf.mxu0
    %v2193 = vadd.f32 %v2080, %v2192
    %v2194 = vpop.f32.mrf.mxu0
    %v2195 = vadd.f32 %v2082, %v2194
    %v2196 = vpop.f32.mrf.mxu0
    %v2197 = vadd.f32 %v2084, %v2196
    %2198 = vmatprep.mubr.bf16.mxu0 %v224
    %2199 = vmatmul.mubr.bf16.gmra.mxu0 %v223
    %v2200 = vpop.f32.mrf.mxu0
    %v2201 = vadd.f32 %v2088, %v2200
    %v2202 = vpop.f32.mrf.mxu0
    %v2203 = vadd.f32 %v2090, %v2202
    %v2204 = vpop.f32.mrf.mxu0
    %v2205 = vadd.f32 %v2092, %v2204
    %v2206 = vpop.f32.mrf.mxu0
    %v2207 = vadd.f32 %v2094, %v2206
    %2208 = vmatprep.mubr.bf16.mxu0 %v230
    %2209 = vmatmul.mubr.bf16.gmra.mxu0 %v229
    %v2210 = vpop.f32.mrf.mxu0
    %v2211 = vadd.f32 %v2098, %v2210
    %v2212 = vpop.f32.mrf.mxu0
    %v2213 = vadd.f32 %v2100, %v2212
    %v2214 = vpop.f32.mrf.mxu0
    %v2215 = vadd.f32 %v2102, %v2214
    %v2216 = vpop.f32.mrf.mxu0
    %v2217 = vadd.f32 %v2104, %v2216
    %2218 = vdwg.mxu0
    %2219 = vmatprep.subr.bf16.mxu0 %v1652
    %2220 = vmatpush1.bf16.msra.mxu0 %v1651
    %2221 = vmatprep.subr.bf16.mxu0 %v1646
    %2222 = vmatpush1.bf16.msra.mxu0 %v1645
    %2223 = vmatprep.subr.bf16.mxu0 %v1640
    %2224 = vmatpush1.bf16.msra.mxu0 %v1639
    %2225 = vmatprep.subr.bf16.mxu0 %v1634
    %2226 = vmatpush1.bf16.msra.mxu0 %v1633
    %2227 = vmatprep.subr.bf16.mxu0 %v1628
    %2228 = vmatpush1.bf16.msra.mxu0 %v1627
    %2229 = vmatprep.subr.bf16.mxu0 %v1622
    %2230 = vmatpush1.bf16.msra.mxu0 %v1621
    %2231 = vmatprep.subr.bf16.mxu0 %v1616
    %2232 = vmatpush1.bf16.msra.mxu0 %v1615
    %2233 = vmatprep.subr.bf16.mxu0 %v1610
    %2234 = vmatpush1.bf16.msra.mxu0 %v1609
    %2235 = vmatprep.subr.bf16.mxu0 %v1700
    %2236 = vmatpush2.bf16.msra.mxu0 %v1699
    %2237 = vmatprep.subr.bf16.mxu0 %v1694
    %2238 = vmatpush2.bf16.msra.mxu0 %v1693
    %2239 = vmatprep.subr.bf16.mxu0 %v1688
    %2240 = vmatpush2.bf16.msra.mxu0 %v1687
    %2241 = vmatprep.subr.bf16.mxu0 %v1682
    %2242 = vmatpush2.bf16.msra.mxu0 %v1681
    %2243 = vmatprep.subr.bf16.mxu0 %v1676
    %2244 = vmatpush2.bf16.msra.mxu0 %v1675
    %2245 = vmatprep.subr.bf16.mxu0 %v1670
    %2246 = vmatpush2.bf16.msra.mxu0 %v1669
    %2247 = vmatprep.subr.bf16.mxu0 %v1664
    %2248 = vmatpush2.bf16.msra.mxu0 %v1663
    %2249 = vmatprep.subr.bf16.mxu0 %v1658
    %2250 = vmatpush2.bf16.msra.mxu0 %v1657
    %2251 = vmatprep.mubr.bf16.mxu0 %v190
    %2252 = vmatmul.mubr.bf16.gmra.mxu0 %v189
    %v2253 = vpop.f32.mrf.mxu0
    %v2254 = vadd.f32 %v2141, %v2253
    %v2255 = vpop.f32.mrf.mxu0
    %v2256 = vadd.f32 %v2143, %v2255
    %v2257 = vpop.f32.mrf.mxu0
    %v2258 = vadd.f32 %v2145, %v2257
    %v2259 = vpop.f32.mrf.mxu0
    %v2260 = vadd.f32 %v2147, %v2259
    %2261 = vmatprep.mubr.bf16.mxu0 %v196
    %2262 = vmatmul.mubr.bf16.gmra.mxu0 %v195
    %v2263 = vpop.f32.mrf.mxu0
    %v2264 = vadd.f32 %v2151, %v2263
    %v2265 = vpop.f32.mrf.mxu0
    %v2266 = vadd.f32 %v2153, %v2265
    %v2267 = vpop.f32.mrf.mxu0
    %v2268 = vadd.f32 %v2155, %v2267
    %v2269 = vpop.f32.mrf.mxu0
    %v2270 = vadd.f32 %v2157, %v2269
    %2271 = vmatprep.mubr.bf16.mxu0 %v202
    %2272 = vmatmul.mubr.bf16.gmra.mxu0 %v201
    %v2273 = vpop.f32.mrf.mxu0
    %v2274 = vadd.f32 %v2161, %v2273
    %v2275 = vpop.f32.mrf.mxu0
    %v2276 = vadd.f32 %v2163, %v2275
    %v2277 = vpop.f32.mrf.mxu0
    %v2278 = vadd.f32 %v2165, %v2277
    %v2279 = vpop.f32.mrf.mxu0
    %v2280 = vadd.f32 %v2167, %v2279
    %2281 = vmatprep.mubr.bf16.mxu0 %v208
    %2282 = vmatmul.mubr.bf16.gmra.mxu0 %v207
    %v2283 = vpop.f32.mrf.mxu0
    %v2284 = vadd.f32 %v2171, %v2283
    %v2285 = vpop.f32.mrf.mxu0
    %v2286 = vadd.f32 %v2173, %v2285
    %v2287 = vpop.f32.mrf.mxu0
    %v2288 = vadd.f32 %v2175, %v2287
    %v2289 = vpop.f32.mrf.mxu0
    %v2290 = vadd.f32 %v2177, %v2289
    %2291 = vmatprep.mubr.bf16.mxu0 %v214
    %2292 = vmatmul.mubr.bf16.gmra.mxu0 %v213
    %v2293 = vpop.f32.mrf.mxu0
    %v2294 = vadd.f32 %v2181, %v2293
    %v2295 = vpop.f32.mrf.mxu0
    %v2296 = vadd.f32 %v2183, %v2295
    %v2297 = vpop.f32.mrf.mxu0
    %v2298 = vadd.f32 %v2185, %v2297
    %v2299 = vpop.f32.mrf.mxu0
    %v2300 = vadd.f32 %v2187, %v2299
    %2301 = vmatprep.mubr.bf16.mxu0 %v220
    %2302 = vmatmul.mubr.bf16.gmra.mxu0 %v219
    %v2303 = vpop.f32.mrf.mxu0
    %v2304 = vadd.f32 %v2191, %v2303
    %v2305 = vpop.f32.mrf.mxu0
    %v2306 = vadd.f32 %v2193, %v2305
    %v2307 = vpop.f32.mrf.mxu0
    %v2308 = vadd.f32 %v2195, %v2307
    %v2309 = vpop.f32.mrf.mxu0
    %v2310 = vadd.f32 %v2197, %v2309
    %2311 = vmatprep.mubr.bf16.mxu0 %v226
    %2312 = vmatmul.mubr.bf16.gmra.mxu0 %v225
    %v2313 = vpop.f32.mrf.mxu0
    %v2314 = vadd.f32 %v2201, %v2313
    %v2315 = vpop.f32.mrf.mxu0
    %v2316 = vadd.f32 %v2203, %v2315
    %v2317 = vpop.f32.mrf.mxu0
    %v2318 = vadd.f32 %v2205, %v2317
    %v2319 = vpop.f32.mrf.mxu0
    %v2320 = vadd.f32 %v2207, %v2319
    %2321 = vmatprep.mubr.bf16.mxu0 %v232
    %2322 = vmatmul.mubr.bf16.gmra.mxu0 %v231
    %v2323 = vpop.f32.mrf.mxu0
    %v2324 = vadd.f32 %v2211, %v2323
    %v2325 = vpop.f32.mrf.mxu0
    %v2326 = vadd.f32 %v2213, %v2325
    %v2327 = vpop.f32.mrf.mxu0
    %v2328 = vadd.f32 %v2215, %v2327
    %v2329 = vpop.f32.mrf.mxu0
    %v2330 = vadd.f32 %v2217, %v2329
    %2331 = vdwg.mxu0
    %2332 = vmatprep.subr.bf16.mxu0 %v1462
    %2333 = vmatpush1.bf16.msra.mxu0 %v1461
    %2334 = vmatprep.subr.bf16.mxu0 %v1456
    %2335 = vmatpush1.bf16.msra.mxu0 %v1455
    %2336 = vmatprep.subr.bf16.mxu0 %v1450
    %2337 = vmatpush1.bf16.msra.mxu0 %v1449
    %2338 = vmatprep.subr.bf16.mxu0 %v1444
    %2339 = vmatpush1.bf16.msra.mxu0 %v1443
    %2340 = vmatprep.subr.bf16.mxu0 %v1438
    %2341 = vmatpush1.bf16.msra.mxu0 %v1437
    %2342 = vmatprep.subr.bf16.mxu0 %v1432
    %2343 = vmatpush1.bf16.msra.mxu0 %v1431
    %2344 = vmatprep.subr.bf16.mxu0 %v1426
    %2345 = vmatpush1.bf16.msra.mxu0 %v1425
    %2346 = vmatprep.subr.bf16.mxu0 %v1420
    %2347 = vmatpush1.bf16.msra.mxu0 %v1419
    %2348 = vmatprep.subr.bf16.mxu0 %v1510
    %2349 = vmatpush2.bf16.msra.mxu0 %v1509
    %2350 = vmatprep.subr.bf16.mxu0 %v1504
    %2351 = vmatpush2.bf16.msra.mxu0 %v1503
    %2352 = vmatprep.subr.bf16.mxu0 %v1498
    %2353 = vmatpush2.bf16.msra.mxu0 %v1497
    %2354 = vmatprep.subr.bf16.mxu0 %v1492
    %2355 = vmatpush2.bf16.msra.mxu0 %v1491
    %2356 = vmatprep.subr.bf16.mxu0 %v1486
    %2357 = vmatpush2.bf16.msra.mxu0 %v1485
    %2358 = vmatprep.subr.bf16.mxu0 %v1480
    %2359 = vmatpush2.bf16.msra.mxu0 %v1479
    %2360 = vmatprep.subr.bf16.mxu0 %v1474
    %2361 = vmatpush2.bf16.msra.mxu0 %v1473
    %2362 = vmatprep.subr.bf16.mxu0 %v1468
    %2363 = vmatpush2.bf16.msra.mxu0 %v1467
    %2364 = vmatprep.mubr.bf16.mxu0 %v186
    %2365 = vmatmul.mubr.bf16.gmra.mxu0 %v185
    %v2366 = vpop.f32.mrf.mxu0
    %v2367 = vadd.f32 %v534, %v2366
    %v2368 = vpop.f32.mrf.mxu0
    %v2369 = vadd.f32 %v538, %v2368
    %v2370 = vpop.f32.mrf.mxu0
    %v2371 = vadd.f32 %v534, %v2370
    %v2372 = vpop.f32.mrf.mxu0
    %v2373 = vadd.f32 %v538, %v2372
    %2374 = vmatprep.mubr.bf16.mxu0 %v192
    %2375 = vmatmul.mubr.bf16.gmra.mxu0 %v191
    %v2376 = vpop.f32.mrf.mxu0
    %v2377 = vadd.f32 %v534, %v2376
    %v2378 = vpop.f32.mrf.mxu0
    %v2379 = vadd.f32 %v538, %v2378
    %v2380 = vpop.f32.mrf.mxu0
    %v2381 = vadd.f32 %v534, %v2380
    %v2382 = vpop.f32.mrf.mxu0
    %v2383 = vadd.f32 %v538, %v2382
    %2384 = vmatprep.mubr.bf16.mxu0 %v198
    %2385 = vmatmul.mubr.bf16.gmra.mxu0 %v197
    %v2386 = vpop.f32.mrf.mxu0
    %v2387 = vadd.f32 %v534, %v2386
    %v2388 = vpop.f32.mrf.mxu0
    %v2389 = vadd.f32 %v538, %v2388
    %v2390 = vpop.f32.mrf.mxu0
    %v2391 = vadd.f32 %v534, %v2390
    %v2392 = vpop.f32.mrf.mxu0
    %v2393 = vadd.f32 %v538, %v2392
    %2394 = vmatprep.mubr.bf16.mxu0 %v204
    %2395 = vmatmul.mubr.bf16.gmra.mxu0 %v203
    %v2396 = vpop.f32.mrf.mxu0
    %v2397 = vadd.f32 %v534, %v2396
    %v2398 = vpop.f32.mrf.mxu0
    %v2399 = vadd.f32 %v538, %v2398
    %v2400 = vpop.f32.mrf.mxu0
    %v2401 = vadd.f32 %v534, %v2400
    %v2402 = vpop.f32.mrf.mxu0
    %v2403 = vadd.f32 %v538, %v2402
    %2404 = vmatprep.mubr.bf16.mxu0 %v210
    %2405 = vmatmul.mubr.bf16.gmra.mxu0 %v209
    %v2406 = vpop.f32.mrf.mxu0
    %v2407 = vadd.f32 %v534, %v2406
    %v2408 = vpop.f32.mrf.mxu0
    %v2409 = vadd.f32 %v538, %v2408
    %v2410 = vpop.f32.mrf.mxu0
    %v2411 = vadd.f32 %v534, %v2410
    %v2412 = vpop.f32.mrf.mxu0
    %v2413 = vadd.f32 %v538, %v2412
    %2414 = vmatprep.mubr.bf16.mxu0 %v216
    %2415 = vmatmul.mubr.bf16.gmra.mxu0 %v215
    %v2416 = vpop.f32.mrf.mxu0
    %v2417 = vadd.f32 %v534, %v2416
    %v2418 = vpop.f32.mrf.mxu0
    %v2419 = vadd.f32 %v538, %v2418
    %v2420 = vpop.f32.mrf.mxu0
    %v2421 = vadd.f32 %v534, %v2420
    %v2422 = vpop.f32.mrf.mxu0
    %v2423 = vadd.f32 %v538, %v2422
    %2424 = vmatprep.mubr.bf16.mxu0 %v222
    %2425 = vmatmul.mubr.bf16.gmra.mxu0 %v221
    %v2426 = vpop.f32.mrf.mxu0
    %v2427 = vadd.f32 %v534, %v2426
    %v2428 = vpop.f32.mrf.mxu0
    %v2429 = vadd.f32 %v538, %v2428
    %v2430 = vpop.f32.mrf.mxu0
    %v2431 = vadd.f32 %v534, %v2430
    %v2432 = vpop.f32.mrf.mxu0
    %v2433 = vadd.f32 %v538, %v2432
    %2434 = vmatprep.mubr.bf16.mxu0 %v228
    %2435 = vmatmul.mubr.bf16.gmra.mxu0 %v227
    %v2436 = vpop.f32.mrf.mxu0
    %v2437 = vadd.f32 %v534, %v2436
    %v2438 = vpop.f32.mrf.mxu0
    %v2439 = vadd.f32 %v538, %v2438
    %v2440 = vpop.f32.mrf.mxu0
    %v2441 = vadd.f32 %v534, %v2440
    %v2442 = vpop.f32.mrf.mxu0
    %v2443 = vadd.f32 %v538, %v2442
    %2444 = vdwg.mxu0
    %2445 = vmatprep.subr.bf16.mxu0 %v1558
    %2446 = vmatpush1.bf16.msra.mxu0 %v1557
    %2447 = vmatprep.subr.bf16.mxu0 %v1552
    %2448 = vmatpush1.bf16.msra.mxu0 %v1551
    %2449 = vmatprep.subr.bf16.mxu0 %v1546
    %2450 = vmatpush1.bf16.msra.mxu0 %v1545
    %2451 = vmatprep.subr.bf16.mxu0 %v1540
    %2452 = vmatpush1.bf16.msra.mxu0 %v1539
    %2453 = vmatprep.subr.bf16.mxu0 %v1534
    %2454 = vmatpush1.bf16.msra.mxu0 %v1533
    %2455 = vmatprep.subr.bf16.mxu0 %v1528
    %2456 = vmatpush1.bf16.msra.mxu0 %v1527
    %2457 = vmatprep.subr.bf16.mxu0 %v1522
    %2458 = vmatpush1.bf16.msra.mxu0 %v1521
    %2459 = vmatprep.subr.bf16.mxu0 %v1516
    %2460 = vmatpush1.bf16.msra.mxu0 %v1515
    %2461 = vmatprep.subr.bf16.mxu0 %v1606
    %2462 = vmatpush2.bf16.msra.mxu0 %v1605
    %2463 = vmatprep.subr.bf16.mxu0 %v1600
    %2464 = vmatpush2.bf16.msra.mxu0 %v1599
    %2465 = vmatprep.subr.bf16.mxu0 %v1594
    %2466 = vmatpush2.bf16.msra.mxu0 %v1593
    %2467 = vmatprep.subr.bf16.mxu0 %v1588
    %2468 = vmatpush2.bf16.msra.mxu0 %v1587
    %2469 = vmatprep.subr.bf16.mxu0 %v1582
    %2470 = vmatpush2.bf16.msra.mxu0 %v1581
    %2471 = vmatprep.subr.bf16.mxu0 %v1576
    %2472 = vmatpush2.bf16.msra.mxu0 %v1575
    %2473 = vmatprep.subr.bf16.mxu0 %v1570
    %2474 = vmatpush2.bf16.msra.mxu0 %v1569
    %2475 = vmatprep.subr.bf16.mxu0 %v1564
    %2476 = vmatpush2.bf16.msra.mxu0 %v1563
    %2477 = vmatprep.mubr.bf16.mxu0 %v188
    %2478 = vmatmul.mubr.bf16.gmra.mxu0 %v187
    %v2479 = vpop.f32.mrf.mxu0
    %v2480 = vadd.f32 %v2367, %v2479
    %v2481 = vpop.f32.mrf.mxu0
    %v2482 = vadd.f32 %v2369, %v2481
    %v2483 = vpop.f32.mrf.mxu0
    %v2484 = vadd.f32 %v2371, %v2483
    %v2485 = vpop.f32.mrf.mxu0
    %v2486 = vadd.f32 %v2373, %v2485
    %2487 = vmatprep.mubr.bf16.mxu0 %v194
    %2488 = vmatmul.mubr.bf16.gmra.mxu0 %v193
    %v2489 = vpop.f32.mrf.mxu0
    %v2490 = vadd.f32 %v2377, %v2489
    %v2491 = vpop.f32.mrf.mxu0
    %v2492 = vadd.f32 %v2379, %v2491
    %v2493 = vpop.f32.mrf.mxu0
    %v2494 = vadd.f32 %v2381, %v2493
    %v2495 = vpop.f32.mrf.mxu0
    %v2496 = vadd.f32 %v2383, %v2495
    %2497 = vmatprep.mubr.bf16.mxu0 %v200
    %2498 = vmatmul.mubr.bf16.gmra.mxu0 %v199
    %v2499 = vpop.f32.mrf.mxu0
    %v2500 = vadd.f32 %v2387, %v2499
    %v2501 = vpop.f32.mrf.mxu0
    %v2502 = vadd.f32 %v2389, %v2501
    %v2503 = vpop.f32.mrf.mxu0
    %v2504 = vadd.f32 %v2391, %v2503
    %v2505 = vpop.f32.mrf.mxu0
    %v2506 = vadd.f32 %v2393, %v2505
    %2507 = vmatprep.mubr.bf16.mxu0 %v206
    %2508 = vmatmul.mubr.bf16.gmra.mxu0 %v205
    %v2509 = vpop.f32.mrf.mxu0
    %v2510 = vadd.f32 %v2397, %v2509
    %v2511 = vpop.f32.mrf.mxu0
    %v2512 = vadd.f32 %v2399, %v2511
    %v2513 = vpop.f32.mrf.mxu0
    %v2514 = vadd.f32 %v2401, %v2513
    %v2515 = vpop.f32.mrf.mxu0
    %v2516 = vadd.f32 %v2403, %v2515
    %2517 = vmatprep.mubr.bf16.mxu0 %v212
    %2518 = vmatmul.mubr.bf16.gmra.mxu0 %v211
    %v2519 = vpop.f32.mrf.mxu0
    %v2520 = vadd.f32 %v2407, %v2519
    %v2521 = vpop.f32.mrf.mxu0
    %v2522 = vadd.f32 %v2409, %v2521
    %v2523 = vpop.f32.mrf.mxu0
    %v2524 = vadd.f32 %v2411, %v2523
    %v2525 = vpop.f32.mrf.mxu0
    %v2526 = vadd.f32 %v2413, %v2525
    %2527 = vmatprep.mubr.bf16.mxu0 %v218
    %2528 = vmatmul.mubr.bf16.gmra.mxu0 %v217
    %v2529 = vpop.f32.mrf.mxu0
    %v2530 = vadd.f32 %v2417, %v2529
    %v2531 = vpop.f32.mrf.mxu0
    %v2532 = vadd.f32 %v2419, %v2531
    %v2533 = vpop.f32.mrf.mxu0
    %v2534 = vadd.f32 %v2421, %v2533
    %v2535 = vpop.f32.mrf.mxu0
    %v2536 = vadd.f32 %v2423, %v2535
    %2537 = vmatprep.mubr.bf16.mxu0 %v224
    %2538 = vmatmul.mubr.bf16.gmra.mxu0 %v223
    %v2539 = vpop.f32.mrf.mxu0
    %v2540 = vadd.f32 %v2427, %v2539
    %v2541 = vpop.f32.mrf.mxu0
    %v2542 = vadd.f32 %v2429, %v2541
    %v2543 = vpop.f32.mrf.mxu0
    %v2544 = vadd.f32 %v2431, %v2543
    %v2545 = vpop.f32.mrf.mxu0
    %v2546 = vadd.f32 %v2433, %v2545
    %2547 = vmatprep.mubr.bf16.mxu0 %v230
    %2548 = vmatmul.mubr.bf16.gmra.mxu0 %v229
    %v2549 = vpop.f32.mrf.mxu0
    %v2550 = vadd.f32 %v2437, %v2549
    %v2551 = vpop.f32.mrf.mxu0
    %v2552 = vadd.f32 %v2439, %v2551
    %v2553 = vpop.f32.mrf.mxu0
    %v2554 = vadd.f32 %v2441, %v2553
    %v2555 = vpop.f32.mrf.mxu0
    %v2556 = vadd.f32 %v2443, %v2555
    %2557 = vdwg.mxu0
    %2558 = vmatprep.subr.bf16.mxu0 %v1654
    %2559 = vmatpush1.bf16.msra.mxu0 %v1653
    %2560 = vmatprep.subr.bf16.mxu0 %v1648
    %2561 = vmatpush1.bf16.msra.mxu0 %v1647
    %2562 = vmatprep.subr.bf16.mxu0 %v1642
    %2563 = vmatpush1.bf16.msra.mxu0 %v1641
    %2564 = vmatprep.subr.bf16.mxu0 %v1636
    %2565 = vmatpush1.bf16.msra.mxu0 %v1635
    %2566 = vmatprep.subr.bf16.mxu0 %v1630
    %2567 = vmatpush1.bf16.msra.mxu0 %v1629
    %2568 = vmatprep.subr.bf16.mxu0 %v1624
    %2569 = vmatpush1.bf16.msra.mxu0 %v1623
    %2570 = vmatprep.subr.bf16.mxu0 %v1618
    %2571 = vmatpush1.bf16.msra.mxu0 %v1617
    %2572 = vmatprep.subr.bf16.mxu0 %v1612
    %2573 = vmatpush1.bf16.msra.mxu0 %v1611
    %2574 = vmatprep.subr.bf16.mxu0 %v1702
    %2575 = vmatpush2.bf16.msra.mxu0 %v1701
    %2576 = vmatprep.subr.bf16.mxu0 %v1696
    %2577 = vmatpush2.bf16.msra.mxu0 %v1695
    %2578 = vmatprep.subr.bf16.mxu0 %v1690
    %2579 = vmatpush2.bf16.msra.mxu0 %v1689
    %2580 = vmatprep.subr.bf16.mxu0 %v1684
    %2581 = vmatpush2.bf16.msra.mxu0 %v1683
    %2582 = vmatprep.subr.bf16.mxu0 %v1678
    %2583 = vmatpush2.bf16.msra.mxu0 %v1677
    %2584 = vmatprep.subr.bf16.mxu0 %v1672
    %2585 = vmatpush2.bf16.msra.mxu0 %v1671
    %2586 = vmatprep.subr.bf16.mxu0 %v1666
    %2587 = vmatpush2.bf16.msra.mxu0 %v1665
    %2588 = vmatprep.subr.bf16.mxu0 %v1660
    %2589 = vmatpush2.bf16.msra.mxu0 %v1659
    %2590 = vmatprep.mubr.bf16.mxu0 %v190
    %2591 = vmatmul.mubr.bf16.gmra.mxu0 %v189
    %v2592 = vpop.f32.mrf.mxu0
    %v2593 = vadd.f32 %v2480, %v2592
    %v2594 = vpop.f32.mrf.mxu0
    %v2595 = vadd.f32 %v2482, %v2594
    %v2596 = vpop.f32.mrf.mxu0
    %v2597 = vadd.f32 %v2484, %v2596
    %v2598 = vpop.f32.mrf.mxu0
    %v2599 = vadd.f32 %v2486, %v2598
    %2600 = vmatprep.mubr.bf16.mxu0 %v196
    %2601 = vmatmul.mubr.bf16.gmra.mxu0 %v195
    %v2602 = vpop.f32.mrf.mxu0
    %v2603 = vadd.f32 %v2490, %v2602
    %v2604 = vpop.f32.mrf.mxu0
    %v2605 = vadd.f32 %v2492, %v2604
    %v2606 = vpop.f32.mrf.mxu0
    %v2607 = vadd.f32 %v2494, %v2606
    %v2608 = vpop.f32.mrf.mxu0
    %v2609 = vadd.f32 %v2496, %v2608
    %2610 = vmatprep.mubr.bf16.mxu0 %v202
    %2611 = vmatmul.mubr.bf16.gmra.mxu0 %v201
    %v2612 = vpop.f32.mrf.mxu0
    %v2613 = vadd.f32 %v2500, %v2612
    %v2614 = vpop.f32.mrf.mxu0
    %v2615 = vadd.f32 %v2502, %v2614
    %v2616 = vpop.f32.mrf.mxu0
    %v2617 = vadd.f32 %v2504, %v2616
    %v2618 = vpop.f32.mrf.mxu0
    %v2619 = vadd.f32 %v2506, %v2618
    %2620 = vmatprep.mubr.bf16.mxu0 %v208
    %2621 = vmatmul.mubr.bf16.gmra.mxu0 %v207
    %v2622 = vpop.f32.mrf.mxu0
    %v2623 = vadd.f32 %v2510, %v2622
    %v2624 = vpop.f32.mrf.mxu0
    %v2625 = vadd.f32 %v2512, %v2624
    %v2626 = vpop.f32.mrf.mxu0
    %v2627 = vadd.f32 %v2514, %v2626
    %v2628 = vpop.f32.mrf.mxu0
    %v2629 = vadd.f32 %v2516, %v2628
    %2630 = vmatprep.mubr.bf16.mxu0 %v214
    %2631 = vmatmul.mubr.bf16.gmra.mxu0 %v213
    %v2632 = vpop.f32.mrf.mxu0
    %v2633 = vadd.f32 %v2520, %v2632
    %v2634 = vpop.f32.mrf.mxu0
    %v2635 = vadd.f32 %v2522, %v2634
    %v2636 = vpop.f32.mrf.mxu0
    %v2637 = vadd.f32 %v2524, %v2636
    %v2638 = vpop.f32.mrf.mxu0
    %v2639 = vadd.f32 %v2526, %v2638
    %2640 = vmatprep.mubr.bf16.mxu0 %v220
    %2641 = vmatmul.mubr.bf16.gmra.mxu0 %v219
    %v2642 = vpop.f32.mrf.mxu0
    %v2643 = vadd.f32 %v2530, %v2642
    %v2644 = vpop.f32.mrf.mxu0
    %v2645 = vadd.f32 %v2532, %v2644
    %v2646 = vpop.f32.mrf.mxu0
    %v2647 = vadd.f32 %v2534, %v2646
    %v2648 = vpop.f32.mrf.mxu0
    %v2649 = vadd.f32 %v2536, %v2648
    %2650 = vmatprep.mubr.bf16.mxu0 %v226
    %2651 = vmatmul.mubr.bf16.gmra.mxu0 %v225
    %v2652 = vpop.f32.mrf.mxu0
    %v2653 = vadd.f32 %v2540, %v2652
    %v2654 = vpop.f32.mrf.mxu0
    %v2655 = vadd.f32 %v2542, %v2654
    %v2656 = vpop.f32.mrf.mxu0
    %v2657 = vadd.f32 %v2544, %v2656
    %v2658 = vpop.f32.mrf.mxu0
    %v2659 = vadd.f32 %v2546, %v2658
    %2660 = vmatprep.mubr.bf16.mxu0 %v232
    %2661 = vmatmul.mubr.bf16.gmra.mxu0 %v231
    %v2662 = vpop.f32.mrf.mxu0
    %v2663 = vadd.f32 %v2550, %v2662
    %v2664 = vpop.f32.mrf.mxu0
    %v2665 = vadd.f32 %v2552, %v2664
    %v2666 = vpop.f32.mrf.mxu0
    %v2667 = vadd.f32 %v2554, %v2666
    %v2668 = vpop.f32.mrf.mxu0
    %v2669 = vadd.f32 %v2556, %v2668
    %2670 = vdwg.mxu0
    %2671 = vmatprep.subr.bf16.mxu0 %v1464
    %2672 = vmatpush1.bf16.msra.mxu0 %v1463
    %2673 = vmatprep.subr.bf16.mxu0 %v1458
    %2674 = vmatpush1.bf16.msra.mxu0 %v1457
    %2675 = vmatprep.subr.bf16.mxu0 %v1452
    %2676 = vmatpush1.bf16.msra.mxu0 %v1451
    %2677 = vmatprep.subr.bf16.mxu0 %v1446
    %2678 = vmatpush1.bf16.msra.mxu0 %v1445
    %2679 = vmatprep.subr.bf16.mxu0 %v1440
    %2680 = vmatpush1.bf16.msra.mxu0 %v1439
    %2681 = vmatprep.subr.bf16.mxu0 %v1434
    %2682 = vmatpush1.bf16.msra.mxu0 %v1433
    %2683 = vmatprep.subr.bf16.mxu0 %v1428
    %2684 = vmatpush1.bf16.msra.mxu0 %v1427
    %2685 = vmatprep.subr.bf16.mxu0 %v1422
    %2686 = vmatpush1.bf16.msra.mxu0 %v1421
    %2687 = vmatprep.subr.bf16.mxu0 %v1512
    %2688 = vmatpush2.bf16.msra.mxu0 %v1511
    %2689 = vmatprep.subr.bf16.mxu0 %v1506
    %2690 = vmatpush2.bf16.msra.mxu0 %v1505
    %2691 = vmatprep.subr.bf16.mxu0 %v1500
    %2692 = vmatpush2.bf16.msra.mxu0 %v1499
    %2693 = vmatprep.subr.bf16.mxu0 %v1494
    %2694 = vmatpush2.bf16.msra.mxu0 %v1493
    %2695 = vmatprep.subr.bf16.mxu0 %v1488
    %2696 = vmatpush2.bf16.msra.mxu0 %v1487
    %2697 = vmatprep.subr.bf16.mxu0 %v1482
    %2698 = vmatpush2.bf16.msra.mxu0 %v1481
    %2699 = vmatprep.subr.bf16.mxu0 %v1476
    %2700 = vmatpush2.bf16.msra.mxu0 %v1475
    %2701 = vmatprep.subr.bf16.mxu0 %v1470
    %2702 = vmatpush2.bf16.msra.mxu0 %v1469
    %2703 = vmatprep.mubr.bf16.mxu0 %v186
    %2704 = vmatmul.mubr.bf16.gmra.mxu0 %v185
    %v2705 = vpop.f32.mrf.mxu0
    %v2706 = vadd.f32 %v542, %v2705
    %v2707 = vpop.f32.mrf.mxu0
    %v2708 = vadd.f32 %v546, %v2707
    %v2709 = vpop.f32.mrf.mxu0
    %v2710 = vadd.f32 %v542, %v2709
    %v2711 = vpop.f32.mrf.mxu0
    %v2712 = vadd.f32 %v546, %v2711
    %2713 = vmatprep.mubr.bf16.mxu0 %v192
    %2714 = vmatmul.mubr.bf16.gmra.mxu0 %v191
    %v2715 = vpop.f32.mrf.mxu0
    %v2716 = vadd.f32 %v542, %v2715
    %v2717 = vpop.f32.mrf.mxu0
    %v2718 = vadd.f32 %v546, %v2717
    %v2719 = vpop.f32.mrf.mxu0
    %v2720 = vadd.f32 %v542, %v2719
    %v2721 = vpop.f32.mrf.mxu0
    %v2722 = vadd.f32 %v546, %v2721
    %2723 = vmatprep.mubr.bf16.mxu0 %v198
    %2724 = vmatmul.mubr.bf16.gmra.mxu0 %v197
    %v2725 = vpop.f32.mrf.mxu0
    %v2726 = vadd.f32 %v542, %v2725
    %v2727 = vpop.f32.mrf.mxu0
    %v2728 = vadd.f32 %v546, %v2727
    %v2729 = vpop.f32.mrf.mxu0
    %v2730 = vadd.f32 %v542, %v2729
    %v2731 = vpop.f32.mrf.mxu0
    %v2732 = vadd.f32 %v546, %v2731
    %2733 = vmatprep.mubr.bf16.mxu0 %v204
    %2734 = vmatmul.mubr.bf16.gmra.mxu0 %v203
    %v2735 = vpop.f32.mrf.mxu0
    %v2736 = vadd.f32 %v542, %v2735
    %v2737 = vpop.f32.mrf.mxu0
    %v2738 = vadd.f32 %v546, %v2737
    %v2739 = vpop.f32.mrf.mxu0
    %v2740 = vadd.f32 %v542, %v2739
    %v2741 = vpop.f32.mrf.mxu0
    %v2742 = vadd.f32 %v546, %v2741
    %2743 = vmatprep.mubr.bf16.mxu0 %v210
    %2744 = vmatmul.mubr.bf16.gmra.mxu0 %v209
    %v2745 = vpop.f32.mrf.mxu0
    %v2746 = vadd.f32 %v542, %v2745
    %v2747 = vpop.f32.mrf.mxu0
    %v2748 = vadd.f32 %v546, %v2747
    %v2749 = vpop.f32.mrf.mxu0
    %v2750 = vadd.f32 %v542, %v2749
    %v2751 = vpop.f32.mrf.mxu0
    %v2752 = vadd.f32 %v546, %v2751
    %2753 = vmatprep.mubr.bf16.mxu0 %v216
    %2754 = vmatmul.mubr.bf16.gmra.mxu0 %v215
    %v2755 = vpop.f32.mrf.mxu0
    %v2756 = vadd.f32 %v542, %v2755
    %v2757 = vpop.f32.mrf.mxu0
    %v2758 = vadd.f32 %v546, %v2757
    %v2759 = vpop.f32.mrf.mxu0
    %v2760 = vadd.f32 %v542, %v2759
    %v2761 = vpop.f32.mrf.mxu0
    %v2762 = vadd.f32 %v546, %v2761
    %2763 = vmatprep.mubr.bf16.mxu0 %v222
    %2764 = vmatmul.mubr.bf16.gmra.mxu0 %v221
    %v2765 = vpop.f32.mrf.mxu0
    %v2766 = vadd.f32 %v542, %v2765
    %v2767 = vpop.f32.mrf.mxu0
    %v2768 = vadd.f32 %v546, %v2767
    %v2769 = vpop.f32.mrf.mxu0
    %v2770 = vadd.f32 %v542, %v2769
    %v2771 = vpop.f32.mrf.mxu0
    %v2772 = vadd.f32 %v546, %v2771
    %2773 = vmatprep.mubr.bf16.mxu0 %v228
    %2774 = vmatmul.mubr.bf16.gmra.mxu0 %v227
    %v2775 = vpop.f32.mrf.mxu0
    %v2776 = vadd.f32 %v542, %v2775
    %v2777 = vpop.f32.mrf.mxu0
    %v2778 = vadd.f32 %v546, %v2777
    %v2779 = vpop.f32.mrf.mxu0
    %v2780 = vadd.f32 %v542, %v2779
    %v2781 = vpop.f32.mrf.mxu0
    %v2782 = vadd.f32 %v546, %v2781
    %2783 = vdwg.mxu0
    %2784 = vmatprep.subr.bf16.mxu0 %v1560
    %2785 = vmatpush1.bf16.msra.mxu0 %v1559
    %2786 = vmatprep.subr.bf16.mxu0 %v1554
    %2787 = vmatpush1.bf16.msra.mxu0 %v1553
    %2788 = vmatprep.subr.bf16.mxu0 %v1548
    %2789 = vmatpush1.bf16.msra.mxu0 %v1547
    %2790 = vmatprep.subr.bf16.mxu0 %v1542
    %2791 = vmatpush1.bf16.msra.mxu0 %v1541
    %2792 = vmatprep.subr.bf16.mxu0 %v1536
    %2793 = vmatpush1.bf16.msra.mxu0 %v1535
    %2794 = vmatprep.subr.bf16.mxu0 %v1530
    %2795 = vmatpush1.bf16.msra.mxu0 %v1529
    %2796 = vmatprep.subr.bf16.mxu0 %v1524
    %2797 = vmatpush1.bf16.msra.mxu0 %v1523
    %2798 = vmatprep.subr.bf16.mxu0 %v1518
    %2799 = vmatpush1.bf16.msra.mxu0 %v1517
    %2800 = vmatprep.subr.bf16.mxu0 %v1608
    %2801 = vmatpush2.bf16.msra.mxu0 %v1607
    %2802 = vmatprep.subr.bf16.mxu0 %v1602
    %2803 = vmatpush2.bf16.msra.mxu0 %v1601
    %2804 = vmatprep.subr.bf16.mxu0 %v1596
    %2805 = vmatpush2.bf16.msra.mxu0 %v1595
    %2806 = vmatprep.subr.bf16.mxu0 %v1590
    %2807 = vmatpush2.bf16.msra.mxu0 %v1589
    %2808 = vmatprep.subr.bf16.mxu0 %v1584
    %2809 = vmatpush2.bf16.msra.mxu0 %v1583
    %2810 = vmatprep.subr.bf16.mxu0 %v1578
    %2811 = vmatpush2.bf16.msra.mxu0 %v1577
    %2812 = vmatprep.subr.bf16.mxu0 %v1572
    %2813 = vmatpush2.bf16.msra.mxu0 %v1571
    %2814 = vmatprep.subr.bf16.mxu0 %v1566
    %2815 = vmatpush2.bf16.msra.mxu0 %v1565
    %2816 = vmatprep.mubr.bf16.mxu0 %v188
    %2817 = vmatmul.mubr.bf16.gmra.mxu0 %v187
    %v2818 = vpop.f32.mrf.mxu0
    %v2819 = vadd.f32 %v2706, %v2818
    %v2820 = vpop.f32.mrf.mxu0
    %v2821 = vadd.f32 %v2708, %v2820
    %v2822 = vpop.f32.mrf.mxu0
    %v2823 = vadd.f32 %v2710, %v2822
    %v2824 = vpop.f32.mrf.mxu0
    %v2825 = vadd.f32 %v2712, %v2824
    %2826 = vmatprep.mubr.bf16.mxu0 %v194
    %2827 = vmatmul.mubr.bf16.gmra.mxu0 %v193
    %v2828 = vpop.f32.mrf.mxu0
    %v2829 = vadd.f32 %v2716, %v2828
    %v2830 = vpop.f32.mrf.mxu0
    %v2831 = vadd.f32 %v2718, %v2830
    %v2832 = vpop.f32.mrf.mxu0
    %v2833 = vadd.f32 %v2720, %v2832
    %v2834 = vpop.f32.mrf.mxu0
    %v2835 = vadd.f32 %v2722, %v2834
    %2836 = vmatprep.mubr.bf16.mxu0 %v200
    %2837 = vmatmul.mubr.bf16.gmra.mxu0 %v199
    %v2838 = vpop.f32.mrf.mxu0
    %v2839 = vadd.f32 %v2726, %v2838
    %v2840 = vpop.f32.mrf.mxu0
    %v2841 = vadd.f32 %v2728, %v2840
    %v2842 = vpop.f32.mrf.mxu0
    %v2843 = vadd.f32 %v2730, %v2842
    %v2844 = vpop.f32.mrf.mxu0
    %v2845 = vadd.f32 %v2732, %v2844
    %2846 = vmatprep.mubr.bf16.mxu0 %v206
    %2847 = vmatmul.mubr.bf16.gmra.mxu0 %v205
    %v2848 = vpop.f32.mrf.mxu0
    %v2849 = vadd.f32 %v2736, %v2848
    %v2850 = vpop.f32.mrf.mxu0
    %v2851 = vadd.f32 %v2738, %v2850
    %v2852 = vpop.f32.mrf.mxu0
    %v2853 = vadd.f32 %v2740, %v2852
    %v2854 = vpop.f32.mrf.mxu0
    %v2855 = vadd.f32 %v2742, %v2854
    %2856 = vmatprep.mubr.bf16.mxu0 %v212
    %2857 = vmatmul.mubr.bf16.gmra.mxu0 %v211
    %v2858 = vpop.f32.mrf.mxu0
    %v2859 = vadd.f32 %v2746, %v2858
    %v2860 = vpop.f32.mrf.mxu0
    %v2861 = vadd.f32 %v2748, %v2860
    %v2862 = vpop.f32.mrf.mxu0
    %v2863 = vadd.f32 %v2750, %v2862
    %v2864 = vpop.f32.mrf.mxu0
    %v2865 = vadd.f32 %v2752, %v2864
    %2866 = vmatprep.mubr.bf16.mxu0 %v218
    %2867 = vmatmul.mubr.bf16.gmra.mxu0 %v217
    %v2868 = vpop.f32.mrf.mxu0
    %v2869 = vadd.f32 %v2756, %v2868
    %v2870 = vpop.f32.mrf.mxu0
    %v2871 = vadd.f32 %v2758, %v2870
    %v2872 = vpop.f32.mrf.mxu0
    %v2873 = vadd.f32 %v2760, %v2872
    %v2874 = vpop.f32.mrf.mxu0
    %v2875 = vadd.f32 %v2762, %v2874
    %2876 = vmatprep.mubr.bf16.mxu0 %v224
    %2877 = vmatmul.mubr.bf16.gmra.mxu0 %v223
    %v2878 = vpop.f32.mrf.mxu0
    %v2879 = vadd.f32 %v2766, %v2878
    %v2880 = vpop.f32.mrf.mxu0
    %v2881 = vadd.f32 %v2768, %v2880
    %v2882 = vpop.f32.mrf.mxu0
    %v2883 = vadd.f32 %v2770, %v2882
    %v2884 = vpop.f32.mrf.mxu0
    %v2885 = vadd.f32 %v2772, %v2884
    %2886 = vmatprep.mubr.bf16.mxu0 %v230
    %2887 = vmatmul.mubr.bf16.gmra.mxu0 %v229
    %v2888 = vpop.f32.mrf.mxu0
    %v2889 = vadd.f32 %v2776, %v2888
    %v2890 = vpop.f32.mrf.mxu0
    %v2891 = vadd.f32 %v2778, %v2890
    %v2892 = vpop.f32.mrf.mxu0
    %v2893 = vadd.f32 %v2780, %v2892
    %v2894 = vpop.f32.mrf.mxu0
    %v2895 = vadd.f32 %v2782, %v2894
    %2896 = vdwg.mxu0
    %2897 = vmatprep.subr.bf16.mxu0 %v1656
    %2898 = vmatpush1.bf16.msra.mxu0 %v1655
    %2899 = vmatprep.subr.bf16.mxu0 %v1650
    %2900 = vmatpush1.bf16.msra.mxu0 %v1649
    %2901 = vmatprep.subr.bf16.mxu0 %v1644
    %2902 = vmatpush1.bf16.msra.mxu0 %v1643
    %2903 = vmatprep.subr.bf16.mxu0 %v1638
    %2904 = vmatpush1.bf16.msra.mxu0 %v1637
    %2905 = vmatprep.subr.bf16.mxu0 %v1632
    %2906 = vmatpush1.bf16.msra.mxu0 %v1631
    %2907 = vmatprep.subr.bf16.mxu0 %v1626
    %2908 = vmatpush1.bf16.msra.mxu0 %v1625
    %2909 = vmatprep.subr.bf16.mxu0 %v1620
    %2910 = vmatpush1.bf16.msra.mxu0 %v1619
    %2911 = vmatprep.subr.bf16.mxu0 %v1614
    %2912 = vmatpush1.bf16.msra.mxu0 %v1613
    %2913 = vmatprep.subr.bf16.mxu0 %v1704
    %2914 = vmatpush2.bf16.msra.mxu0 %v1703
    %2915 = vmatprep.subr.bf16.mxu0 %v1698
    %2916 = vmatpush2.bf16.msra.mxu0 %v1697
    %2917 = vmatprep.subr.bf16.mxu0 %v1692
    %2918 = vmatpush2.bf16.msra.mxu0 %v1691
    %2919 = vmatprep.subr.bf16.mxu0 %v1686
    %2920 = vmatpush2.bf16.msra.mxu0 %v1685
    %2921 = vmatprep.subr.bf16.mxu0 %v1680
    %2922 = vmatpush2.bf16.msra.mxu0 %v1679
    %2923 = vmatprep.subr.bf16.mxu0 %v1674
    %2924 = vmatpush2.bf16.msra.mxu0 %v1673
    %2925 = vmatprep.subr.bf16.mxu0 %v1668
    %2926 = vmatpush2.bf16.msra.mxu0 %v1667
    %2927 = vmatprep.subr.bf16.mxu0 %v1662
    %2928 = vmatpush2.bf16.msra.mxu0 %v1661
    %2929 = vmatprep.mubr.bf16.mxu0 %v190
    %2930 = vmatmul.mubr.bf16.gmra.mxu0 %v189
    %v2931 = vpop.f32.mrf.mxu0
    %v2932 = vadd.f32 %v2819, %v2931
    %v2933 = vpop.f32.mrf.mxu0
    %v2934 = vadd.f32 %v2821, %v2933
    %v2935 = vpop.f32.mrf.mxu0
    %v2936 = vadd.f32 %v2823, %v2935
    %v2937 = vpop.f32.mrf.mxu0
    %v2938 = vadd.f32 %v2825, %v2937
    %2939 = vmatprep.mubr.bf16.mxu0 %v196
    %2940 = vmatmul.mubr.bf16.gmra.mxu0 %v195
    %v2941 = vpop.f32.mrf.mxu0
    %v2942 = vadd.f32 %v2829, %v2941
    %v2943 = vpop.f32.mrf.mxu0
    %v2944 = vadd.f32 %v2831, %v2943
    %v2945 = vpop.f32.mrf.mxu0
    %v2946 = vadd.f32 %v2833, %v2945
    %v2947 = vpop.f32.mrf.mxu0
    %v2948 = vadd.f32 %v2835, %v2947
    %2949 = vmatprep.mubr.bf16.mxu0 %v202
    %2950 = vmatmul.mubr.bf16.gmra.mxu0 %v201
    %v2951 = vpop.f32.mrf.mxu0
    %v2952 = vadd.f32 %v2839, %v2951
    %v2953 = vpop.f32.mrf.mxu0
    %v2954 = vadd.f32 %v2841, %v2953
    %v2955 = vpop.f32.mrf.mxu0
    %v2956 = vadd.f32 %v2843, %v2955
    %v2957 = vpop.f32.mrf.mxu0
    %v2958 = vadd.f32 %v2845, %v2957
    %2959 = vmatprep.mubr.bf16.mxu0 %v208
    %2960 = vmatmul.mubr.bf16.gmra.mxu0 %v207
    %v2961 = vpop.f32.mrf.mxu0
    %v2962 = vadd.f32 %v2849, %v2961
    %v2963 = vpop.f32.mrf.mxu0
    %v2964 = vadd.f32 %v2851, %v2963
    %v2965 = vpop.f32.mrf.mxu0
    %v2966 = vadd.f32 %v2853, %v2965
    %v2967 = vpop.f32.mrf.mxu0
    %v2968 = vadd.f32 %v2855, %v2967
    %2969 = vmatprep.mubr.bf16.mxu0 %v214
    %2970 = vmatmul.mubr.bf16.gmra.mxu0 %v213
    %v2971 = vpop.f32.mrf.mxu0
    %v2972 = vadd.f32 %v2859, %v2971
    %v2973 = vpop.f32.mrf.mxu0
    %v2974 = vadd.f32 %v2861, %v2973
    %v2975 = vpop.f32.mrf.mxu0
    %v2976 = vadd.f32 %v2863, %v2975
    %v2977 = vpop.f32.mrf.mxu0
    %v2978 = vadd.f32 %v2865, %v2977
    %2979 = vmatprep.mubr.bf16.mxu0 %v220
    %2980 = vmatmul.mubr.bf16.gmra.mxu0 %v219
    %v2981 = vpop.f32.mrf.mxu0
    %v2982 = vadd.f32 %v2869, %v2981
    %v2983 = vpop.f32.mrf.mxu0
    %v2984 = vadd.f32 %v2871, %v2983
    %v2985 = vpop.f32.mrf.mxu0
    %v2986 = vadd.f32 %v2873, %v2985
    %v2987 = vpop.f32.mrf.mxu0
    %v2988 = vadd.f32 %v2875, %v2987
    %2989 = vmatprep.mubr.bf16.mxu0 %v226
    %2990 = vmatmul.mubr.bf16.gmra.mxu0 %v225
    %v2991 = vpop.f32.mrf.mxu0
    %v2992 = vadd.f32 %v2879, %v2991
    %v2993 = vpop.f32.mrf.mxu0
    %v2994 = vadd.f32 %v2881, %v2993
    %v2995 = vpop.f32.mrf.mxu0
    %v2996 = vadd.f32 %v2883, %v2995
    %v2997 = vpop.f32.mrf.mxu0
    %v2998 = vadd.f32 %v2885, %v2997
    %2999 = vmatprep.mubr.bf16.mxu0 %v232
    %3000 = vmatmul.mubr.bf16.gmra.mxu0 %v231
    %v3001 = vpop.f32.mrf.mxu0
    %v3002 = vadd.f32 %v2889, %v3001
    %v3003 = vpop.f32.mrf.mxu0
    %v3004 = vadd.f32 %v2891, %v3003
    %v3005 = vpop.f32.mrf.mxu0
    %v3006 = vadd.f32 %v2893, %v3005
    %v3007 = vpop.f32.mrf.mxu0
    %v3008 = vadd.f32 %v2895, %v3007
    %3009 = vdwg.mxu0
    %v3010 = vpack.c.bf16 %v2258, %v2254
    %v3011 = vpack.c.bf16 %v2260, %v2256
    %v3012 = vpack.c.bf16 %v2597, %v2593
    %v3013 = vpack.c.bf16 %v2599, %v2595
    %v3014 = vpack.c.bf16 %v2936, %v2932
    %v3015 = vpack.c.bf16 %v2938, %v2934
    %v3016 = vpack.c.bf16 %v2268, %v2264
    %v3017 = vpack.c.bf16 %v2270, %v2266
    %v3018 = vpack.c.bf16 %v2607, %v2603
    %v3019 = vpack.c.bf16 %v2609, %v2605
    %v3020 = vpack.c.bf16 %v2946, %v2942
    %v3021 = vpack.c.bf16 %v2948, %v2944
    %v3022 = vpack.c.bf16 %v2278, %v2274
    %v3023 = vpack.c.bf16 %v2280, %v2276
    %v3024 = vpack.c.bf16 %v2617, %v2613
    %v3025 = vpack.c.bf16 %v2619, %v2615
    %v3026 = vpack.c.bf16 %v2956, %v2952
    %v3027 = vpack.c.bf16 %v2958, %v2954
    %v3028 = vpack.c.bf16 %v2288, %v2284
    %v3029 = vpack.c.bf16 %v2290, %v2286
    %v3030 = vpack.c.bf16 %v2627, %v2623
    %v3031 = vpack.c.bf16 %v2629, %v2625
    %v3032 = vpack.c.bf16 %v2966, %v2962
    %v3033 = vpack.c.bf16 %v2968, %v2964
    %v3034 = vpack.c.bf16 %v2298, %v2294
    %v3035 = vpack.c.bf16 %v2300, %v2296
    %v3036 = vpack.c.bf16 %v2637, %v2633
    %v3037 = vpack.c.bf16 %v2639, %v2635
    %v3038 = vpack.c.bf16 %v2976, %v2972
    %v3039 = vpack.c.bf16 %v2978, %v2974
    %v3040 = vpack.c.bf16 %v2308, %v2304
    %v3041 = vpack.c.bf16 %v2310, %v2306
    %v3042 = vpack.c.bf16 %v2647, %v2643
    %v3043 = vpack.c.bf16 %v2649, %v2645
    %v3044 = vpack.c.bf16 %v2986, %v2982
    %v3045 = vpack.c.bf16 %v2988, %v2984
    %v3046 = vpack.c.bf16 %v2318, %v2314
    %v3047 = vpack.c.bf16 %v2320, %v2316
    %v3048 = vpack.c.bf16 %v2657, %v2653
    %v3049 = vpack.c.bf16 %v2659, %v2655
    %v3050 = vpack.c.bf16 %v2996, %v2992
    %v3051 = vpack.c.bf16 %v2998, %v2994
    %v3052 = vpack.c.bf16 %v2328, %v2324
    %v3053 = vpack.c.bf16 %v2330, %v2326
    %v3054 = vpack.c.bf16 %v2667, %v2663
    %v3055 = vpack.c.bf16 %v2669, %v2665
    %v3056 = vpack.c.bf16 %v3006, %v3002
    %v3057 = vpack.c.bf16 %v3008, %v3004
    %v3106 = vunpack.c.l.b16 %v3010
    %v3107 = vunpack.c.l.b16 %v3011
    %v3108 = vunpack.c.l.b16 %v3012
    %v3109 = vunpack.c.l.b16 %v3013
    %v3110 = vunpack.c.l.b16 %v3014
    %v3111 = vunpack.c.l.b16 %v3015
    %v3112 = vunpack.c.h.b16 %v3010
    %v3113 = vunpack.c.h.b16 %v3011
    %v3114 = vunpack.c.h.b16 %v3012
    %v3115 = vunpack.c.h.b16 %v3013
    %v3116 = vunpack.c.h.b16 %v3014
    %v3117 = vunpack.c.h.b16 %v3015
    %v3118 = vunpack.c.l.b16 %v3016
    %v3119 = vunpack.c.l.b16 %v3017
    %v3120 = vunpack.c.l.b16 %v3018
    %v3121 = vunpack.c.l.b16 %v3019
    %v3122 = vunpack.c.l.b16 %v3020
    %v3123 = vunpack.c.l.b16 %v3021
    %v3124 = vunpack.c.h.b16 %v3016
    %v3125 = vunpack.c.h.b16 %v3017
    %v3126 = vunpack.c.h.b16 %v3018
    %v3127 = vunpack.c.h.b16 %v3019
    %v3128 = vunpack.c.h.b16 %v3020
    %v3129 = vunpack.c.h.b16 %v3021
    %v3130 = vunpack.c.l.b16 %v3022
    %v3131 = vunpack.c.l.b16 %v3023
    %v3132 = vunpack.c.l.b16 %v3024
    %v3133 = vunpack.c.l.b16 %v3025
    %v3134 = vunpack.c.l.b16 %v3026
    %v3135 = vunpack.c.l.b16 %v3027
    %v3136 = vunpack.c.h.b16 %v3022
    %v3137 = vunpack.c.h.b16 %v3023
    %v3138 = vunpack.c.h.b16 %v3024
    %v3139 = vunpack.c.h.b16 %v3025
    %v3140 = vunpack.c.h.b16 %v3026
    %v3141 = vunpack.c.h.b16 %v3027
    %v3142 = vunpack.c.l.b16 %v3028
    %v3143 = vunpack.c.l.b16 %v3029
    %v3144 = vunpack.c.l.b16 %v3030
    %v3145 = vunpack.c.l.b16 %v3031
    %v3146 = vunpack.c.l.b16 %v3032
    %v3147 = vunpack.c.l.b16 %v3033
    %v3148 = vunpack.c.h.b16 %v3028
    %v3149 = vunpack.c.h.b16 %v3029
    %v3150 = vunpack.c.h.b16 %v3030
    %v3151 = vunpack.c.h.b16 %v3031
    %v3152 = vunpack.c.h.b16 %v3032
    %v3153 = vunpack.c.h.b16 %v3033
    %v3154 = vunpack.c.l.b16 %v3034
    %v3155 = vunpack.c.l.b16 %v3035
    %v3156 = vunpack.c.l.b16 %v3036
    %v3157 = vunpack.c.l.b16 %v3037
    %v3158 = vunpack.c.l.b16 %v3038
    %v3159 = vunpack.c.l.b16 %v3039
    %v3160 = vunpack.c.h.b16 %v3034
    %v3161 = vunpack.c.h.b16 %v3035
    %v3162 = vunpack.c.h.b16 %v3036
    %v3163 = vunpack.c.h.b16 %v3037
    %v3164 = vunpack.c.h.b16 %v3038
    %v3165 = vunpack.c.h.b16 %v3039
    %v3166 = vunpack.c.l.b16 %v3040
    %v3167 = vunpack.c.l.b16 %v3041
    %v3168 = vunpack.c.l.b16 %v3042
    %v3169 = vunpack.c.l.b16 %v3043
    %v3170 = vunpack.c.l.b16 %v3044
    %v3171 = vunpack.c.l.b16 %v3045
    %v3172 = vunpack.c.h.b16 %v3040
    %v3173 = vunpack.c.h.b16 %v3041
    %v3174 = vunpack.c.h.b16 %v3042
    %v3175 = vunpack.c.h.b16 %v3043
    %v3176 = vunpack.c.h.b16 %v3044
    %v3177 = vunpack.c.h.b16 %v3045
    %v3178 = vunpack.c.l.b16 %v3046
    %v3179 = vunpack.c.l.b16 %v3047
    %v3180 = vunpack.c.l.b16 %v3048
    %v3181 = vunpack.c.l.b16 %v3049
    %v3182 = vunpack.c.l.b16 %v3050
    %v3183 = vunpack.c.l.b16 %v3051
    %v3184 = vunpack.c.h.b16 %v3046
    %v3185 = vunpack.c.h.b16 %v3047
    %v3186 = vunpack.c.h.b16 %v3048
    %v3187 = vunpack.c.h.b16 %v3049
    %v3188 = vunpack.c.h.b16 %v3050
    %v3189 = vunpack.c.h.b16 %v3051
    %v3190 = vunpack.c.l.b16 %v3052
    %v3191 = vunpack.c.l.b16 %v3053
    %v3192 = vunpack.c.l.b16 %v3054
    %v3193 = vunpack.c.l.b16 %v3055
    %v3194 = vunpack.c.l.b16 %v3056
    %v3195 = vunpack.c.l.b16 %v3057
    %v3196 = vunpack.c.h.b16 %v3052
    %v3197 = vunpack.c.h.b16 %v3053
    %v3198 = vunpack.c.h.b16 %v3054
    %v3199 = vunpack.c.h.b16 %v3055
    %v3200 = vunpack.c.h.b16 %v3056
    %v3201 = vunpack.c.h.b16 %v3057
    %v3202 = vpack.c.b16 %v3107, %v3106
    %v3203 = vpack.c.b16 %v3109, %v3108
    %v3204 = vpack.c.b16 %v3111, %v3110
    %v3205 = vpack.c.b16 %v3113, %v3112
    %v3206 = vpack.c.b16 %v3115, %v3114
    %v3207 = vpack.c.b16 %v3117, %v3116
    %v3208 = vpack.c.b16 %v3119, %v3118
    %v3209 = vpack.c.b16 %v3121, %v3120
    %v3210 = vpack.c.b16 %v3123, %v3122
    %v3211 = vpack.c.b16 %v3125, %v3124
    %v3212 = vpack.c.b16 %v3127, %v3126
    %v3213 = vpack.c.b16 %v3129, %v3128
    %v3214 = vpack.c.b16 %v3131, %v3130
    %v3215 = vpack.c.b16 %v3133, %v3132
    %v3216 = vpack.c.b16 %v3135, %v3134
    %v3217 = vpack.c.b16 %v3137, %v3136
    %v3218 = vpack.c.b16 %v3139, %v3138
    %v3219 = vpack.c.b16 %v3141, %v3140
    %v3220 = vpack.c.b16 %v3143, %v3142
    %v3221 = vpack.c.b16 %v3145, %v3144
    %v3222 = vpack.c.b16 %v3147, %v3146
    %v3223 = vpack.c.b16 %v3149, %v3148
    %v3224 = vpack.c.b16 %v3151, %v3150
    %v3225 = vpack.c.b16 %v3153, %v3152
    %v3226 = vpack.c.b16 %v3155, %v3154
    %v3227 = vpack.c.b16 %v3157, %v3156
    %v3228 = vpack.c.b16 %v3159, %v3158
    %v3229 = vpack.c.b16 %v3161, %v3160
    %v3230 = vpack.c.b16 %v3163, %v3162
    %v3231 = vpack.c.b16 %v3165, %v3164
    %v3232 = vpack.c.b16 %v3167, %v3166
    %v3233 = vpack.c.b16 %v3169, %v3168
    %v3234 = vpack.c.b16 %v3171, %v3170
    %v3235 = vpack.c.b16 %v3173, %v3172
    %v3236 = vpack.c.b16 %v3175, %v3174
    %v3237 = vpack.c.b16 %v3177, %v3176
    %v3238 = vpack.c.b16 %v3179, %v3178
    %v3239 = vpack.c.b16 %v3181, %v3180
    %v3240 = vpack.c.b16 %v3183, %v3182
    %v3241 = vpack.c.b16 %v3185, %v3184
    %v3242 = vpack.c.b16 %v3187, %v3186
    %v3243 = vpack.c.b16 %v3189, %v3188
    %v3244 = vpack.c.b16 %v3191, %v3190
    %v3245 = vpack.c.b16 %v3193, %v3192
    %v3246 = vpack.c.b16 %v3195, %v3194
    %v3247 = vpack.c.b16 %v3197, %v3196
    %v3248 = vpack.c.b16 %v3199, %v3198
    %v3249 = vpack.c.b16 %v3201, %v3200
    %3298 = vst [vmem:[#allocation11] sm:$0xff] %v3202
    %3299 = vst [vmem:[#allocation11 + $0x8] sm:$0xff] %v3203
    %3300 = vst [vmem:[#allocation11 + $0x10] sm:$0xff] %v3204
    %3301 = vst [vmem:[#allocation11 + $0x18] sm:$0xff] %v3205
    %3302 = vst [vmem:[#allocation11 + $0x20] sm:$0xff] %v3206
    %3303 = vst [vmem:[#allocation11 + $0x28] sm:$0xff] %v3207
    %3304 = vst [vmem:[#allocation11 + $0x30] sm:$0xff] %v3208
    %3305 = vst [vmem:[#allocation11 + $0x38] sm:$0xff] %v3209
    %3306 = vst [vmem:[#allocation11 + $0x40] sm:$0xff] %v3210
    %3307 = vst [vmem:[#allocation11 + $0x48] sm:$0xff] %v3211
    %3308 = vst [vmem:[#allocation11 + $0x50] sm:$0xff] %v3212
    %3309 = vst [vmem:[#allocation11 + $0x58] sm:$0xff] %v3213
    %3310 = vst [vmem:[#allocation11 + $0x60] sm:$0xff] %v3214
    %3311 = vst [vmem:[#allocation11 + $0x68] sm:$0xff] %v3215
    %3312 = vst [vmem:[#allocation11 + $0x70] sm:$0xff] %v3216
    %3313 = vst [vmem:[#allocation11 + $0x78] sm:$0xff] %v3217
    %3314 = vst [vmem:[#allocation11 + $0x80] sm:$0xff] %v3218
    %3315 = vst [vmem:[#allocation11 + $0x88] sm:$0xff] %v3219
    %3316 = vst [vmem:[#allocation11 + $0x90] sm:$0xff] %v3220
    %3317 = vst [vmem:[#allocation11 + $0x98] sm:$0xff] %v3221
    %3318 = vst [vmem:[#allocation11 + $0xa0] sm:$0xff] %v3222
    %3319 = vst [vmem:[#allocation11 + $0xa8] sm:$0xff] %v3223
    %3320 = vst [vmem:[#allocation11 + $0xb0] sm:$0xff] %v3224
    %3321 = vst [vmem:[#allocation11 + $0xb8] sm:$0xff] %v3225
    %3322 = vst [vmem:[#allocation11 + $0xc0] sm:$0xff] %v3226
    %3323 = vst [vmem:[#allocation11 + $0xc8] sm:$0xff] %v3227
    %3324 = vst [vmem:[#allocation11 + $0xd0] sm:$0xff] %v3228
    %3325 = vst [vmem:[#allocation11 + $0xd8] sm:$0xff] %v3229
    %3326 = vst [vmem:[#allocation11 + $0xe0] sm:$0xff] %v3230
    %3327 = vst [vmem:[#allocation11 + $0xe8] sm:$0xff] %v3231
    %3328 = vst [vmem:[#allocation11 + $0xf0] sm:$0xff] %v3232
    %3329 = vst [vmem:[#allocation11 + $0xf8] sm:$0xff] %v3233
    %3330 = vst [vmem:[#allocation11 + $0x100] sm:$0xff] %v3234
    %3331 = vst [vmem:[#allocation11 + $0x108] sm:$0xff] %v3235
    %3332 = vst [vmem:[#allocation11 + $0x110] sm:$0xff] %v3236
    %3333 = vst [vmem:[#allocation11 + $0x118] sm:$0xff] %v3237
    %3334 = vst [vmem:[#allocation11 + $0x120] sm:$0xff] %v3238
    %3335 = vst [vmem:[#allocation11 + $0x128] sm:$0xff] %v3239
    %3336 = vst [vmem:[#allocation11 + $0x130] sm:$0xff] %v3240
    %3337 = vst [vmem:[#allocation11 + $0x138] sm:$0xff] %v3241
    %3338 = vst [vmem:[#allocation11 + $0x140] sm:$0xff] %v3242
    %3339 = vst [vmem:[#allocation11 + $0x148] sm:$0xff] %v3243
    %3340 = vst [vmem:[#allocation11 + $0x150] sm:$0xff] %v3244
    %3341 = vst [vmem:[#allocation11 + $0x158] sm:$0xff] %v3245
    %3342 = vst [vmem:[#allocation11 + $0x160] sm:$0xff] %v3246
    %3343 = vst [vmem:[#allocation11 + $0x168] sm:$0xff] %v3247
    %3344 = vst [vmem:[#allocation11 + $0x170] sm:$0xff] %v3248
    %3345 = vst [vmem:[#allocation11 + $0x178] sm:$0xff] %v3249
    %v3346 = vld [vmem:[#allocation8] sm:$0xf]
    %v3347 = vld [vmem:[#allocation8 + $0x4] sm:$0xf]
    %v3348 = vld [vmem:[#allocation8 + $0x8] sm:$0xf]
    %v3349 = vld [vmem:[#allocation8 + $0xc] sm:$0xf]
    %v3350 = vld [vmem:[#allocation8 + $0x10] sm:$0xf]
    %v3351 = vld [vmem:[#allocation8 + $0x14] sm:$0xf]
    %v3352 = vld [vmem:[#allocation8 + $0x18] sm:$0xf]
    %v3353 = vld [vmem:[#allocation8 + $0x1c] sm:$0xf]
    %v3354 = vld [vmem:[#allocation8 + $0x20] sm:$0xf]
    %v3355 = vld [vmem:[#allocation8 + $0x24] sm:$0xf]
    %v3356 = vld [vmem:[#allocation8 + $0x28] sm:$0xf]
    %v3357 = vld [vmem:[#allocation8 + $0x2c] sm:$0xf]
    %v3358 = vld [vmem:[#allocation8 + $0x30] sm:$0xf]
    %v3359 = vld [vmem:[#allocation8 + $0x34] sm:$0xf]
    %v3360 = vld [vmem:[#allocation8 + $0x38] sm:$0xf]
    %v3361 = vld [vmem:[#allocation8 + $0x3c] sm:$0xf]
    %v3362 = vld [vmem:[#allocation8 + $0x40] sm:$0xf]
    %v3363 = vld [vmem:[#allocation8 + $0x44] sm:$0xf]
    %v3364 = vld [vmem:[#allocation8 + $0x48] sm:$0xf]
    %v3365 = vld [vmem:[#allocation8 + $0x4c] sm:$0xf]
    %v3366 = vld [vmem:[#allocation8 + $0x50] sm:$0xf]
    %v3367 = vld [vmem:[#allocation8 + $0x54] sm:$0xf]
    %v3368 = vld [vmem:[#allocation8 + $0x58] sm:$0xf]
    %v3369 = vld [vmem:[#allocation8 + $0x5c] sm:$0xf]
    %v3370 = vld [vmem:[#allocation8 + $0x60] sm:$0xf]
    %v3371 = vld [vmem:[#allocation8 + $0x64] sm:$0xf]
    %v3372 = vld [vmem:[#allocation8 + $0x68] sm:$0xf]
    %v3373 = vld [vmem:[#allocation8 + $0x6c] sm:$0xf]
    %v3374 = vld [vmem:[#allocation8 + $0x70] sm:$0xf]
    %v3375 = vld [vmem:[#allocation8 + $0x74] sm:$0xf]
    %v3376 = vld [vmem:[#allocation8 + $0x78] sm:$0xf]
    %v3377 = vld [vmem:[#allocation8 + $0x7c] sm:$0xf]
    %v3378 = vld [vmem:[#allocation8 + $0x80] sm:$0xf]
    %v3379 = vld [vmem:[#allocation8 + $0x84] sm:$0xf]
    %v3380 = vld [vmem:[#allocation8 + $0x88] sm:$0xf]
    %v3381 = vld [vmem:[#allocation8 + $0x8c] sm:$0xf]
    %v3382 = vld [vmem:[#allocation8 + $0x90] sm:$0xf]
    %v3383 = vld [vmem:[#allocation8 + $0x94] sm:$0xf]
    %v3384 = vld [vmem:[#allocation8 + $0x98] sm:$0xf]
    %v3385 = vld [vmem:[#allocation8 + $0x9c] sm:$0xf]
    %v3386 = vld [vmem:[#allocation8 + $0xa0] sm:$0xf]
    %v3387 = vld [vmem:[#allocation8 + $0xa4] sm:$0xf]
    %v3388 = vld [vmem:[#allocation8 + $0xa8] sm:$0xf]
    %v3389 = vld [vmem:[#allocation8 + $0xac] sm:$0xf]
    %v3390 = vld [vmem:[#allocation8 + $0xb0] sm:$0xf]
    %v3391 = vld [vmem:[#allocation8 + $0xb4] sm:$0xf]
    %v3392 = vld [vmem:[#allocation8 + $0xb8] sm:$0xf]
    %v3393 = vld [vmem:[#allocation8 + $0xbc] sm:$0xf]
    %v3394 = vld [vmem:[#allocation8 + $0xc0] sm:$0xf]
    %v3395 = vld [vmem:[#allocation8 + $0xc4] sm:$0xf]
    %v3396 = vld [vmem:[#allocation8 + $0xc8] sm:$0xf]
    %v3397 = vld [vmem:[#allocation8 + $0xcc] sm:$0xf]
    %v3398 = vld [vmem:[#allocation8 + $0xd0] sm:$0xf]
    %v3399 = vld [vmem:[#allocation8 + $0xd4] sm:$0xf]
    %v3400 = vld [vmem:[#allocation8 + $0xd8] sm:$0xf]
    %v3401 = vld [vmem:[#allocation8 + $0xdc] sm:$0xf]
    %v3402 = vld [vmem:[#allocation8 + $0xe0] sm:$0xf]
    %v3403 = vld [vmem:[#allocation8 + $0xe4] sm:$0xf]
    %v3404 = vld [vmem:[#allocation8 + $0xe8] sm:$0xf]
    %v3405 = vld [vmem:[#allocation8 + $0xec] sm:$0xf]
    %v3406 = vld [vmem:[#allocation8 + $0xf0] sm:$0xf]
    %v3407 = vld [vmem:[#allocation8 + $0xf4] sm:$0xf]
    %v3408 = vld [vmem:[#allocation8 + $0xf8] sm:$0xf]
    %v3409 = vld [vmem:[#allocation8 + $0xfc] sm:$0xf]
    %v3410 = vld [vmem:[#allocation8 + $0x100] sm:$0xf]
    %v3411 = vld [vmem:[#allocation8 + $0x104] sm:$0xf]
    %v3412 = vld [vmem:[#allocation8 + $0x108] sm:$0xf]
    %v3413 = vld [vmem:[#allocation8 + $0x10c] sm:$0xf]
    %v3414 = vld [vmem:[#allocation8 + $0x110] sm:$0xf]
    %v3415 = vld [vmem:[#allocation8 + $0x114] sm:$0xf]
    %v3416 = vld [vmem:[#allocation8 + $0x118] sm:$0xf]
    %v3417 = vld [vmem:[#allocation8 + $0x11c] sm:$0xf]
    %v3418 = vld [vmem:[#allocation8 + $0x120] sm:$0xf]
    %v3419 = vld [vmem:[#allocation8 + $0x124] sm:$0xf]
    %v3420 = vld [vmem:[#allocation8 + $0x128] sm:$0xf]
    %v3421 = vld [vmem:[#allocation8 + $0x12c] sm:$0xf]
    %v3422 = vld [vmem:[#allocation8 + $0x130] sm:$0xf]
    %v3423 = vld [vmem:[#allocation8 + $0x134] sm:$0xf]
    %v3424 = vld [vmem:[#allocation8 + $0x138] sm:$0xf]
    %v3425 = vld [vmem:[#allocation8 + $0x13c] sm:$0xf]
    %v3426 = vld [vmem:[#allocation8 + $0x140] sm:$0xf]
    %v3427 = vld [vmem:[#allocation8 + $0x144] sm:$0xf]
    %v3428 = vld [vmem:[#allocation8 + $0x148] sm:$0xf]
    %v3429 = vld [vmem:[#allocation8 + $0x14c] sm:$0xf]
    %v3430 = vld [vmem:[#allocation8 + $0x150] sm:$0xf]
    %v3431 = vld [vmem:[#allocation8 + $0x154] sm:$0xf]
    %v3432 = vld [vmem:[#allocation8 + $0x158] sm:$0xf]
    %v3433 = vld [vmem:[#allocation8 + $0x15c] sm:$0xf]
    %v3434 = vld [vmem:[#allocation8 + $0x160] sm:$0xf]
    %v3435 = vld [vmem:[#allocation8 + $0x164] sm:$0xf]
    %v3436 = vld [vmem:[#allocation8 + $0x168] sm:$0xf]
    %v3437 = vld [vmem:[#allocation8 + $0x16c] sm:$0xf]
    %v3438 = vld [vmem:[#allocation8 + $0x170] sm:$0xf]
    %v3439 = vld [vmem:[#allocation8 + $0x174] sm:$0xf]
    %v3440 = vld [vmem:[#allocation8 + $0x178] sm:$0xf]
    %v3441 = vld [vmem:[#allocation8 + $0x17c] sm:$0xf]
    %v3442 = vld [vmem:[#allocation10] sm:$0x1]
    %v3444 = vlaneseq
    %v3445 = vshrl.u32 %v3444, 7
    %v3446 = vsub.s32 0, %v3445
    %v3447 = vrot.slane %v3442, %v3446
    %v3545 = vunpack.c.l.b16 %v3346
    %v3546 = vunpack.c.l.b16 %v3347
    %v3547 = vunpack.c.l.b16 %v3348
    %v3548 = vunpack.c.l.b16 %v3349
    %v3549 = vunpack.c.l.b16 %v3350
    %v3550 = vunpack.c.l.b16 %v3351
    %v3551 = vunpack.c.l.b16 %v3352
    %v3552 = vunpack.c.l.b16 %v3353
    %v3553 = vunpack.c.l.b16 %v3354
    %v3554 = vunpack.c.l.b16 %v3355
    %v3555 = vunpack.c.l.b16 %v3356
    %v3556 = vunpack.c.l.b16 %v3357
    %v3557 = vunpack.c.l.b16 %v3358
    %v3558 = vunpack.c.l.b16 %v3359
    %v3559 = vunpack.c.l.b16 %v3360
    %v3560 = vunpack.c.l.b16 %v3361
    %v3561 = vunpack.c.l.b16 %v3362
    %v3562 = vunpack.c.l.b16 %v3363
    %v3563 = vunpack.c.l.b16 %v3364
    %v3564 = vunpack.c.l.b16 %v3365
    %v3565 = vunpack.c.l.b16 %v3366
    %v3566 = vunpack.c.l.b16 %v3367
    %v3567 = vunpack.c.l.b16 %v3368
    %v3568 = vunpack.c.l.b16 %v3369
    %v3569 = vunpack.c.l.b16 %v3370
    %v3570 = vunpack.c.l.b16 %v3371
    %v3571 = vunpack.c.l.b16 %v3372
    %v3572 = vunpack.c.l.b16 %v3373
    %v3573 = vunpack.c.l.b16 %v3374
    %v3574 = vunpack.c.l.b16 %v3375
    %v3575 = vunpack.c.l.b16 %v3376
    %v3576 = vunpack.c.l.b16 %v3377
    %v3577 = vunpack.c.l.b16 %v3378
    %v3578 = vunpack.c.l.b16 %v3379
    %v3579 = vunpack.c.l.b16 %v3380
    %v3580 = vunpack.c.l.b16 %v3381
    %v3581 = vunpack.c.l.b16 %v3382
    %v3582 = vunpack.c.l.b16 %v3383
    %v3583 = vunpack.c.l.b16 %v3384
    %v3584 = vunpack.c.l.b16 %v3385
    %v3585 = vunpack.c.l.b16 %v3386
    %v3586 = vunpack.c.l.b16 %v3387
    %v3587 = vunpack.c.l.b16 %v3388
    %v3588 = vunpack.c.l.b16 %v3389
    %v3589 = vunpack.c.l.b16 %v3390
    %v3590 = vunpack.c.l.b16 %v3391
    %v3591 = vunpack.c.l.b16 %v3392
    %v3592 = vunpack.c.l.b16 %v3393
    %v3593 = vunpack.c.l.b16 %v3394
    %v3594 = vunpack.c.l.b16 %v3395
    %v3595 = vunpack.c.l.b16 %v3396
    %v3596 = vunpack.c.l.b16 %v3397
    %v3597 = vunpack.c.l.b16 %v3398
    %v3598 = vunpack.c.l.b16 %v3399
    %v3599 = vunpack.c.l.b16 %v3400
    %v3600 = vunpack.c.l.b16 %v3401
    %v3601 = vunpack.c.l.b16 %v3402
    %v3602 = vunpack.c.l.b16 %v3403
    %v3603 = vunpack.c.l.b16 %v3404
    %v3604 = vunpack.c.l.b16 %v3405
    %v3605 = vunpack.c.l.b16 %v3406
    %v3606 = vunpack.c.l.b16 %v3407
    %v3607 = vunpack.c.l.b16 %v3408
    %v3608 = vunpack.c.l.b16 %v3409
    %v3609 = vunpack.c.l.b16 %v3410
    %v3610 = vunpack.c.l.b16 %v3411
    %v3611 = vunpack.c.l.b16 %v3412
    %v3612 = vunpack.c.l.b16 %v3413
    %v3613 = vunpack.c.l.b16 %v3414
    %v3614 = vunpack.c.l.b16 %v3415
    %v3615 = vunpack.c.l.b16 %v3416
    %v3616 = vunpack.c.l.b16 %v3417
    %v3617 = vunpack.c.l.b16 %v3418
    %v3618 = vunpack.c.l.b16 %v3419
    %v3619 = vunpack.c.l.b16 %v3420
    %v3620 = vunpack.c.l.b16 %v3421
    %v3621 = vunpack.c.l.b16 %v3422
    %v3622 = vunpack.c.l.b16 %v3423
    %v3623 = vunpack.c.l.b16 %v3424
    %v3624 = vunpack.c.l.b16 %v3425
    %v3625 = vunpack.c.l.b16 %v3426
    %v3626 = vunpack.c.l.b16 %v3427
    %v3627 = vunpack.c.l.b16 %v3428
    %v3628 = vunpack.c.l.b16 %v3429
    %v3629 = vunpack.c.l.b16 %v3430
    %v3630 = vunpack.c.l.b16 %v3431
    %v3631 = vunpack.c.l.b16 %v3432
    %v3632 = vunpack.c.l.b16 %v3433
    %v3633 = vunpack.c.l.b16 %v3434
    %v3634 = vunpack.c.l.b16 %v3435
    %v3635 = vunpack.c.l.b16 %v3436
    %v3636 = vunpack.c.l.b16 %v3437
    %v3637 = vunpack.c.l.b16 %v3438
    %v3638 = vunpack.c.l.b16 %v3439
    %v3639 = vunpack.c.l.b16 %v3440
    %v3640 = vunpack.c.l.b16 %v3441
    %v3641 = vpack.c.b16 %v3546, %v3545
    %v3642 = vpack.c.b16 %v3548, %v3547
    %v3643 = vpack.c.b16 %v3550, %v3549
    %v3644 = vpack.c.b16 %v3552, %v3551
    %v3645 = vpack.c.b16 %v3554, %v3553
    %v3646 = vpack.c.b16 %v3556, %v3555
    %v3647 = vpack.c.b16 %v3558, %v3557
    %v3648 = vpack.c.b16 %v3560, %v3559
    %v3649 = vpack.c.b16 %v3562, %v3561
    %v3650 = vpack.c.b16 %v3564, %v3563
    %v3651 = vpack.c.b16 %v3566, %v3565
    %v3652 = vpack.c.b16 %v3568, %v3567
    %v3653 = vpack.c.b16 %v3570, %v3569
    %v3654 = vpack.c.b16 %v3572, %v3571
    %v3655 = vpack.c.b16 %v3574, %v3573
    %v3656 = vpack.c.b16 %v3576, %v3575
    %v3657 = vpack.c.b16 %v3578, %v3577
    %v3658 = vpack.c.b16 %v3580, %v3579
    %v3659 = vpack.c.b16 %v3582, %v3581
    %v3660 = vpack.c.b16 %v3584, %v3583
    %v3661 = vpack.c.b16 %v3586, %v3585
    %v3662 = vpack.c.b16 %v3588, %v3587
    %v3663 = vpack.c.b16 %v3590, %v3589
    %v3664 = vpack.c.b16 %v3592, %v3591
    %v3665 = vpack.c.b16 %v3594, %v3593
    %v3666 = vpack.c.b16 %v3596, %v3595
    %v3667 = vpack.c.b16 %v3598, %v3597
    %v3668 = vpack.c.b16 %v3600, %v3599
    %v3669 = vpack.c.b16 %v3602, %v3601
    %v3670 = vpack.c.b16 %v3604, %v3603
    %v3671 = vpack.c.b16 %v3606, %v3605
    %v3672 = vpack.c.b16 %v3608, %v3607
    %v3673 = vpack.c.b16 %v3610, %v3609
    %v3674 = vpack.c.b16 %v3612, %v3611
    %v3675 = vpack.c.b16 %v3614, %v3613
    %v3676 = vpack.c.b16 %v3616, %v3615
    %v3677 = vpack.c.b16 %v3618, %v3617
    %v3678 = vpack.c.b16 %v3620, %v3619
    %v3679 = vpack.c.b16 %v3622, %v3621
    %v3680 = vpack.c.b16 %v3624, %v3623
    %v3681 = vpack.c.b16 %v3626, %v3625
    %v3682 = vpack.c.b16 %v3628, %v3627
    %v3683 = vpack.c.b16 %v3630, %v3629
    %v3684 = vpack.c.b16 %v3632, %v3631
    %v3685 = vpack.c.b16 %v3634, %v3633
    %v3686 = vpack.c.b16 %v3636, %v3635
    %v3687 = vpack.c.b16 %v3638, %v3637
    %v3688 = vpack.c.b16 %v3640, %v3639
    %3737 = vmatprep.subr.bf16.mxu0 0
    %3738 = vmatpush1.bf16.msra.mxu0 %v3648
    %3739 = vmatprep.subr.bf16.mxu0 0
    %3740 = vmatpush1.bf16.msra.mxu0 %v3647
    %3741 = vmatprep.subr.bf16.mxu0 0
    %3742 = vmatpush1.bf16.msra.mxu0 %v3646
    %3743 = vmatprep.subr.bf16.mxu0 0
    %3744 = vmatpush1.bf16.msra.mxu0 %v3645
    %3745 = vmatprep.subr.bf16.mxu0 0
    %3746 = vmatpush1.bf16.msra.mxu0 %v3644
    %3747 = vmatprep.subr.bf16.mxu0 0
    %3748 = vmatpush1.bf16.msra.mxu0 %v3643
    %3749 = vmatprep.subr.bf16.mxu0 0
    %3750 = vmatpush1.bf16.msra.mxu0 %v3642
    %3751 = vmatprep.subr.bf16.mxu0 0
    %3752 = vmatpush1.bf16.msra.mxu0 %v3641
    %3753 = vmatprep.subr.bf16.mxu0 0
    %3754 = vmatpush2.bf16.msra.mxu0 %v3656
    %3755 = vmatprep.subr.bf16.mxu0 0
    %3756 = vmatpush2.bf16.msra.mxu0 %v3655
    %3757 = vmatprep.subr.bf16.mxu0 0
    %3758 = vmatpush2.bf16.msra.mxu0 %v3654
    %3759 = vmatprep.subr.bf16.mxu0 0
    %3760 = vmatpush2.bf16.msra.mxu0 %v3653
    %3761 = vmatprep.subr.bf16.mxu0 0
    %3762 = vmatpush2.bf16.msra.mxu0 %v3652
    %3763 = vmatprep.subr.bf16.mxu0 0
    %3764 = vmatpush2.bf16.msra.mxu0 %v3651
    %3765 = vmatprep.subr.bf16.mxu0 0
    %3766 = vmatpush2.bf16.msra.mxu0 %v3650
    %3767 = vmatprep.subr.bf16.mxu0 0
    %3768 = vmatpush2.bf16.msra.mxu0 %v3649
    %3769 = vmatprep.mubr.bf16.mxu0 %v186
    %3770 = vmatmul.mubr.bf16.gmra.mxu0 %v185
    %v3771 = vpop.f32.mrf.mxu0
    %v3772 = vadd.f32 %v3447, %v3771
    %v3773 = vpop.f32.mrf.mxu0
    %v3774 = vpop.f32.mrf.mxu0
    %v3775 = vadd.f32 %v3447, %v3774
    %v3776 = vpop.f32.mrf.mxu0
    %3777 = vmatprep.mubr.bf16.mxu0 %v192
    %3778 = vmatmul.mubr.bf16.gmra.mxu0 %v191
    %v3779 = vpop.f32.mrf.mxu0
    %v3780 = vadd.f32 %v3447, %v3779
    %v3781 = vpop.f32.mrf.mxu0
    %v3782 = vpop.f32.mrf.mxu0
    %v3783 = vadd.f32 %v3447, %v3782
    %v3784 = vpop.f32.mrf.mxu0
    %3785 = vmatprep.mubr.bf16.mxu0 %v198
    %3786 = vmatmul.mubr.bf16.gmra.mxu0 %v197
    %v3787 = vpop.f32.mrf.mxu0
    %v3788 = vadd.f32 %v3447, %v3787
    %v3789 = vpop.f32.mrf.mxu0
    %v3790 = vpop.f32.mrf.mxu0
    %v3791 = vadd.f32 %v3447, %v3790
    %v3792 = vpop.f32.mrf.mxu0
    %3793 = vmatprep.mubr.bf16.mxu0 %v204
    %3794 = vmatmul.mubr.bf16.gmra.mxu0 %v203
    %v3795 = vpop.f32.mrf.mxu0
    %v3796 = vadd.f32 %v3447, %v3795
    %v3797 = vpop.f32.mrf.mxu0
    %v3798 = vpop.f32.mrf.mxu0
    %v3799 = vadd.f32 %v3447, %v3798
    %v3800 = vpop.f32.mrf.mxu0
    %3801 = vmatprep.mubr.bf16.mxu0 %v210
    %3802 = vmatmul.mubr.bf16.gmra.mxu0 %v209
    %v3803 = vpop.f32.mrf.mxu0
    %v3804 = vadd.f32 %v3447, %v3803
    %v3805 = vpop.f32.mrf.mxu0
    %v3806 = vpop.f32.mrf.mxu0
    %v3807 = vadd.f32 %v3447, %v3806
    %v3808 = vpop.f32.mrf.mxu0
    %3809 = vmatprep.mubr.bf16.mxu0 %v216
    %3810 = vmatmul.mubr.bf16.gmra.mxu0 %v215
    %v3811 = vpop.f32.mrf.mxu0
    %v3812 = vadd.f32 %v3447, %v3811
    %v3813 = vpop.f32.mrf.mxu0
    %v3814 = vpop.f32.mrf.mxu0
    %v3815 = vadd.f32 %v3447, %v3814
    %v3816 = vpop.f32.mrf.mxu0
    %3817 = vmatprep.mubr.bf16.mxu0 %v222
    %3818 = vmatmul.mubr.bf16.gmra.mxu0 %v221
    %v3819 = vpop.f32.mrf.mxu0
    %v3820 = vadd.f32 %v3447, %v3819
    %v3821 = vpop.f32.mrf.mxu0
    %v3822 = vpop.f32.mrf.mxu0
    %v3823 = vadd.f32 %v3447, %v3822
    %v3824 = vpop.f32.mrf.mxu0
    %3825 = vmatprep.mubr.bf16.mxu0 %v228
    %3826 = vmatmul.mubr.bf16.gmra.mxu0 %v227
    %v3827 = vpop.f32.mrf.mxu0
    %v3828 = vadd.f32 %v3447, %v3827
    %v3829 = vpop.f32.mrf.mxu0
    %v3830 = vpop.f32.mrf.mxu0
    %v3831 = vadd.f32 %v3447, %v3830
    %v3832 = vpop.f32.mrf.mxu0
    %3833 = vdwg.mxu0
    %3834 = vmatprep.subr.bf16.mxu0 0
    %3835 = vmatpush1.bf16.msra.mxu0 %v3664
    %3836 = vmatprep.subr.bf16.mxu0 0
    %3837 = vmatpush1.bf16.msra.mxu0 %v3663
    %3838 = vmatprep.subr.bf16.mxu0 0
    %3839 = vmatpush1.bf16.msra.mxu0 %v3662
    %3840 = vmatprep.subr.bf16.mxu0 0
    %3841 = vmatpush1.bf16.msra.mxu0 %v3661
    %3842 = vmatprep.subr.bf16.mxu0 0
    %3843 = vmatpush1.bf16.msra.mxu0 %v3660
    %3844 = vmatprep.subr.bf16.mxu0 0
    %3845 = vmatpush1.bf16.msra.mxu0 %v3659
    %3846 = vmatprep.subr.bf16.mxu0 0
    %3847 = vmatpush1.bf16.msra.mxu0 %v3658
    %3848 = vmatprep.subr.bf16.mxu0 0
    %3849 = vmatpush1.bf16.msra.mxu0 %v3657
    %3850 = vmatprep.subr.bf16.mxu0 0
    %3851 = vmatpush2.bf16.msra.mxu0 %v3672
    %3852 = vmatprep.subr.bf16.mxu0 0
    %3853 = vmatpush2.bf16.msra.mxu0 %v3671
    %3854 = vmatprep.subr.bf16.mxu0 0
    %3855 = vmatpush2.bf16.msra.mxu0 %v3670
    %3856 = vmatprep.subr.bf16.mxu0 0
    %3857 = vmatpush2.bf16.msra.mxu0 %v3669
    %3858 = vmatprep.subr.bf16.mxu0 0
    %3859 = vmatpush2.bf16.msra.mxu0 %v3668
    %3860 = vmatprep.subr.bf16.mxu0 0
    %3861 = vmatpush2.bf16.msra.mxu0 %v3667
    %3862 = vmatprep.subr.bf16.mxu0 0
    %3863 = vmatpush2.bf16.msra.mxu0 %v3666
    %3864 = vmatprep.subr.bf16.mxu0 0
    %3865 = vmatpush2.bf16.msra.mxu0 %v3665
    %3866 = vmatprep.mubr.bf16.mxu0 %v188
    %3867 = vmatmul.mubr.bf16.gmra.mxu0 %v187
    %v3868 = vpop.f32.mrf.mxu0
    %v3869 = vadd.f32 %v3772, %v3868
    %v3870 = vpop.f32.mrf.mxu0
    %v3871 = vpop.f32.mrf.mxu0
    %v3872 = vadd.f32 %v3775, %v3871
    %v3873 = vpop.f32.mrf.mxu0
    %3874 = vmatprep.mubr.bf16.mxu0 %v194
    %3875 = vmatmul.mubr.bf16.gmra.mxu0 %v193
    %v3876 = vpop.f32.mrf.mxu0
    %v3877 = vadd.f32 %v3780, %v3876
    %v3878 = vpop.f32.mrf.mxu0
    %v3879 = vpop.f32.mrf.mxu0
    %v3880 = vadd.f32 %v3783, %v3879
    %v3881 = vpop.f32.mrf.mxu0
    %3882 = vmatprep.mubr.bf16.mxu0 %v200
    %3883 = vmatmul.mubr.bf16.gmra.mxu0 %v199
    %v3884 = vpop.f32.mrf.mxu0
    %v3885 = vadd.f32 %v3788, %v3884
    %v3886 = vpop.f32.mrf.mxu0
    %v3887 = vpop.f32.mrf.mxu0
    %v3888 = vadd.f32 %v3791, %v3887
    %v3889 = vpop.f32.mrf.mxu0
    %3890 = vmatprep.mubr.bf16.mxu0 %v206
    %3891 = vmatmul.mubr.bf16.gmra.mxu0 %v205
    %v3892 = vpop.f32.mrf.mxu0
    %v3893 = vadd.f32 %v3796, %v3892
    %v3894 = vpop.f32.mrf.mxu0
    %v3895 = vpop.f32.mrf.mxu0
    %v3896 = vadd.f32 %v3799, %v3895
    %v3897 = vpop.f32.mrf.mxu0
    %3898 = vmatprep.mubr.bf16.mxu0 %v212
    %3899 = vmatmul.mubr.bf16.gmra.mxu0 %v211
    %v3900 = vpop.f32.mrf.mxu0
    %v3901 = vadd.f32 %v3804, %v3900
    %v3902 = vpop.f32.mrf.mxu0
    %v3903 = vpop.f32.mrf.mxu0
    %v3904 = vadd.f32 %v3807, %v3903
    %v3905 = vpop.f32.mrf.mxu0
    %3906 = vmatprep.mubr.bf16.mxu0 %v218
    %3907 = vmatmul.mubr.bf16.gmra.mxu0 %v217
    %v3908 = vpop.f32.mrf.mxu0
    %v3909 = vadd.f32 %v3812, %v3908
    %v3910 = vpop.f32.mrf.mxu0
    %v3911 = vpop.f32.mrf.mxu0
    %v3912 = vadd.f32 %v3815, %v3911
    %v3913 = vpop.f32.mrf.mxu0
    %3914 = vmatprep.mubr.bf16.mxu0 %v224
    %3915 = vmatmul.mubr.bf16.gmra.mxu0 %v223
    %v3916 = vpop.f32.mrf.mxu0
    %v3917 = vadd.f32 %v3820, %v3916
    %v3918 = vpop.f32.mrf.mxu0
    %v3919 = vpop.f32.mrf.mxu0
    %v3920 = vadd.f32 %v3823, %v3919
    %v3921 = vpop.f32.mrf.mxu0
    %3922 = vmatprep.mubr.bf16.mxu0 %v230
    %3923 = vmatmul.mubr.bf16.gmra.mxu0 %v229
    %v3924 = vpop.f32.mrf.mxu0
    %v3925 = vadd.f32 %v3828, %v3924
    %v3926 = vpop.f32.mrf.mxu0
    %v3927 = vpop.f32.mrf.mxu0
    %v3928 = vadd.f32 %v3831, %v3927
    %v3929 = vpop.f32.mrf.mxu0
    %3930 = vdwg.mxu0
    %3931 = vmatprep.subr.bf16.mxu0 0
    %3932 = vmatpush1.bf16.msra.mxu0 %v3680
    %3933 = vmatprep.subr.bf16.mxu0 0
    %3934 = vmatpush1.bf16.msra.mxu0 %v3679
    %3935 = vmatprep.subr.bf16.mxu0 0
    %3936 = vmatpush1.bf16.msra.mxu0 %v3678
    %3937 = vmatprep.subr.bf16.mxu0 0
    %3938 = vmatpush1.bf16.msra.mxu0 %v3677
    %3939 = vmatprep.subr.bf16.mxu0 0
    %3940 = vmatpush1.bf16.msra.mxu0 %v3676
    %3941 = vmatprep.subr.bf16.mxu0 0
    %3942 = vmatpush1.bf16.msra.mxu0 %v3675
    %3943 = vmatprep.subr.bf16.mxu0 0
    %3944 = vmatpush1.bf16.msra.mxu0 %v3674
    %3945 = vmatprep.subr.bf16.mxu0 0
    %3946 = vmatpush1.bf16.msra.mxu0 %v3673
    %3947 = vmatprep.subr.bf16.mxu0 0
    %3948 = vmatpush2.bf16.msra.mxu0 %v3688
    %3949 = vmatprep.subr.bf16.mxu0 0
    %3950 = vmatpush2.bf16.msra.mxu0 %v3687
    %3951 = vmatprep.subr.bf16.mxu0 0
    %3952 = vmatpush2.bf16.msra.mxu0 %v3686
    %3953 = vmatprep.subr.bf16.mxu0 0
    %3954 = vmatpush2.bf16.msra.mxu0 %v3685
    %3955 = vmatprep.subr.bf16.mxu0 0
    %3956 = vmatpush2.bf16.msra.mxu0 %v3684
    %3957 = vmatprep.subr.bf16.mxu0 0
    %3958 = vmatpush2.bf16.msra.mxu0 %v3683
    %3959 = vmatprep.subr.bf16.mxu0 0
    %3960 = vmatpush2.bf16.msra.mxu0 %v3682
    %3961 = vmatprep.subr.bf16.mxu0 0
    %3962 = vmatpush2.bf16.msra.mxu0 %v3681
    %3963 = vmatprep.mubr.bf16.mxu0 %v190
    %3964 = vmatmul.mubr.bf16.gmra.mxu0 %v189
    %v3965 = vpop.f32.mrf.mxu0
    %v3966 = vadd.f32 %v3869, %v3965
    %v3967 = vpop.f32.mrf.mxu0
    %v3968 = vpop.f32.mrf.mxu0
    %v3969 = vadd.f32 %v3872, %v3968
    %v3970 = vpop.f32.mrf.mxu0
    %3971 = vmatprep.mubr.bf16.mxu0 %v196
    %3972 = vmatmul.mubr.bf16.gmra.mxu0 %v195
    %v3973 = vpop.f32.mrf.mxu0
    %v3974 = vadd.f32 %v3877, %v3973
    %v3975 = vpop.f32.mrf.mxu0
    %v3976 = vpop.f32.mrf.mxu0
    %v3977 = vadd.f32 %v3880, %v3976
    %v3978 = vpop.f32.mrf.mxu0
    %3979 = vmatprep.mubr.bf16.mxu0 %v202
    %3980 = vmatmul.mubr.bf16.gmra.mxu0 %v201
    %v3981 = vpop.f32.mrf.mxu0
    %v3982 = vadd.f32 %v3885, %v3981
    %v3983 = vpop.f32.mrf.mxu0
    %v3984 = vpop.f32.mrf.mxu0
    %v3985 = vadd.f32 %v3888, %v3984
    %v3986 = vpop.f32.mrf.mxu0
    %3987 = vmatprep.mubr.bf16.mxu0 %v208
    %3988 = vmatmul.mubr.bf16.gmra.mxu0 %v207
    %v3989 = vpop.f32.mrf.mxu0
    %v3990 = vadd.f32 %v3893, %v3989
    %v3991 = vpop.f32.mrf.mxu0
    %v3992 = vpop.f32.mrf.mxu0
    %v3993 = vadd.f32 %v3896, %v3992
    %v3994 = vpop.f32.mrf.mxu0
    %3995 = vmatprep.mubr.bf16.mxu0 %v214
    %3996 = vmatmul.mubr.bf16.gmra.mxu0 %v213
    %v3997 = vpop.f32.mrf.mxu0
    %v3998 = vadd.f32 %v3901, %v3997
    %v3999 = vpop.f32.mrf.mxu0
    %v4000 = vpop.f32.mrf.mxu0
    %v4001 = vadd.f32 %v3904, %v4000
    %v4002 = vpop.f32.mrf.mxu0
    %4003 = vmatprep.mubr.bf16.mxu0 %v220
    %4004 = vmatmul.mubr.bf16.gmra.mxu0 %v219
    %v4005 = vpop.f32.mrf.mxu0
    %v4006 = vadd.f32 %v3909, %v4005
    %v4007 = vpop.f32.mrf.mxu0
    %v4008 = vpop.f32.mrf.mxu0
    %v4009 = vadd.f32 %v3912, %v4008
    %v4010 = vpop.f32.mrf.mxu0
    %4011 = vmatprep.mubr.bf16.mxu0 %v226
    %4012 = vmatmul.mubr.bf16.gmra.mxu0 %v225
    %v4013 = vpop.f32.mrf.mxu0
    %v4014 = vadd.f32 %v3917, %v4013
    %v4015 = vpop.f32.mrf.mxu0
    %v4016 = vpop.f32.mrf.mxu0
    %v4017 = vadd.f32 %v3920, %v4016
    %v4018 = vpop.f32.mrf.mxu0
    %4019 = vmatprep.mubr.bf16.mxu0 %v232
    %4020 = vmatmul.mubr.bf16.gmra.mxu0 %v231
    %v4021 = vpop.f32.mrf.mxu0
    %v4022 = vadd.f32 %v3925, %v4021
    %v4023 = vpop.f32.mrf.mxu0
    %v4024 = vpop.f32.mrf.mxu0
    %v4025 = vadd.f32 %v3928, %v4024
    %v4026 = vpop.f32.mrf.mxu0
    %4027 = vdwg.mxu0
    %v4028 = vpack.c.bf16 %v3969, %v3966
    %v4029 = vpack.c.bf16 %v3977, %v3974
    %v4030 = vpack.c.bf16 %v3985, %v3982
    %v4031 = vpack.c.bf16 %v3993, %v3990
    %v4032 = vpack.c.bf16 %v4001, %v3998
    %v4033 = vpack.c.bf16 %v4009, %v4006
    %v4034 = vpack.c.bf16 %v4017, %v4014
    %v4035 = vpack.c.bf16 %v4025, %v4022
    %v4044 = vunpack.c.l.b16 %v4028
    %v4045 = vunpack.c.h.b16 %v4028
    %v4046 = vunpack.c.l.b16 %v4029
    %v4047 = vunpack.c.h.b16 %v4029
    %v4048 = vunpack.c.l.b16 %v4030
    %v4049 = vunpack.c.h.b16 %v4030
    %v4050 = vunpack.c.l.b16 %v4031
    %v4051 = vunpack.c.h.b16 %v4031
    %v4052 = vunpack.c.l.b16 %v4032
    %v4053 = vunpack.c.h.b16 %v4032
    %v4054 = vunpack.c.l.b16 %v4033
    %v4055 = vunpack.c.h.b16 %v4033
    %v4056 = vunpack.c.l.b16 %v4034
    %v4057 = vunpack.c.h.b16 %v4034
    %v4058 = vunpack.c.l.b16 %v4035
    %v4059 = vunpack.c.h.b16 %v4035
    %v4060 = vpack.c.b16 %v4044, %v4044
    %v4061 = vpack.c.b16 %v4045, %v4045
    %v4062 = vpack.c.b16 %v4046, %v4046
    %v4063 = vpack.c.b16 %v4047, %v4047
    %v4064 = vpack.c.b16 %v4048, %v4048
    %v4065 = vpack.c.b16 %v4049, %v4049
    %v4066 = vpack.c.b16 %v4050, %v4050
    %v4067 = vpack.c.b16 %v4051, %v4051
    %v4068 = vpack.c.b16 %v4052, %v4052
    %v4069 = vpack.c.b16 %v4053, %v4053
    %v4070 = vpack.c.b16 %v4054, %v4054
    %v4071 = vpack.c.b16 %v4055, %v4055
    %v4072 = vpack.c.b16 %v4056, %v4056
    %v4073 = vpack.c.b16 %v4057, %v4057
    %v4074 = vpack.c.b16 %v4058, %v4058
    %v4075 = vpack.c.b16 %v4059, %v4059
    %4092 = vst [vmem:[#allocation12] sm:$0xf] %v4060
    %4093 = vst [vmem:[#allocation12 + $0x4] sm:$0xf] %v4061
    %4094 = vst [vmem:[#allocation12 + $0x8] sm:$0xf] %v4062
    %4095 = vst [vmem:[#allocation12 + $0xc] sm:$0xf] %v4063
    %4096 = vst [vmem:[#allocation12 + $0x10] sm:$0xf] %v4064
    %4097 = vst [vmem:[#allocation12 + $0x14] sm:$0xf] %v4065
    %4098 = vst [vmem:[#allocation12 + $0x18] sm:$0xf] %v4066
    %4099 = vst [vmem:[#allocation12 + $0x1c] sm:$0xf] %v4067
    %4100 = vst [vmem:[#allocation12 + $0x20] sm:$0xf] %v4068
    %4101 = vst [vmem:[#allocation12 + $0x24] sm:$0xf] %v4069
    %4102 = vst [vmem:[#allocation12 + $0x28] sm:$0xf] %v4070
    %4103 = vst [vmem:[#allocation12 + $0x2c] sm:$0xf] %v4071
    %4104 = vst [vmem:[#allocation12 + $0x30] sm:$0xf] %v4072
    %4105 = vst [vmem:[#allocation12 + $0x34] sm:$0xf] %v4073
    %4106 = vst [vmem:[#allocation12 + $0x38] sm:$0xf] %v4074
    %4107 = vst [vmem:[#allocation12 + $0x3c] sm:$0xf] %v4075
    // Predicated region
    $region42: #{tpu_custom_call.1} parent=1 // pred_check
      _
    $region43: #{tpu_custom_call.1} parent=1 // pred_check_branch
      %4109 = sbr.rel (0) target = $region45
    $region44: #{tpu_custom_call.1} parent=1 // pred_region
      %s4111 = ssub.s32 6144, 6144
      %4112 = vsyncadd [#allocation4], %s4111
      %s4113 = sshll.u32 [#allocation11], 4
      %s4114 = int_to_ptr.vmem [resolvable:$true] %s4113
      %4119 = dma.vmem_to_hbm [thread:$0]  %s4114, 6144, %s5, [#allocation4], 384, 384, 24
    $region45: #{tpu_custom_call.1} parent=1 // pred_fallthru
      _
    // Predicated region
    $region46: #{tpu_custom_call.1} parent=1 // pred_check
      _
    $region47: #{tpu_custom_call.1} parent=1 // pred_check_branch
      %4121 = sbr.rel (0) target = $region49
    $region48: #{tpu_custom_call.1} parent=1 // pred_region
      %s4123 = ssub.s32 1024, 1024
      %4124 = vsyncadd [#allocation13], %s4123
      %s4125 = sshll.u32 [#allocation12], 4
      %s4126 = int_to_ptr.vmem [resolvable:$true] %s4125
      %4131 = dma.vmem_to_hbm [thread:$0]  %s4126, 1024, %s6, [#allocation13], 64, 64, 4
    $region49: #{tpu_custom_call.1} parent=1 // pred_fallthru
      _
    // Predicated region
    $region50: #{tpu_custom_call.1} parent=1 // pred_check
      _
    $region51: #{tpu_custom_call.1} parent=1 // pred_check_branch
      %4133 = sbr.rel (0) target = $region53
    $region52: #{tpu_custom_call.1} parent=1 // pred_region
      %4134 = dma.done [#allocation4], 6144
    $region53: #{tpu_custom_call.1} parent=1 // pred_fallthru
      _
    // Predicated region
    $region54: #{tpu_custom_call.1} parent=1 // pred_check
      _
    $region55: #{tpu_custom_call.1} parent=1 // pred_check_branch
      %4136 = sbr.rel (0) target = $region57
    $region56: #{tpu_custom_call.1} parent=1 // pred_region
      %4137 = dma.done [#allocation13], 1024
    $region57: #{tpu_custom_call.1} parent=1 // pred_fallthru
      _
    %4138 = vsyncpa [#allocation3], 1
    %4139 = vsyncpa [#allocation6], 1
    %4140 = vsyncpa [#allocation9], 1
    %4141 = vsyncpa [#allocation4], 1
    %4142 = vsyncpa [#allocation13], 1

// kernel: tpu_custom_call.1
$region0: #{tpu_custom_call.1}
  #allocation0 [shape = 'u32[]', space=smem, size = 0x4, offset = 0x4, fixed_abs, tag = 'smem constant byte address 0x4 - core index']
  #allocation1 [shape = 'u32[144,128]{1,0:T(1,128)}', space=vmem, size = 0x12000, scoped, tag = 'internal scratch']
  %s0 = inlined_call_operand.hbm [shape: f32[128,768], index: 0, kind: input, shape index: {}]
  %s1 = inlined_call_operand.hbm [shape: bf16[768,768], index: 1, kind: input, shape index: {}]
  %s2 = inlined_call_operand.hbm [shape: f32[1,768], index: 2, kind: input, shape index: {}]
  %s3 = inlined_call_operand.hbm [shape: bf16[768,128], index: 3, kind: input, shape index: {}]
  %s4 = inlined_call_operand.hbm [shape: f32[1,128], index: 4, kind: input, shape index: {}]
  %s5 = inlined_call_operand.hbm [shape: bf16[128,768], index: 5, kind: output, shape index: {0}]
  %s6 = inlined_call_operand.hbm [shape: bf16[128,128], index: 6, kind: output, shape index: {1}]
  %7 = xla_tuple %s5, %s6
  %s8 = sld [smem:[#allocation0]]
  $region58: #{tpu_custom_call.1} parent=0
    _
  %s10 = ssub.s32 1, %s8
  %s11 = scalar_select 0, %s10, %s8
  $region1: #{tpu_custom_call.1} parent=0
    #allocation2 [shape = 'u8[393216]{0}', space=vmem, size = 0x60000, scoped, tag = 'input window, operand 0, single buffered']
    #allocation3 [shape = 's32[1]{0}', space=sflag, size = 0x4, scoped, tag = 'scoped memory for tpu_custom_call.1']
    #allocation4 [shape = 's32[1]{0}', space=sflag, size = 0x4, scoped, tag = 'scoped memory for tpu_custom_call.1']
    #allocation5 [shape = 'u8[1179648]{0}', space=vmem, size = 0x120000, scoped, tag = 'input window, operand 1, single buffered']
    #allocation6 [shape = 's32[1]{0}', space=sflag, size = 0x4, scoped, tag = 'scoped memory for tpu_custom_call.1']
    #allocation7 [shape = 'u8[3072]{0}', space=vmem, size = 0xc00, scoped, tag = 'input window, operand 2, single buffered']
    #allocation8 [shape = 'u8[196608]{0}', space=vmem, size = 0x30000, scoped, tag = 'input window, operand 3, single buffered']
    #allocation9 [shape = 's32[1]{0}', space=sflag, size = 0x4, scoped, tag = 'scoped memory for tpu_custom_call.1']
    #allocation10 [shape = 'u8[512]{0}', space=vmem, size = 0x400, scoped, tag = 'input window, operand 4, single buffered']
    #allocation11 [shape = 'u8[196608]{0}', space=vmem, size = 0x30000, scoped, tag = 'output window, operand 0, single buffered']
    #allocation12 [shape = 'u8[32768]{0}', space=vmem, size = 0x8000, scoped, tag = 'output window, operand 1, single buffered']
    #allocation13 [shape = 's32[1]{0}', space=sflag, size = 0x4, scoped, tag = 'scoped memory for tpu_custom_call.1']
    %12 = vsyncpa [#allocation3], 0
    %13 = vsyncpa [#allocation6], 0
    %14 = vsyncpa [#allocation9], 0
    %15 = vsyncpa [#allocation4], 0
    %16 = vsyncpa [#allocation13], 0
    // Predicated region
    $region2: #{tpu_custom_call.1} parent=1 // pred_check
      _
    $region3: #{tpu_custom_call.1} parent=1 // pred_check_branch
      %18 = sbr.rel (0) target = $region5
    $region4: #{tpu_custom_call.1} parent=1 // pred_region
      %s20 = ssub.s32 12288, 12288
      %21 = vsyncadd [#allocation3], %s20
      %s22 = sshll.u32 [#allocation2], 4
      %s23 = int_to_ptr.vmem [resolvable:$true] %s22
      %28 = dma.hbm_to_vmem [thread:$0]  %s0, 12288, %s23, [#allocation3], 768, 768, 48
    $region5: #{tpu_custom_call.1} parent=1 // pred_fallthru
      _
    // Predicated region
    $region6: #{tpu_custom_call.1} parent=1 // pred_check
      _
    $region7: #{tpu_custom_call.1} parent=1 // pred_check_branch
      %30 = sbr.rel (0) target = $region9
    $region8: #{tpu_custom_call.1} parent=1 // pred_region
      %s32 = ssub.s32 36864, 36864
      %33 = vsyncadd [#allocation6], %s32
      %s34 = sshll.u32 [#allocation5], 4
      %s35 = int_to_ptr.vmem [resolvable:$true] %s34
      %40 = dma.hbm_to_vmem [thread:$0]  %s1, 36864, %s35, [#allocation6], 384, 384, 24
    $region9: #{tpu_custom_call.1} parent=1 // pred_fallthru
      _
    // Predicated region
    $region10: #{tpu_custom_call.1} parent=1 // pred_check
      _
    $region11: #{tpu_custom_call.1} parent=1 // pred_check_branch
      %42 = sbr.rel (0) target = $region13
    $region12: #{tpu_custom_call.1} parent=1 // pred_region
      %s44 = ssub.s32 96, 96
      %45 = vsyncadd [#allocation6], %s44
      %s47 = sshll.u32 [#allocation7], 4
      %s48 = int_to_ptr.vmem [resolvable:$true] %s47
      %50 = dma.hbm_to_vmem [thread:$0]  %s2, 96, %s48, [#allocation6]
    $region13: #{tpu_custom_call.1} parent=1 // pred_fallthru
      _
    // Predicated region
    $region14: #{tpu_custom_call.1} parent=1 // pred_check
      _
    $region15: #{tpu_custom_call.1} parent=1 // pred_check_branch
      %52 = sbr.rel (0) target = $region17
    $region16: #{tpu_custom_call.1} parent=1 // pred_region
      %s54 = ssub.s32 6144, 6144
      %55 = vsyncadd [#allocation9], %s54
      %s56 = sshll.u32 [#allocation8], 4
      %s57 = int_to_ptr.vmem [resolvable:$true] %s56
      %62 = dma.hbm_to_vmem [thread:$0]  %s3, 6144, %s57, [#allocation9], 64, 64, 4
    $region17: #{tpu_custom_call.1} parent=1 // pred_fallthru
      _
    // Predicated region
    $region18: #{tpu_custom_call.1} parent=1 // pred_check
      _
    $region19: #{tpu_custom_call.1} parent=1 // pred_check_branch
      %64 = sbr.rel (0) target = $region21
    $region20: #{tpu_custom_call.1} parent=1 // pred_region
      %s66 = ssub.s32 16, 16
      %67 = vsyncadd [#allocation9], %s66
      %s69 = sshll.u32 [#allocation10], 4
      %s70 = int_to_ptr.vmem [resolvable:$true] %s69
      %72 = dma.hbm_to_vmem [thread:$0]  %s4, 16, %s70, [#allocation9]
    $region21: #{tpu_custom_call.1} parent=1 // pred_fallthru
      _
    // Predicated region
    $region22: #{tpu_custom_call.1} parent=1 // pred_check
      _
    $region23: #{tpu_custom_call.1} parent=1 // pred_check_branch
      %74 = sbr.rel (0) target = $region25
    $region24: #{tpu_custom_call.1} parent=1 // pred_region
      %75 = dma.done [#allocation3], 12288
    $region25: #{tpu_custom_call.1} parent=1 // pred_fallthru
      _
    // Predicated region
    $region26: #{tpu_custom_call.1} parent=1 // pred_check
      _
    $region27: #{tpu_custom_call.1} parent=1 // pred_check_branch
      %77 = sbr.rel (0) target = $region29
    $region28: #{tpu_custom_call.1} parent=1 // pred_region
      %78 = dma.done [#allocation6], 36864
    $region29: #{tpu_custom_call.1} parent=1 // pred_fallthru
      _
    // Predicated region
    $region30: #{tpu_custom_call.1} parent=1 // pred_check
      _
    $region31: #{tpu_custom_call.1} parent=1 // pred_check_branch
      %80 = sbr.rel (0) target = $region33
    $region32: #{tpu_custom_call.1} parent=1 // pred_region
      %81 = dma.done [#allocation6], 96
    $region33: #{tpu_custom_call.1} parent=1 // pred_fallthru
      _
    // Predicated region
    $region34: #{tpu_custom_call.1} parent=1 // pred_check
      _
    $region35: #{tpu_custom_call.1} parent=1 // pred_check_branch
      %83 = sbr.rel (0) target = $region37
    $region36: #{tpu_custom_call.1} parent=1 // pred_region
      %84 = dma.done [#allocation9], 6144
    $region37: #{tpu_custom_call.1} parent=1 // pred_fallthru
      _
    // Predicated region
    $region38: #{tpu_custom_call.1} parent=1 // pred_check
      _
    $region39: #{tpu_custom_call.1} parent=1 // pred_check_branch
      %86 = sbr.rel (0) target = $region41
    $region40: #{tpu_custom_call.1} parent=1 // pred_region
      %87 = dma.done [#allocation9], 16
    $region41: #{tpu_custom_call.1} parent=1 // pred_fallthru
      _
    %v89 = vld [vmem:[#allocation2] sm:$0xff]
    %v90 = vld [vmem:[#allocation2 + $0x8] sm:$0xff]
    %v91 = vld [vmem:[#allocation2 + $0x10] sm:$0xff]
    %v92 = vld [vmem:[#allocation2 + $0x18] sm:$0xff]
    %v93 = vld [vmem:[#allocation2 + $0x20] sm:$0xff]
    %v94 = vld [vmem:[#allocation2 + $0x28] sm:$0xff]
    %v95 = vld [vmem:[#allocation2 + $0x30] sm:$0xff]
    %v96 = vld [vmem:[#allocation2 + $0x38] sm:$0xff]
    %v97 = vld [vmem:[#allocation2 + $0x40] sm:$0xff]
    %v98 = vld [vmem:[#allocation2 + $0x48] sm:$0xff]
    %v99 = vld [vmem:[#allocation2 + $0x50] sm:$0xff]
    %v100 = vld [vmem:[#allocation2 + $0x58] sm:$0xff]
    %v101 = vld [vmem:[#allocation2 + $0x60] sm:$0xff]
    %v102 = vld [vmem:[#allocation2 + $0x68] sm:$0xff]
    %v103 = vld [vmem:[#allocation2 + $0x70] sm:$0xff]
    %v104 = vld [vmem:[#allocation2 + $0x78] sm:$0xff]
    %v105 = vld [vmem:[#allocation2 + $0x80] sm:$0xff]
    %v106 = vld [vmem:[#allocation2 + $0x88] sm:$0xff]
    %v107 = vld [vmem:[#allocation2 + $0x90] sm:$0xff]
    %v108 = vld [vmem:[#allocation2 + $0x98] sm:$0xff]
    %v109 = vld [vmem:[#allocation2 + $0xa0] sm:$0xff]
    %v110 = vld [vmem:[#allocation2 + $0xa8] sm:$0xff]
    %v111 = vld [vmem:[#allocation2 + $0xb0] sm:$0xff]
    %v112 = vld [vmem:[#allocation2 + $0xb8] sm:$0xff]
    %v113 = vld [vmem:[#allocation2 + $0xc0] sm:$0xff]
    %v114 = vld [vmem:[#allocation2 + $0xc8] sm:$0xff]
    %v115 = vld [vmem:[#allocation2 + $0xd0] sm:$0xff]
    %v116 = vld [vmem:[#allocation2 + $0xd8] sm:$0xff]
    %v117 = vld [vmem:[#allocation2 + $0xe0] sm:$0xff]
    %v118 = vld [vmem:[#allocation2 + $0xe8] sm:$0xff]
    %v119 = vld [vmem:[#allocation2 + $0xf0] sm:$0xff]
    %v120 = vld [vmem:[#allocation2 + $0xf8] sm:$0xff]
    %v121 = vld [vmem:[#allocation2 + $0x100] sm:$0xff]
    %v122 = vld [vmem:[#allocation2 + $0x108] sm:$0xff]
    %v123 = vld [vmem:[#allocation2 + $0x110] sm:$0xff]
    %v124 = vld [vmem:[#allocation2 + $0x118] sm:$0xff]
    %v125 = vld [vmem:[#allocation2 + $0x120] sm:$0xff]
    %v126 = vld [vmem:[#allocation2 + $0x128] sm:$0xff]
    %v127 = vld [vmem:[#allocation2 + $0x130] sm:$0xff]
    %v128 = vld [vmem:[#allocation2 + $0x138] sm:$0xff]
    %v129 = vld [vmem:[#allocation2 + $0x140] sm:$0xff]
    %v130 = vld [vmem:[#allocation2 + $0x148] sm:$0xff]
    %v131 = vld [vmem:[#allocation2 + $0x150] sm:$0xff]
    %v132 = vld [vmem:[#allocation2 + $0x158] sm:$0xff]
    %v133 = vld [vmem:[#allocation2 + $0x160] sm:$0xff]
    %v134 = vld [vmem:[#allocation2 + $0x168] sm:$0xff]
    %v135 = vld [vmem:[#allocation2 + $0x170] sm:$0xff]
    %v136 = vld [vmem:[#allocation2 + $0x178] sm:$0xff]
    %v137 = vld [vmem:[#allocation2 + $0x180] sm:$0xff]
    %v138 = vld [vmem:[#allocation2 + $0x188] sm:$0xff]
    %v139 = vld [vmem:[#allocation2 + $0x190] sm:$0xff]
    %v140 = vld [vmem:[#allocation2 + $0x198] sm:$0xff]
    %v141 = vld [vmem:[#allocation2 + $0x1a0] sm:$0xff]
    %v142 = vld [vmem:[#allocation2 + $0x1a8] sm:$0xff]
    %v143 = vld [vmem:[#allocation2 + $0x1b0] sm:$0xff]
    %v144 = vld [vmem:[#allocation2 + $0x1b8] sm:$0xff]
    %v145 = vld [vmem:[#allocation2 + $0x1c0] sm:$0xff]
    %v146 = vld [vmem:[#allocation2 + $0x1c8] sm:$0xff]
    %v147 = vld [vmem:[#allocation2 + $0x1d0] sm:$0xff]
    %v148 = vld [vmem:[#allocation2 + $0x1d8] sm:$0xff]
    %v149 = vld [vmem:[#allocation2 + $0x1e0] sm:$0xff]
    %v150 = vld [vmem:[#allocation2 + $0x1e8] sm:$0xff]
    %v151 = vld [vmem:[#allocation2 + $0x1f0] sm:$0xff]
    %v152 = vld [vmem:[#allocation2 + $0x1f8] sm:$0xff]
    %v153 = vld [vmem:[#allocation2 + $0x200] sm:$0xff]
    %v154 = vld [vmem:[#allocation2 + $0x208] sm:$0xff]
    %v155 = vld [vmem:[#allocation2 + $0x210] sm:$0xff]
    %v156 = vld [vmem:[#allocation2 + $0x218] sm:$0xff]
    %v157 = vld [vmem:[#allocation2 + $0x220] sm:$0xff]
    %v158 = vld [vmem:[#allocation2 + $0x228] sm:$0xff]
    %v159 = vld [vmem:[#allocation2 + $0x230] sm:$0xff]
    %v160 = vld [vmem:[#allocation2 + $0x238] sm:$0xff]
    %v161 = vld [vmem:[#allocation2 + $0x240] sm:$0xff]
    %v162 = vld [vmem:[#allocation2 + $0x248] sm:$0xff]
    %v163 = vld [vmem:[#allocation2 + $0x250] sm:$0xff]
    %v164 = vld [vmem:[#allocation2 + $0x258] sm:$0xff]
    %v165 = vld [vmem:[#allocation2 + $0x260] sm:$0xff]
    %v166 = vld [vmem:[#allocation2 + $0x268] sm:$0xff]
    %v167 = vld [vmem:[#allocation2 + $0x270] sm:$0xff]
    %v168 = vld [vmem:[#allocation2 + $0x278] sm:$0xff]
    %v169 = vld [vmem:[#allocation2 + $0x280] sm:$0xff]
    %v170 = vld [vmem:[#allocation2 + $0x288] sm:$0xff]
    %v171 = vld [vmem:[#allocation2 + $0x290] sm:$0xff]
    %v172 = vld [vmem:[#allocation2 + $0x298] sm:$0xff]
    %v173 = vld [vmem:[#allocation2 + $0x2a0] sm:$0xff]
    %v174 = vld [vmem:[#allocation2 + $0x2a8] sm:$0xff]
    %v175 = vld [vmem:[#allocation2 + $0x2b0] sm:$0xff]
    %v176 = vld [vmem:[#allocation2 + $0x2b8] sm:$0xff]
    %v177 = vld [vmem:[#allocation2 + $0x2c0] sm:$0xff]
    %v178 = vld [vmem:[#allocation2 + $0x2c8] sm:$0xff]
    %v179 = vld [vmem:[#allocation2 + $0x2d0] sm:$0xff]
    %v180 = vld [vmem:[#allocation2 + $0x2d8] sm:$0xff]
    %v181 = vld [vmem:[#allocation2 + $0x2e0] sm:$0xff]
    %v182 = vld [vmem:[#allocation2 + $0x2e8] sm:$0xff]
    %v183 = vld [vmem:[#allocation2 + $0x2f0] sm:$0xff]
    %v184 = vld [vmem:[#allocation2 + $0x2f8] sm:$0xff]
    %v185 = vpack.c.bf16 %v95, %v89
    %v186 = vpack.c.bf16 %v96, %v90
    %v187 = vpack.c.bf16 %v97, %v91
    %v188 = vpack.c.bf16 %v98, %v92
    %v189 = vpack.c.bf16 %v99, %v93
    %v190 = vpack.c.bf16 %v100, %v94
    %v191 = vpack.c.bf16 %v107, %v101
    %v192 = vpack.c.bf16 %v108, %v102
    %v193 = vpack.c.bf16 %v109, %v103
    %v194 = vpack.c.bf16 %v110, %v104
    %v195 = vpack.c.bf16 %v111, %v105
    %v196 = vpack.c.bf16 %v112, %v106
    %v197 = vpack.c.bf16 %v119, %v113
    %v198 = vpack.c.bf16 %v120, %v114
    %v199 = vpack.c.bf16 %v121, %v115
    %v200 = vpack.c.bf16 %v122, %v116
    %v201 = vpack.c.bf16 %v123, %v117
    %v202 = vpack.c.bf16 %v124, %v118
    %v203 = vpack.c.bf16 %v131, %v125
    %v204 = vpack.c.bf16 %v132, %v126
    %v205 = vpack.c.bf16 %v133, %v127
    %v206 = vpack.c.bf16 %v134, %v128
    %v207 = vpack.c.bf16 %v135, %v129
    %v208 = vpack.c.bf16 %v136, %v130
    %v209 = vpack.c.bf16 %v143, %v137
    %v210 = vpack.c.bf16 %v144, %v138
    %v211 = vpack.c.bf16 %v145, %v139
    %v212 = vpack.c.bf16 %v146, %v140
    %v213 = vpack.c.bf16 %v147, %v141
    %v214 = vpack.c.bf16 %v148, %v142
    %v215 = vpack.c.bf16 %v155, %v149
    %v216 = vpack.c.bf16 %v156, %v150
    %v217 = vpack.c.bf16 %v157, %v151
    %v218 = vpack.c.bf16 %v158, %v152
    %v219 = vpack.c.bf16 %v159, %v153
    %v220 = vpack.c.bf16 %v160, %v154
    %v221 = vpack.c.bf16 %v167, %v161
    %v222 = vpack.c.bf16 %v168, %v162
    %v223 = vpack.c.bf16 %v169, %v163
    %v224 = vpack.c.bf16 %v170, %v164
    %v225 = vpack.c.bf16 %v171, %v165
    %v226 = vpack.c.bf16 %v172, %v166
    %v227 = vpack.c.bf16 %v179, %v173
    %v228 = vpack.c.bf16 %v180, %v174
    %v229 = vpack.c.bf16 %v181, %v175
    %v230 = vpack.c.bf16 %v182, %v176
    %v231 = vpack.c.bf16 %v183, %v177
    %v232 = vpack.c.bf16 %v184, %v178
    %v233 = vld [vmem:[#allocation5] sm:$0xff]
    %v234 = vld [vmem:[#allocation5 + $0x8] sm:$0xff]
    %v235 = vld [vmem:[#allocation5 + $0x10] sm:$0xff]
    %v236 = vld [vmem:[#allocation5 + $0x18] sm:$0xff]
    %v237 = vld [vmem:[#allocation5 + $0x20] sm:$0xff]
    %v238 = vld [vmem:[#allocation5 + $0x28] sm:$0xff]
    %v239 = vld [vmem:[#allocation5 + $0x30] sm:$0xff]
    %v240 = vld [vmem:[#allocation5 + $0x38] sm:$0xff]
    %v241 = vld [vmem:[#allocation5 + $0x40] sm:$0xff]
    %v242 = vld [vmem:[#allocation5 + $0x48] sm:$0xff]
    %v243 = vld [vmem:[#allocation5 + $0x50] sm:$0xff]
    %v244 = vld [vmem:[#allocation5 + $0x58] sm:$0xff]
    %v245 = vld [vmem:[#allocation5 + $0x60] sm:$0xff]
    %v246 = vld [vmem:[#allocation5 + $0x68] sm:$0xff]
    %v247 = vld [vmem:[#allocation5 + $0x70] sm:$0xff]
    %v248 = vld [vmem:[#allocation5 + $0x78] sm:$0xff]
    %v249 = vld [vmem:[#allocation5 + $0x80] sm:$0xff]
    %v250 = vld [vmem:[#allocation5 + $0x88] sm:$0xff]
    %v251 = vld [vmem:[#allocation5 + $0x90] sm:$0xff]
    %v252 = vld [vmem:[#allocation5 + $0x98] sm:$0xff]
    %v253 = vld [vmem:[#allocation5 + $0xa0] sm:$0xff]
    %v254 = vld [vmem:[#allocation5 + $0xa8] sm:$0xff]
    %v255 = vld [vmem:[#allocation5 + $0xb0] sm:$0xff]
    %v256 = vld [vmem:[#allocation5 + $0xb8] sm:$0xff]
    %v257 = vld [vmem:[#allocation5 + $0xc0] sm:$0xff]
    %v258 = vld [vmem:[#allocation5 + $0xc8] sm:$0xff]
    %v259 = vld [vmem:[#allocation5 + $0xd0] sm:$0xff]
    %v260 = vld [vmem:[#allocation5 + $0xd8] sm:$0xff]
    %v261 = vld [vmem:[#allocation5 + $0xe0] sm:$0xff]
    %v262 = vld [vmem:[#allocation5 + $0xe8] sm:$0xff]
    %v263 = vld [vmem:[#allocation5 + $0xf0] sm:$0xff]
    %v264 = vld [vmem:[#allocation5 + $0xf8] sm:$0xff]
    %v265 = vld [vmem:[#allocation5 + $0x100] sm:$0xff]
    %v266 = vld [vmem:[#allocation5 + $0x108] sm:$0xff]
    %v267 = vld [vmem:[#allocation5 + $0x110] sm:$0xff]
    %v268 = vld [vmem:[#allocation5 + $0x118] sm:$0xff]
    %v269 = vld [vmem:[#allocation5 + $0x120] sm:$0xff]
    %v270 = vld [vmem:[#allocation5 + $0x128] sm:$0xff]
    %v271 = vld [vmem:[#allocation5 + $0x130] sm:$0xff]
    %v272 = vld [vmem:[#allocation5 + $0x138] sm:$0xff]
    %v273 = vld [vmem:[#allocation5 + $0x140] sm:$0xff]
    %v274 = vld [vmem:[#allocation5 + $0x148] sm:$0xff]
    %v275 = vld [vmem:[#allocation5 + $0x150] sm:$0xff]
    %v276 = vld [vmem:[#allocation5 + $0x158] sm:$0xff]
    %v277 = vld [vmem:[#allocation5 + $0x160] sm:$0xff]
    %v278 = vld [vmem:[#allocation5 + $0x168] sm:$0xff]
    %v279 = vld [vmem:[#allocation5 + $0x170] sm:$0xff]
    %v280 = vld [vmem:[#allocation5 + $0x178] sm:$0xff]
    %v281 = vld [vmem:[#allocation5 + $0x180] sm:$0xff]
    %v282 = vld [vmem:[#allocation5 + $0x188] sm:$0xff]
    %v283 = vld [vmem:[#allocation5 + $0x190] sm:$0xff]
    %v284 = vld [vmem:[#allocation5 + $0x198] sm:$0xff]
    %v285 = vld [vmem:[#allocation5 + $0x1a0] sm:$0xff]
    %v286 = vld [vmem:[#allocation5 + $0x1a8] sm:$0xff]
    %v287 = vld [vmem:[#allocation5 + $0x1b0] sm:$0xff]
    %v288 = vld [vmem:[#allocation5 + $0x1b8] sm:$0xff]
    %v289 = vld [vmem:[#allocation5 + $0x1c0] sm:$0xff]
    %v290 = vld [vmem:[#allocation5 + $0x1c8] sm:$0xff]
    %v291 = vld [vmem:[#allocation5 + $0x1d0] sm:$0xff]
    %v292 = vld [vmem:[#allocation5 + $0x1d8] sm:$0xff]
    %v293 = vld [vmem:[#allocation5 + $0x1e0] sm:$0xff]
    %v294 = vld [vmem:[#allocation5 + $0x1e8] sm:$0xff]
    %v295 = vld [vmem:[#allocation5 + $0x1f0] sm:$0xff]
    %v296 = vld [vmem:[#allocation5 + $0x1f8] sm:$0xff]
    %v297 = vld [vmem:[#allocation5 + $0x200] sm:$0xff]
    %v298 = vld [vmem:[#allocation5 + $0x208] sm:$0xff]
    %v299 = vld [vmem:[#allocation5 + $0x210] sm:$0xff]
    %v300 = vld [vmem:[#allocation5 + $0x218] sm:$0xff]
    %v301 = vld [vmem:[#allocation5 + $0x220] sm:$0xff]
    %v302 = vld [vmem:[#allocation5 + $0x228] sm:$0xff]
    %v303 = vld [vmem:[#allocation5 + $0x230] sm:$0xff]
    %v304 = vld [vmem:[#allocation5 + $0x238] sm:$0xff]
    %v305 = vld [vmem:[#allocation5 + $0x240] sm:$0xff]
    %v306 = vld [vmem:[#allocation5 + $0x248] sm:$0xff]
    %v307 = vld [vmem:[#allocation5 + $0x250] sm:$0xff]
    %v308 = vld [vmem:[#allocation5 + $0x258] sm:$0xff]
    %v309 = vld [vmem:[#allocation5 + $0x260] sm:$0xff]
    %v310 = vld [vmem:[#allocation5 + $0x268] sm:$0xff]
    %v311 = vld [vmem:[#allocation5 + $0x270] sm:$0xff]
    %v312 = vld [vmem:[#allocation5 + $0x278] sm:$0xff]
    %v313 = vld [vmem:[#allocation5 + $0x280] sm:$0xff]
    %v314 = vld [vmem:[#allocation5 + $0x288] sm:$0xff]
    %v315 = vld [vmem:[#allocation5 + $0x290] sm:$0xff]
    %v316 = vld [vmem:[#allocation5 + $0x298] sm:$0xff]
    %v317 = vld [vmem:[#allocation5 + $0x2a0] sm:$0xff]
    %v318 = vld [vmem:[#allocation5 + $0x2a8] sm:$0xff]
    %v319 = vld [vmem:[#allocation5 + $0x2b0] sm:$0xff]
    %v320 = vld [vmem:[#allocation5 + $0x2b8] sm:$0xff]
    %v321 = vld [vmem:[#allocation5 + $0x2c0] sm:$0xff]
    %v322 = vld [vmem:[#allocation5 + $0x2c8] sm:$0xff]
    %v323 = vld [vmem:[#allocation5 + $0x2d0] sm:$0xff]
    %v324 = vld [vmem:[#allocation5 + $0x2d8] sm:$0xff]
    %v325 = vld [vmem:[#allocation5 + $0x2e0] sm:$0xff]
    %v326 = vld [vmem:[#allocation5 + $0x2e8] sm:$0xff]
    %v327 = vld [vmem:[#allocation5 + $0x2f0] sm:$0xff]
    %v328 = vld [vmem:[#allocation5 + $0x2f8] sm:$0xff]
    %v329 = vld [vmem:[#allocation5 + $0x300] sm:$0xff]
    %v330 = vld [vmem:[#allocation5 + $0x308] sm:$0xff]
    %v331 = vld [vmem:[#allocation5 + $0x310] sm:$0xff]
    %v332 = vld [vmem:[#allocation5 + $0x318] sm:$0xff]
    %v333 = vld [vmem:[#allocation5 + $0x320] sm:$0xff]
    %v334 = vld [vmem:[#allocation5 + $0x328] sm:$0xff]
    %v335 = vld [vmem:[#allocation5 + $0x330] sm:$0xff]
    %v336 = vld [vmem:[#allocation5 + $0x338] sm:$0xff]
    %v337 = vld [vmem:[#allocation5 + $0x340] sm:$0xff]
    %v338 = vld [vmem:[#allocation5 + $0x348] sm:$0xff]
    %v339 = vld [vmem:[#allocation5 + $0x350] sm:$0xff]
    %v340 = vld [vmem:[#allocation5 + $0x358] sm:$0xff]
    %v341 = vld [vmem:[#allocation5 + $0x360] sm:$0xff]
    %v342 = vld [vmem:[#allocation5 + $0x368] sm:$0xff]
    %v343 = vld [vmem:[#allocation5 + $0x370] sm:$0xff]
    %v344 = vld [vmem:[#allocation5 + $0x378] sm:$0xff]
    %v345 = vld [vmem:[#allocation5 + $0x380] sm:$0xff]
    %v346 = vld [vmem:[#allocation5 + $0x388] sm:$0xff]
    %v347 = vld [vmem:[#allocation5 + $0x390] sm:$0xff]
    %v348 = vld [vmem:[#allocation5 + $0x398] sm:$0xff]
    %v349 = vld [vmem:[#allocation5 + $0x3a0] sm:$0xff]
    %v350 = vld [vmem:[#allocation5 + $0x3a8] sm:$0xff]
    %v351 = vld [vmem:[#allocation5 + $0x3b0] sm:$0xff]
    %v352 = vld [vmem:[#allocation5 + $0x3b8] sm:$0xff]
    %v353 = vld [vmem:[#allocation5 + $0x3c0] sm:$0xff]
    %v354 = vld [vmem:[#allocation5 + $0x3c8] sm:$0xff]
    %v355 = vld [vmem:[#allocation5 + $0x3d0] sm:$0xff]
    %v356 = vld [vmem:[#allocation5 + $0x3d8] sm:$0xff]
    %v357 = vld [vmem:[#allocation5 + $0x3e0] sm:$0xff]
    %v358 = vld [vmem:[#allocation5 + $0x3e8] sm:$0xff]
    %v359 = vld [vmem:[#allocation5 + $0x3f0] sm:$0xff]
    %v360 = vld [vmem:[#allocation5 + $0x3f8] sm:$0xff]
    %v361 = vld [vmem:[#allocation5 + $0x400] sm:$0xff]
    %v362 = vld [vmem:[#allocation5 + $0x408] sm:$0xff]
    %v363 = vld [vmem:[#allocation5 + $0x410] sm:$0xff]
    %v364 = vld [vmem:[#allocation5 + $0x418] sm:$0xff]
    %v365 = vld [vmem:[#allocation5 + $0x420] sm:$0xff]
    %v366 = vld [vmem:[#allocation5 + $0x428] sm:$0xff]
    %v367 = vld [vmem:[#allocation5 + $0x430] sm:$0xff]
    %v368 = vld [vmem:[#allocation5 + $0x438] sm:$0xff]
    %v369 = vld [vmem:[#allocation5 + $0x440] sm:$0xff]
    %v370 = vld [vmem:[#allocation5 + $0x448] sm:$0xff]
    %v371 = vld [vmem:[#allocation5 + $0x450] sm:$0xff]
    %v372 = vld [vmem:[#allocation5 + $0x458] sm:$0xff]
    %v373 = vld [vmem:[#allocation5 + $0x460] sm:$0xff]
    %v374 = vld [vmem:[#allocation5 + $0x468] sm:$0xff]
    %v375 = vld [vmem:[#allocation5 + $0x470] sm:$0xff]
    %v376 = vld [vmem:[#allocation5 + $0x478] sm:$0xff]
    %v377 = vld [vmem:[#allocation5 + $0x480] sm:$0xff]
    %v378 = vld [vmem:[#allocation5 + $0x488] sm:$0xff]
    %v379 = vld [vmem:[#allocation5 + $0x490] sm:$0xff]
    %v380 = vld [vmem:[#allocation5 + $0x498] sm:$0xff]
    %v381 = vld [vmem:[#allocation5 + $0x4a0] sm:$0xff]
    %v382 = vld [vmem:[#allocation5 + $0x4a8] sm:$0xff]
    %v383 = vld [vmem:[#allocation5 + $0x4b0] sm:$0xff]
    %v384 = vld [vmem:[#allocation5 + $0x4b8] sm:$0xff]
    %v385 = vld [vmem:[#allocation5 + $0x4c0] sm:$0xff]
    %v386 = vld [vmem:[#allocation5 + $0x4c8] sm:$0xff]
    %v387 = vld [vmem:[#allocation5 + $0x4d0] sm:$0xff]
    %v388 = vld [vmem:[#allocation5 + $0x4d8] sm:$0xff]
    %v389 = vld [vmem:[#allocation5 + $0x4e0] sm:$0xff]
    %v390 = vld [vmem:[#allocation5 + $0x4e8] sm:$0xff]
    %v391 = vld [vmem:[#allocation5 + $0x4f0] sm:$0xff]
    %v392 = vld [vmem:[#allocation5 + $0x4f8] sm:$0xff]
    %v393 = vld [vmem:[#allocation5 + $0x500] sm:$0xff]
    %v394 = vld [vmem:[#allocation5 + $0x508] sm:$0xff]
    %v395 = vld [vmem:[#allocation5 + $0x510] sm:$0xff]
    %v396 = vld [vmem:[#allocation5 + $0x518] sm:$0xff]
    %v397 = vld [vmem:[#allocation5 + $0x520] sm:$0xff]
    %v398 = vld [vmem:[#allocation5 + $0x528] sm:$0xff]
    %v399 = vld [vmem:[#allocation5 + $0x530] sm:$0xff]
    %v400 = vld [vmem:[#allocation5 + $0x538] sm:$0xff]
    %v401 = vld [vmem:[#allocation5 + $0x540] sm:$0xff]
    %v402 = vld [vmem:[#allocation5 + $0x548] sm:$0xff]
    %v403 = vld [vmem:[#allocation5 + $0x550] sm:$0xff]
    %v404 = vld [vmem:[#allocation5 + $0x558] sm:$0xff]
    %v405 = vld [vmem:[#allocation5 + $0x560] sm:$0xff]
    %v406 = vld [vmem:[#allocation5 + $0x568] sm:$0xff]
    %v407 = vld [vmem:[#allocation5 + $0x570] sm:$0xff]
    %v408 = vld [vmem:[#allocation5 + $0x578] sm:$0xff]
    %v409 = vld [vmem:[#allocation5 + $0x580] sm:$0xff]
    %v410 = vld [vmem:[#allocation5 + $0x588] sm:$0xff]
    %v411 = vld [vmem:[#allocation5 + $0x590] sm:$0xff]
    %v412 = vld [vmem:[#allocation5 + $0x598] sm:$0xff]
    %v413 = vld [vmem:[#allocation5 + $0x5a0] sm:$0xff]
    %v414 = vld [vmem:[#allocation5 + $0x5a8] sm:$0xff]
    %v415 = vld [vmem:[#allocation5 + $0x5b0] sm:$0xff]
    %v416 = vld [vmem:[#allocation5 + $0x5b8] sm:$0xff]
    %v417 = vld [vmem:[#allocation5 + $0x5c0] sm:$0xff]
    %v418 = vld [vmem:[#allocation5 + $0x5c8] sm:$0xff]
    %v419 = vld [vmem:[#allocation5 + $0x5d0] sm:$0xff]
    %v420 = vld [vmem:[#allocation5 + $0x5d8] sm:$0xff]
    %v421 = vld [vmem:[#allocation5 + $0x5e0] sm:$0xff]
    %v422 = vld [vmem:[#allocation5 + $0x5e8] sm:$0xff]
    %v423 = vld [vmem:[#allocation5 + $0x5f0] sm:$0xff]
    %v424 = vld [vmem:[#allocation5 + $0x5f8] sm:$0xff]
    %v425 = vld [vmem:[#allocation5 + $0x600] sm:$0xff]
    %v426 = vld [vmem:[#allocation5 + $0x608] sm:$0xff]
    %v427 = vld [vmem:[#allocation5 + $0x610] sm:$0xff]
    %v428 = vld [vmem:[#allocation5 + $0x618] sm:$0xff]
    %v429 = vld [vmem:[#allocation5 + $0x620] sm:$0xff]
    %v430 = vld [vmem:[#allocation5 + $0x628] sm:$0xff]
    %v431 = vld [vmem:[#allocation5 + $0x630] sm:$0xff]
    %v432 = vld [vmem:[#allocation5 + $0x638] sm:$0xff]
    %v433 = vld [vmem:[#allocation5 + $0x640] sm:$0xff]
    %v434 = vld [vmem:[#allocation5 + $0x648] sm:$0xff]
    %v435 = vld [vmem:[#allocation5 + $0x650] sm:$0xff]
    %v436 = vld [vmem:[#allocation5 + $0x658] sm:$0xff]
    %v437 = vld [vmem:[#allocation5 + $0x660] sm:$0xff]
    %v438 = vld [vmem:[#allocation5 + $0x668] sm:$0xff]
    %v439 = vld [vmem:[#allocation5 + $0x670] sm:$0xff]
    %v440 = vld [vmem:[#allocation5 + $0x678] sm:$0xff]
    %v441 = vld [vmem:[#allocation5 + $0x680] sm:$0xff]
    %v442 = vld [vmem:[#allocation5 + $0x688] sm:$0xff]
    %v443 = vld [vmem:[#allocation5 + $0x690] sm:$0xff]
    %v444 = vld [vmem:[#allocation5 + $0x698] sm:$0xff]
    %v445 = vld [vmem:[#allocation5 + $0x6a0] sm:$0xff]
    %v446 = vld [vmem:[#allocation5 + $0x6a8] sm:$0xff]
    %v447 = vld [vmem:[#allocation5 + $0x6b0] sm:$0xff]
    %v448 = vld [vmem:[#allocation5 + $0x6b8] sm:$0xff]
    %v449 = vld [vmem:[#allocation5 + $0x6c0] sm:$0xff]
    %v450 = vld [vmem:[#allocation5 + $0x6c8] sm:$0xff]
    %v451 = vld [vmem:[#allocation5 + $0x6d0] sm:$0xff]
    %v452 = vld [vmem:[#allocation5 + $0x6d8] sm:$0xff]
    %v453 = vld [vmem:[#allocation5 + $0x6e0] sm:$0xff]
    %v454 = vld [vmem:[#allocation5 + $0x6e8] sm:$0xff]
    %v455 = vld [vmem:[#allocation5 + $0x6f0] sm:$0xff]
    %v456 = vld [vmem:[#allocation5 + $0x6f8] sm:$0xff]
    %v457 = vld [vmem:[#allocation5 + $0x700] sm:$0xff]
    %v458 = vld [vmem:[#allocation5 + $0x708] sm:$0xff]
    %v459 = vld [vmem:[#allocation5 + $0x710] sm:$0xff]
    %v460 = vld [vmem:[#allocation5 + $0x718] sm:$0xff]
    %v461 = vld [vmem:[#allocation5 + $0x720] sm:$0xff]
    %v462 = vld [vmem:[#allocation5 + $0x728] sm:$0xff]
    %v463 = vld [vmem:[#allocation5 + $0x730] sm:$0xff]
    %v464 = vld [vmem:[#allocation5 + $0x738] sm:$0xff]
    %v465 = vld [vmem:[#allocation5 + $0x740] sm:$0xff]
    %v466 = vld [vmem:[#allocation5 + $0x748] sm:$0xff]
    %v467 = vld [vmem:[#allocation5 + $0x750] sm:$0xff]
    %v468 = vld [vmem:[#allocation5 + $0x758] sm:$0xff]
    %v469 = vld [vmem:[#allocation5 + $0x760] sm:$0xff]
    %v470 = vld [vmem:[#allocation5 + $0x768] sm:$0xff]
    %v471 = vld [vmem:[#allocation5 + $0x770] sm:$0xff]
    %v472 = vld [vmem:[#allocation5 + $0x778] sm:$0xff]
    %v473 = vld [vmem:[#allocation5 + $0x780] sm:$0xff]
    %v474 = vld [vmem:[#allocation5 + $0x788] sm:$0xff]
    %v475 = vld [vmem:[#allocation5 + $0x790] sm:$0xff]
    %v476 = vld [vmem:[#allocation5 + $0x798] sm:$0xff]
    %v477 = vld [vmem:[#allocation5 + $0x7a0] sm:$0xff]
    %v478 = vld [vmem:[#allocation5 + $0x7a8] sm:$0xff]
    %v479 = vld [vmem:[#allocation5 + $0x7b0] sm:$0xff]
    %v480 = vld [vmem:[#allocation5 + $0x7b8] sm:$0xff]
    %v481 = vld [vmem:[#allocation5 + $0x7c0] sm:$0xff]
    %v482 = vld [vmem:[#allocation5 + $0x7c8] sm:$0xff]
    %v483 = vld [vmem:[#allocation5 + $0x7d0] sm:$0xff]
    %v484 = vld [vmem:[#allocation5 + $0x7d8] sm:$0xff]
    %v485 = vld [vmem:[#allocation5 + $0x7e0] sm:$0xff]
    %v486 = vld [vmem:[#allocation5 + $0x7e8] sm:$0xff]
    %v487 = vld [vmem:[#allocation5 + $0x7f0] sm:$0xff]
    %v488 = vld [vmem:[#allocation5 + $0x7f8] sm:$0xff]
    %v489 = vld [vmem:[#allocation5 + $0x800] sm:$0xff]
    %v490 = vld [vmem:[#allocation5 + $0x808] sm:$0xff]
    %v491 = vld [vmem:[#allocation5 + $0x810] sm:$0xff]
    %v492 = vld [vmem:[#allocation5 + $0x818] sm:$0xff]
    %v493 = vld [vmem:[#allocation5 + $0x820] sm:$0xff]
    %v494 = vld [vmem:[#allocation5 + $0x828] sm:$0xff]
    %v495 = vld [vmem:[#allocation5 + $0x830] sm:$0xff]
    %v496 = vld [vmem:[#allocation5 + $0x838] sm:$0xff]
    %v497 = vld [vmem:[#allocation5 + $0x840] sm:$0xff]
    %v498 = vld [vmem:[#allocation5 + $0x848] sm:$0xff]
    %v499 = vld [vmem:[#allocation5 + $0x850] sm:$0xff]
    %v500 = vld [vmem:[#allocation5 + $0x858] sm:$0xff]
    %v501 = vld [vmem:[#allocation5 + $0x860] sm:$0xff]
    %v502 = vld [vmem:[#allocation5 + $0x868] sm:$0xff]
    %v503 = vld [vmem:[#allocation5 + $0x870] sm:$0xff]
    %v504 = vld [vmem:[#allocation5 + $0x878] sm:$0xff]
    %v505 = vld [vmem:[#allocation5 + $0x880] sm:$0xff]
    %v506 = vld [vmem:[#allocation5 + $0x888] sm:$0xff]
    %v507 = vld [vmem:[#allocation5 + $0x890] sm:$0xff]
    %v508 = vld [vmem:[#allocation5 + $0x898] sm:$0xff]
    %v509 = vld [vmem:[#allocation5 + $0x8a0] sm:$0xff]
    %v510 = vld [vmem:[#allocation5 + $0x8a8] sm:$0xff]
    %v511 = vld [vmem:[#allocation5 + $0x8b0] sm:$0xff]
    %v512 = vld [vmem:[#allocation5 + $0x8b8] sm:$0xff]
    %v513 = vld [vmem:[#allocation5 + $0x8c0] sm:$0xff]
    %v514 = vld [vmem:[#allocation5 + $0x8c8] sm:$0xff]
    %v515 = vld [vmem:[#allocation5 + $0x8d0] sm:$0xff]
    %v516 = vld [vmem:[#allocation5 + $0x8d8] sm:$0xff]
    %v517 = vld [vmem:[#allocation5 + $0x8e0] sm:$0xff]
    %v518 = vld [vmem:[#allocation5 + $0x8e8] sm:$0xff]
    %v519 = vld [vmem:[#allocation5 + $0x8f0] sm:$0xff]
    %v520 = vld [vmem:[#allocation5 + $0x8f8] sm:$0xff]
    %v521 = vld [vmem:[#allocation7] sm:$0x3f]
    %v523 = vlaneseq
    %v524 = vshrl.u32 %v523, 7
    %v525 = vsub.s32 0, %v524
    %v526 = vrot.slane %v521, %v525
    %v527 = vlaneseq
    %v528 = vshrl.u32 %v527, 7
    %v529 = vsub.s32 1, %v528
    %v530 = vrot.slane %v521, %v529
    %v531 = vlaneseq
    %v532 = vshrl.u32 %v531, 7
    %v533 = vsub.s32 2, %v532
    %v534 = vrot.slane %v521, %v533
    %v535 = vlaneseq
    %v536 = vshrl.u32 %v535, 7
    %v537 = vsub.s32 3, %v536
    %v538 = vrot.slane %v521, %v537
    %v539 = vlaneseq
    %v540 = vshrl.u32 %v539, 7
    %v541 = vsub.s32 4, %v540
    %v542 = vrot.slane %v521, %v541
    %v543 = vlaneseq
    %v544 = vshrl.u32 %v543, 7
    %v545 = vsub.s32 5, %v544
    %v546 = vrot.slane %v521, %v545
    %v841 = vunpack.c.l.b16 %v233
    %v842 = vunpack.c.h.b16 %v233
    %v843 = vunpack.c.l.b16 %v234
    %v844 = vunpack.c.h.b16 %v234
    %v845 = vunpack.c.l.b16 %v235
    %v846 = vunpack.c.h.b16 %v235
    %v847 = vunpack.c.l.b16 %v236
    %v848 = vunpack.c.h.b16 %v236
    %v849 = vunpack.c.l.b16 %v237
    %v850 = vunpack.c.h.b16 %v237
    %v851 = vunpack.c.l.b16 %v238
    %v852 = vunpack.c.h.b16 %v238
    %v853 = vunpack.c.l.b16 %v239
    %v854 = vunpack.c.h.b16 %v239
    %v855 = vunpack.c.l.b16 %v240
    %v856 = vunpack.c.h.b16 %v240
    %v857 = vunpack.c.l.b16 %v241
    %v858 = vunpack.c.h.b16 %v241
    %v859 = vunpack.c.l.b16 %v242
    %v860 = vunpack.c.h.b16 %v242
    %v861 = vunpack.c.l.b16 %v243
    %v862 = vunpack.c.h.b16 %v243
    %v863 = vunpack.c.l.b16 %v244
    %v864 = vunpack.c.h.b16 %v244
    %v865 = vunpack.c.l.b16 %v245
    %v866 = vunpack.c.h.b16 %v245
    %v867 = vunpack.c.l.b16 %v246
    %v868 = vunpack.c.h.b16 %v246
    %v869 = vunpack.c.l.b16 %v247
    %v870 = vunpack.c.h.b16 %v247
    %v871 = vunpack.c.l.b16 %v248
    %v872 = vunpack.c.h.b16 %v248
    %v873 = vunpack.c.l.b16 %v249
    %v874 = vunpack.c.h.b16 %v249
    %v875 = vunpack.c.l.b16 %v250
    %v876 = vunpack.c.h.b16 %v250
    %v877 = vunpack.c.l.b16 %v251
    %v878 = vunpack.c.h.b16 %v251
    %v879 = vunpack.c.l.b16 %v252
    %v880 = vunpack.c.h.b16 %v252
    %v881 = vunpack.c.l.b16 %v253
    %v882 = vunpack.c.h.b16 %v253
    %v883 = vunpack.c.l.b16 %v254
    %v884 = vunpack.c.h.b16 %v254
    %v885 = vunpack.c.l.b16 %v255
    %v886 = vunpack.c.h.b16 %v255
    %v887 = vunpack.c.l.b16 %v256
    %v888 = vunpack.c.h.b16 %v256
    %v889 = vunpack.c.l.b16 %v257
    %v890 = vunpack.c.h.b16 %v257
    %v891 = vunpack.c.l.b16 %v258
    %v892 = vunpack.c.h.b16 %v258
    %v893 = vunpack.c.l.b16 %v259
    %v894 = vunpack.c.h.b16 %v259
    %v895 = vunpack.c.l.b16 %v260
    %v896 = vunpack.c.h.b16 %v260
    %v897 = vunpack.c.l.b16 %v261
    %v898 = vunpack.c.h.b16 %v261
    %v899 = vunpack.c.l.b16 %v262
    %v900 = vunpack.c.h.b16 %v262
    %v901 = vunpack.c.l.b16 %v263
    %v902 = vunpack.c.h.b16 %v263
    %v903 = vunpack.c.l.b16 %v264
    %v904 = vunpack.c.h.b16 %v264
    %v905 = vunpack.c.l.b16 %v265
    %v906 = vunpack.c.h.b16 %v265
    %v907 = vunpack.c.l.b16 %v266
    %v908 = vunpack.c.h.b16 %v266
    %v909 = vunpack.c.l.b16 %v267
    %v910 = vunpack.c.h.b16 %v267
    %v911 = vunpack.c.l.b16 %v268
    %v912 = vunpack.c.h.b16 %v268
    %v913 = vunpack.c.l.b16 %v269
    %v914 = vunpack.c.h.b16 %v269
    %v915 = vunpack.c.l.b16 %v270
    %v916 = vunpack.c.h.b16 %v270
    %v917 = vunpack.c.l.b16 %v271
    %v918 = vunpack.c.h.b16 %v271
    %v919 = vunpack.c.l.b16 %v272
    %v920 = vunpack.c.h.b16 %v272
    %v921 = vunpack.c.l.b16 %v273
    %v922 = vunpack.c.h.b16 %v273
    %v923 = vunpack.c.l.b16 %v274
    %v924 = vunpack.c.h.b16 %v274
    %v925 = vunpack.c.l.b16 %v275
    %v926 = vunpack.c.h.b16 %v275
    %v927 = vunpack.c.l.b16 %v276
    %v928 = vunpack.c.h.b16 %v276
    %v929 = vunpack.c.l.b16 %v277
    %v930 = vunpack.c.h.b16 %v277
    %v931 = vunpack.c.l.b16 %v278
    %v932 = vunpack.c.h.b16 %v278
    %v933 = vunpack.c.l.b16 %v279
    %v934 = vunpack.c.h.b16 %v279
    %v935 = vunpack.c.l.b16 %v280
    %v936 = vunpack.c.h.b16 %v280
    %v937 = vunpack.c.l.b16 %v281
    %v938 = vunpack.c.h.b16 %v281
    %v939 = vunpack.c.l.b16 %v282
    %v940 = vunpack.c.h.b16 %v282
    %v941 = vunpack.c.l.b16 %v283
    %v942 = vunpack.c.h.b16 %v283
    %v943 = vunpack.c.l.b16 %v284
    %v944 = vunpack.c.h.b16 %v284
    %v945 = vunpack.c.l.b16 %v285
    %v946 = vunpack.c.h.b16 %v285
    %v947 = vunpack.c.l.b16 %v286
    %v948 = vunpack.c.h.b16 %v286
    %v949 = vunpack.c.l.b16 %v287
    %v950 = vunpack.c.h.b16 %v287
    %v951 = vunpack.c.l.b16 %v288
    %v952 = vunpack.c.h.b16 %v288
    %v953 = vunpack.c.l.b16 %v289
    %v954 = vunpack.c.h.b16 %v289
    %v955 = vunpack.c.l.b16 %v290
    %v956 = vunpack.c.h.b16 %v290
    %v957 = vunpack.c.l.b16 %v291
    %v958 = vunpack.c.h.b16 %v291
    %v959 = vunpack.c.l.b16 %v292
    %v960 = vunpack.c.h.b16 %v292
    %v961 = vunpack.c.l.b16 %v293
    %v962 = vunpack.c.h.b16 %v293
    %v963 = vunpack.c.l.b16 %v294
    %v964 = vunpack.c.h.b16 %v294
    %v965 = vunpack.c.l.b16 %v295
    %v966 = vunpack.c.h.b16 %v295
    %v967 = vunpack.c.l.b16 %v296
    %v968 = vunpack.c.h.b16 %v296
    %v969 = vunpack.c.l.b16 %v297
    %v970 = vunpack.c.h.b16 %v297
    %v971 = vunpack.c.l.b16 %v298
    %v972 = vunpack.c.h.b16 %v298
    %v973 = vunpack.c.l.b16 %v299
    %v974 = vunpack.c.h.b16 %v299
    %v975 = vunpack.c.l.b16 %v300
    %v976 = vunpack.c.h.b16 %v300
    %v977 = vunpack.c.l.b16 %v301
    %v978 = vunpack.c.h.b16 %v301
    %v979 = vunpack.c.l.b16 %v302
    %v980 = vunpack.c.h.b16 %v302
    %v981 = vunpack.c.l.b16 %v303
    %v982 = vunpack.c.h.b16 %v303
    %v983 = vunpack.c.l.b16 %v304
    %v984 = vunpack.c.h.b16 %v304
    %v985 = vunpack.c.l.b16 %v305
    %v986 = vunpack.c.h.b16 %v305
    %v987 = vunpack.c.l.b16 %v306
    %v988 = vunpack.c.h.b16 %v306
    %v989 = vunpack.c.l.b16 %v307
    %v990 = vunpack.c.h.b16 %v307
    %v991 = vunpack.c.l.b16 %v308
    %v992 = vunpack.c.h.b16 %v308
    %v993 = vunpack.c.l.b16 %v309
    %v994 = vunpack.c.h.b16 %v309
    %v995 = vunpack.c.l.b16 %v310
    %v996 = vunpack.c.h.b16 %v310
    %v997 = vunpack.c.l.b16 %v311
    %v998 = vunpack.c.h.b16 %v311
    %v999 = vunpack.c.l.b16 %v312
    %v1000 = vunpack.c.h.b16 %v312
    %v1001 = vunpack.c.l.b16 %v313
    %v1002 = vunpack.c.h.b16 %v313
    %v1003 = vunpack.c.l.b16 %v314
    %v1004 = vunpack.c.h.b16 %v314
    %v1005 = vunpack.c.l.b16 %v315
    %v1006 = vunpack.c.h.b16 %v315
    %v1007 = vunpack.c.l.b16 %v316
    %v1008 = vunpack.c.h.b16 %v316
    %v1009 = vunpack.c.l.b16 %v317
    %v1010 = vunpack.c.h.b16 %v317
    %v1011 = vunpack.c.l.b16 %v318
    %v1012 = vunpack.c.h.b16 %v318
    %v1013 = vunpack.c.l.b16 %v319
    %v1014 = vunpack.c.h.b16 %v319
    %v1015 = vunpack.c.l.b16 %v320
    %v1016 = vunpack.c.h.b16 %v320
    %v1017 = vunpack.c.l.b16 %v321
    %v1018 = vunpack.c.h.b16 %v321
    %v1019 = vunpack.c.l.b16 %v322
    %v1020 = vunpack.c.h.b16 %v322
    %v1021 = vunpack.c.l.b16 %v323
    %v1022 = vunpack.c.h.b16 %v323
    %v1023 = vunpack.c.l.b16 %v324
    %v1024 = vunpack.c.h.b16 %v324
    %v1025 = vunpack.c.l.b16 %v325
    %v1026 = vunpack.c.h.b16 %v325
    %v1027 = vunpack.c.l.b16 %v326
    %v1028 = vunpack.c.h.b16 %v326
    %v1029 = vunpack.c.l.b16 %v327
    %v1030 = vunpack.c.h.b16 %v327
    %v1031 = vunpack.c.l.b16 %v328
    %v1032 = vunpack.c.h.b16 %v328
    %v1033 = vunpack.c.l.b16 %v329
    %v1034 = vunpack.c.h.b16 %v329
    %v1035 = vunpack.c.l.b16 %v330
    %v1036 = vunpack.c.h.b16 %v330
    %v1037 = vunpack.c.l.b16 %v331
    %v1038 = vunpack.c.h.b16 %v331
    %v1039 = vunpack.c.l.b16 %v332
    %v1040 = vunpack.c.h.b16 %v332
    %v1041 = vunpack.c.l.b16 %v333
    %v1042 = vunpack.c.h.b16 %v333
    %v1043 = vunpack.c.l.b16 %v334
    %v1044 = vunpack.c.h.b16 %v334
    %v1045 = vunpack.c.l.b16 %v335
    %v1046 = vunpack.c.h.b16 %v335
    %v1047 = vunpack.c.l.b16 %v336
    %v1048 = vunpack.c.h.b16 %v336
    %v1049 = vunpack.c.l.b16 %v337
    %v1050 = vunpack.c.h.b16 %v337
    %v1051 = vunpack.c.l.b16 %v338
    %v1052 = vunpack.c.h.b16 %v338
    %v1053 = vunpack.c.l.b16 %v339
    %v1054 = vunpack.c.h.b16 %v339
    %v1055 = vunpack.c.l.b16 %v340
    %v1056 = vunpack.c.h.b16 %v340
    %v1057 = vunpack.c.l.b16 %v341
    %v1058 = vunpack.c.h.b16 %v341
    %v1059 = vunpack.c.l.b16 %v342
    %v1060 = vunpack.c.h.b16 %v342
    %v1061 = vunpack.c.l.b16 %v343
    %v1062 = vunpack.c.h.b16 %v343
    %v1063 = vunpack.c.l.b16 %v344
    %v1064 = vunpack.c.h.b16 %v344
    %v1065 = vunpack.c.l.b16 %v345
    %v1066 = vunpack.c.h.b16 %v345
    %v1067 = vunpack.c.l.b16 %v346
    %v1068 = vunpack.c.h.b16 %v346
    %v1069 = vunpack.c.l.b16 %v347
    %v1070 = vunpack.c.h.b16 %v347
    %v1071 = vunpack.c.l.b16 %v348
    %v1072 = vunpack.c.h.b16 %v348
    %v1073 = vunpack.c.l.b16 %v349
    %v1074 = vunpack.c.h.b16 %v349
    %v1075 = vunpack.c.l.b16 %v350
    %v1076 = vunpack.c.h.b16 %v350
    %v1077 = vunpack.c.l.b16 %v351
    %v1078 = vunpack.c.h.b16 %v351
    %v1079 = vunpack.c.l.b16 %v352
    %v1080 = vunpack.c.h.b16 %v352
    %v1081 = vunpack.c.l.b16 %v353
    %v1082 = vunpack.c.h.b16 %v353
    %v1083 = vunpack.c.l.b16 %v354
    %v1084 = vunpack.c.h.b16 %v354
    %v1085 = vunpack.c.l.b16 %v355
    %v1086 = vunpack.c.h.b16 %v355
    %v1087 = vunpack.c.l.b16 %v356
    %v1088 = vunpack.c.h.b16 %v356
    %v1089 = vunpack.c.l.b16 %v357
    %v1090 = vunpack.c.h.b16 %v357
    %v1091 = vunpack.c.l.b16 %v358
    %v1092 = vunpack.c.h.b16 %v358
    %v1093 = vunpack.c.l.b16 %v359
    %v1094 = vunpack.c.h.b16 %v359
    %v1095 = vunpack.c.l.b16 %v360
    %v1096 = vunpack.c.h.b16 %v360
    %v1097 = vunpack.c.l.b16 %v361
    %v1098 = vunpack.c.h.b16 %v361
    %v1099 = vunpack.c.l.b16 %v362
    %v1100 = vunpack.c.h.b16 %v362
    %v1101 = vunpack.c.l.b16 %v363
    %v1102 = vunpack.c.h.b16 %v363
    %v1103 = vunpack.c.l.b16 %v364
    %v1104 = vunpack.c.h.b16 %v364
    %v1105 = vunpack.c.l.b16 %v365
    %v1106 = vunpack.c.h.b16 %v365
    %v1107 = vunpack.c.l.b16 %v366
    %v1108 = vunpack.c.h.b16 %v366
    %v1109 = vunpack.c.l.b16 %v367
    %v1110 = vunpack.c.h.b16 %v367
    %v1111 = vunpack.c.l.b16 %v368
    %v1112 = vunpack.c.h.b16 %v368
    %v1113 = vunpack.c.l.b16 %v369
    %v1114 = vunpack.c.h.b16 %v369
    %v1115 = vunpack.c.l.b16 %v370
    %v1116 = vunpack.c.h.b16 %v370
    %v1117 = vunpack.c.l.b16 %v371
    %v1118 = vunpack.c.h.b16 %v371
    %v1119 = vunpack.c.l.b16 %v372
    %v1120 = vunpack.c.h.b16 %v372
    %v1121 = vunpack.c.l.b16 %v373
    %v1122 = vunpack.c.h.b16 %v373
    %v1123 = vunpack.c.l.b16 %v374
    %v1124 = vunpack.c.h.b16 %v374
    %v1125 = vunpack.c.l.b16 %v375
    %v1126 = vunpack.c.h.b16 %v375
    %v1127 = vunpack.c.l.b16 %v376
    %v1128 = vunpack.c.h.b16 %v376
    %v1129 = vunpack.c.l.b16 %v377
    %v1130 = vunpack.c.h.b16 %v377
    %v1131 = vunpack.c.l.b16 %v378
    %v1132 = vunpack.c.h.b16 %v378
    %v1133 = vunpack.c.l.b16 %v379
    %v1134 = vunpack.c.h.b16 %v379
    %v1135 = vunpack.c.l.b16 %v380
    %v1136 = vunpack.c.h.b16 %v380
    %v1137 = vunpack.c.l.b16 %v381
    %v1138 = vunpack.c.h.b16 %v381
    %v1139 = vunpack.c.l.b16 %v382
    %v1140 = vunpack.c.h.b16 %v382
    %v1141 = vunpack.c.l.b16 %v383
    %v1142 = vunpack.c.h.b16 %v383
    %v1143 = vunpack.c.l.b16 %v384
    %v1144 = vunpack.c.h.b16 %v384
    %v1145 = vunpack.c.l.b16 %v385
    %v1146 = vunpack.c.h.b16 %v385
    %v1147 = vunpack.c.l.b16 %v386
    %v1148 = vunpack.c.h.b16 %v386
    %v1149 = vunpack.c.l.b16 %v387
    %v1150 = vunpack.c.h.b16 %v387
    %v1151 = vunpack.c.l.b16 %v388
    %v1152 = vunpack.c.h.b16 %v388
    %v1153 = vunpack.c.l.b16 %v389
    %v1154 = vunpack.c.h.b16 %v389
    %v1155 = vunpack.c.l.b16 %v390
    %v1156 = vunpack.c.h.b16 %v390
    %v1157 = vunpack.c.l.b16 %v391
    %v1158 = vunpack.c.h.b16 %v391
    %v1159 = vunpack.c.l.b16 %v392
    %v1160 = vunpack.c.h.b16 %v392
    %v1161 = vunpack.c.l.b16 %v393
    %v1162 = vunpack.c.h.b16 %v393
    %v1163 = vunpack.c.l.b16 %v394
    %v1164 = vunpack.c.h.b16 %v394
    %v1165 = vunpack.c.l.b16 %v395
    %v1166 = vunpack.c.h.b16 %v395
    %v1167 = vunpack.c.l.b16 %v396
    %v1168 = vunpack.c.h.b16 %v396
    %v1169 = vunpack.c.l.b16 %v397
    %v1170 = vunpack.c.h.b16 %v397
    %v1171 = vunpack.c.l.b16 %v398
    %v1172 = vunpack.c.h.b16 %v398
    %v1173 = vunpack.c.l.b16 %v399
    %v1174 = vunpack.c.h.b16 %v399
    %v1175 = vunpack.c.l.b16 %v400
    %v1176 = vunpack.c.h.b16 %v400
    %v1177 = vunpack.c.l.b16 %v401
    %v1178 = vunpack.c.h.b16 %v401
    %v1179 = vunpack.c.l.b16 %v402
    %v1180 = vunpack.c.h.b16 %v402
    %v1181 = vunpack.c.l.b16 %v403
    %v1182 = vunpack.c.h.b16 %v403
    %v1183 = vunpack.c.l.b16 %v404
    %v1184 = vunpack.c.h.b16 %v404
    %v1185 = vunpack.c.l.b16 %v405
    %v1186 = vunpack.c.h.b16 %v405
    %v1187 = vunpack.c.l.b16 %v406
    %v1188 = vunpack.c.h.b16 %v406
    %v1189 = vunpack.c.l.b16 %v407
    %v1190 = vunpack.c.h.b16 %v407
    %v1191 = vunpack.c.l.b16 %v408
    %v1192 = vunpack.c.h.b16 %v408
    %v1193 = vunpack.c.l.b16 %v409
    %v1194 = vunpack.c.h.b16 %v409
    %v1195 = vunpack.c.l.b16 %v410
    %v1196 = vunpack.c.h.b16 %v410
    %v1197 = vunpack.c.l.b16 %v411
    %v1198 = vunpack.c.h.b16 %v411
    %v1199 = vunpack.c.l.b16 %v412
    %v1200 = vunpack.c.h.b16 %v412
    %v1201 = vunpack.c.l.b16 %v413
    %v1202 = vunpack.c.h.b16 %v413
    %v1203 = vunpack.c.l.b16 %v414
    %v1204 = vunpack.c.h.b16 %v414
    %v1205 = vunpack.c.l.b16 %v415
    %v1206 = vunpack.c.h.b16 %v415
    %v1207 = vunpack.c.l.b16 %v416
    %v1208 = vunpack.c.h.b16 %v416
    %v1209 = vunpack.c.l.b16 %v417
    %v1210 = vunpack.c.h.b16 %v417
    %v1211 = vunpack.c.l.b16 %v418
    %v1212 = vunpack.c.h.b16 %v418
    %v1213 = vunpack.c.l.b16 %v419
    %v1214 = vunpack.c.h.b16 %v419
    %v1215 = vunpack.c.l.b16 %v420
    %v1216 = vunpack.c.h.b16 %v420
    %v1217 = vunpack.c.l.b16 %v421
    %v1218 = vunpack.c.h.b16 %v421
    %v1219 = vunpack.c.l.b16 %v422
    %v1220 = vunpack.c.h.b16 %v422
    %v1221 = vunpack.c.l.b16 %v423
    %v1222 = vunpack.c.h.b16 %v423
    %v1223 = vunpack.c.l.b16 %v424
    %v1224 = vunpack.c.h.b16 %v424
    %v1225 = vunpack.c.l.b16 %v425
    %v1226 = vunpack.c.h.b16 %v425
    %v1227 = vunpack.c.l.b16 %v426
    %v1228 = vunpack.c.h.b16 %v426
    %v1229 = vunpack.c.l.b16 %v427
    %v1230 = vunpack.c.h.b16 %v427
    %v1231 = vunpack.c.l.b16 %v428
    %v1232 = vunpack.c.h.b16 %v428
    %v1233 = vunpack.c.l.b16 %v429
    %v1234 = vunpack.c.h.b16 %v429
    %v1235 = vunpack.c.l.b16 %v430
    %v1236 = vunpack.c.h.b16 %v430
    %v1237 = vunpack.c.l.b16 %v431
    %v1238 = vunpack.c.h.b16 %v431
    %v1239 = vunpack.c.l.b16 %v432
    %v1240 = vunpack.c.h.b16 %v432
    %v1241 = vunpack.c.l.b16 %v433
    %v1242 = vunpack.c.h.b16 %v433
    %v1243 = vunpack.c.l.b16 %v434
    %v1244 = vunpack.c.h.b16 %v434
    %v1245 = vunpack.c.l.b16 %v435
    %v1246 = vunpack.c.h.b16 %v435
    %v1247 = vunpack.c.l.b16 %v436
    %v1248 = vunpack.c.h.b16 %v436
    %v1249 = vunpack.c.l.b16 %v437
    %v1250 = vunpack.c.h.b16 %v437
    %v1251 = vunpack.c.l.b16 %v438
    %v1252 = vunpack.c.h.b16 %v438
    %v1253 = vunpack.c.l.b16 %v439
    %v1254 = vunpack.c.h.b16 %v439
    %v1255 = vunpack.c.l.b16 %v440
    %v1256 = vunpack.c.h.b16 %v440
    %v1257 = vunpack.c.l.b16 %v441
    %v1258 = vunpack.c.h.b16 %v441
    %v1259 = vunpack.c.l.b16 %v442
    %v1260 = vunpack.c.h.b16 %v442
    %v1261 = vunpack.c.l.b16 %v443
    %v1262 = vunpack.c.h.b16 %v443
    %v1263 = vunpack.c.l.b16 %v444
    %v1264 = vunpack.c.h.b16 %v444
    %v1265 = vunpack.c.l.b16 %v445
    %v1266 = vunpack.c.h.b16 %v445
    %v1267 = vunpack.c.l.b16 %v446
    %v1268 = vunpack.c.h.b16 %v446
    %v1269 = vunpack.c.l.b16 %v447
    %v1270 = vunpack.c.h.b16 %v447
    %v1271 = vunpack.c.l.b16 %v448
    %v1272 = vunpack.c.h.b16 %v448
    %v1273 = vunpack.c.l.b16 %v449
    %v1274 = vunpack.c.h.b16 %v449
    %v1275 = vunpack.c.l.b16 %v450
    %v1276 = vunpack.c.h.b16 %v450
    %v1277 = vunpack.c.l.b16 %v451
    %v1278 = vunpack.c.h.b16 %v451
    %v1279 = vunpack.c.l.b16 %v452
    %v1280 = vunpack.c.h.b16 %v452
    %v1281 = vunpack.c.l.b16 %v453
    %v1282 = vunpack.c.h.b16 %v453
    %v1283 = vunpack.c.l.b16 %v454
    %v1284 = vunpack.c.h.b16 %v454
    %v1285 = vunpack.c.l.b16 %v455
    %v1286 = vunpack.c.h.b16 %v455
    %v1287 = vunpack.c.l.b16 %v456
    %v1288 = vunpack.c.h.b16 %v456
    %v1289 = vunpack.c.l.b16 %v457
    %v1290 = vunpack.c.h.b16 %v457
    %v1291 = vunpack.c.l.b16 %v458
    %v1292 = vunpack.c.h.b16 %v458
    %v1293 = vunpack.c.l.b16 %v459
    %v1294 = vunpack.c.h.b16 %v459
    %v1295 = vunpack.c.l.b16 %v460
    %v1296 = vunpack.c.h.b16 %v460
    %v1297 = vunpack.c.l.b16 %v461
    %v1298 = vunpack.c.h.b16 %v461
    %v1299 = vunpack.c.l.b16 %v462
    %v1300 = vunpack.c.h.b16 %v462
    %v1301 = vunpack.c.l.b16 %v463
    %v1302 = vunpack.c.h.b16 %v463
    %v1303 = vunpack.c.l.b16 %v464
    %v1304 = vunpack.c.h.b16 %v464
    %v1305 = vunpack.c.l.b16 %v465
    %v1306 = vunpack.c.h.b16 %v465
    %v1307 = vunpack.c.l.b16 %v466
    %v1308 = vunpack.c.h.b16 %v466
    %v1309 = vunpack.c.l.b16 %v467
    %v1310 = vunpack.c.h.b16 %v467
    %v1311 = vunpack.c.l.b16 %v468
    %v1312 = vunpack.c.h.b16 %v468
    %v1313 = vunpack.c.l.b16 %v469
    %v1314 = vunpack.c.h.b16 %v469
    %v1315 = vunpack.c.l.b16 %v470
    %v1316 = vunpack.c.h.b16 %v470
    %v1317 = vunpack.c.l.b16 %v471
    %v1318 = vunpack.c.h.b16 %v471
    %v1319 = vunpack.c.l.b16 %v472
    %v1320 = vunpack.c.h.b16 %v472
    %v1321 = vunpack.c.l.b16 %v473
    %v1322 = vunpack.c.h.b16 %v473
    %v1323 = vunpack.c.l.b16 %v474
    %v1324 = vunpack.c.h.b16 %v474
    %v1325 = vunpack.c.l.b16 %v475
    %v1326 = vunpack.c.h.b16 %v475
    %v1327 = vunpack.c.l.b16 %v476
    %v1328 = vunpack.c.h.b16 %v476
    %v1329 = vunpack.c.l.b16 %v477
    %v1330 = vunpack.c.h.b16 %v477
    %v1331 = vunpack.c.l.b16 %v478
    %v1332 = vunpack.c.h.b16 %v478
    %v1333 = vunpack.c.l.b16 %v479
    %v1334 = vunpack.c.h.b16 %v479
    %v1335 = vunpack.c.l.b16 %v480
    %v1336 = vunpack.c.h.b16 %v480
    %v1337 = vunpack.c.l.b16 %v481
    %v1338 = vunpack.c.h.b16 %v481
    %v1339 = vunpack.c.l.b16 %v482
    %v1340 = vunpack.c.h.b16 %v482
    %v1341 = vunpack.c.l.b16 %v483
    %v1342 = vunpack.c.h.b16 %v483
    %v1343 = vunpack.c.l.b16 %v484
    %v1344 = vunpack.c.h.b16 %v484
    %v1345 = vunpack.c.l.b16 %v485
    %v1346 = vunpack.c.h.b16 %v485
    %v1347 = vunpack.c.l.b16 %v486
    %v1348 = vunpack.c.h.b16 %v486
    %v1349 = vunpack.c.l.b16 %v487
    %v1350 = vunpack.c.h.b16 %v487
    %v1351 = vunpack.c.l.b16 %v488
    %v1352 = vunpack.c.h.b16 %v488
    %v1353 = vunpack.c.l.b16 %v489
    %v1354 = vunpack.c.h.b16 %v489
    %v1355 = vunpack.c.l.b16 %v490
    %v1356 = vunpack.c.h.b16 %v490
    %v1357 = vunpack.c.l.b16 %v491
    %v1358 = vunpack.c.h.b16 %v491
    %v1359 = vunpack.c.l.b16 %v492
    %v1360 = vunpack.c.h.b16 %v492
    %v1361 = vunpack.c.l.b16 %v493
    %v1362 = vunpack.c.h.b16 %v493
    %v1363 = vunpack.c.l.b16 %v494
    %v1364 = vunpack.c.h.b16 %v494
    %v1365 = vunpack.c.l.b16 %v495
    %v1366 = vunpack.c.h.b16 %v495
    %v1367 = vunpack.c.l.b16 %v496
    %v1368 = vunpack.c.h.b16 %v496
    %v1369 = vunpack.c.l.b16 %v497
    %v1370 = vunpack.c.h.b16 %v497
    %v1371 = vunpack.c.l.b16 %v498
    %v1372 = vunpack.c.h.b16 %v498
    %v1373 = vunpack.c.l.b16 %v499
    %v1374 = vunpack.c.h.b16 %v499
    %v1375 = vunpack.c.l.b16 %v500
    %v1376 = vunpack.c.h.b16 %v500
    %v1377 = vunpack.c.l.b16 %v501
    %v1378 = vunpack.c.h.b16 %v501
    %v1379 = vunpack.c.l.b16 %v502
    %v1380 = vunpack.c.h.b16 %v502
    %v1381 = vunpack.c.l.b16 %v503
    %v1382 = vunpack.c.h.b16 %v503
    %v1383 = vunpack.c.l.b16 %v504
    %v1384 = vunpack.c.h.b16 %v504
    %v1385 = vunpack.c.l.b16 %v505
    %v1386 = vunpack.c.h.b16 %v505
    %v1387 = vunpack.c.l.b16 %v506
    %v1388 = vunpack.c.h.b16 %v506
    %v1389 = vunpack.c.l.b16 %v507
    %v1390 = vunpack.c.h.b16 %v507
    %v1391 = vunpack.c.l.b16 %v508
    %v1392 = vunpack.c.h.b16 %v508
    %v1393 = vunpack.c.l.b16 %v509
    %v1394 = vunpack.c.h.b16 %v509
    %v1395 = vunpack.c.l.b16 %v510
    %v1396 = vunpack.c.h.b16 %v510
    %v1397 = vunpack.c.l.b16 %v511
    %v1398 = vunpack.c.h.b16 %v511
    %v1399 = vunpack.c.l.b16 %v512
    %v1400 = vunpack.c.h.b16 %v512
    %v1401 = vunpack.c.l.b16 %v513
    %v1402 = vunpack.c.h.b16 %v513
    %v1403 = vunpack.c.l.b16 %v514
    %v1404 = vunpack.c.h.b16 %v514
    %v1405 = vunpack.c.l.b16 %v515
    %v1406 = vunpack.c.h.b16 %v515
    %v1407 = vunpack.c.l.b16 %v516
    %v1408 = vunpack.c.h.b16 %v516
    %v1409 = vunpack.c.l.b16 %v517
    %v1410 = vunpack.c.h.b16 %v517
    %v1411 = vunpack.c.l.b16 %v518
    %v1412 = vunpack.c.h.b16 %v518
    %v1413 = vunpack.c.l.b16 %v519
    %v1414 = vunpack.c.h.b16 %v519
    %v1415 = vunpack.c.l.b16 %v520
    %v1416 = vunpack.c.h.b16 %v520
    %v1417 = vpack.c.b16 %v847, %v841
    %v1418 = vpack.c.b16 %v848, %v842
    %v1419 = vpack.c.b16 %v849, %v843
    %v1420 = vpack.c.b16 %v850, %v844
    %v1421 = vpack.c.b16 %v851, %v845
    %v1422 = vpack.c.b16 %v852, %v846
    %v1423 = vpack.c.b16 %v859, %v853
    %v1424 = vpack.c.b16 %v860, %v854
    %v1425 = vpack.c.b16 %v861, %v855
    %v1426 = vpack.c.b16 %v862, %v856
    %v1427 = vpack.c.b16 %v863, %v857
    %v1428 = vpack.c.b16 %v864, %v858
    %v1429 = vpack.c.b16 %v871, %v865
    %v1430 = vpack.c.b16 %v872, %v866
    %v1431 = vpack.c.b16 %v873, %v867
    %v1432 = vpack.c.b16 %v874, %v868
    %v1433 = vpack.c.b16 %v875, %v869
    %v1434 = vpack.c.b16 %v876, %v870
    %v1435 = vpack.c.b16 %v883, %v877
    %v1436 = vpack.c.b16 %v884, %v878
    %v1437 = vpack.c.b16 %v885, %v879
    %v1438 = vpack.c.b16 %v886, %v880
    %v1439 = vpack.c.b16 %v887, %v881
    %v1440 = vpack.c.b16 %v888, %v882
    %v1441 = vpack.c.b16 %v895, %v889
    %v1442 = vpack.c.b16 %v896, %v890
    %v1443 = vpack.c.b16 %v897, %v891
    %v1444 = vpack.c.b16 %v898, %v892
    %v1445 = vpack.c.b16 %v899, %v893
    %v1446 = vpack.c.b16 %v900, %v894
    %v1447 = vpack.c.b16 %v907, %v901
    %v1448 = vpack.c.b16 %v908, %v902
    %v1449 = vpack.c.b16 %v909, %v903
    %v1450 = vpack.c.b16 %v910, %v904
    %v1451 = vpack.c.b16 %v911, %v905
    %v1452 = vpack.c.b16 %v912, %v906
    %v1453 = vpack.c.b16 %v919, %v913
    %v1454 = vpack.c.b16 %v920, %v914
    %v1455 = vpack.c.b16 %v921, %v915
    %v1456 = vpack.c.b16 %v922, %v916
    %v1457 = vpack.c.b16 %v923, %v917
    %v1458 = vpack.c.b16 %v924, %v918
    %v1459 = vpack.c.b16 %v931, %v925
    %v1460 = vpack.c.b16 %v932, %v926
    %v1461 = vpack.c.b16 %v933, %v927
    %v1462 = vpack.c.b16 %v934, %v928
    %v1463 = vpack.c.b16 %v935, %v929
    %v1464 = vpack.c.b16 %v936, %v930
    %v1465 = vpack.c.b16 %v943, %v937
    %v1466 = vpack.c.b16 %v944, %v938
    %v1467 = vpack.c.b16 %v945, %v939
    %v1468 = vpack.c.b16 %v946, %v940
    %v1469 = vpack.c.b16 %v947, %v941
    %v1470 = vpack.c.b16 %v948, %v942
    %v1471 = vpack.c.b16 %v955, %v949
    %v1472 = vpack.c.b16 %v956, %v950
    %v1473 = vpack.c.b16 %v957, %v951
    %v1474 = vpack.c.b16 %v958, %v952
    %v1475 = vpack.c.b16 %v959, %v953
    %v1476 = vpack.c.b16 %v960, %v954
    %v1477 = vpack.c.b16 %v967, %v961
    %v1478 = vpack.c.b16 %v968, %v962
    %v1479 = vpack.c.b16 %v969, %v963
    %v1480 = vpack.c.b16 %v970, %v964
    %v1481 = vpack.c.b16 %v971, %v965
    %v1482 = vpack.c.b16 %v972, %v966
    %v1483 = vpack.c.b16 %v979, %v973
    %v1484 = vpack.c.b16 %v980, %v974
    %v1485 = vpack.c.b16 %v981, %v975
    %v1486 = vpack.c.b16 %v982, %v976
    %v1487 = vpack.c.b16 %v983, %v977
    %v1488 = vpack.c.b16 %v984, %v978
    %v1489 = vpack.c.b16 %v991, %v985
    %v1490 = vpack.c.b16 %v992, %v986
    %v1491 = vpack.c.b16 %v993, %v987
    %v1492 = vpack.c.b16 %v994, %v988
    %v1493 = vpack.c.b16 %v995, %v989
    %v1494 = vpack.c.b16 %v996, %v990
    %v1495 = vpack.c.b16 %v1003, %v997
    %v1496 = vpack.c.b16 %v1004, %v998
    %v1497 = vpack.c.b16 %v1005, %v999
    %v1498 = vpack.c.b16 %v1006, %v1000
    %v1499 = vpack.c.b16 %v1007, %v1001
    %v1500 = vpack.c.b16 %v1008, %v1002
    %v1501 = vpack.c.b16 %v1015, %v1009
    %v1502 = vpack.c.b16 %v1016, %v1010
    %v1503 = vpack.c.b16 %v1017, %v1011
    %v1504 = vpack.c.b16 %v1018, %v1012
    %v1505 = vpack.c.b16 %v1019, %v1013
    %v1506 = vpack.c.b16 %v1020, %v1014
    %v1507 = vpack.c.b16 %v1027, %v1021
    %v1508 = vpack.c.b16 %v1028, %v1022
    %v1509 = vpack.c.b16 %v1029, %v1023
    %v1510 = vpack.c.b16 %v1030, %v1024
    %v1511 = vpack.c.b16 %v1031, %v1025
    %v1512 = vpack.c.b16 %v1032, %v1026
    %v1513 = vpack.c.b16 %v1039, %v1033
    %v1514 = vpack.c.b16 %v1040, %v1034
    %v1515 = vpack.c.b16 %v1041, %v1035
    %v1516 = vpack.c.b16 %v1042, %v1036
    %v1517 = vpack.c.b16 %v1043, %v1037
    %v1518 = vpack.c.b16 %v1044, %v1038
    %v1519 = vpack.c.b16 %v1051, %v1045
    %v1520 = vpack.c.b16 %v1052, %v1046
    %v1521 = vpack.c.b16 %v1053, %v1047
    %v1522 = vpack.c.b16 %v1054, %v1048
    %v1523 = vpack.c.b16 %v1055, %v1049
    %v1524 = vpack.c.b16 %v1056, %v1050
    %v1525 = vpack.c.b16 %v1063, %v1057
    %v1526 = vpack.c.b16 %v1064, %v1058
    %v1527 = vpack.c.b16 %v1065, %v1059
    %v1528 = vpack.c.b16 %v1066, %v1060
    %v1529 = vpack.c.b16 %v1067, %v1061
    %v1530 = vpack.c.b16 %v1068, %v1062
    %v1531 = vpack.c.b16 %v1075, %v1069
    %v1532 = vpack.c.b16 %v1076, %v1070
    %v1533 = vpack.c.b16 %v1077, %v1071
    %v1534 = vpack.c.b16 %v1078, %v1072
    %v1535 = vpack.c.b16 %v1079, %v1073
    %v1536 = vpack.c.b16 %v1080, %v1074
    %v1537 = vpack.c.b16 %v1087, %v1081
    %v1538 = vpack.c.b16 %v1088, %v1082
    %v1539 = vpack.c.b16 %v1089, %v1083
    %v1540 = vpack.c.b16 %v1090, %v1084
    %v1541 = vpack.c.b16 %v1091, %v1085
    %v1542 = vpack.c.b16 %v1092, %v1086
    %v1543 = vpack.c.b16 %v1099, %v1093
    %v1544 = vpack.c.b16 %v1100, %v1094
    %v1545 = vpack.c.b16 %v1101, %v1095
    %v1546 = vpack.c.b16 %v1102, %v1096
    %v1547 = vpack.c.b16 %v1103, %v1097
    %v1548 = vpack.c.b16 %v1104, %v1098
    %v1549 = vpack.c.b16 %v1111, %v1105
    %v1550 = vpack.c.b16 %v1112, %v1106
    %v1551 = vpack.c.b16 %v1113, %v1107
    %v1552 = vpack.c.b16 %v1114, %v1108
    %v1553 = vpack.c.b16 %v1115, %v1109
    %v1554 = vpack.c.b16 %v1116, %v1110
    %v1555 = vpack.c.b16 %v1123, %v1117
    %v1556 = vpack.c.b16 %v1124, %v1118
    %v1557 = vpack.c.b16 %v1125, %v1119
    %v1558 = vpack.c.b16 %v1126, %v1120
    %v1559 = vpack.c.b16 %v1127, %v1121
    %v1560 = vpack.c.b16 %v1128, %v1122
    %v1561 = vpack.c.b16 %v1135, %v1129
    %v1562 = vpack.c.b16 %v1136, %v1130
    %v1563 = vpack.c.b16 %v1137, %v1131
    %v1564 = vpack.c.b16 %v1138, %v1132
    %v1565 = vpack.c.b16 %v1139, %v1133
    %v1566 = vpack.c.b16 %v1140, %v1134
    %v1567 = vpack.c.b16 %v1147, %v1141
    %v1568 = vpack.c.b16 %v1148, %v1142
    %v1569 = vpack.c.b16 %v1149, %v1143
    %v1570 = vpack.c.b16 %v1150, %v1144
    %v1571 = vpack.c.b16 %v1151, %v1145
    %v1572 = vpack.c.b16 %v1152, %v1146
    %v1573 = vpack.c.b16 %v1159, %v1153
    %v1574 = vpack.c.b16 %v1160, %v1154
    %v1575 = vpack.c.b16 %v1161, %v1155
    %v1576 = vpack.c.b16 %v1162, %v1156
    %v1577 = vpack.c.b16 %v1163, %v1157
    %v1578 = vpack.c.b16 %v1164, %v1158
    %v1579 = vpack.c.b16 %v1171, %v1165
    %v1580 = vpack.c.b16 %v1172, %v1166
    %v1581 = vpack.c.b16 %v1173, %v1167
    %v1582 = vpack.c.b16 %v1174, %v1168
    %v1583 = vpack.c.b16 %v1175, %v1169
    %v1584 = vpack.c.b16 %v1176, %v1170
    %v1585 = vpack.c.b16 %v1183, %v1177
    %v1586 = vpack.c.b16 %v1184, %v1178
    %v1587 = vpack.c.b16 %v1185, %v1179
    %v1588 = vpack.c.b16 %v1186, %v1180
    %v1589 = vpack.c.b16 %v1187, %v1181
    %v1590 = vpack.c.b16 %v1188, %v1182
    %v1591 = vpack.c.b16 %v1195, %v1189
    %v1592 = vpack.c.b16 %v1196, %v1190
    %v1593 = vpack.c.b16 %v1197, %v1191
    %v1594 = vpack.c.b16 %v1198, %v1192
    %v1595 = vpack.c.b16 %v1199, %v1193
    %v1596 = vpack.c.b16 %v1200, %v1194
    %v1597 = vpack.c.b16 %v1207, %v1201
    %v1598 = vpack.c.b16 %v1208, %v1202
    %v1599 = vpack.c.b16 %v1209, %v1203
    %v1600 = vpack.c.b16 %v1210, %v1204
    %v1601 = vpack.c.b16 %v1211, %v1205
    %v1602 = vpack.c.b16 %v1212, %v1206
    %v1603 = vpack.c.b16 %v1219, %v1213
    %v1604 = vpack.c.b16 %v1220, %v1214
    %v1605 = vpack.c.b16 %v1221, %v1215
    %v1606 = vpack.c.b16 %v1222, %v1216
    %v1607 = vpack.c.b16 %v1223, %v1217
    %v1608 = vpack.c.b16 %v1224, %v1218
    %v1609 = vpack.c.b16 %v1231, %v1225
    %v1610 = vpack.c.b16 %v1232, %v1226
    %v1611 = vpack.c.b16 %v1233, %v1227
    %v1612 = vpack.c.b16 %v1234, %v1228
    %v1613 = vpack.c.b16 %v1235, %v1229
    %v1614 = vpack.c.b16 %v1236, %v1230
    %v1615 = vpack.c.b16 %v1243, %v1237
    %v1616 = vpack.c.b16 %v1244, %v1238
    %v1617 = vpack.c.b16 %v1245, %v1239
    %v1618 = vpack.c.b16 %v1246, %v1240
    %v1619 = vpack.c.b16 %v1247, %v1241
    %v1620 = vpack.c.b16 %v1248, %v1242
    %v1621 = vpack.c.b16 %v1255, %v1249
    %v1622 = vpack.c.b16 %v1256, %v1250
    %v1623 = vpack.c.b16 %v1257, %v1251
    %v1624 = vpack.c.b16 %v1258, %v1252
    %v1625 = vpack.c.b16 %v1259, %v1253
    %v1626 = vpack.c.b16 %v1260, %v1254
    %v1627 = vpack.c.b16 %v1267, %v1261
    %v1628 = vpack.c.b16 %v1268, %v1262
    %v1629 = vpack.c.b16 %v1269, %v1263
    %v1630 = vpack.c.b16 %v1270, %v1264
    %v1631 = vpack.c.b16 %v1271, %v1265
    %v1632 = vpack.c.b16 %v1272, %v1266
    %v1633 = vpack.c.b16 %v1279, %v1273
    %v1634 = vpack.c.b16 %v1280, %v1274
    %v1635 = vpack.c.b16 %v1281, %v1275
    %v1636 = vpack.c.b16 %v1282, %v1276
    %v1637 = vpack.c.b16 %v1283, %v1277
    %v1638 = vpack.c.b16 %v1284, %v1278
    %v1639 = vpack.c.b16 %v1291, %v1285
    %v1640 = vpack.c.b16 %v1292, %v1286
    %v1641 = vpack.c.b16 %v1293, %v1287
    %v1642 = vpack.c.b16 %v1294, %v1288
    %v1643 = vpack.c.b16 %v1295, %v1289
    %v1644 = vpack.c.b16 %v1296, %v1290
    %v1645 = vpack.c.b16 %v1303, %v1297
    %v1646 = vpack.c.b16 %v1304, %v1298
    %v1647 = vpack.c.b16 %v1305, %v1299
    %v1648 = vpack.c.b16 %v1306, %v1300
    %v1649 = vpack.c.b16 %v1307, %v1301
    %v1650 = vpack.c.b16 %v1308, %v1302
    %v1651 = vpack.c.b16 %v1315, %v1309
    %v1652 = vpack.c.b16 %v1316, %v1310
    %v1653 = vpack.c.b16 %v1317, %v1311
    %v1654 = vpack.c.b16 %v1318, %v1312
    %v1655 = vpack.c.b16 %v1319, %v1313
    %v1656 = vpack.c.b16 %v1320, %v1314
    %v1657 = vpack.c.b16 %v1327, %v1321
    %v1658 = vpack.c.b16 %v1328, %v1322
    %v1659 = vpack.c.b16 %v1329, %v1323
    %v1660 = vpack.c.b16 %v1330, %v1324
    %v1661 = vpack.c.b16 %v1331, %v1325
    %v1662 = vpack.c.b16 %v1332, %v1326
    %v1663 = vpack.c.b16 %v1339, %v1333
    %v1664 = vpack.c.b16 %v1340, %v1334
    %v1665 = vpack.c.b16 %v1341, %v1335
    %v1666 = vpack.c.b16 %v1342, %v1336
    %v1667 = vpack.c.b16 %v1343, %v1337
    %v1668 = vpack.c.b16 %v1344, %v1338
    %v1669 = vpack.c.b16 %v1351, %v1345
    %v1670 = vpack.c.b16 %v1352, %v1346
    %v1671 = vpack.c.b16 %v1353, %v1347
    %v1672 = vpack.c.b16 %v1354, %v1348
    %v1673 = vpack.c.b16 %v1355, %v1349
    %v1674 = vpack.c.b16 %v1356, %v1350
    %v1675 = vpack.c.b16 %v1363, %v1357
    %v1676 = vpack.c.b16 %v1364, %v1358
    %v1677 = vpack.c.b16 %v1365, %v1359
    %v1678 = vpack.c.b16 %v1366, %v1360
    %v1679 = vpack.c.b16 %v1367, %v1361
    %v1680 = vpack.c.b16 %v1368, %v1362
    %v1681 = vpack.c.b16 %v1375, %v1369
    %v1682 = vpack.c.b16 %v1376, %v1370
    %v1683 = vpack.c.b16 %v1377, %v1371
    %v1684 = vpack.c.b16 %v1378, %v1372
    %v1685 = vpack.c.b16 %v1379, %v1373
    %v1686 = vpack.c.b16 %v1380, %v1374
    %v1687 = vpack.c.b16 %v1387, %v1381
    %v1688 = vpack.c.b16 %v1388, %v1382
    %v1689 = vpack.c.b16 %v1389, %v1383
    %v1690 = vpack.c.b16 %v1390, %v1384
    %v1691 = vpack.c.b16 %v1391, %v1385
    %v1692 = vpack.c.b16 %v1392, %v1386
    %v1693 = vpack.c.b16 %v1399, %v1393
    %v1694 = vpack.c.b16 %v1400, %v1394
    %v1695 = vpack.c.b16 %v1401, %v1395
    %v1696 = vpack.c.b16 %v1402, %v1396
    %v1697 = vpack.c.b16 %v1403, %v1397
    %v1698 = vpack.c.b16 %v1404, %v1398
    %v1699 = vpack.c.b16 %v1411, %v1405
    %v1700 = vpack.c.b16 %v1412, %v1406
    %v1701 = vpack.c.b16 %v1413, %v1407
    %v1702 = vpack.c.b16 %v1414, %v1408
    %v1703 = vpack.c.b16 %v1415, %v1409
    %v1704 = vpack.c.b16 %v1416, %v1410
    %1993 = vmatprep.subr.bf16.mxu0 %v1460
    %1994 = vmatpush1.bf16.msra.mxu0 %v1459
    %1995 = vmatprep.subr.bf16.mxu0 %v1454
    %1996 = vmatpush1.bf16.msra.mxu0 %v1453
    %1997 = vmatprep.subr.bf16.mxu0 %v1448
    %1998 = vmatpush1.bf16.msra.mxu0 %v1447
    %1999 = vmatprep.subr.bf16.mxu0 %v1442
    %2000 = vmatpush1.bf16.msra.mxu0 %v1441
    %2001 = vmatprep.subr.bf16.mxu0 %v1436
    %2002 = vmatpush1.bf16.msra.mxu0 %v1435
    %2003 = vmatprep.subr.bf16.mxu0 %v1430
    %2004 = vmatpush1.bf16.msra.mxu0 %v1429
    %2005 = vmatprep.subr.bf16.mxu0 %v1424
    %2006 = vmatpush1.bf16.msra.mxu0 %v1423
    %2007 = vmatprep.subr.bf16.mxu0 %v1418
    %2008 = vmatpush1.bf16.msra.mxu0 %v1417
    %2009 = vmatprep.subr.bf16.mxu0 %v1508
    %2010 = vmatpush2.bf16.msra.mxu0 %v1507
    %2011 = vmatprep.subr.bf16.mxu0 %v1502
    %2012 = vmatpush2.bf16.msra.mxu0 %v1501
    %2013 = vmatprep.subr.bf16.mxu0 %v1496
    %2014 = vmatpush2.bf16.msra.mxu0 %v1495
    %2015 = vmatprep.subr.bf16.mxu0 %v1490
    %2016 = vmatpush2.bf16.msra.mxu0 %v1489
    %2017 = vmatprep.subr.bf16.mxu0 %v1484
    %2018 = vmatpush2.bf16.msra.mxu0 %v1483
    %2019 = vmatprep.subr.bf16.mxu0 %v1478
    %2020 = vmatpush2.bf16.msra.mxu0 %v1477
    %2021 = vmatprep.subr.bf16.mxu0 %v1472
    %2022 = vmatpush2.bf16.msra.mxu0 %v1471
    %2023 = vmatprep.subr.bf16.mxu0 %v1466
    %2024 = vmatpush2.bf16.msra.mxu0 %v1465
    %2025 = vmatprep.mubr.bf16.mxu0 %v186
    %2026 = vmatmul.mubr.bf16.gmra.mxu0 %v185
    %v2027 = vpop.f32.mrf.mxu0
    %v2028 = vadd.f32 %v526, %v2027
    %v2029 = vpop.f32.mrf.mxu0
    %v2030 = vadd.f32 %v530, %v2029
    %v2031 = vpop.f32.mrf.mxu0
    %v2032 = vadd.f32 %v526, %v2031
    %v2033 = vpop.f32.mrf.mxu0
    %v2034 = vadd.f32 %v530, %v2033
    %2035 = vmatprep.mubr.bf16.mxu0 %v192
    %2036 = vmatmul.mubr.bf16.gmra.mxu0 %v191
    %v2037 = vpop.f32.mrf.mxu0
    %v2038 = vadd.f32 %v526, %v2037
    %v2039 = vpop.f32.mrf.mxu0
    %v2040 = vadd.f32 %v530, %v2039
    %v2041 = vpop.f32.mrf.mxu0
    %v2042 = vadd.f32 %v526, %v2041
    %v2043 = vpop.f32.mrf.mxu0
    %v2044 = vadd.f32 %v530, %v2043
    %2045 = vmatprep.mubr.bf16.mxu0 %v198
    %2046 = vmatmul.mubr.bf16.gmra.mxu0 %v197
    %v2047 = vpop.f32.mrf.mxu0
    %v2048 = vadd.f32 %v526, %v2047
    %v2049 = vpop.f32.mrf.mxu0
    %v2050 = vadd.f32 %v530, %v2049
    %v2051 = vpop.f32.mrf.mxu0
    %v2052 = vadd.f32 %v526, %v2051
    %v2053 = vpop.f32.mrf.mxu0
    %v2054 = vadd.f32 %v530, %v2053
    %2055 = vmatprep.mubr.bf16.mxu0 %v204
    %2056 = vmatmul.mubr.bf16.gmra.mxu0 %v203
    %v2057 = vpop.f32.mrf.mxu0
    %v2058 = vadd.f32 %v526, %v2057
    %v2059 = vpop.f32.mrf.mxu0
    %v2060 = vadd.f32 %v530, %v2059
    %v2061 = vpop.f32.mrf.mxu0
    %v2062 = vadd.f32 %v526, %v2061
    %v2063 = vpop.f32.mrf.mxu0
    %v2064 = vadd.f32 %v530, %v2063
    %2065 = vmatprep.mubr.bf16.mxu0 %v210
    %2066 = vmatmul.mubr.bf16.gmra.mxu0 %v209
    %v2067 = vpop.f32.mrf.mxu0
    %v2068 = vadd.f32 %v526, %v2067
    %v2069 = vpop.f32.mrf.mxu0
    %v2070 = vadd.f32 %v530, %v2069
    %v2071 = vpop.f32.mrf.mxu0
    %v2072 = vadd.f32 %v526, %v2071
    %v2073 = vpop.f32.mrf.mxu0
    %v2074 = vadd.f32 %v530, %v2073
    %2075 = vmatprep.mubr.bf16.mxu0 %v216
    %2076 = vmatmul.mubr.bf16.gmra.mxu0 %v215
    %v2077 = vpop.f32.mrf.mxu0
    %v2078 = vadd.f32 %v526, %v2077
    %v2079 = vpop.f32.mrf.mxu0
    %v2080 = vadd.f32 %v530, %v2079
    %v2081 = vpop.f32.mrf.mxu0
    %v2082 = vadd.f32 %v526, %v2081
    %v2083 = vpop.f32.mrf.mxu0
    %v2084 = vadd.f32 %v530, %v2083
    %2085 = vmatprep.mubr.bf16.mxu0 %v222
    %2086 = vmatmul.mubr.bf16.gmra.mxu0 %v221
    %v2087 = vpop.f32.mrf.mxu0
    %v2088 = vadd.f32 %v526, %v2087
    %v2089 = vpop.f32.mrf.mxu0
    %v2090 = vadd.f32 %v530, %v2089
    %v2091 = vpop.f32.mrf.mxu0
    %v2092 = vadd.f32 %v526, %v2091
    %v2093 = vpop.f32.mrf.mxu0
    %v2094 = vadd.f32 %v530, %v2093
    %2095 = vmatprep.mubr.bf16.mxu0 %v228
    %2096 = vmatmul.mubr.bf16.gmra.mxu0 %v227
    %v2097 = vpop.f32.mrf.mxu0
    %v2098 = vadd.f32 %v526, %v2097
    %v2099 = vpop.f32.mrf.mxu0
    %v2100 = vadd.f32 %v530, %v2099
    %v2101 = vpop.f32.mrf.mxu0
    %v2102 = vadd.f32 %v526, %v2101
    %v2103 = vpop.f32.mrf.mxu0
    %v2104 = vadd.f32 %v530, %v2103
    %2105 = vdwg.mxu0
    %2106 = vmatprep.subr.bf16.mxu0 %v1556
    %2107 = vmatpush1.bf16.msra.mxu0 %v1555
    %2108 = vmatprep.subr.bf16.mxu0 %v1550
    %2109 = vmatpush1.bf16.msra.mxu0 %v1549
    %2110 = vmatprep.subr.bf16.mxu0 %v1544
    %2111 = vmatpush1.bf16.msra.mxu0 %v1543
    %2112 = vmatprep.subr.bf16.mxu0 %v1538
    %2113 = vmatpush1.bf16.msra.mxu0 %v1537
    %2114 = vmatprep.subr.bf16.mxu0 %v1532
    %2115 = vmatpush1.bf16.msra.mxu0 %v1531
    %2116 = vmatprep.subr.bf16.mxu0 %v1526
    %2117 = vmatpush1.bf16.msra.mxu0 %v1525
    %2118 = vmatprep.subr.bf16.mxu0 %v1520
    %2119 = vmatpush1.bf16.msra.mxu0 %v1519
    %2120 = vmatprep.subr.bf16.mxu0 %v1514
    %2121 = vmatpush1.bf16.msra.mxu0 %v1513
    %2122 = vmatprep.subr.bf16.mxu0 %v1604
    %2123 = vmatpush2.bf16.msra.mxu0 %v1603
    %2124 = vmatprep.subr.bf16.mxu0 %v1598
    %2125 = vmatpush2.bf16.msra.mxu0 %v1597
    %2126 = vmatprep.subr.bf16.mxu0 %v1592
    %2127 = vmatpush2.bf16.msra.mxu0 %v1591
    %2128 = vmatprep.subr.bf16.mxu0 %v1586
    %2129 = vmatpush2.bf16.msra.mxu0 %v1585
    %2130 = vmatprep.subr.bf16.mxu0 %v1580
    %2131 = vmatpush2.bf16.msra.mxu0 %v1579
    %2132 = vmatprep.subr.bf16.mxu0 %v1574
    %2133 = vmatpush2.bf16.msra.mxu0 %v1573
    %2134 = vmatprep.subr.bf16.mxu0 %v1568
    %2135 = vmatpush2.bf16.msra.mxu0 %v1567
    %2136 = vmatprep.subr.bf16.mxu0 %v1562
    %2137 = vmatpush2.bf16.msra.mxu0 %v1561
    %2138 = vmatprep.mubr.bf16.mxu0 %v188
    %2139 = vmatmul.mubr.bf16.gmra.mxu0 %v187
    %v2140 = vpop.f32.mrf.mxu0
    %v2141 = vadd.f32 %v2028, %v2140
    %v2142 = vpop.f32.mrf.mxu0
    %v2143 = vadd.f32 %v2030, %v2142
    %v2144 = vpop.f32.mrf.mxu0
    %v2145 = vadd.f32 %v2032, %v2144
    %v2146 = vpop.f32.mrf.mxu0
    %v2147 = vadd.f32 %v2034, %v2146
    %2148 = vmatprep.mubr.bf16.mxu0 %v194
    %2149 = vmatmul.mubr.bf16.gmra.mxu0 %v193
    %v2150 = vpop.f32.mrf.mxu0
    %v2151 = vadd.f32 %v2038, %v2150
    %v2152 = vpop.f32.mrf.mxu0
    %v2153 = vadd.f32 %v2040, %v2152
    %v2154 = vpop.f32.mrf.mxu0
    %v2155 = vadd.f32 %v2042, %v2154
    %v2156 = vpop.f32.mrf.mxu0
    %v2157 = vadd.f32 %v2044, %v2156
    %2158 = vmatprep.mubr.bf16.mxu0 %v200
    %2159 = vmatmul.mubr.bf16.gmra.mxu0 %v199
    %v2160 = vpop.f32.mrf.mxu0
    %v2161 = vadd.f32 %v2048, %v2160
    %v2162 = vpop.f32.mrf.mxu0
    %v2163 = vadd.f32 %v2050, %v2162
    %v2164 = vpop.f32.mrf.mxu0
    %v2165 = vadd.f32 %v2052, %v2164
    %v2166 = vpop.f32.mrf.mxu0
    %v2167 = vadd.f32 %v2054, %v2166
    %2168 = vmatprep.mubr.bf16.mxu0 %v206
    %2169 = vmatmul.mubr.bf16.gmra.mxu0 %v205
    %v2170 = vpop.f32.mrf.mxu0
    %v2171 = vadd.f32 %v2058, %v2170
    %v2172 = vpop.f32.mrf.mxu0
    %v2173 = vadd.f32 %v2060, %v2172
    %v2174 = vpop.f32.mrf.mxu0
    %v2175 = vadd.f32 %v2062, %v2174
    %v2176 = vpop.f32.mrf.mxu0
    %v2177 = vadd.f32 %v2064, %v2176
    %2178 = vmatprep.mubr.bf16.mxu0 %v212
    %2179 = vmatmul.mubr.bf16.gmra.mxu0 %v211
    %v2180 = vpop.f32.mrf.mxu0
    %v2181 = vadd.f32 %v2068, %v2180
    %v2182 = vpop.f32.mrf.mxu0
    %v2183 = vadd.f32 %v2070, %v2182
    %v2184 = vpop.f32.mrf.mxu0
    %v2185 = vadd.f32 %v2072, %v2184
    %v2186 = vpop.f32.mrf.mxu0
    %v2187 = vadd.f32 %v2074, %v2186
    %2188 = vmatprep.mubr.bf16.mxu0 %v218
    %2189 = vmatmul.mubr.bf16.gmra.mxu0 %v217
    %v2190 = vpop.f32.mrf.mxu0
    %v2191 = vadd.f32 %v2078, %v2190
    %v2192 = vpop.f32.mrf.mxu0
    %v2193 = vadd.f32 %v2080, %v2192
    %v2194 = vpop.f32.mrf.mxu0
    %v2195 = vadd.f32 %v2082, %v2194
    %v2196 = vpop.f32.mrf.mxu0
    %v2197 = vadd.f32 %v2084, %v2196
    %2198 = vmatprep.mubr.bf16.mxu0 %v224
    %2199 = vmatmul.mubr.bf16.gmra.mxu0 %v223
    %v2200 = vpop.f32.mrf.mxu0
    %v2201 = vadd.f32 %v2088, %v2200
    %v2202 = vpop.f32.mrf.mxu0
    %v2203 = vadd.f32 %v2090, %v2202
    %v2204 = vpop.f32.mrf.mxu0
    %v2205 = vadd.f32 %v2092, %v2204
    %v2206 = vpop.f32.mrf.mxu0
    %v2207 = vadd.f32 %v2094, %v2206
    %2208 = vmatprep.mubr.bf16.mxu0 %v230
    %2209 = vmatmul.mubr.bf16.gmra.mxu0 %v229
    %v2210 = vpop.f32.mrf.mxu0
    %v2211 = vadd.f32 %v2098, %v2210
    %v2212 = vpop.f32.mrf.mxu0
    %v2213 = vadd.f32 %v2100, %v2212
    %v2214 = vpop.f32.mrf.mxu0
    %v2215 = vadd.f32 %v2102, %v2214
    %v2216 = vpop.f32.mrf.mxu0
    %v2217 = vadd.f32 %v2104, %v2216
    %2218 = vdwg.mxu0
    %2219 = vmatprep.subr.bf16.mxu0 %v1652
    %2220 = vmatpush1.bf16.msra.mxu0 %v1651
    %2221 = vmatprep.subr.bf16.mxu0 %v1646
    %2222 = vmatpush1.bf16.msra.mxu0 %v1645
    %2223 = vmatprep.subr.bf16.mxu0 %v1640
    %2224 = vmatpush1.bf16.msra.mxu0 %v1639
    %2225 = vmatprep.subr.bf16.mxu0 %v1634
    %2226 = vmatpush1.bf16.msra.mxu0 %v1633
    %2227 = vmatprep.subr.bf16.mxu0 %v1628
    %2228 = vmatpush1.bf16.msra.mxu0 %v1627
    %2229 = vmatprep.subr.bf16.mxu0 %v1622
    %2230 = vmatpush1.bf16.msra.mxu0 %v1621
    %2231 = vmatprep.subr.bf16.mxu0 %v1616
    %2232 = vmatpush1.bf16.msra.mxu0 %v1615
    %2233 = vmatprep.subr.bf16.mxu0 %v1610
    %2234 = vmatpush1.bf16.msra.mxu0 %v1609
    %2235 = vmatprep.subr.bf16.mxu0 %v1700
    %2236 = vmatpush2.bf16.msra.mxu0 %v1699
    %2237 = vmatprep.subr.bf16.mxu0 %v1694
    %2238 = vmatpush2.bf16.msra.mxu0 %v1693
    %2239 = vmatprep.subr.bf16.mxu0 %v1688
    %2240 = vmatpush2.bf16.msra.mxu0 %v1687
    %2241 = vmatprep.subr.bf16.mxu0 %v1682
    %2242 = vmatpush2.bf16.msra.mxu0 %v1681
    %2243 = vmatprep.subr.bf16.mxu0 %v1676
    %2244 = vmatpush2.bf16.msra.mxu0 %v1675
    %2245 = vmatprep.subr.bf16.mxu0 %v1670
    %2246 = vmatpush2.bf16.msra.mxu0 %v1669
    %2247 = vmatprep.subr.bf16.mxu0 %v1664
    %2248 = vmatpush2.bf16.msra.mxu0 %v1663
    %2249 = vmatprep.subr.bf16.mxu0 %v1658
    %2250 = vmatpush2.bf16.msra.mxu0 %v1657
    %2251 = vmatprep.mubr.bf16.mxu0 %v190
    %2252 = vmatmul.mubr.bf16.gmra.mxu0 %v189
    %v2253 = vpop.f32.mrf.mxu0
    %v2254 = vadd.f32 %v2141, %v2253
    %v2255 = vpop.f32.mrf.mxu0
    %v2256 = vadd.f32 %v2143, %v2255
    %v2257 = vpop.f32.mrf.mxu0
    %v2258 = vadd.f32 %v2145, %v2257
    %v2259 = vpop.f32.mrf.mxu0
    %v2260 = vadd.f32 %v2147, %v2259
    %2261 = vmatprep.mubr.bf16.mxu0 %v196
    %2262 = vmatmul.mubr.bf16.gmra.mxu0 %v195
    %v2263 = vpop.f32.mrf.mxu0
    %v2264 = vadd.f32 %v2151, %v2263
    %v2265 = vpop.f32.mrf.mxu0
    %v2266 = vadd.f32 %v2153, %v2265
    %v2267 = vpop.f32.mrf.mxu0
    %v2268 = vadd.f32 %v2155, %v2267
    %v2269 = vpop.f32.mrf.mxu0
    %v2270 = vadd.f32 %v2157, %v2269
    %2271 = vmatprep.mubr.bf16.mxu0 %v202
    %2272 = vmatmul.mubr.bf16.gmra.mxu0 %v201
    %v2273 = vpop.f32.mrf.mxu0
    %v2274 = vadd.f32 %v2161, %v2273
    %v2275 = vpop.f32.mrf.mxu0
    %v2276 = vadd.f32 %v2163, %v2275
    %v2277 = vpop.f32.mrf.mxu0
    %v2278 = vadd.f32 %v2165, %v2277
    %v2279 = vpop.f32.mrf.mxu0
    %v2280 = vadd.f32 %v2167, %v2279
    %2281 = vmatprep.mubr.bf16.mxu0 %v208
    %2282 = vmatmul.mubr.bf16.gmra.mxu0 %v207
    %v2283 = vpop.f32.mrf.mxu0
    %v2284 = vadd.f32 %v2171, %v2283
    %v2285 = vpop.f32.mrf.mxu0
    %v2286 = vadd.f32 %v2173, %v2285
    %v2287 = vpop.f32.mrf.mxu0
    %v2288 = vadd.f32 %v2175, %v2287
    %v2289 = vpop.f32.mrf.mxu0
    %v2290 = vadd.f32 %v2177, %v2289
    %2291 = vmatprep.mubr.bf16.mxu0 %v214
    %2292 = vmatmul.mubr.bf16.gmra.mxu0 %v213
    %v2293 = vpop.f32.mrf.mxu0
    %v2294 = vadd.f32 %v2181, %v2293
    %v2295 = vpop.f32.mrf.mxu0
    %v2296 = vadd.f32 %v2183, %v2295
    %v2297 = vpop.f32.mrf.mxu0
    %v2298 = vadd.f32 %v2185, %v2297
    %v2299 = vpop.f32.mrf.mxu0
    %v2300 = vadd.f32 %v2187, %v2299
    %2301 = vmatprep.mubr.bf16.mxu0 %v220
    %2302 = vmatmul.mubr.bf16.gmra.mxu0 %v219
    %v2303 = vpop.f32.mrf.mxu0
    %v2304 = vadd.f32 %v2191, %v2303
    %v2305 = vpop.f32.mrf.mxu0
    %v2306 = vadd.f32 %v2193, %v2305
    %v2307 = vpop.f32.mrf.mxu0
    %v2308 = vadd.f32 %v2195, %v2307
    %v2309 = vpop.f32.mrf.mxu0
    %v2310 = vadd.f32 %v2197, %v2309
    %2311 = vmatprep.mubr.bf16.mxu0 %v226
    %2312 = vmatmul.mubr.bf16.gmra.mxu0 %v225
    %v2313 = vpop.f32.mrf.mxu0
    %v2314 = vadd.f32 %v2201, %v2313
    %v2315 = vpop.f32.mrf.mxu0
    %v2316 = vadd.f32 %v2203, %v2315
    %v2317 = vpop.f32.mrf.mxu0
    %v2318 = vadd.f32 %v2205, %v2317
    %v2319 = vpop.f32.mrf.mxu0
    %v2320 = vadd.f32 %v2207, %v2319
    %2321 = vmatprep.mubr.bf16.mxu0 %v232
    %2322 = vmatmul.mubr.bf16.gmra.mxu0 %v231
    %v2323 = vpop.f32.mrf.mxu0
    %v2324 = vadd.f32 %v2211, %v2323
    %v2325 = vpop.f32.mrf.mxu0
    %v2326 = vadd.f32 %v2213, %v2325
    %v2327 = vpop.f32.mrf.mxu0
    %v2328 = vadd.f32 %v2215, %v2327
    %v2329 = vpop.f32.mrf.mxu0
    %v2330 = vadd.f32 %v2217, %v2329
    %2331 = vdwg.mxu0
    %2332 = vmatprep.subr.bf16.mxu0 %v1462
    %2333 = vmatpush1.bf16.msra.mxu0 %v1461
    %2334 = vmatprep.subr.bf16.mxu0 %v1456
    %2335 = vmatpush1.bf16.msra.mxu0 %v1455
    %2336 = vmatprep.subr.bf16.mxu0 %v1450
    %2337 = vmatpush1.bf16.msra.mxu0 %v1449
    %2338 = vmatprep.subr.bf16.mxu0 %v1444
    %2339 = vmatpush1.bf16.msra.mxu0 %v1443
    %2340 = vmatprep.subr.bf16.mxu0 %v1438
    %2341 = vmatpush1.bf16.msra.mxu0 %v1437
    %2342 = vmatprep.subr.bf16.mxu0 %v1432
    %2343 = vmatpush1.bf16.msra.mxu0 %v1431
    %2344 = vmatprep.subr.bf16.mxu0 %v1426
    %2345 = vmatpush1.bf16.msra.mxu0 %v1425
    %2346 = vmatprep.subr.bf16.mxu0 %v1420
    %2347 = vmatpush1.bf16.msra.mxu0 %v1419
    %2348 = vmatprep.subr.bf16.mxu0 %v1510
    %2349 = vmatpush2.bf16.msra.mxu0 %v1509
    %2350 = vmatprep.subr.bf16.mxu0 %v1504
    %2351 = vmatpush2.bf16.msra.mxu0 %v1503
    %2352 = vmatprep.subr.bf16.mxu0 %v1498
    %2353 = vmatpush2.bf16.msra.mxu0 %v1497
    %2354 = vmatprep.subr.bf16.mxu0 %v1492
    %2355 = vmatpush2.bf16.msra.mxu0 %v1491
    %2356 = vmatprep.subr.bf16.mxu0 %v1486
    %2357 = vmatpush2.bf16.msra.mxu0 %v1485
    %2358 = vmatprep.subr.bf16.mxu0 %v1480
    %2359 = vmatpush2.bf16.msra.mxu0 %v1479
    %2360 = vmatprep.subr.bf16.mxu0 %v1474
    %2361 = vmatpush2.bf16.msra.mxu0 %v1473
    %2362 = vmatprep.subr.bf16.mxu0 %v1468
    %2363 = vmatpush2.bf16.msra.mxu0 %v1467
    %2364 = vmatprep.mubr.bf16.mxu0 %v186
    %2365 = vmatmul.mubr.bf16.gmra.mxu0 %v185
    %v2366 = vpop.f32.mrf.mxu0
    %v2367 = vadd.f32 %v534, %v2366
    %v2368 = vpop.f32.mrf.mxu0
    %v2369 = vadd.f32 %v538, %v2368
    %v2370 = vpop.f32.mrf.mxu0
    %v2371 = vadd.f32 %v534, %v2370
    %v2372 = vpop.f32.mrf.mxu0
    %v2373 = vadd.f32 %v538, %v2372
    %2374 = vmatprep.mubr.bf16.mxu0 %v192
    %2375 = vmatmul.mubr.bf16.gmra.mxu0 %v191
    %v2376 = vpop.f32.mrf.mxu0
    %v2377 = vadd.f32 %v534, %v2376
    %v2378 = vpop.f32.mrf.mxu0
    %v2379 = vadd.f32 %v538, %v2378
    %v2380 = vpop.f32.mrf.mxu0
    %v2381 = vadd.f32 %v534, %v2380
    %v2382 = vpop.f32.mrf.mxu0
    %v2383 = vadd.f32 %v538, %v2382
    %2384 = vmatprep.mubr.bf16.mxu0 %v198
    %2385 = vmatmul.mubr.bf16.gmra.mxu0 %v197
    %v2386 = vpop.f32.mrf.mxu0
    %v2387 = vadd.f32 %v534, %v2386
    %v2388 = vpop.f32.mrf.mxu0
    %v2389 = vadd.f32 %v538, %v2388
    %v2390 = vpop.f32.mrf.mxu0
    %v2391 = vadd.f32 %v534, %v2390
    %v2392 = vpop.f32.mrf.mxu0
    %v2393 = vadd.f32 %v538, %v2392
    %2394 = vmatprep.mubr.bf16.mxu0 %v204
    %2395 = vmatmul.mubr.bf16.gmra.mxu0 %v203
    %v2396 = vpop.f32.mrf.mxu0
    %v2397 = vadd.f32 %v534, %v2396
    %v2398 = vpop.f32.mrf.mxu0
    %v2399 = vadd.f32 %v538, %v2398
    %v2400 = vpop.f32.mrf.mxu0
    %v2401 = vadd.f32 %v534, %v2400
    %v2402 = vpop.f32.mrf.mxu0
    %v2403 = vadd.f32 %v538, %v2402
    %2404 = vmatprep.mubr.bf16.mxu0 %v210
    %2405 = vmatmul.mubr.bf16.gmra.mxu0 %v209
    %v2406 = vpop.f32.mrf.mxu0
    %v2407 = vadd.f32 %v534, %v2406
    %v2408 = vpop.f32.mrf.mxu0
    %v2409 = vadd.f32 %v538, %v2408
    %v2410 = vpop.f32.mrf.mxu0
    %v2411 = vadd.f32 %v534, %v2410
    %v2412 = vpop.f32.mrf.mxu0
    %v2413 = vadd.f32 %v538, %v2412
    %2414 = vmatprep.mubr.bf16.mxu0 %v216
    %2415 = vmatmul.mubr.bf16.gmra.mxu0 %v215
    %v2416 = vpop.f32.mrf.mxu0
    %v2417 = vadd.f32 %v534, %v2416
    %v2418 = vpop.f32.mrf.mxu0
    %v2419 = vadd.f32 %v538, %v2418
    %v2420 = vpop.f32.mrf.mxu0
    %v2421 = vadd.f32 %v534, %v2420
    %v2422 = vpop.f32.mrf.mxu0
    %v2423 = vadd.f32 %v538, %v2422
    %2424 = vmatprep.mubr.bf16.mxu0 %v222
    %2425 = vmatmul.mubr.bf16.gmra.mxu0 %v221
    %v2426 = vpop.f32.mrf.mxu0
    %v2427 = vadd.f32 %v534, %v2426
    %v2428 = vpop.f32.mrf.mxu0
    %v2429 = vadd.f32 %v538, %v2428
    %v2430 = vpop.f32.mrf.mxu0
    %v2431 = vadd.f32 %v534, %v2430
    %v2432 = vpop.f32.mrf.mxu0
    %v2433 = vadd.f32 %v538, %v2432
    %2434 = vmatprep.mubr.bf16.mxu0 %v228
    %2435 = vmatmul.mubr.bf16.gmra.mxu0 %v227
    %v2436 = vpop.f32.mrf.mxu0
    %v2437 = vadd.f32 %v534, %v2436
    %v2438 = vpop.f32.mrf.mxu0
    %v2439 = vadd.f32 %v538, %v2438
    %v2440 = vpop.f32.mrf.mxu0
    %v2441 = vadd.f32 %v534, %v2440
    %v2442 = vpop.f32.mrf.mxu0
    %v2443 = vadd.f32 %v538, %v2442
    %2444 = vdwg.mxu0
    %2445 = vmatprep.subr.bf16.mxu0 %v1558
    %2446 = vmatpush1.bf16.msra.mxu0 %v1557
    %2447 = vmatprep.subr.bf16.mxu0 %v1552
    %2448 = vmatpush1.bf16.msra.mxu0 %v1551
    %2449 = vmatprep.subr.bf16.mxu0 %v1546
    %2450 = vmatpush1.bf16.msra.mxu0 %v1545
    %2451 = vmatprep.subr.bf16.mxu0 %v1540
    %2452 = vmatpush1.bf16.msra.mxu0 %v1539
    %2453 = vmatprep.subr.bf16.mxu0 %v1534
    %2454 = vmatpush1.bf16.msra.mxu0 %v1533
    %2455 = vmatprep.subr.bf16.mxu0 %v1528
    %2456 = vmatpush1.bf16.msra.mxu0 %v1527
    %2457 = vmatprep.subr.bf16.mxu0 %v1522
    %2458 = vmatpush1.bf16.msra.mxu0 %v1521
    %2459 = vmatprep.subr.bf16.mxu0 %v1516
    %2460 = vmatpush1.bf16.msra.mxu0 %v1515
    %2461 = vmatprep.subr.bf16.mxu0 %v1606
    %2462 = vmatpush2.bf16.msra.mxu0 %v1605
    %2463 = vmatprep.subr.bf16.mxu0 %v1600
    %2464 = vmatpush2.bf16.msra.mxu0 %v1599
    %2465 = vmatprep.subr.bf16.mxu0 %v1594
    %2466 = vmatpush2.bf16.msra.mxu0 %v1593
    %2467 = vmatprep.subr.bf16.mxu0 %v1588
    %2468 = vmatpush2.bf16.msra.mxu0 %v1587
    %2469 = vmatprep.subr.bf16.mxu0 %v1582
    %2470 = vmatpush2.bf16.msra.mxu0 %v1581
    %2471 = vmatprep.subr.bf16.mxu0 %v1576
    %2472 = vmatpush2.bf16.msra.mxu0 %v1575
    %2473 = vmatprep.subr.bf16.mxu0 %v1570
    %2474 = vmatpush2.bf16.msra.mxu0 %v1569
    %2475 = vmatprep.subr.bf16.mxu0 %v1564
    %2476 = vmatpush2.bf16.msra.mxu0 %v1563
    %2477 = vmatprep.mubr.bf16.mxu0 %v188
    %2478 = vmatmul.mubr.bf16.gmra.mxu0 %v187
    %v2479 = vpop.f32.mrf.mxu0
    %v2480 = vadd.f32 %v2367, %v2479
    %v2481 = vpop.f32.mrf.mxu0
    %v2482 = vadd.f32 %v2369, %v2481
    %v2483 = vpop.f32.mrf.mxu0
    %v2484 = vadd.f32 %v2371, %v2483
    %v2485 = vpop.f32.mrf.mxu0
    %v2486 = vadd.f32 %v2373, %v2485
    %2487 = vmatprep.mubr.bf16.mxu0 %v194
    %2488 = vmatmul.mubr.bf16.gmra.mxu0 %v193
    %v2489 = vpop.f32.mrf.mxu0
    %v2490 = vadd.f32 %v2377, %v2489
    %v2491 = vpop.f32.mrf.mxu0
    %v2492 = vadd.f32 %v2379, %v2491
    %v2493 = vpop.f32.mrf.mxu0
    %v2494 = vadd.f32 %v2381, %v2493
    %v2495 = vpop.f32.mrf.mxu0
    %v2496 = vadd.f32 %v2383, %v2495
    %2497 = vmatprep.mubr.bf16.mxu0 %v200
    %2498 = vmatmul.mubr.bf16.gmra.mxu0 %v199
    %v2499 = vpop.f32.mrf.mxu0
    %v2500 = vadd.f32 %v2387, %v2499
    %v2501 = vpop.f32.mrf.mxu0
    %v2502 = vadd.f32 %v2389, %v2501
    %v2503 = vpop.f32.mrf.mxu0
    %v2504 = vadd.f32 %v2391, %v2503
    %v2505 = vpop.f32.mrf.mxu0
    %v2506 = vadd.f32 %v2393, %v2505
    %2507 = vmatprep.mubr.bf16.mxu0 %v206
    %2508 = vmatmul.mubr.bf16.gmra.mxu0 %v205
    %v2509 = vpop.f32.mrf.mxu0
    %v2510 = vadd.f32 %v2397, %v2509
    %v2511 = vpop.f32.mrf.mxu0
    %v2512 = vadd.f32 %v2399, %v2511
    %v2513 = vpop.f32.mrf.mxu0
    %v2514 = vadd.f32 %v2401, %v2513
    %v2515 = vpop.f32.mrf.mxu0
    %v2516 = vadd.f32 %v2403, %v2515
    %2517 = vmatprep.mubr.bf16.mxu0 %v212
    %2518 = vmatmul.mubr.bf16.gmra.mxu0 %v211
    %v2519 = vpop.f32.mrf.mxu0
    %v2520 = vadd.f32 %v2407, %v2519
    %v2521 = vpop.f32.mrf.mxu0
    %v2522 = vadd.f32 %v2409, %v2521
    %v2523 = vpop.f32.mrf.mxu0
    %v2524 = vadd.f32 %v2411, %v2523
    %v2525 = vpop.f32.mrf.mxu0
    %v2526 = vadd.f32 %v2413, %v2525
    %2527 = vmatprep.mubr.bf16.mxu0 %v218
    %2528 = vmatmul.mubr.bf16.gmra.mxu0 %v217
    %v2529 = vpop.f32.mrf.mxu0
    %v2530 = vadd.f32 %v2417, %v2529
    %v2531 = vpop.f32.mrf.mxu0
    %v2532 = vadd.f32 %v2419, %v2531
    %v2533 = vpop.f32.mrf.mxu0
    %v2534 = vadd.f32 %v2421, %v2533
    %v2535 = vpop.f32.mrf.mxu0
    %v2536 = vadd.f32 %v2423, %v2535
    %2537 = vmatprep.mubr.bf16.mxu0 %v224
    %2538 = vmatmul.mubr.bf16.gmra.mxu0 %v223
    %v2539 = vpop.f32.mrf.mxu0
    %v2540 = vadd.f32 %v2427, %v2539
    %v2541 = vpop.f32.mrf.mxu0
    %v2542 = vadd.f32 %v2429, %v2541
    %v2543 = vpop.f32.mrf.mxu0
    %v2544 = vadd.f32 %v2431, %v2543
    %v2545 = vpop.f32.mrf.mxu0
    %v2546 = vadd.f32 %v2433, %v2545
    %2547 = vmatprep.mubr.bf16.mxu0 %v230
    %2548 = vmatmul.mubr.bf16.gmra.mxu0 %v229
    %v2549 = vpop.f32.mrf.mxu0
    %v2550 = vadd.f32 %v2437, %v2549
    %v2551 = vpop.f32.mrf.mxu0
    %v2552 = vadd.f32 %v2439, %v2551
    %v2553 = vpop.f32.mrf.mxu0
    %v2554 = vadd.f32 %v2441, %v2553
    %v2555 = vpop.f32.mrf.mxu0
    %v2556 = vadd.f32 %v2443, %v2555
    %2557 = vdwg.mxu0
    %2558 = vmatprep.subr.bf16.mxu0 %v1654
    %2559 = vmatpush1.bf16.msra.mxu0 %v1653
    %2560 = vmatprep.subr.bf16.mxu0 %v1648
    %2561 = vmatpush1.bf16.msra.mxu0 %v1647
    %2562 = vmatprep.subr.bf16.mxu0 %v1642
    %2563 = vmatpush1.bf16.msra.mxu0 %v1641
    %2564 = vmatprep.subr.bf16.mxu0 %v1636
    %2565 = vmatpush1.bf16.msra.mxu0 %v1635
    %2566 = vmatprep.subr.bf16.mxu0 %v1630
    %2567 = vmatpush1.bf16.msra.mxu0 %v1629
    %2568 = vmatprep.subr.bf16.mxu0 %v1624
    %2569 = vmatpush1.bf16.msra.mxu0 %v1623
    %2570 = vmatprep.subr.bf16.mxu0 %v1618
    %2571 = vmatpush1.bf16.msra.mxu0 %v1617
    %2572 = vmatprep.subr.bf16.mxu0 %v1612
    %2573 = vmatpush1.bf16.msra.mxu0 %v1611
    %2574 = vmatprep.subr.bf16.mxu0 %v1702
    %2575 = vmatpush2.bf16.msra.mxu0 %v1701
    %2576 = vmatprep.subr.bf16.mxu0 %v1696
    %2577 = vmatpush2.bf16.msra.mxu0 %v1695
    %2578 = vmatprep.subr.bf16.mxu0 %v1690
    %2579 = vmatpush2.bf16.msra.mxu0 %v1689
    %2580 = vmatprep.subr.bf16.mxu0 %v1684
    %2581 = vmatpush2.bf16.msra.mxu0 %v1683
    %2582 = vmatprep.subr.bf16.mxu0 %v1678
    %2583 = vmatpush2.bf16.msra.mxu0 %v1677
    %2584 = vmatprep.subr.bf16.mxu0 %v1672
    %2585 = vmatpush2.bf16.msra.mxu0 %v1671
    %2586 = vmatprep.subr.bf16.mxu0 %v1666
    %2587 = vmatpush2.bf16.msra.mxu0 %v1665
    %2588 = vmatprep.subr.bf16.mxu0 %v1660
    %2589 = vmatpush2.bf16.msra.mxu0 %v1659
    %2590 = vmatprep.mubr.bf16.mxu0 %v190
    %2591 = vmatmul.mubr.bf16.gmra.mxu0 %v189
    %v2592 = vpop.f32.mrf.mxu0
    %v2593 = vadd.f32 %v2480, %v2592
    %v2594 = vpop.f32.mrf.mxu0
    %v2595 = vadd.f32 %v2482, %v2594
    %v2596 = vpop.f32.mrf.mxu0
    %v2597 = vadd.f32 %v2484, %v2596
    %v2598 = vpop.f32.mrf.mxu0
    %v2599 = vadd.f32 %v2486, %v2598
    %2600 = vmatprep.mubr.bf16.mxu0 %v196
    %2601 = vmatmul.mubr.bf16.gmra.mxu0 %v195
    %v2602 = vpop.f32.mrf.mxu0
    %v2603 = vadd.f32 %v2490, %v2602
    %v2604 = vpop.f32.mrf.mxu0
    %v2605 = vadd.f32 %v2492, %v2604
    %v2606 = vpop.f32.mrf.mxu0
    %v2607 = vadd.f32 %v2494, %v2606
    %v2608 = vpop.f32.mrf.mxu0
    %v2609 = vadd.f32 %v2496, %v2608
    %2610 = vmatprep.mubr.bf16.mxu0 %v202
    %2611 = vmatmul.mubr.bf16.gmra.mxu0 %v201
    %v2612 = vpop.f32.mrf.mxu0
    %v2613 = vadd.f32 %v2500, %v2612
    %v2614 = vpop.f32.mrf.mxu0
    %v2615 = vadd.f32 %v2502, %v2614
    %v2616 = vpop.f32.mrf.mxu0
    %v2617 = vadd.f32 %v2504, %v2616
    %v2618 = vpop.f32.mrf.mxu0
    %v2619 = vadd.f32 %v2506, %v2618
    %2620 = vmatprep.mubr.bf16.mxu0 %v208
    %2621 = vmatmul.mubr.bf16.gmra.mxu0 %v207
    %v2622 = vpop.f32.mrf.mxu0
    %v2623 = vadd.f32 %v2510, %v2622
    %v2624 = vpop.f32.mrf.mxu0
    %v2625 = vadd.f32 %v2512, %v2624
    %v2626 = vpop.f32.mrf.mxu0
    %v2627 = vadd.f32 %v2514, %v2626
    %v2628 = vpop.f32.mrf.mxu0
    %v2629 = vadd.f32 %v2516, %v2628
    %2630 = vmatprep.mubr.bf16.mxu0 %v214
    %2631 = vmatmul.mubr.bf16.gmra.mxu0 %v213
    %v2632 = vpop.f32.mrf.mxu0
    %v2633 = vadd.f32 %v2520, %v2632
    %v2634 = vpop.f32.mrf.mxu0
    %v2635 = vadd.f32 %v2522, %v2634
    %v2636 = vpop.f32.mrf.mxu0
    %v2637 = vadd.f32 %v2524, %v2636
    %v2638 = vpop.f32.mrf.mxu0
    %v2639 = vadd.f32 %v2526, %v2638
    %2640 = vmatprep.mubr.bf16.mxu0 %v220
    %2641 = vmatmul.mubr.bf16.gmra.mxu0 %v219
    %v2642 = vpop.f32.mrf.mxu0
    %v2643 = vadd.f32 %v2530, %v2642
    %v2644 = vpop.f32.mrf.mxu0
    %v2645 = vadd.f32 %v2532, %v2644
    %v2646 = vpop.f32.mrf.mxu0
    %v2647 = vadd.f32 %v2534, %v2646
    %v2648 = vpop.f32.mrf.mxu0
    %v2649 = vadd.f32 %v2536, %v2648
    %2650 = vmatprep.mubr.bf16.mxu0 %v226
    %2651 = vmatmul.mubr.bf16.gmra.mxu0 %v225
    %v2652 = vpop.f32.mrf.mxu0
    %v2653 = vadd.f32 %v2540, %v2652
    %v2654 = vpop.f32.mrf.mxu0
    %v2655 = vadd.f32 %v2542, %v2654
    %v2656 = vpop.f32.mrf.mxu0
    %v2657 = vadd.f32 %v2544, %v2656
    %v2658 = vpop.f32.mrf.mxu0
    %v2659 = vadd.f32 %v2546, %v2658
    %2660 = vmatprep.mubr.bf16.mxu0 %v232
    %2661 = vmatmul.mubr.bf16.gmra.mxu0 %v231
    %v2662 = vpop.f32.mrf.mxu0
    %v2663 = vadd.f32 %v2550, %v2662
    %v2664 = vpop.f32.mrf.mxu0
    %v2665 = vadd.f32 %v2552, %v2664
    %v2666 = vpop.f32.mrf.mxu0
    %v2667 = vadd.f32 %v2554, %v2666
    %v2668 = vpop.f32.mrf.mxu0
    %v2669 = vadd.f32 %v2556, %v2668
    %2670 = vdwg.mxu0
    %2671 = vmatprep.subr.bf16.mxu0 %v1464
    %2672 = vmatpush1.bf16.msra.mxu0 %v1463
    %2673 = vmatprep.subr.bf16.mxu0 %v1458
    %2674 = vmatpush1.bf16.msra.mxu0 %v1457
    %2675 = vmatprep.subr.bf16.mxu0 %v1452
    %2676 = vmatpush1.bf16.msra.mxu0 %v1451
    %2677 = vmatprep.subr.bf16.mxu0 %v1446
    %2678 = vmatpush1.bf16.msra.mxu0 %v1445
    %2679 = vmatprep.subr.bf16.mxu0 %v1440
    %2680 = vmatpush1.bf16.msra.mxu0 %v1439
    %2681 = vmatprep.subr.bf16.mxu0 %v1434
    %2682 = vmatpush1.bf16.msra.mxu0 %v1433
    %2683 = vmatprep.subr.bf16.mxu0 %v1428
    %2684 = vmatpush1.bf16.msra.mxu0 %v1427
    %2685 = vmatprep.subr.bf16.mxu0 %v1422
    %2686 = vmatpush1.bf16.msra.mxu0 %v1421
    %2687 = vmatprep.subr.bf16.mxu0 %v1512
    %2688 = vmatpush2.bf16.msra.mxu0 %v1511
    %2689 = vmatprep.subr.bf16.mxu0 %v1506
    %2690 = vmatpush2.bf16.msra.mxu0 %v1505
    %2691 = vmatprep.subr.bf16.mxu0 %v1500
    %2692 = vmatpush2.bf16.msra.mxu0 %v1499
    %2693 = vmatprep.subr.bf16.mxu0 %v1494
    %2694 = vmatpush2.bf16.msra.mxu0 %v1493
    %2695 = vmatprep.subr.bf16.mxu0 %v1488
    %2696 = vmatpush2.bf16.msra.mxu0 %v1487
    %2697 = vmatprep.subr.bf16.mxu0 %v1482
    %2698 = vmatpush2.bf16.msra.mxu0 %v1481
    %2699 = vmatprep.subr.bf16.mxu0 %v1476
    %2700 = vmatpush2.bf16.msra.mxu0 %v1475
    %2701 = vmatprep.subr.bf16.mxu0 %v1470
    %2702 = vmatpush2.bf16.msra.mxu0 %v1469
    %2703 = vmatprep.mubr.bf16.mxu0 %v186
    %2704 = vmatmul.mubr.bf16.gmra.mxu0 %v185
    %v2705 = vpop.f32.mrf.mxu0
    %v2706 = vadd.f32 %v542, %v2705
    %v2707 = vpop.f32.mrf.mxu0
    %v2708 = vadd.f32 %v546, %v2707
    %v2709 = vpop.f32.mrf.mxu0
    %v2710 = vadd.f32 %v542, %v2709
    %v2711 = vpop.f32.mrf.mxu0
    %v2712 = vadd.f32 %v546, %v2711
    %2713 = vmatprep.mubr.bf16.mxu0 %v192
    %2714 = vmatmul.mubr.bf16.gmra.mxu0 %v191
    %v2715 = vpop.f32.mrf.mxu0
    %v2716 = vadd.f32 %v542, %v2715
    %v2717 = vpop.f32.mrf.mxu0
    %v2718 = vadd.f32 %v546, %v2717
    %v2719 = vpop.f32.mrf.mxu0
    %v2720 = vadd.f32 %v542, %v2719
    %v2721 = vpop.f32.mrf.mxu0
    %v2722 = vadd.f32 %v546, %v2721
    %2723 = vmatprep.mubr.bf16.mxu0 %v198
    %2724 = vmatmul.mubr.bf16.gmra.mxu0 %v197
    %v2725 = vpop.f32.mrf.mxu0
    %v2726 = vadd.f32 %v542, %v2725
    %v2727 = vpop.f32.mrf.mxu0
    %v2728 = vadd.f32 %v546, %v2727
    %v2729 = vpop.f32.mrf.mxu0
    %v2730 = vadd.f32 %v542, %v2729
    %v2731 = vpop.f32.mrf.mxu0
    %v2732 = vadd.f32 %v546, %v2731
    %2733 = vmatprep.mubr.bf16.mxu0 %v204
    %2734 = vmatmul.mubr.bf16.gmra.mxu0 %v203
    %v2735 = vpop.f32.mrf.mxu0
    %v2736 = vadd.f32 %v542, %v2735
    %v2737 = vpop.f32.mrf.mxu0
    %v2738 = vadd.f32 %v546, %v2737
    %v2739 = vpop.f32.mrf.mxu0
    %v2740 = vadd.f32 %v542, %v2739
    %v2741 = vpop.f32.mrf.mxu0
    %v2742 = vadd.f32 %v546, %v2741
    %2743 = vmatprep.mubr.bf16.mxu0 %v210
    %2744 = vmatmul.mubr.bf16.gmra.mxu0 %v209
    %v2745 = vpop.f32.mrf.mxu0
    %v2746 = vadd.f32 %v542, %v2745
    %v2747 = vpop.f32.mrf.mxu0
    %v2748 = vadd.f32 %v546, %v2747
    %v2749 = vpop.f32.mrf.mxu0
    %v2750 = vadd.f32 %v542, %v2749
    %v2751 = vpop.f32.mrf.mxu0
    %v2752 = vadd.f32 %v546, %v2751
    %2753 = vmatprep.mubr.bf16.mxu0 %v216
    %2754 = vmatmul.mubr.bf16.gmra.mxu0 %v215
    %v2755 = vpop.f32.mrf.mxu0
    %v2756 = vadd.f32 %v542, %v2755
    %v2757 = vpop.f32.mrf.mxu0
    %v2758 = vadd.f32 %v546, %v2757
    %v2759 = vpop.f32.mrf.mxu0
    %v2760 = vadd.f32 %v542, %v2759
    %v2761 = vpop.f32.mrf.mxu0
    %v2762 = vadd.f32 %v546, %v2761
    %2763 = vmatprep.mubr.bf16.mxu0 %v222
    %2764 = vmatmul.mubr.bf16.gmra.mxu0 %v221
    %v2765 = vpop.f32.mrf.mxu0
    %v2766 = vadd.f32 %v542, %v2765
    %v2767 = vpop.f32.mrf.mxu0
    %v2768 = vadd.f32 %v546, %v2767
    %v2769 = vpop.f32.mrf.mxu0
    %v2770 = vadd.f32 %v542, %v2769
    %v2771 = vpop.f32.mrf.mxu0
    %v2772 = vadd.f32 %v546, %v2771
    %2773 = vmatprep.mubr.bf16.mxu0 %v228
    %2774 = vmatmul.mubr.bf16.gmra.mxu0 %v227
    %v2775 = vpop.f32.mrf.mxu0
    %v2776 = vadd.f32 %v542, %v2775
    %v2777 = vpop.f32.mrf.mxu0
    %v2778 = vadd.f32 %v546, %v2777
    %v2779 = vpop.f32.mrf.mxu0
    %v2780 = vadd.f32 %v542, %v2779
    %v2781 = vpop.f32.mrf.mxu0
    %v2782 = vadd.f32 %v546, %v2781
    %2783 = vdwg.mxu0
    %2784 = vmatprep.subr.bf16.mxu0 %v1560
    %2785 = vmatpush1.bf16.msra.mxu0 %v1559
    %2786 = vmatprep.subr.bf16.mxu0 %v1554
    %2787 = vmatpush1.bf16.msra.mxu0 %v1553
    %2788 = vmatprep.subr.bf16.mxu0 %v1548
    %2789 = vmatpush1.bf16.msra.mxu0 %v1547
    %2790 = vmatprep.subr.bf16.mxu0 %v1542
    %2791 = vmatpush1.bf16.msra.mxu0 %v1541
    %2792 = vmatprep.subr.bf16.mxu0 %v1536
    %2793 = vmatpush1.bf16.msra.mxu0 %v1535
    %2794 = vmatprep.subr.bf16.mxu0 %v1530
    %2795 = vmatpush1.bf16.msra.mxu0 %v1529
    %2796 = vmatprep.subr.bf16.mxu0 %v1524
    %2797 = vmatpush1.bf16.msra.mxu0 %v1523
    %2798 = vmatprep.subr.bf16.mxu0 %v1518
    %2799 = vmatpush1.bf16.msra.mxu0 %v1517
    %2800 = vmatprep.subr.bf16.mxu0 %v1608
    %2801 = vmatpush2.bf16.msra.mxu0 %v1607
    %2802 = vmatprep.subr.bf16.mxu0 %v1602
    %2803 = vmatpush2.bf16.msra.mxu0 %v1601
    %2804 = vmatprep.subr.bf16.mxu0 %v1596
    %2805 = vmatpush2.bf16.msra.mxu0 %v1595
    %2806 = vmatprep.subr.bf16.mxu0 %v1590
    %2807 = vmatpush2.bf16.msra.mxu0 %v1589
    %2808 = vmatprep.subr.bf16.mxu0 %v1584
    %2809 = vmatpush2.bf16.msra.mxu0 %v1583
    %2810 = vmatprep.subr.bf16.mxu0 %v1578
    %2811 = vmatpush2.bf16.msra.mxu0 %v1577
    %2812 = vmatprep.subr.bf16.mxu0 %v1572
    %2813 = vmatpush2.bf16.msra.mxu0 %v1571
    %2814 = vmatprep.subr.bf16.mxu0 %v1566
    %2815 = vmatpush2.bf16.msra.mxu0 %v1565
    %2816 = vmatprep.mubr.bf16.mxu0 %v188
    %2817 = vmatmul.mubr.bf16.gmra.mxu0 %v187
    %v2818 = vpop.f32.mrf.mxu0
    %v2819 = vadd.f32 %v2706, %v2818
    %v2820 = vpop.f32.mrf.mxu0
    %v2821 = vadd.f32 %v2708, %v2820
    %v2822 = vpop.f32.mrf.mxu0
    %v2823 = vadd.f32 %v2710, %v2822
    %v2824 = vpop.f32.mrf.mxu0
    %v2825 = vadd.f32 %v2712, %v2824
    %2826 = vmatprep.mubr.bf16.mxu0 %v194
    %2827 = vmatmul.mubr.bf16.gmra.mxu0 %v193
    %v2828 = vpop.f32.mrf.mxu0
    %v2829 = vadd.f32 %v2716, %v2828
    %v2830 = vpop.f32.mrf.mxu0
    %v2831 = vadd.f32 %v2718, %v2830
    %v2832 = vpop.f32.mrf.mxu0
    %v2833 = vadd.f32 %v2720, %v2832
    %v2834 = vpop.f32.mrf.mxu0
    %v2835 = vadd.f32 %v2722, %v2834
    %2836 = vmatprep.mubr.bf16.mxu0 %v200
    %2837 = vmatmul.mubr.bf16.gmra.mxu0 %v199
    %v2838 = vpop.f32.mrf.mxu0
    %v2839 = vadd.f32 %v2726, %v2838
    %v2840 = vpop.f32.mrf.mxu0
    %v2841 = vadd.f32 %v2728, %v2840
    %v2842 = vpop.f32.mrf.mxu0
    %v2843 = vadd.f32 %v2730, %v2842
    %v2844 = vpop.f32.mrf.mxu0
    %v2845 = vadd.f32 %v2732, %v2844
    %2846 = vmatprep.mubr.bf16.mxu0 %v206
    %2847 = vmatmul.mubr.bf16.gmra.mxu0 %v205
    %v2848 = vpop.f32.mrf.mxu0
    %v2849 = vadd.f32 %v2736, %v2848
    %v2850 = vpop.f32.mrf.mxu0
    %v2851 = vadd.f32 %v2738, %v2850
    %v2852 = vpop.f32.mrf.mxu0
    %v2853 = vadd.f32 %v2740, %v2852
    %v2854 = vpop.f32.mrf.mxu0
    %v2855 = vadd.f32 %v2742, %v2854
    %2856 = vmatprep.mubr.bf16.mxu0 %v212
    %2857 = vmatmul.mubr.bf16.gmra.mxu0 %v211
    %v2858 = vpop.f32.mrf.mxu0
    %v2859 = vadd.f32 %v2746, %v2858
    %v2860 = vpop.f32.mrf.mxu0
    %v2861 = vadd.f32 %v2748, %v2860
    %v2862 = vpop.f32.mrf.mxu0
    %v2863 = vadd.f32 %v2750, %v2862
    %v2864 = vpop.f32.mrf.mxu0
    %v2865 = vadd.f32 %v2752, %v2864
    %2866 = vmatprep.mubr.bf16.mxu0 %v218
    %2867 = vmatmul.mubr.bf16.gmra.mxu0 %v217
    %v2868 = vpop.f32.mrf.mxu0
    %v2869 = vadd.f32 %v2756, %v2868
    %v2870 = vpop.f32.mrf.mxu0
    %v2871 = vadd.f32 %v2758, %v2870
    %v2872 = vpop.f32.mrf.mxu0
    %v2873 = vadd.f32 %v2760, %v2872
    %v2874 = vpop.f32.mrf.mxu0
    %v2875 = vadd.f32 %v2762, %v2874
    %2876 = vmatprep.mubr.bf16.mxu0 %v224
    %2877 = vmatmul.mubr.bf16.gmra.mxu0 %v223
    %v2878 = vpop.f32.mrf.mxu0
    %v2879 = vadd.f32 %v2766, %v2878
    %v2880 = vpop.f32.mrf.mxu0
    %v2881 = vadd.f32 %v2768, %v2880
    %v2882 = vpop.f32.mrf.mxu0
    %v2883 = vadd.f32 %v2770, %v2882
    %v2884 = vpop.f32.mrf.mxu0
    %v2885 = vadd.f32 %v2772, %v2884
    %2886 = vmatprep.mubr.bf16.mxu0 %v230
    %2887 = vmatmul.mubr.bf16.gmra.mxu0 %v229
    %v2888 = vpop.f32.mrf.mxu0
    %v2889 = vadd.f32 %v2776, %v2888
    %v2890 = vpop.f32.mrf.mxu0
    %v2891 = vadd.f32 %v2778, %v2890
    %v2892 = vpop.f32.mrf.mxu0
    %v2893 = vadd.f32 %v2780, %v2892
    %v2894 = vpop.f32.mrf.mxu0
    %v2895 = vadd.f32 %v2782, %v2894
    %2896 = vdwg.mxu0
    %2897 = vmatprep.subr.bf16.mxu0 %v1656
    %2898 = vmatpush1.bf16.msra.mxu0 %v1655
    %2899 = vmatprep.subr.bf16.mxu0 %v1650
    %2900 = vmatpush1.bf16.msra.mxu0 %v1649
    %2901 = vmatprep.subr.bf16.mxu0 %v1644
    %2902 = vmatpush1.bf16.msra.mxu0 %v1643
    %2903 = vmatprep.subr.bf16.mxu0 %v1638
    %2904 = vmatpush1.bf16.msra.mxu0 %v1637
    %2905 = vmatprep.subr.bf16.mxu0 %v1632
    %2906 = vmatpush1.bf16.msra.mxu0 %v1631
    %2907 = vmatprep.subr.bf16.mxu0 %v1626
    %2908 = vmatpush1.bf16.msra.mxu0 %v1625
    %2909 = vmatprep.subr.bf16.mxu0 %v1620
    %2910 = vmatpush1.bf16.msra.mxu0 %v1619
    %2911 = vmatprep.subr.bf16.mxu0 %v1614
    %2912 = vmatpush1.bf16.msra.mxu0 %v1613
    %2913 = vmatprep.subr.bf16.mxu0 %v1704
    %2914 = vmatpush2.bf16.msra.mxu0 %v1703
    %2915 = vmatprep.subr.bf16.mxu0 %v1698
    %2916 = vmatpush2.bf16.msra.mxu0 %v1697
    %2917 = vmatprep.subr.bf16.mxu0 %v1692
    %2918 = vmatpush2.bf16.msra.mxu0 %v1691
    %2919 = vmatprep.subr.bf16.mxu0 %v1686
    %2920 = vmatpush2.bf16.msra.mxu0 %v1685
    %2921 = vmatprep.subr.bf16.mxu0 %v1680
    %2922 = vmatpush2.bf16.msra.mxu0 %v1679
    %2923 = vmatprep.subr.bf16.mxu0 %v1674
    %2924 = vmatpush2.bf16.msra.mxu0 %v1673
    %2925 = vmatprep.subr.bf16.mxu0 %v1668
    %2926 = vmatpush2.bf16.msra.mxu0 %v1667
    %2927 = vmatprep.subr.bf16.mxu0 %v1662
    %2928 = vmatpush2.bf16.msra.mxu0 %v1661
    %2929 = vmatprep.mubr.bf16.mxu0 %v190
    %2930 = vmatmul.mubr.bf16.gmra.mxu0 %v189
    %v2931 = vpop.f32.mrf.mxu0
    %v2932 = vadd.f32 %v2819, %v2931
    %v2933 = vpop.f32.mrf.mxu0
    %v2934 = vadd.f32 %v2821, %v2933
    %v2935 = vpop.f32.mrf.mxu0
    %v2936 = vadd.f32 %v2823, %v2935
    %v2937 = vpop.f32.mrf.mxu0
    %v2938 = vadd.f32 %v2825, %v2937
    %2939 = vmatprep.mubr.bf16.mxu0 %v196
    %2940 = vmatmul.mubr.bf16.gmra.mxu0 %v195
    %v2941 = vpop.f32.mrf.mxu0
    %v2942 = vadd.f32 %v2829, %v2941
    %v2943 = vpop.f32.mrf.mxu0
    %v2944 = vadd.f32 %v2831, %v2943
    %v2945 = vpop.f32.mrf.mxu0
    %v2946 = vadd.f32 %v2833, %v2945
    %v2947 = vpop.f32.mrf.mxu0
    %v2948 = vadd.f32 %v2835, %v2947
    %2949 = vmatprep.mubr.bf16.mxu0 %v202
    %2950 = vmatmul.mubr.bf16.gmra.mxu0 %v201
    %v2951 = vpop.f32.mrf.mxu0
    %v2952 = vadd.f32 %v2839, %v2951
    %v2953 = vpop.f32.mrf.mxu0
    %v2954 = vadd.f32 %v2841, %v2953
    %v2955 = vpop.f32.mrf.mxu0
    %v2956 = vadd.f32 %v2843, %v2955
    %v2957 = vpop.f32.mrf.mxu0
    %v2958 = vadd.f32 %v2845, %v2957
    %2959 = vmatprep.mubr.bf16.mxu0 %v208
    %2960 = vmatmul.mubr.bf16.gmra.mxu0 %v207
    %v2961 = vpop.f32.mrf.mxu0
    %v2962 = vadd.f32 %v2849, %v2961
    %v2963 = vpop.f32.mrf.mxu0
    %v2964 = vadd.f32 %v2851, %v2963
    %v2965 = vpop.f32.mrf.mxu0
    %v2966 = vadd.f32 %v2853, %v2965
    %v2967 = vpop.f32.mrf.mxu0
    %v2968 = vadd.f32 %v2855, %v2967
    %2969 = vmatprep.mubr.bf16.mxu0 %v214
    %2970 = vmatmul.mubr.bf16.gmra.mxu0 %v213
    %v2971 = vpop.f32.mrf.mxu0
    %v2972 = vadd.f32 %v2859, %v2971
    %v2973 = vpop.f32.mrf.mxu0
    %v2974 = vadd.f32 %v2861, %v2973
    %v2975 = vpop.f32.mrf.mxu0
    %v2976 = vadd.f32 %v2863, %v2975
    %v2977 = vpop.f32.mrf.mxu0
    %v2978 = vadd.f32 %v2865, %v2977
    %2979 = vmatprep.mubr.bf16.mxu0 %v220
    %2980 = vmatmul.mubr.bf16.gmra.mxu0 %v219
    %v2981 = vpop.f32.mrf.mxu0
    %v2982 = vadd.f32 %v2869, %v2981
    %v2983 = vpop.f32.mrf.mxu0
    %v2984 = vadd.f32 %v2871, %v2983
    %v2985 = vpop.f32.mrf.mxu0
    %v2986 = vadd.f32 %v2873, %v2985
    %v2987 = vpop.f32.mrf.mxu0
    %v2988 = vadd.f32 %v2875, %v2987
    %2989 = vmatprep.mubr.bf16.mxu0 %v226
    %2990 = vmatmul.mubr.bf16.gmra.mxu0 %v225
    %v2991 = vpop.f32.mrf.mxu0
    %v2992 = vadd.f32 %v2879, %v2991
    %v2993 = vpop.f32.mrf.mxu0
    %v2994 = vadd.f32 %v2881, %v2993
    %v2995 = vpop.f32.mrf.mxu0
    %v2996 = vadd.f32 %v2883, %v2995
    %v2997 = vpop.f32.mrf.mxu0
    %v2998 = vadd.f32 %v2885, %v2997
    %2999 = vmatprep.mubr.bf16.mxu0 %v232
    %3000 = vmatmul.mubr.bf16.gmra.mxu0 %v231
    %v3001 = vpop.f32.mrf.mxu0
    %v3002 = vadd.f32 %v2889, %v3001
    %v3003 = vpop.f32.mrf.mxu0
    %v3004 = vadd.f32 %v2891, %v3003
    %v3005 = vpop.f32.mrf.mxu0
    %v3006 = vadd.f32 %v2893, %v3005
    %v3007 = vpop.f32.mrf.mxu0
    %v3008 = vadd.f32 %v2895, %v3007
    %3009 = vdwg.mxu0
    %v3010 = vpack.c.bf16 %v2258, %v2254
    %v3011 = vpack.c.bf16 %v2260, %v2256
    %v3012 = vpack.c.bf16 %v2597, %v2593
    %v3013 = vpack.c.bf16 %v2599, %v2595
    %v3014 = vpack.c.bf16 %v2936, %v2932
    %v3015 = vpack.c.bf16 %v2938, %v2934
    %v3016 = vpack.c.bf16 %v2268, %v2264
    %v3017 = vpack.c.bf16 %v2270, %v2266
    %v3018 = vpack.c.bf16 %v2607, %v2603
    %v3019 = vpack.c.bf16 %v2609, %v2605
    %v3020 = vpack.c.bf16 %v2946, %v2942
    %v3021 = vpack.c.bf16 %v2948, %v2944
    %v3022 = vpack.c.bf16 %v2278, %v2274
    %v3023 = vpack.c.bf16 %v2280, %v2276
    %v3024 = vpack.c.bf16 %v2617, %v2613
    %v3025 = vpack.c.bf16 %v2619, %v2615
    %v3026 = vpack.c.bf16 %v2956, %v2952
    %v3027 = vpack.c.bf16 %v2958, %v2954
    %v3028 = vpack.c.bf16 %v2288, %v2284
    %v3029 = vpack.c.bf16 %v2290, %v2286
    %v3030 = vpack.c.bf16 %v2627, %v2623
    %v3031 = vpack.c.bf16 %v2629, %v2625
    %v3032 = vpack.c.bf16 %v2966, %v2962
    %v3033 = vpack.c.bf16 %v2968, %v2964
    %v3034 = vpack.c.bf16 %v2298, %v2294
    %v3035 = vpack.c.bf16 %v2300, %v2296
    %v3036 = vpack.c.bf16 %v2637, %v2633
    %v3037 = vpack.c.bf16 %v2639, %v2635
    %v3038 = vpack.c.bf16 %v2976, %v2972
    %v3039 = vpack.c.bf16 %v2978, %v2974
    %v3040 = vpack.c.bf16 %v2308, %v2304
    %v3041 = vpack.c.bf16 %v2310, %v2306
    %v3042 = vpack.c.bf16 %v2647, %v2643
    %v3043 = vpack.c.bf16 %v2649, %v2645
    %v3044 = vpack.c.bf16 %v2986, %v2982
    %v3045 = vpack.c.bf16 %v2988, %v2984
    %v3046 = vpack.c.bf16 %v2318, %v2314
    %v3047 = vpack.c.bf16 %v2320, %v2316
    %v3048 = vpack.c.bf16 %v2657, %v2653
    %v3049 = vpack.c.bf16 %v2659, %v2655
    %v3050 = vpack.c.bf16 %v2996, %v2992
    %v3051 = vpack.c.bf16 %v2998, %v2994
    %v3052 = vpack.c.bf16 %v2328, %v2324
    %v3053 = vpack.c.bf16 %v2330, %v2326
    %v3054 = vpack.c.bf16 %v2667, %v2663
    %v3055 = vpack.c.bf16 %v2669, %v2665
    %v3056 = vpack.c.bf16 %v3006, %v3002
    %v3057 = vpack.c.bf16 %v3008, %v3004
    %v3106 = vunpack.c.l.b16 %v3010
    %v3107 = vunpack.c.l.b16 %v3011
    %v3108 = vunpack.c.l.b16 %v3012
    %v3109 = vunpack.c.l.b16 %v3013
    %v3110 = vunpack.c.l.b16 %v3014
    %v3111 = vunpack.c.l.b16 %v3015
    %v3112 = vunpack.c.h.b16 %v3010
    %v3113 = vunpack.c.h.b16 %v3011
    %v3114 = vunpack.c.h.b16 %v3012
    %v3115 = vunpack.c.h.b16 %v3013
    %v3116 = vunpack.c.h.b16 %v3014
    %v3117 = vunpack.c.h.b16 %v3015
    %v3118 = vunpack.c.l.b16 %v3016
    %v3119 = vunpack.c.l.b16 %v3017
    %v3120 = vunpack.c.l.b16 %v3018
    %v3121 = vunpack.c.l.b16 %v3019
    %v3122 = vunpack.c.l.b16 %v3020
    %v3123 = vunpack.c.l.b16 %v3021
    %v3124 = vunpack.c.h.b16 %v3016
    %v3125 = vunpack.c.h.b16 %v3017
    %v3126 = vunpack.c.h.b16 %v3018
    %v3127 = vunpack.c.h.b16 %v3019
    %v3128 = vunpack.c.h.b16 %v3020
    %v3129 = vunpack.c.h.b16 %v3021
    %v3130 = vunpack.c.l.b16 %v3022
    %v3131 = vunpack.c.l.b16 %v3023
    %v3132 = vunpack.c.l.b16 %v3024
    %v3133 = vunpack.c.l.b16 %v3025
    %v3134 = vunpack.c.l.b16 %v3026
    %v3135 = vunpack.c.l.b16 %v3027
    %v3136 = vunpack.c.h.b16 %v3022
    %v3137 = vunpack.c.h.b16 %v3023
    %v3138 = vunpack.c.h.b16 %v3024
    %v3139 = vunpack.c.h.b16 %v3025
    %v3140 = vunpack.c.h.b16 %v3026
    %v3141 = vunpack.c.h.b16 %v3027
    %v3142 = vunpack.c.l.b16 %v3028
    %v3143 = vunpack.c.l.b16 %v3029
    %v3144 = vunpack.c.l.b16 %v3030
    %v3145 = vunpack.c.l.b16 %v3031
    %v3146 = vunpack.c.l.b16 %v3032
    %v3147 = vunpack.c.l.b16 %v3033
    %v3148 = vunpack.c.h.b16 %v3028
    %v3149 = vunpack.c.h.b16 %v3029
    %v3150 = vunpack.c.h.b16 %v3030
    %v3151 = vunpack.c.h.b16 %v3031
    %v3152 = vunpack.c.h.b16 %v3032
    %v3153 = vunpack.c.h.b16 %v3033
    %v3154 = vunpack.c.l.b16 %v3034
    %v3155 = vunpack.c.l.b16 %v3035
    %v3156 = vunpack.c.l.b16 %v3036
    %v3157 = vunpack.c.l.b16 %v3037
    %v3158 = vunpack.c.l.b16 %v3038
    %v3159 = vunpack.c.l.b16 %v3039
    %v3160 = vunpack.c.h.b16 %v3034
    %v3161 = vunpack.c.h.b16 %v3035
    %v3162 = vunpack.c.h.b16 %v3036
    %v3163 = vunpack.c.h.b16 %v3037
    %v3164 = vunpack.c.h.b16 %v3038
    %v3165 = vunpack.c.h.b16 %v3039
    %v3166 = vunpack.c.l.b16 %v3040
    %v3167 = vunpack.c.l.b16 %v3041
    %v3168 = vunpack.c.l.b16 %v3042
    %v3169 = vunpack.c.l.b16 %v3043
    %v3170 = vunpack.c.l.b16 %v3044
    %v3171 = vunpack.c.l.b16 %v3045
    %v3172 = vunpack.c.h.b16 %v3040
    %v3173 = vunpack.c.h.b16 %v3041
    %v3174 = vunpack.c.h.b16 %v3042
    %v3175 = vunpack.c.h.b16 %v3043
    %v3176 = vunpack.c.h.b16 %v3044
    %v3177 = vunpack.c.h.b16 %v3045
    %v3178 = vunpack.c.l.b16 %v3046
    %v3179 = vunpack.c.l.b16 %v3047
    %v3180 = vunpack.c.l.b16 %v3048
    %v3181 = vunpack.c.l.b16 %v3049
    %v3182 = vunpack.c.l.b16 %v3050
    %v3183 = vunpack.c.l.b16 %v3051
    %v3184 = vunpack.c.h.b16 %v3046
    %v3185 = vunpack.c.h.b16 %v3047
    %v3186 = vunpack.c.h.b16 %v3048
    %v3187 = vunpack.c.h.b16 %v3049
    %v3188 = vunpack.c.h.b16 %v3050
    %v3189 = vunpack.c.h.b16 %v3051
    %v3190 = vunpack.c.l.b16 %v3052
    %v3191 = vunpack.c.l.b16 %v3053
    %v3192 = vunpack.c.l.b16 %v3054
    %v3193 = vunpack.c.l.b16 %v3055
    %v3194 = vunpack.c.l.b16 %v3056
    %v3195 = vunpack.c.l.b16 %v3057
    %v3196 = vunpack.c.h.b16 %v3052
    %v3197 = vunpack.c.h.b16 %v3053
    %v3198 = vunpack.c.h.b16 %v3054
    %v3199 = vunpack.c.h.b16 %v3055
    %v3200 = vunpack.c.h.b16 %v3056
    %v3201 = vunpack.c.h.b16 %v3057
    %v3202 = vpack.c.b16 %v3107, %v3106
    %v3203 = vpack.c.b16 %v3109, %v3108
    %v3204 = vpack.c.b16 %v3111, %v3110
    %v3205 = vpack.c.b16 %v3113, %v3112
    %v3206 = vpack.c.b16 %v3115, %v3114
    %v3207 = vpack.c.b16 %v3117, %v3116
    %v3208 = vpack.c.b16 %v3119, %v3118
    %v3209 = vpack.c.b16 %v3121, %v3120
    %v3210 = vpack.c.b16 %v3123, %v3122
    %v3211 = vpack.c.b16 %v3125, %v3124
    %v3212 = vpack.c.b16 %v3127, %v3126
    %v3213 = vpack.c.b16 %v3129, %v3128
    %v3214 = vpack.c.b16 %v3131, %v3130
    %v3215 = vpack.c.b16 %v3133, %v3132
    %v3216 = vpack.c.b16 %v3135, %v3134
    %v3217 = vpack.c.b16 %v3137, %v3136
    %v3218 = vpack.c.b16 %v3139, %v3138
    %v3219 = vpack.c.b16 %v3141, %v3140
    %v3220 = vpack.c.b16 %v3143, %v3142
    %v3221 = vpack.c.b16 %v3145, %v3144
    %v3222 = vpack.c.b16 %v3147, %v3146
    %v3223 = vpack.c.b16 %v3149, %v3148
    %v3224 = vpack.c.b16 %v3151, %v3150
    %v3225 = vpack.c.b16 %v3153, %v3152
    %v3226 = vpack.c.b16 %v3155, %v3154
    %v3227 = vpack.c.b16 %v3157, %v3156
    %v3228 = vpack.c.b16 %v3159, %v3158
    %v3229 = vpack.c.b16 %v3161, %v3160
    %v3230 = vpack.c.b16 %v3163, %v3162
    %v3231 = vpack.c.b16 %v3165, %v3164
    %v3232 = vpack.c.b16 %v3167, %v3166
    %v3233 = vpack.c.b16 %v3169, %v3168
    %v3234 = vpack.c.b16 %v3171, %v3170
    %v3235 = vpack.c.b16 %v3173, %v3172
    %v3236 = vpack.c.b16 %v3175, %v3174
    %v3237 = vpack.c.b16 %v3177, %v3176
    %v3238 = vpack.c.b16 %v3179, %v3178
    %v3239 = vpack.c.b16 %v3181, %v3180
    %v3240 = vpack.c.b16 %v3183, %v3182
    %v3241 = vpack.c.b16 %v3185, %v3184
    %v3242 = vpack.c.b16 %v3187, %v3186
    %v3243 = vpack.c.b16 %v3189, %v3188
    %v3244 = vpack.c.b16 %v3191, %v3190
    %v3245 = vpack.c.b16 %v3193, %v3192
    %v3246 = vpack.c.b16 %v3195, %v3194
    %v3247 = vpack.c.b16 %v3197, %v3196
    %v3248 = vpack.c.b16 %v3199, %v3198
    %v3249 = vpack.c.b16 %v3201, %v3200
    %3298 = vst [vmem:[#allocation11] sm:$0xff] %v3202
    %3299 = vst [vmem:[#allocation11 + $0x8] sm:$0xff] %v3203
    %3300 = vst [vmem:[#allocation11 + $0x10] sm:$0xff] %v3204
    %3301 = vst [vmem:[#allocation11 + $0x18] sm:$0xff] %v3205
    %3302 = vst [vmem:[#allocation11 + $0x20] sm:$0xff] %v3206
    %3303 = vst [vmem:[#allocation11 + $0x28] sm:$0xff] %v3207
    %3304 = vst [vmem:[#allocation11 + $0x30] sm:$0xff] %v3208
    %3305 = vst [vmem:[#allocation11 + $0x38] sm:$0xff] %v3209
    %3306 = vst [vmem:[#allocation11 + $0x40] sm:$0xff] %v3210
    %3307 = vst [vmem:[#allocation11 + $0x48] sm:$0xff] %v3211
    %3308 = vst [vmem:[#allocation11 + $0x50] sm:$0xff] %v3212
    %3309 = vst [vmem:[#allocation11 + $0x58] sm:$0xff] %v3213
    %3310 = vst [vmem:[#allocation11 + $0x60] sm:$0xff] %v3214
    %3311 = vst [vmem:[#allocation11 + $0x68] sm:$0xff] %v3215
    %3312 = vst [vmem:[#allocation11 + $0x70] sm:$0xff] %v3216
    %3313 = vst [vmem:[#allocation11 + $0x78] sm:$0xff] %v3217
    %3314 = vst [vmem:[#allocation11 + $0x80] sm:$0xff] %v3218
    %3315 = vst [vmem:[#allocation11 + $0x88] sm:$0xff] %v3219
    %3316 = vst [vmem:[#allocation11 + $0x90] sm:$0xff] %v3220
    %3317 = vst [vmem:[#allocation11 + $0x98] sm:$0xff] %v3221
    %3318 = vst [vmem:[#allocation11 + $0xa0] sm:$0xff] %v3222
    %3319 = vst [vmem:[#allocation11 + $0xa8] sm:$0xff] %v3223
    %3320 = vst [vmem:[#allocation11 + $0xb0] sm:$0xff] %v3224
    %3321 = vst [vmem:[#allocation11 + $0xb8] sm:$0xff] %v3225
    %3322 = vst [vmem:[#allocation11 + $0xc0] sm:$0xff] %v3226
    %3323 = vst [vmem:[#allocation11 + $0xc8] sm:$0xff] %v3227
    %3324 = vst [vmem:[#allocation11 + $0xd0] sm:$0xff] %v3228
    %3325 = vst [vmem:[#allocation11 + $0xd8] sm:$0xff] %v3229
    %3326 = vst [vmem:[#allocation11 + $0xe0] sm:$0xff] %v3230
    %3327 = vst [vmem:[#allocation11 + $0xe8] sm:$0xff] %v3231
    %3328 = vst [vmem:[#allocation11 + $0xf0] sm:$0xff] %v3232
    %3329 = vst [vmem:[#allocation11 + $0xf8] sm:$0xff] %v3233
    %3330 = vst [vmem:[#allocation11 + $0x100] sm:$0xff] %v3234
    %3331 = vst [vmem:[#allocation11 + $0x108] sm:$0xff] %v3235
    %3332 = vst [vmem:[#allocation11 + $0x110] sm:$0xff] %v3236
    %3333 = vst [vmem:[#allocation11 + $0x118] sm:$0xff] %v3237
    %3334 = vst [vmem:[#allocation11 + $0x120] sm:$0xff] %v3238
    %3335 = vst [vmem:[#allocation11 + $0x128] sm:$0xff] %v3239
    %3336 = vst [vmem:[#allocation11 + $0x130] sm:$0xff] %v3240
    %3337 = vst [vmem:[#allocation11 + $0x138] sm:$0xff] %v3241
    %3338 = vst [vmem:[#allocation11 + $0x140] sm:$0xff] %v3242
    %3339 = vst [vmem:[#allocation11 + $0x148] sm:$0xff] %v3243
    %3340 = vst [vmem:[#allocation11 + $0x150] sm:$0xff] %v3244
    %3341 = vst [vmem:[#allocation11 + $0x158] sm:$0xff] %v3245
    %3342 = vst [vmem:[#allocation11 + $0x160] sm:$0xff] %v3246
    %3343 = vst [vmem:[#allocation11 + $0x168] sm:$0xff] %v3247
    %3344 = vst [vmem:[#allocation11 + $0x170] sm:$0xff] %v3248
    %3345 = vst [vmem:[#allocation11 + $0x178] sm:$0xff] %v3249
    %v3346 = vld [vmem:[#allocation8] sm:$0xf]
    %v3347 = vld [vmem:[#allocation8 + $0x4] sm:$0xf]
    %v3348 = vld [vmem:[#allocation8 + $0x8] sm:$0xf]
    %v3349 = vld [vmem:[#allocation8 + $0xc] sm:$0xf]
    %v3350 = vld [vmem:[#allocation8 + $0x10] sm:$0xf]
    %v3351 = vld [vmem:[#allocation8 + $0x14] sm:$0xf]
    %v3352 = vld [vmem:[#allocation8 + $0x18] sm:$0xf]
    %v3353 = vld [vmem:[#allocation8 + $0x1c] sm:$0xf]
    %v3354 = vld [vmem:[#allocation8 + $0x20] sm:$0xf]
    %v3355 = vld [vmem:[#allocation8 + $0x24] sm:$0xf]
    %v3356 = vld [vmem:[#allocation8 + $0x28] sm:$0xf]
    %v3357 = vld [vmem:[#allocation8 + $0x2c] sm:$0xf]
    %v3358 = vld [vmem:[#allocation8 + $0x30] sm:$0xf]
    %v3359 = vld [vmem:[#allocation8 + $0x34] sm:$0xf]
    %v3360 = vld [vmem:[#allocation8 + $0x38] sm:$0xf]
    %v3361 = vld [vmem:[#allocation8 + $0x3c] sm:$0xf]
    %v3362 = vld [vmem:[#allocation8 + $0x40] sm:$0xf]
    %v3363 = vld [vmem:[#allocation8 + $0x44] sm:$0xf]
    %v3364 = vld [vmem:[#allocation8 + $0x48] sm:$0xf]
    %v3365 = vld [vmem:[#allocation8 + $0x4c] sm:$0xf]
    %v3366 = vld [vmem:[#allocation8 + $0x50] sm:$0xf]
    %v3367 = vld [vmem:[#allocation8 + $0x54] sm:$0xf]
    %v3368 = vld [vmem:[#allocation8 + $0x58] sm:$0xf]
    %v3369 = vld [vmem:[#allocation8 + $0x5c] sm:$0xf]
    %v3370 = vld [vmem:[#allocation8 + $0x60] sm:$0xf]
    %v3371 = vld [vmem:[#allocation8 + $0x64] sm:$0xf]
    %v3372 = vld [vmem:[#allocation8 + $0x68] sm:$0xf]
    %v3373 = vld [vmem:[#allocation8 + $0x6c] sm:$0xf]
    %v3374 = vld [vmem:[#allocation8 + $0x70] sm:$0xf]
    %v3375 = vld [vmem:[#allocation8 + $0x74] sm:$0xf]
    %v3376 = vld [vmem:[#allocation8 + $0x78] sm:$0xf]
    %v3377 = vld [vmem:[#allocation8 + $0x7c] sm:$0xf]
    %v3378 = vld [vmem:[#allocation8 + $0x80] sm:$0xf]
    %v3379 = vld [vmem:[#allocation8 + $0x84] sm:$0xf]
    %v3380 = vld [vmem:[#allocation8 + $0x88] sm:$0xf]
    %v3381 = vld [vmem:[#allocation8 + $0x8c] sm:$0xf]
    %v3382 = vld [vmem:[#allocation8 + $0x90] sm:$0xf]
    %v3383 = vld [vmem:[#allocation8 + $0x94] sm:$0xf]
    %v3384 = vld [vmem:[#allocation8 + $0x98] sm:$0xf]
    %v3385 = vld [vmem:[#allocation8 + $0x9c] sm:$0xf]
    %v3386 = vld [vmem:[#allocation8 + $0xa0] sm:$0xf]
    %v3387 = vld [vmem:[#allocation8 + $0xa4] sm:$0xf]
    %v3388 = vld [vmem:[#allocation8 + $0xa8] sm:$0xf]
    %v3389 = vld [vmem:[#allocation8 + $0xac] sm:$0xf]
    %v3390 = vld [vmem:[#allocation8 + $0xb0] sm:$0xf]
    %v3391 = vld [vmem:[#allocation8 + $0xb4] sm:$0xf]
    %v3392 = vld [vmem:[#allocation8 + $0xb8] sm:$0xf]
    %v3393 = vld [vmem:[#allocation8 + $0xbc] sm:$0xf]
    %v3394 = vld [vmem:[#allocation8 + $0xc0] sm:$0xf]
    %v3395 = vld [vmem:[#allocation8 + $0xc4] sm:$0xf]
    %v3396 = vld [vmem:[#allocation8 + $0xc8] sm:$0xf]
    %v3397 = vld [vmem:[#allocation8 + $0xcc] sm:$0xf]
    %v3398 = vld [vmem:[#allocation8 + $0xd0] sm:$0xf]
    %v3399 = vld [vmem:[#allocation8 + $0xd4] sm:$0xf]
    %v3400 = vld [vmem:[#allocation8 + $0xd8] sm:$0xf]
    %v3401 = vld [vmem:[#allocation8 + $0xdc] sm:$0xf]
    %v3402 = vld [vmem:[#allocation8 + $0xe0] sm:$0xf]
    %v3403 = vld [vmem:[#allocation8 + $0xe4] sm:$0xf]
    %v3404 = vld [vmem:[#allocation8 + $0xe8] sm:$0xf]
    %v3405 = vld [vmem:[#allocation8 + $0xec] sm:$0xf]
    %v3406 = vld [vmem:[#allocation8 + $0xf0] sm:$0xf]
    %v3407 = vld [vmem:[#allocation8 + $0xf4] sm:$0xf]
    %v3408 = vld [vmem:[#allocation8 + $0xf8] sm:$0xf]
    %v3409 = vld [vmem:[#allocation8 + $0xfc] sm:$0xf]
    %v3410 = vld [vmem:[#allocation8 + $0x100] sm:$0xf]
    %v3411 = vld [vmem:[#allocation8 + $0x104] sm:$0xf]
    %v3412 = vld [vmem:[#allocation8 + $0x108] sm:$0xf]
    %v3413 = vld [vmem:[#allocation8 + $0x10c] sm:$0xf]
    %v3414 = vld [vmem:[#allocation8 + $0x110] sm:$0xf]
    %v3415 = vld [vmem:[#allocation8 + $0x114] sm:$0xf]
    %v3416 = vld [vmem:[#allocation8 + $0x118] sm:$0xf]
    %v3417 = vld [vmem:[#allocation8 + $0x11c] sm:$0xf]
    %v3418 = vld [vmem:[#allocation8 + $0x120] sm:$0xf]
    %v3419 = vld [vmem:[#allocation8 + $0x124] sm:$0xf]
    %v3420 = vld [vmem:[#allocation8 + $0x128] sm:$0xf]
    %v3421 = vld [vmem:[#allocation8 + $0x12c] sm:$0xf]
    %v3422 = vld [vmem:[#allocation8 + $0x130] sm:$0xf]
    %v3423 = vld [vmem:[#allocation8 + $0x134] sm:$0xf]
    %v3424 = vld [vmem:[#allocation8 + $0x138] sm:$0xf]
    %v3425 = vld [vmem:[#allocation8 + $0x13c] sm:$0xf]
    %v3426 = vld [vmem:[#allocation8 + $0x140] sm:$0xf]
    %v3427 = vld [vmem:[#allocation8 + $0x144] sm:$0xf]
    %v3428 = vld [vmem:[#allocation8 + $0x148] sm:$0xf]
    %v3429 = vld [vmem:[#allocation8 + $0x14c] sm:$0xf]
    %v3430 = vld [vmem:[#allocation8 + $0x150] sm:$0xf]
    %v3431 = vld [vmem:[#allocation8 + $0x154] sm:$0xf]
    %v3432 = vld [vmem:[#allocation8 + $0x158] sm:$0xf]
    %v3433 = vld [vmem:[#allocation8 + $0x15c] sm:$0xf]
    %v3434 = vld [vmem:[#allocation8 + $0x160] sm:$0xf]
    %v3435 = vld [vmem:[#allocation8 + $0x164] sm:$0xf]
    %v3436 = vld [vmem:[#allocation8 + $0x168] sm:$0xf]
    %v3437 = vld [vmem:[#allocation8 + $0x16c] sm:$0xf]
    %v3438 = vld [vmem:[#allocation8 + $0x170] sm:$0xf]
    %v3439 = vld [vmem:[#allocation8 + $0x174] sm:$0xf]
    %v3440 = vld [vmem:[#allocation8 + $0x178] sm:$0xf]
    %v3441 = vld [vmem:[#allocation8 + $0x17c] sm:$0xf]
    %v3442 = vld [vmem:[#allocation10] sm:$0x1]
    %v3444 = vlaneseq
    %v3445 = vshrl.u32 %v3444, 7
    %v3446 = vsub.s32 0, %v3445
    %v3447 = vrot.slane %v3442, %v3446
    %v3545 = vunpack.c.l.b16 %v3346
    %v3546 = vunpack.c.l.b16 %v3347
    %v3547 = vunpack.c.l.b16 %v3348
    %v3548 = vunpack.c.l.b16 %v3349
    %v3549 = vunpack.c.l.b16 %v3350
    %v3550 = vunpack.c.l.b16 %v3351
    %v3551 = vunpack.c.l.b16 %v3352
    %v3552 = vunpack.c.l.b16 %v3353
    %v3553 = vunpack.c.l.b16 %v3354
    %v3554 = vunpack.c.l.b16 %v3355
    %v3555 = vunpack.c.l.b16 %v3356
    %v3556 = vunpack.c.l.b16 %v3357
    %v3557 = vunpack.c.l.b16 %v3358
    %v3558 = vunpack.c.l.b16 %v3359
    %v3559 = vunpack.c.l.b16 %v3360
    %v3560 = vunpack.c.l.b16 %v3361
    %v3561 = vunpack.c.l.b16 %v3362
    %v3562 = vunpack.c.l.b16 %v3363
    %v3563 = vunpack.c.l.b16 %v3364
    %v3564 = vunpack.c.l.b16 %v3365
    %v3565 = vunpack.c.l.b16 %v3366
    %v3566 = vunpack.c.l.b16 %v3367
    %v3567 = vunpack.c.l.b16 %v3368
    %v3568 = vunpack.c.l.b16 %v3369
    %v3569 = vunpack.c.l.b16 %v3370
    %v3570 = vunpack.c.l.b16 %v3371
    %v3571 = vunpack.c.l.b16 %v3372
    %v3572 = vunpack.c.l.b16 %v3373
    %v3573 = vunpack.c.l.b16 %v3374
    %v3574 = vunpack.c.l.b16 %v3375
    %v3575 = vunpack.c.l.b16 %v3376
    %v3576 = vunpack.c.l.b16 %v3377
    %v3577 = vunpack.c.l.b16 %v3378
    %v3578 = vunpack.c.l.b16 %v3379
    %v3579 = vunpack.c.l.b16 %v3380
    %v3580 = vunpack.c.l.b16 %v3381
    %v3581 = vunpack.c.l.b16 %v3382
    %v3582 = vunpack.c.l.b16 %v3383
    %v3583 = vunpack.c.l.b16 %v3384
    %v3584 = vunpack.c.l.b16 %v3385
    %v3585 = vunpack.c.l.b16 %v3386
    %v3586 = vunpack.c.l.b16 %v3387
    %v3587 = vunpack.c.l.b16 %v3388
    %v3588 = vunpack.c.l.b16 %v3389
    %v3589 = vunpack.c.l.b16 %v3390
    %v3590 = vunpack.c.l.b16 %v3391
    %v3591 = vunpack.c.l.b16 %v3392
    %v3592 = vunpack.c.l.b16 %v3393
    %v3593 = vunpack.c.l.b16 %v3394
    %v3594 = vunpack.c.l.b16 %v3395
    %v3595 = vunpack.c.l.b16 %v3396
    %v3596 = vunpack.c.l.b16 %v3397
    %v3597 = vunpack.c.l.b16 %v3398
    %v3598 = vunpack.c.l.b16 %v3399
    %v3599 = vunpack.c.l.b16 %v3400
    %v3600 = vunpack.c.l.b16 %v3401
    %v3601 = vunpack.c.l.b16 %v3402
    %v3602 = vunpack.c.l.b16 %v3403
    %v3603 = vunpack.c.l.b16 %v3404
    %v3604 = vunpack.c.l.b16 %v3405
    %v3605 = vunpack.c.l.b16 %v3406
    %v3606 = vunpack.c.l.b16 %v3407
    %v3607 = vunpack.c.l.b16 %v3408
    %v3608 = vunpack.c.l.b16 %v3409
    %v3609 = vunpack.c.l.b16 %v3410
    %v3610 = vunpack.c.l.b16 %v3411
    %v3611 = vunpack.c.l.b16 %v3412
    %v3612 = vunpack.c.l.b16 %v3413
    %v3613 = vunpack.c.l.b16 %v3414
    %v3614 = vunpack.c.l.b16 %v3415
    %v3615 = vunpack.c.l.b16 %v3416
    %v3616 = vunpack.c.l.b16 %v3417
    %v3617 = vunpack.c.l.b16 %v3418
    %v3618 = vunpack.c.l.b16 %v3419
    %v3619 = vunpack.c.l.b16 %v3420
    %v3620 = vunpack.c.l.b16 %v3421
    %v3621 = vunpack.c.l.b16 %v3422
    %v3622 = vunpack.c.l.b16 %v3423
    %v3623 = vunpack.c.l.b16 %v3424
    %v3624 = vunpack.c.l.b16 %v3425
    %v3625 = vunpack.c.l.b16 %v3426
    %v3626 = vunpack.c.l.b16 %v3427
    %v3627 = vunpack.c.l.b16 %v3428
    %v3628 = vunpack.c.l.b16 %v3429
    %v3629 = vunpack.c.l.b16 %v3430
    %v3630 = vunpack.c.l.b16 %v3431
    %v3631 = vunpack.c.l.b16 %v3432
    %v3632 = vunpack.c.l.b16 %v3433
    %v3633 = vunpack.c.l.b16 %v3434
    %v3634 = vunpack.c.l.b16 %v3435
    %v3635 = vunpack.c.l.b16 %v3436
    %v3636 = vunpack.c.l.b16 %v3437
    %v3637 = vunpack.c.l.b16 %v3438
    %v3638 = vunpack.c.l.b16 %v3439
    %v3639 = vunpack.c.l.b16 %v3440
    %v3640 = vunpack.c.l.b16 %v3441
    %v3641 = vpack.c.b16 %v3546, %v3545
    %v3642 = vpack.c.b16 %v3548, %v3547
    %v3643 = vpack.c.b16 %v3550, %v3549
    %v3644 = vpack.c.b16 %v3552, %v3551
    %v3645 = vpack.c.b16 %v3554, %v3553
    %v3646 = vpack.c.b16 %v3556, %v3555
    %v3647 = vpack.c.b16 %v3558, %v3557
    %v3648 = vpack.c.b16 %v3560, %v3559
    %v3649 = vpack.c.b16 %v3562, %v3561
    %v3650 = vpack.c.b16 %v3564, %v3563
    %v3651 = vpack.c.b16 %v3566, %v3565
    %v3652 = vpack.c.b16 %v3568, %v3567
    %v3653 = vpack.c.b16 %v3570, %v3569
    %v3654 = vpack.c.b16 %v3572, %v3571
    %v3655 = vpack.c.b16 %v3574, %v3573
    %v3656 = vpack.c.b16 %v3576, %v3575
    %v3657 = vpack.c.b16 %v3578, %v3577
    %v3658 = vpack.c.b16 %v3580, %v3579
    %v3659 = vpack.c.b16 %v3582, %v3581
    %v3660 = vpack.c.b16 %v3584, %v3583
    %v3661 = vpack.c.b16 %v3586, %v3585
    %v3662 = vpack.c.b16 %v3588, %v3587
    %v3663 = vpack.c.b16 %v3590, %v3589
    %v3664 = vpack.c.b16 %v3592, %v3591
    %v3665 = vpack.c.b16 %v3594, %v3593
    %v3666 = vpack.c.b16 %v3596, %v3595
    %v3667 = vpack.c.b16 %v3598, %v3597
    %v3668 = vpack.c.b16 %v3600, %v3599
    %v3669 = vpack.c.b16 %v3602, %v3601
    %v3670 = vpack.c.b16 %v3604, %v3603
    %v3671 = vpack.c.b16 %v3606, %v3605
    %v3672 = vpack.c.b16 %v3608, %v3607
    %v3673 = vpack.c.b16 %v3610, %v3609
    %v3674 = vpack.c.b16 %v3612, %v3611
    %v3675 = vpack.c.b16 %v3614, %v3613
    %v3676 = vpack.c.b16 %v3616, %v3615
    %v3677 = vpack.c.b16 %v3618, %v3617
    %v3678 = vpack.c.b16 %v3620, %v3619
    %v3679 = vpack.c.b16 %v3622, %v3621
    %v3680 = vpack.c.b16 %v3624, %v3623
    %v3681 = vpack.c.b16 %v3626, %v3625
    %v3682 = vpack.c.b16 %v3628, %v3627
    %v3683 = vpack.c.b16 %v3630, %v3629
    %v3684 = vpack.c.b16 %v3632, %v3631
    %v3685 = vpack.c.b16 %v3634, %v3633
    %v3686 = vpack.c.b16 %v3636, %v3635
    %v3687 = vpack.c.b16 %v3638, %v3637
    %v3688 = vpack.c.b16 %v3640, %v3639
    %3737 = vmatprep.subr.bf16.mxu0 0
    %3738 = vmatpush1.bf16.msra.mxu0 %v3648
    %3739 = vmatprep.subr.bf16.mxu0 0
    %3740 = vmatpush1.bf16.msra.mxu0 %v3647
    %3741 = vmatprep.subr.bf16.mxu0 0
    %3742 = vmatpush1.bf16.msra.mxu0 %v3646
    %3743 = vmatprep.subr.bf16.mxu0 0
    %3744 = vmatpush1.bf16.msra.mxu0 %v3645
    %3745 = vmatprep.subr.bf16.mxu0 0
    %3746 = vmatpush1.bf16.msra.mxu0 %v3644
    %3747 = vmatprep.subr.bf16.mxu0 0
    %3748 = vmatpush1.bf16.msra.mxu0 %v3643
    %3749 = vmatprep.subr.bf16.mxu0 0
    %3750 = vmatpush1.bf16.msra.mxu0 %v3642
    %3751 = vmatprep.subr.bf16.mxu0 0
    %3752 = vmatpush1.bf16.msra.mxu0 %v3641
    %3753 = vmatprep.subr.bf16.mxu0 0
    %3754 = vmatpush2.bf16.msra.mxu0 %v3656
    %3755 = vmatprep.subr.bf16.mxu0 0
    %3756 = vmatpush2.bf16.msra.mxu0 %v3655
    %3757 = vmatprep.subr.bf16.mxu0 0
    %3758 = vmatpush2.bf16.msra.mxu0 %v3654
    %3759 = vmatprep.subr.bf16.mxu0 0
    %3760 = vmatpush2.bf16.msra.mxu0 %v3653
    %3761 = vmatprep.subr.bf16.mxu0 0
    %3762 = vmatpush2.bf16.msra.mxu0 %v3652
    %3763 = vmatprep.subr.bf16.mxu0 0
    %3764 = vmatpush2.bf16.msra.mxu0 %v3651
    %3765 = vmatprep.subr.bf16.mxu0 0
    %3766 = vmatpush2.bf16.msra.mxu0 %v3650
    %3767 = vmatprep.subr.bf16.mxu0 0
    %3768 = vmatpush2.bf16.msra.mxu0 %v3649
    %3769 = vmatprep.mubr.bf16.mxu0 %v186
    %3770 = vmatmul.mubr.bf16.gmra.mxu0 %v185
    %v3771 = vpop.f32.mrf.mxu0
    %v3772 = vadd.f32 %v3447, %v3771
    %v3773 = vpop.f32.mrf.mxu0
    %v3774 = vpop.f32.mrf.mxu0
    %v3775 = vadd.f32 %v3447, %v3774
    %v3776 = vpop.f32.mrf.mxu0
    %3777 = vmatprep.mubr.bf16.mxu0 %v192
    %3778 = vmatmul.mubr.bf16.gmra.mxu0 %v191
    %v3779 = vpop.f32.mrf.mxu0
    %v3780 = vadd.f32 %v3447, %v3779
    %v3781 = vpop.f32.mrf.mxu0
    %v3782 = vpop.f32.mrf.mxu0
    %v3783 = vadd.f32 %v3447, %v3782
    %v3784 = vpop.f32.mrf.mxu0
    %3785 = vmatprep.mubr.bf16.mxu0 %v198
    %3786 = vmatmul.mubr.bf16.gmra.mxu0 %v197
    %v3787 = vpop.f32.mrf.mxu0
    %v3788 = vadd.f32 %v3447, %v3787
    %v3789 = vpop.f32.mrf.mxu0
    %v3790 = vpop.f32.mrf.mxu0
    %v3791 = vadd.f32 %v3447, %v3790
    %v3792 = vpop.f32.mrf.mxu0
    %3793 = vmatprep.mubr.bf16.mxu0 %v204
    %3794 = vmatmul.mubr.bf16.gmra.mxu0 %v203
    %v3795 = vpop.f32.mrf.mxu0
    %v3796 = vadd.f32 %v3447, %v3795
    %v3797 = vpop.f32.mrf.mxu0
    %v3798 = vpop.f32.mrf.mxu0
    %v3799 = vadd.f32 %v3447, %v3798
    %v3800 = vpop.f32.mrf.mxu0
    %3801 = vmatprep.mubr.bf16.mxu0 %v210
    %3802 = vmatmul.mubr.bf16.gmra.mxu0 %v209
    %v3803 = vpop.f32.mrf.mxu0
    %v3804 = vadd.f32 %v3447, %v3803
    %v3805 = vpop.f32.mrf.mxu0
    %v3806 = vpop.f32.mrf.mxu0
    %v3807 = vadd.f32 %v3447, %v3806
    %v3808 = vpop.f32.mrf.mxu0
    %3809 = vmatprep.mubr.bf16.mxu0 %v216
    %3810 = vmatmul.mubr.bf16.gmra.mxu0 %v215
    %v3811 = vpop.f32.mrf.mxu0
    %v3812 = vadd.f32 %v3447, %v3811
    %v3813 = vpop.f32.mrf.mxu0
    %v3814 = vpop.f32.mrf.mxu0
    %v3815 = vadd.f32 %v3447, %v3814
    %v3816 = vpop.f32.mrf.mxu0
    %3817 = vmatprep.mubr.bf16.mxu0 %v222
    %3818 = vmatmul.mubr.bf16.gmra.mxu0 %v221
    %v3819 = vpop.f32.mrf.mxu0
    %v3820 = vadd.f32 %v3447, %v3819
    %v3821 = vpop.f32.mrf.mxu0
    %v3822 = vpop.f32.mrf.mxu0
    %v3823 = vadd.f32 %v3447, %v3822
    %v3824 = vpop.f32.mrf.mxu0
    %3825 = vmatprep.mubr.bf16.mxu0 %v228
    %3826 = vmatmul.mubr.bf16.gmra.mxu0 %v227
    %v3827 = vpop.f32.mrf.mxu0
    %v3828 = vadd.f32 %v3447, %v3827
    %v3829 = vpop.f32.mrf.mxu0
    %v3830 = vpop.f32.mrf.mxu0
    %v3831 = vadd.f32 %v3447, %v3830
    %v3832 = vpop.f32.mrf.mxu0
    %3833 = vdwg.mxu0
    %3834 = vmatprep.subr.bf16.mxu0 0
    %3835 = vmatpush1.bf16.msra.mxu0 %v3664
    %3836 = vmatprep.subr.bf16.mxu0 0
    %3837 = vmatpush1.bf16.msra.mxu0 %v3663
    %3838 = vmatprep.subr.bf16.mxu0 0
    %3839 = vmatpush1.bf16.msra.mxu0 %v3662
    %3840 = vmatprep.subr.bf16.mxu0 0
    %3841 = vmatpush1.bf16.msra.mxu0 %v3661
    %3842 = vmatprep.subr.bf16.mxu0 0
    %3843 = vmatpush1.bf16.msra.mxu0 %v3660
    %3844 = vmatprep.subr.bf16.mxu0 0
    %3845 = vmatpush1.bf16.msra.mxu0 %v3659
    %3846 = vmatprep.subr.bf16.mxu0 0
    %3847 = vmatpush1.bf16.msra.mxu0 %v3658
    %3848 = vmatprep.subr.bf16.mxu0 0
    %3849 = vmatpush1.bf16.msra.mxu0 %v3657
    %3850 = vmatprep.subr.bf16.mxu0 0
    %3851 = vmatpush2.bf16.msra.mxu0 %v3672
    %3852 = vmatprep.subr.bf16.mxu0 0
    %3853 = vmatpush2.bf16.msra.mxu0 %v3671
    %3854 = vmatprep.subr.bf16.mxu0 0
    %3855 = vmatpush2.bf16.msra.mxu0 %v3670
    %3856 = vmatprep.subr.bf16.mxu0 0
    %3857 = vmatpush2.bf16.msra.mxu0 %v3669
    %3858 = vmatprep.subr.bf16.mxu0 0
    %3859 = vmatpush2.bf16.msra.mxu0 %v3668
    %3860 = vmatprep.subr.bf16.mxu0 0
    %3861 = vmatpush2.bf16.msra.mxu0 %v3667
    %3862 = vmatprep.subr.bf16.mxu0 0
    %3863 = vmatpush2.bf16.msra.mxu0 %v3666
    %3864 = vmatprep.subr.bf16.mxu0 0
    %3865 = vmatpush2.bf16.msra.mxu0 %v3665
    %3866 = vmatprep.mubr.bf16.mxu0 %v188
    %3867 = vmatmul.mubr.bf16.gmra.mxu0 %v187
    %v3868 = vpop.f32.mrf.mxu0
    %v3869 = vadd.f32 %v3772, %v3868
    %v3870 = vpop.f32.mrf.mxu0
    %v3871 = vpop.f32.mrf.mxu0
    %v3872 = vadd.f32 %v3775, %v3871
    %v3873 = vpop.f32.mrf.mxu0
    %3874 = vmatprep.mubr.bf16.mxu0 %v194
    %3875 = vmatmul.mubr.bf16.gmra.mxu0 %v193
    %v3876 = vpop.f32.mrf.mxu0
    %v3877 = vadd.f32 %v3780, %v3876
    %v3878 = vpop.f32.mrf.mxu0
    %v3879 = vpop.f32.mrf.mxu0
    %v3880 = vadd.f32 %v3783, %v3879
    %v3881 = vpop.f32.mrf.mxu0
    %3882 = vmatprep.mubr.bf16.mxu0 %v200
    %3883 = vmatmul.mubr.bf16.gmra.mxu0 %v199
    %v3884 = vpop.f32.mrf.mxu0
    %v3885 = vadd.f32 %v3788, %v3884
    %v3886 = vpop.f32.mrf.mxu0
    %v3887 = vpop.f32.mrf.mxu0
    %v3888 = vadd.f32 %v3791, %v3887
    %v3889 = vpop.f32.mrf.mxu0
    %3890 = vmatprep.mubr.bf16.mxu0 %v206
    %3891 = vmatmul.mubr.bf16.gmra.mxu0 %v205
    %v3892 = vpop.f32.mrf.mxu0
    %v3893 = vadd.f32 %v3796, %v3892
    %v3894 = vpop.f32.mrf.mxu0
    %v3895 = vpop.f32.mrf.mxu0
    %v3896 = vadd.f32 %v3799, %v3895
    %v3897 = vpop.f32.mrf.mxu0
    %3898 = vmatprep.mubr.bf16.mxu0 %v212
    %3899 = vmatmul.mubr.bf16.gmra.mxu0 %v211
    %v3900 = vpop.f32.mrf.mxu0
    %v3901 = vadd.f32 %v3804, %v3900
    %v3902 = vpop.f32.mrf.mxu0
    %v3903 = vpop.f32.mrf.mxu0
    %v3904 = vadd.f32 %v3807, %v3903
    %v3905 = vpop.f32.mrf.mxu0
    %3906 = vmatprep.mubr.bf16.mxu0 %v218
    %3907 = vmatmul.mubr.bf16.gmra.mxu0 %v217
    %v3908 = vpop.f32.mrf.mxu0
    %v3909 = vadd.f32 %v3812, %v3908
    %v3910 = vpop.f32.mrf.mxu0
    %v3911 = vpop.f32.mrf.mxu0
    %v3912 = vadd.f32 %v3815, %v3911
    %v3913 = vpop.f32.mrf.mxu0
    %3914 = vmatprep.mubr.bf16.mxu0 %v224
    %3915 = vmatmul.mubr.bf16.gmra.mxu0 %v223
    %v3916 = vpop.f32.mrf.mxu0
    %v3917 = vadd.f32 %v3820, %v3916
    %v3918 = vpop.f32.mrf.mxu0
    %v3919 = vpop.f32.mrf.mxu0
    %v3920 = vadd.f32 %v3823, %v3919
    %v3921 = vpop.f32.mrf.mxu0
    %3922 = vmatprep.mubr.bf16.mxu0 %v230
    %3923 = vmatmul.mubr.bf16.gmra.mxu0 %v229
    %v3924 = vpop.f32.mrf.mxu0
    %v3925 = vadd.f32 %v3828, %v3924
    %v3926 = vpop.f32.mrf.mxu0
    %v3927 = vpop.f32.mrf.mxu0
    %v3928 = vadd.f32 %v3831, %v3927
    %v3929 = vpop.f32.mrf.mxu0
    %3930 = vdwg.mxu0
    %3931 = vmatprep.subr.bf16.mxu0 0
    %3932 = vmatpush1.bf16.msra.mxu0 %v3680
    %3933 = vmatprep.subr.bf16.mxu0 0
    %3934 = vmatpush1.bf16.msra.mxu0 %v3679
    %3935 = vmatprep.subr.bf16.mxu0 0
    %3936 = vmatpush1.bf16.msra.mxu0 %v3678
    %3937 = vmatprep.subr.bf16.mxu0 0
    %3938 = vmatpush1.bf16.msra.mxu0 %v3677
    %3939 = vmatprep.subr.bf16.mxu0 0
    %3940 = vmatpush1.bf16.msra.mxu0 %v3676
    %3941 = vmatprep.subr.bf16.mxu0 0
    %3942 = vmatpush1.bf16.msra.mxu0 %v3675
    %3943 = vmatprep.subr.bf16.mxu0 0
    %3944 = vmatpush1.bf16.msra.mxu0 %v3674
    %3945 = vmatprep.subr.bf16.mxu0 0
    %3946 = vmatpush1.bf16.msra.mxu0 %v3673
    %3947 = vmatprep.subr.bf16.mxu0 0
    %3948 = vmatpush2.bf16.msra.mxu0 %v3688
    %3949 = vmatprep.subr.bf16.mxu0 0
    %3950 = vmatpush2.bf16.msra.mxu0 %v3687
    %3951 = vmatprep.subr.bf16.mxu0 0
    %3952 = vmatpush2.bf16.msra.mxu0 %v3686
    %3953 = vmatprep.subr.bf16.mxu0 0
    %3954 = vmatpush2.bf16.msra.mxu0 %v3685
    %3955 = vmatprep.subr.bf16.mxu0 0
    %3956 = vmatpush2.bf16.msra.mxu0 %v3684
    %3957 = vmatprep.subr.bf16.mxu0 0
    %3958 = vmatpush2.bf16.msra.mxu0 %v3683
    %3959 = vmatprep.subr.bf16.mxu0 0
    %3960 = vmatpush2.bf16.msra.mxu0 %v3682
    %3961 = vmatprep.subr.bf16.mxu0 0
    %3962 = vmatpush2.bf16.msra.mxu0 %v3681
    %3963 = vmatprep.mubr.bf16.mxu0 %v190
    %3964 = vmatmul.mubr.bf16.gmra.mxu0 %v189
    %v3965 = vpop.f32.mrf.mxu0
    %v3966 = vadd.f32 %v3869, %v3965
    %v3967 = vpop.f32.mrf.mxu0
    %v3968 = vpop.f32.mrf.mxu0
    %v3969 = vadd.f32 %v3872, %v3968
    %v3970 = vpop.f32.mrf.mxu0
    %3971 = vmatprep.mubr.bf16.mxu0 %v196
    %3972 = vmatmul.mubr.bf16.gmra.mxu0 %v195
    %v3973 = vpop.f32.mrf.mxu0
    %v3974 = vadd.f32 %v3877, %v3973
    %v3975 = vpop.f32.mrf.mxu0
    %v3976 = vpop.f32.mrf.mxu0
    %v3977 = vadd.f32 %v3880, %v3976
    %v3978 = vpop.f32.mrf.mxu0
    %3979 = vmatprep.mubr.bf16.mxu0 %v202
    %3980 = vmatmul.mubr.bf16.gmra.mxu0 %v201
    %v3981 = vpop.f32.mrf.mxu0
    %v3982 = vadd.f32 %v3885, %v3981
    %v3983 = vpop.f32.mrf.mxu0
    %v3984 = vpop.f32.mrf.mxu0
    %v3985 = vadd.f32 %v3888, %v3984
    %v3986 = vpop.f32.mrf.mxu0
    %3987 = vmatprep.mubr.bf16.mxu0 %v208
    %3988 = vmatmul.mubr.bf16.gmra.mxu0 %v207
    %v3989 = vpop.f32.mrf.mxu0
    %v3990 = vadd.f32 %v3893, %v3989
    %v3991 = vpop.f32.mrf.mxu0
    %v3992 = vpop.f32.mrf.mxu0
    %v3993 = vadd.f32 %v3896, %v3992
    %v3994 = vpop.f32.mrf.mxu0
    %3995 = vmatprep.mubr.bf16.mxu0 %v214
    %3996 = vmatmul.mubr.bf16.gmra.mxu0 %v213
    %v3997 = vpop.f32.mrf.mxu0
    %v3998 = vadd.f32 %v3901, %v3997
    %v3999 = vpop.f32.mrf.mxu0
    %v4000 = vpop.f32.mrf.mxu0
    %v4001 = vadd.f32 %v3904, %v4000
    %v4002 = vpop.f32.mrf.mxu0
    %4003 = vmatprep.mubr.bf16.mxu0 %v220
    %4004 = vmatmul.mubr.bf16.gmra.mxu0 %v219
    %v4005 = vpop.f32.mrf.mxu0
    %v4006 = vadd.f32 %v3909, %v4005
    %v4007 = vpop.f32.mrf.mxu0
    %v4008 = vpop.f32.mrf.mxu0
    %v4009 = vadd.f32 %v3912, %v4008
    %v4010 = vpop.f32.mrf.mxu0
    %4011 = vmatprep.mubr.bf16.mxu0 %v226
    %4012 = vmatmul.mubr.bf16.gmra.mxu0 %v225
    %v4013 = vpop.f32.mrf.mxu0
    %v4014 = vadd.f32 %v3917, %v4013
    %v4015 = vpop.f32.mrf.mxu0
    %v4016 = vpop.f32.mrf.mxu0
    %v4017 = vadd.f32 %v3920, %v4016
    %v4018 = vpop.f32.mrf.mxu0
    %4019 = vmatprep.mubr.bf16.mxu0 %v232
    %4020 = vmatmul.mubr.bf16.gmra.mxu0 %v231
    %v4021 = vpop.f32.mrf.mxu0
    %v4022 = vadd.f32 %v3925, %v4021
    %v4023 = vpop.f32.mrf.mxu0
    %v4024 = vpop.f32.mrf.mxu0
    %v4025 = vadd.f32 %v3928, %v4024
    %v4026 = vpop.f32.mrf.mxu0
    %4027 = vdwg.mxu0
    %v4028 = vpack.c.bf16 %v3969, %v3966
    %v4029 = vpack.c.bf16 %v3977, %v3974
    %v4030 = vpack.c.bf16 %v3985, %v3982
    %v4031 = vpack.c.bf16 %v3993, %v3990
    %v4032 = vpack.c.bf16 %v4001, %v3998
    %v4033 = vpack.c.bf16 %v4009, %v4006
    %v4034 = vpack.c.bf16 %v4017, %v4014
    %v4035 = vpack.c.bf16 %v4025, %v4022
    %v4044 = vunpack.c.l.b16 %v4028
    %v4045 = vunpack.c.h.b16 %v4028
    %v4046 = vunpack.c.l.b16 %v4029
    %v4047 = vunpack.c.h.b16 %v4029
    %v4048 = vunpack.c.l.b16 %v4030
    %v4049 = vunpack.c.h.b16 %v4030
    %v4050 = vunpack.c.l.b16 %v4031
    %v4051 = vunpack.c.h.b16 %v4031
    %v4052 = vunpack.c.l.b16 %v4032
    %v4053 = vunpack.c.h.b16 %v4032
    %v4054 = vunpack.c.l.b16 %v4033
    %v4055 = vunpack.c.h.b16 %v4033
    %v4056 = vunpack.c.l.b16 %v4034
    %v4057 = vunpack.c.h.b16 %v4034
    %v4058 = vunpack.c.l.b16 %v4035
    %v4059 = vunpack.c.h.b16 %v4035
    %v4060 = vpack.c.b16 %v4044, %v4044
    %v4061 = vpack.c.b16 %v4045, %v4045
    %v4062 = vpack.c.b16 %v4046, %v4046
    %v4063 = vpack.c.b16 %v4047, %v4047
    %v4064 = vpack.c.b16 %v4048, %v4048
    %v4065 = vpack.c.b16 %v4049, %v4049
    %v4066 = vpack.c.b16 %v4050, %v4050
    %v4067 = vpack.c.b16 %v4051, %v4051
    %v4068 = vpack.c.b16 %v4052, %v4052
    %v4069 = vpack.c.b16 %v4053, %v4053
    %v4070 = vpack.c.b16 %v4054, %v4054
    %v4071 = vpack.c.b16 %v4055, %v4055
    %v4072 = vpack.c.b16 %v4056, %v4056
    %v4073 = vpack.c.b16 %v4057, %v4057
    %v4074 = vpack.c.b16 %v4058, %v4058
    %v4075 = vpack.c.b16 %v4059, %v4059
    %4092 = vst [vmem:[#allocation12] sm:$0xf] %v4060
    %4093 = vst [vmem:[#allocation12 + $0x4] sm:$0xf] %v4061
    %4094 = vst [vmem:[#allocation12 + $0x8] sm:$0xf] %v4062
    %4095 = vst [vmem:[#allocation12 + $0xc] sm:$0xf] %v4063
    %4096 = vst [vmem:[#allocation12 + $0x10] sm:$0xf] %v4064
    %4097 = vst [vmem:[#allocation12 + $0x14] sm:$0xf] %v4065
    %4098 = vst [vmem:[#allocation12 + $0x18] sm:$0xf] %v4066
    %4099 = vst [vmem:[#allocation12 + $0x1c] sm:$0xf] %v4067
    %4100 = vst [vmem:[#allocation12 + $0x20] sm:$0xf] %v4068
    %4101 = vst [vmem:[#allocation12 + $0x24] sm:$0xf] %v4069
    %4102 = vst [vmem:[#allocation12 + $0x28] sm:$0xf] %v4070
    %4103 = vst [vmem:[#allocation12 + $0x2c] sm:$0xf] %v4071
    %4104 = vst [vmem:[#allocation12 + $0x30] sm:$0xf] %v4072
    %4105 = vst [vmem:[#allocation12 + $0x34] sm:$0xf] %v4073
    %4106 = vst [vmem:[#allocation12 + $0x38] sm:$0xf] %v4074
    %4107 = vst [vmem:[#allocation12 + $0x3c] sm:$0xf] %v4075
    // Predicated region
    $region42: #{tpu_custom_call.1} parent=1 // pred_check
      _
    $region43: #{tpu_custom_call.1} parent=1 // pred_check_branch
      %4109 = sbr.rel (0) target = $region45
    $region44: #{tpu_custom_call.1} parent=1 // pred_region
      %s4111 = ssub.s32 6144, 6144
      %4112 = vsyncadd [#allocation4], %s4111
      %s4113 = sshll.u32 [#allocation11], 4
      %s4114 = int_to_ptr.vmem [resolvable:$true] %s4113
      %4119 = dma.vmem_to_hbm [thread:$0]  %s4114, 6144, %s5, [#allocation4], 384, 384, 24
    $region45: #{tpu_custom_call.1} parent=1 // pred_fallthru
      _
    // Predicated region
    $region46: #{tpu_custom_call.1} parent=1 // pred_check
      _
    $region47: #{tpu_custom_call.1} parent=1 // pred_check_branch
      %4121 = sbr.rel (0) target = $region49
    $region48: #{tpu_custom_call.1} parent=1 // pred_region
      %s4123 = ssub.s32 1024, 1024
      %4124 = vsyncadd [#allocation13], %s4123
      %s4125 = sshll.u32 [#allocation12], 4
      %s4126 = int_to_ptr.vmem [resolvable:$true] %s4125
      %4131 = dma.vmem_to_hbm [thread:$0]  %s4126, 1024, %s6, [#allocation13], 64, 64, 4
    $region49: #{tpu_custom_call.1} parent=1 // pred_fallthru
      _
    // Predicated region
    $region50: #{tpu_custom_call.1} parent=1 // pred_check
      _
    $region51: #{tpu_custom_call.1} parent=1 // pred_check_branch
      %4133 = sbr.rel (0) target = $region53
    $region52: #{tpu_custom_call.1} parent=1 // pred_region
      %4134 = dma.done [#allocation4], 6144
    $region53: #{tpu_custom_call.1} parent=1 // pred_fallthru
      _
    // Predicated region
    $region54: #{tpu_custom_call.1} parent=1 // pred_check
      _
    $region55: #{tpu_custom_call.1} parent=1 // pred_check_branch
      %4136 = sbr.rel (0) target = $region57
    $region56: #{tpu_custom_call.1} parent=1 // pred_region
      %4137 = dma.done [#allocation13], 1024
    $region57: #{tpu_custom_call.1} parent=1 // pred_fallthru
      _
    %4138 = vsyncpa [#allocation3], 1
    %4139 = vsyncpa [#allocation6], 1
    %4140 = vsyncpa [#allocation9], 1
    %4141 = vsyncpa [#allocation4], 1
    %4142 = vsyncpa [#allocation13], 1

</llo_original>
